<compile_context>
chip_gen: v6e
topology: v6e:2x2x1
jax: 0.10.0
libtpu: 0.0.40
codegen_flags: <defaults>
</compile_context>

<pallas_src>
import functools

import jax
import jax.numpy as jnp
from jax import lax
from jax.experimental import pallas as pl
from jax.experimental.pallas import tpu as pltpu


# ------------------------------ fused kernel ------------------------------- #

def _fused_encoder_kernel(
    x_ref,       # (B, H, W, C0)    f32  B images per grid step
    w1_ref,      # (9*C0, C1)       bf16 conv1 weight, rows in (kh, kw, cin) order
    b1_ref,      # (1, C1)          f32
    w2_ref,      # (9*C1, C2)       bf16
    b2_ref,      # (1, C2)          f32
    wl_ref,      # (H4*W4*C2, ZO)   f32  linear weight, rows in (i, j, c) order
    bl_ref,      # (1, ZO)          f32
    out_ref,     # (B, ZO)          f32
    # ---------------- VMEM scratch ----------------
    xpad_ref,    # (B, H+2, W+2, C0)      bf16  zero-padded conv1 input
    h1_ref,      # (B*H*W, C1)            f32   relu(conv1) output (row-major b,i,w)
    h2pad_ref,   # (B, H/2+2, W/2+2, C1)  bf16  zero-padded conv2 input
    h3_ref,      # (B*H2*W2, C2)          f32   relu(conv2) output
    *, B, H, W, C0, C1, C2,
):
    f32 = jnp.float32
    bf16 = jnp.bfloat16
    H2, W2 = H // 2, W // 2
    H4, W4 = H // 4, W // 4

    # ---------------- conv1 (3x3, pad 1, C0 -> C1) + ReLU ----------------
    # zero only the 1-wide padding ring; interior is overwritten just below
    xpad_ref[:, 0:1, :, :] = jnp.zeros((B, 1, W + 2, C0), bf16)
    xpad_ref[:, H + 1:H + 2, :, :] = jnp.zeros((B, 1, W + 2, C0), bf16)
    xpad_ref[:, :, 0:1, :] = jnp.zeros((B, H + 2, 1, C0), bf16)
    xpad_ref[:, :, W + 1:W + 2, :] = jnp.zeros((B, H + 2, 1, C0), bf16)
    xpad_ref[:, 1:H + 1, 1:W + 1, :] = x_ref[...].astype(bf16)

    # in-register im2col: 9 shifted taps, lane-concatenated -> (B*H*W, 9*C0)
    taps1 = [xpad_ref[:, di:di + H, dj:dj + W, :]
             for di in range(3) for dj in range(3)]
    p1 = jnp.concatenate(taps1, axis=-1).reshape(B * H * W, 9 * C0)      # bf16
    h1 = jnp.dot(p1, w1_ref[...], preferred_element_type=f32) + b1_ref[...]
    h1_ref[...] = jnp.maximum(h1, 0.0)                                   # (B*H*W, C1)

    # ---- maxpool 2x2 (ReLU after the pool is a no-op on non-negative data) ----
    # W-pool: rows of h1_ref alternate even/odd W -> two stride-2 sublane loads.
    pw1 = jnp.maximum(h1_ref[pl.ds(0, B * H * W2, 2), :],
                      h1_ref[pl.ds(1, B * H * W2, 2), :])                # (B*H*W2, C1)
    # H-pool: split the row index (b, i, j) -> (b, i2, 2, j) and max the pair.
    pw1 = pw1.reshape(B, H2, 2, W2, C1)
    pooled1 = jnp.maximum(pw1[:, :, 0, :, :], pw1[:, :, 1, :, :])        # (B, H2, W2, C1)

    # ---------------- conv2 (3x3, pad 1, C1 -> C2) + ReLU ----------------
    h2pad_ref[:, 0:1, :, :] = jnp.zeros((B, 1, W2 + 2, C1), bf16)
    h2pad_ref[:, H2 + 1:H2 + 2, :, :] = jnp.zeros((B, 1, W2 + 2, C1), bf16)
    h2pad_ref[:, :, 0:1, :] = jnp.zeros((B, H2 + 2, 1, C1), bf16)
    h2pad_ref[:, :, W2 + 1:W2 + 2, :] = jnp.zeros((B, H2 + 2, 1, C1), bf16)
    h2pad_ref[:, 1:H2 + 1, 1:W2 + 1, :] = pooled1.astype(bf16)           # one dense store

    taps2 = [h2pad_ref[:, di:di + H2, dj:dj + W2, :]
             for di in range(3) for dj in range(3)]
    p2 = jnp.concatenate(taps2, axis=-1).reshape(B * H2 * W2, 9 * C1)    # bf16
    h3 = jnp.dot(p2, w2_ref[...], preferred_element_type=f32) + b2_ref[...]
    h3_ref[...] = jnp.maximum(h3, 0.0)                                   # (B*H2*W2, C2)

    # ------------------- maxpool 2x2 + flatten + linear --------------------
    pw2 = jnp.maximum(h3_ref[pl.ds(0, B * H2 * W4, 2), :],
                      h3_ref[pl.ds(1, B * H2 * W4, 2), :])               # (B*H2*W4, C2)
    pw2 = pw2.reshape(B, H4, 2, W4, C2)
    pooled2 = jnp.maximum(pw2[:, :, 0, :, :], pw2[:, :, 1, :, :])        # (B, H4, W4, C2)

    # flatten in (i, j, c) order via a register-level lane concat (no scratch scatter)
    pieces = [pooled2[:, io, jo, :] for io in range(H4) for jo in range(W4)]
    flat = jnp.concatenate(pieces, axis=-1)                              # (B, H4*W4*C2) f32

    out = jnp.dot(flat, wl_ref[...], preferred_element_type=f32) + bl_ref[...]
    out_ref[...] = out.astype(out_ref.dtype)


# -------------------------------- wrapper ----------------------------------- #

def _pick_batch_tile(n):
    # Prefer 8-image tiles; keep >= 2 grid steps for small batches so a 2-TC chip
    # (v7x) can shard the batch axis.
    if n >= 16:
        return 8
    if n >= 2:
        return max(1, n // 2)
    return 1


def cnn_encoder1_forward(x_nchw, params, z_dim):
    N, C0, H, W = x_nchw.shape
    C1, C2 = 16, 4
    assert H % 4 == 0 and W % 4 == 0, "CNNEncoder1 kernel requires H, W divisible by 4"
    H2, W2, H4, W4 = H // 2, W // 2, H // 4, W // 4
    ZO = 2 * z_dim
    FEAT = H4 * W4 * C2

    B = _pick_batch_tile(N)
    num_steps = -(-N // B)              # cdiv
    N_pad = num_steps * B

    x = jnp.transpose(x_nchw, (0, 2, 3, 1)).astype(jnp.float32)          # NHWC
    if N_pad != N:
        x = jnp.pad(x, ((0, N_pad - N), (0, 0), (0, 0), (0, 0)))

    # One-time parameter re-layouts (torch conventions -> kernel layout).
    # conv weight (C_out, C_in, kh, kw) -> rows (kh, kw, cin), cols cout
    w1 = jnp.transpose(params["w1"], (2, 3, 1, 0)).reshape(9 * C0, C1).astype(jnp.bfloat16)
    w2 = jnp.transpose(params["w2"], (2, 3, 1, 0)).reshape(9 * C1, C2).astype(jnp.bfloat16)
    b1 = params["b1"].reshape(1, C1).astype(jnp.float32)
    b2 = params["b2"].reshape(1, C2).astype(jnp.float32)
    # linear weight (ZO, feat) with feat in torch NCHW-flatten (c,i,j) order
    # -> rows re-ordered to the kernel's (i, j, c) flatten order; kept f32 (tiny matmul)
    wl = (params["wl"].T.reshape(C2, H4, W4, ZO)
          .transpose(1, 2, 0, 3).reshape(FEAT, ZO).astype(jnp.float32))
    bl = params["bl"].reshape(1, ZO).astype(jnp.float32)

    kernel = functools.partial(_fused_encoder_kernel,
                               B=B, H=H, W=W, C0=C0, C1=C1, C2=C2)

    flops = 2 * N_pad * (H * W * 9 * C0 * C1 + H2 * W2 * 9 * C1 * C2 + FEAT * ZO)
    bytes_accessed = (4 * x.size + 2 * (w1.size + w2.size) + 4 * wl.size
                      + 4 * (b1.size + b2.size + bl.size) + 4 * N_pad * ZO)

    out = pl.pallas_call(
        kernel,
        grid=(num_steps,),
        in_specs=[
            pl.BlockSpec((B, H, W, C0), lambda n: (n, 0, 0, 0)),
            pl.BlockSpec((9 * C0, C1), lambda n: (0, 0)),
            pl.BlockSpec((1, C1), lambda n: (0, 0)),
            pl.BlockSpec((9 * C1, C2), lambda n: (0, 0)),
            pl.BlockSpec((1, C2), lambda n: (0, 0)),
            pl.BlockSpec((FEAT, ZO), lambda n: (0, 0)),
            pl.BlockSpec((1, ZO), lambda n: (0, 0)),
        ],
        out_specs=pl.BlockSpec((None, B, ZO), lambda n: (n, 0, 0)),
        out_shape=jax.ShapeDtypeStruct((num_steps, B, ZO), jnp.float32),
        scratch_shapes=[
            pltpu.VMEM((B, H + 2, W + 2, C0), jnp.bfloat16),
            pltpu.VMEM((B * H * W, C1), jnp.float32),
            pltpu.VMEM((B, H2 + 2, W2 + 2, C1), jnp.bfloat16),
            pltpu.VMEM((B * H2 * W2, C2), jnp.float32),
        ],
        compiler_params=pltpu.CompilerParams(
            dimension_semantics=("parallel",),
            vmem_limit_bytes=32 * 1024 * 1024,   # explicit; actual use ~1 MiB/step
        ),
        cost_estimate=pl.CostEstimate(flops=flops, transcendentals=0,
                                      bytes_accessed=bytes_accessed),
    )(x, w1, b1, w2, b2, wl, bl)

    out = out.reshape(N_pad, ZO)[:N]
    return out[:, :z_dim], out[:, z_dim:]


# --------------------------- params / reference ----------------------------- #

def init_params(key, c_in, h, w, z_dim):
    """Deterministic synthetic params, stored in the torch module's native layouts."""
    k1, k2, k3, k4, k5, k6 = jax.random.split(key, 6)
    feat = 4 * (h // 4) * (w // 4)
    return dict(
        w1=0.1 * jax.random.normal(k1, (16, c_in, 3, 3), jnp.float32),   # Conv2d OIHW
        b1=0.1 * jax.random.normal(k2, (16,), jnp.float32),
        w2=0.1 * jax.random.normal(k3, (4, 16, 3, 3), jnp.float32),
        b2=0.1 * jax.random.normal(k4, (4,), jnp.float32),
        wl=0.1 * jax.random.normal(k5, (2 * z_dim, feat), jnp.float32),  # Linear (out, in)
        bl=0.1 * jax.random.normal(k6, (2 * z_dim,), jnp.float32),
    )


def reference_forward(x_nchw, params, z_dim):
    """Pure-JAX (f32) reference that mirrors the torch module literally."""
    def conv(x, w, b):
        y = lax.conv_general_dilated(x, w, (1, 1), "SAME",
                                     dimension_numbers=("NCHW", "OIHW", "NCHW"))
        return y + b.reshape(1, -1, 1, 1)

    def maxpool(x):
        return lax.reduce_window(x, -jnp.inf, lax.max,
                                 (1, 1, 2, 2), (1, 1, 2, 2), "VALID")

    relu = lambda t: jnp.maximum(t, 0.0)
    h = relu(conv(x_nchw, params["w1"], params["b1"]))
    h = relu(maxpool(h))
    h = relu(conv(h, params["w2"], params["b2"]))
    h = relu(maxpool(h))
    flat = h.reshape(h.shape[0], -1)                       # torch.flatten on NCHW
    out = flat @ params["wl"].T + params["bl"]
    return out[:, :z_dim], out[:, z_dim:]


if __name__ == "__main__":
    z_dim, H, W = 8, 16, 16
    grayscale = True
    c_in = 2 if grayscale else 6            # Encoder.__init__: grayscale -> 2 channels
    N = 4                                   # exercises batch tiling (B_tile=2, 2 grid steps)

    key = jax.random.PRNGKey(0)
    kx, kp = jax.random.split(key)
    x = jax.random.normal(kx, (N, c_in, H, W), jnp.float32)              # NCHW like torch
    params = init_params(kp, c_in, H, W, z_dim)

    fwd = jax.jit(cnn_encoder1_forward, static_argnames=("z_dim",))
    mean, logvar = fwd(x, params, z_dim=z_dim)
    jax.block_until_ready((mean, logvar))

    assert mean.shape == (N, z_dim) and logvar.shape == (N, z_dim)
    assert bool(jnp.all(jnp.isfinite(mean))) and bool(jnp.all(jnp.isfinite(logvar)))

    # Cross-check against the f32 reference (bf16 MXU operands -> loose tolerance).
    ref_mean, ref_logvar = reference_forward(x, params, z_dim)
    assert jnp.allclose(mean, ref_mean, atol=5e-2, rtol=5e-2), \
        float(jnp.max(jnp.abs(mean - ref_mean)))
    assert jnp.allclose(logvar, ref_logvar, atol=5e-2, rtol=5e-2), \
        float(jnp.max(jnp.abs(logvar - ref_logvar)))
    print("KERNEL_OK")
</pallas_src>

<mosaic_0001>
module attributes {stable_mosaic.version = 11 : i64} {
  func.func @_fused_encoder_kernel(%arg0: i32, %arg1: memref<2x16x16x2xf32, #tpu.memory_space<vmem>>, %arg2: memref<18x16xbf16, #tpu.memory_space<vmem>>, %arg3: memref<1x16xf32, #tpu.memory_space<vmem>>, %arg4: memref<144x4xbf16, #tpu.memory_space<vmem>>, %arg5: memref<1x4xf32, #tpu.memory_space<vmem>>, %arg6: memref<64x16xf32, #tpu.memory_space<vmem>>, %arg7: memref<1x16xf32, #tpu.memory_space<vmem>>, %arg8: memref<1x2x16xf32, #tpu.memory_space<vmem>>, %arg9: memref<2x18x18x2xbf16, #tpu.memory_space<vmem>>, %arg10: memref<512x16xf32, #tpu.memory_space<vmem>>, %arg11: memref<2x10x10x16xbf16, #tpu.memory_space<vmem>>, %arg12: memref<128x4xf32, #tpu.memory_space<vmem>>) attributes {dimension_semantics = [#tpu.dimension_semantics<parallel>], iteration_bounds = array<i64: 2>, scalar_prefetch = 0 : i64, scratch_operands = 4 : i64, tpu.core_type = #tpu.core_type<tc>, window_params = [{transform_indices = @transform_0, window_bounds = array<i64: 2, 16, 16, 2>}, {pipeline_mode = #tpu.pipeline_mode<synchronous>, transform_indices = @transform_1, window_bounds = array<i64: 18, 16>}, {pipeline_mode = #tpu.pipeline_mode<synchronous>, transform_indices = @transform_2, window_bounds = array<i64: 1, 16>}, {pipeline_mode = #tpu.pipeline_mode<synchronous>, transform_indices = @transform_3, window_bounds = array<i64: 144, 4>}, {pipeline_mode = #tpu.pipeline_mode<synchronous>, transform_indices = @transform_4, window_bounds = array<i64: 1, 4>}, {pipeline_mode = #tpu.pipeline_mode<synchronous>, transform_indices = @transform_5, window_bounds = array<i64: 64, 16>}, {pipeline_mode = #tpu.pipeline_mode<synchronous>, transform_indices = @transform_6, window_bounds = array<i64: 1, 16>}, {transform_indices = @transform_7, window_bounds = array<i64: 1, 2, 16>}]} {
    %cst = arith.constant 0.000000e+00 : bf16
    %0 = vector.broadcast %cst : bf16 to vector<2x1x18x2xbf16>
    %c0 = arith.constant 0 : index
    %c0_0 = arith.constant 0 : index
    %c0_1 = arith.constant 0 : index
    %c0_2 = arith.constant 0 : index
    %1 = vector.load %arg9[%c0, %c0_0, %c0_1, %c0_2] : memref<2x18x18x2xbf16, #tpu.memory_space<vmem>>, vector<2x1x18x2xbf16>
    tpu.vector_store %arg9[%c0, %c0_0, %c0_1, %c0_2], %0 {strides = array<i32>} : memref<2x18x18x2xbf16, #tpu.memory_space<vmem>>, vector<2x1x18x2xbf16>,
    %cst_3 = arith.constant 0.000000e+00 : bf16
    %2 = vector.broadcast %cst_3 : bf16 to vector<2x1x18x2xbf16>
    %c0_4 = arith.constant 0 : index
    %c17 = arith.constant 17 : index
    %c0_5 = arith.constant 0 : index
    %c0_6 = arith.constant 0 : index
    %3 = vector.load %arg9[%c0_4, %c17, %c0_5, %c0_6] : memref<2x18x18x2xbf16, #tpu.memory_space<vmem>>, vector<2x1x18x2xbf16>
    tpu.vector_store %arg9[%c0_4, %c17, %c0_5, %c0_6], %2 {strides = array<i32>} : memref<2x18x18x2xbf16, #tpu.memory_space<vmem>>, vector<2x1x18x2xbf16>,
    %cst_7 = arith.constant 0.000000e+00 : bf16
    %4 = vector.broadcast %cst_7 : bf16 to vector<2x18x1x2xbf16>
    %c0_8 = arith.constant 0 : index
    %c0_9 = arith.constant 0 : index
    %c0_10 = arith.constant 0 : index
    %c0_11 = arith.constant 0 : index
    %5 = vector.load %arg9[%c0_8, %c0_9, %c0_10, %c0_11] : memref<2x18x18x2xbf16, #tpu.memory_space<vmem>>, vector<2x18x1x2xbf16>
    tpu.vector_store %arg9[%c0_8, %c0_9, %c0_10, %c0_11], %4 {strides = array<i32>} : memref<2x18x18x2xbf16, #tpu.memory_space<vmem>>, vector<2x18x1x2xbf16>,
    %cst_12 = arith.constant 0.000000e+00 : bf16
    %6 = vector.broadcast %cst_12 : bf16 to vector<2x18x1x2xbf16>
    %c0_13 = arith.constant 0 : index
    %c0_14 = arith.constant 0 : index
    %c17_15 = arith.constant 17 : index
    %c0_16 = arith.constant 0 : index
    %7 = vector.load %arg9[%c0_13, %c0_14, %c17_15, %c0_16] : memref<2x18x18x2xbf16, #tpu.memory_space<vmem>>, vector<2x18x1x2xbf16>
    tpu.vector_store %arg9[%c0_13, %c0_14, %c17_15, %c0_16], %6 {strides = array<i32>} : memref<2x18x18x2xbf16, #tpu.memory_space<vmem>>, vector<2x18x1x2xbf16>,
    %c0_17 = arith.constant 0 : index
    %c0_18 = arith.constant 0 : index
    %c0_19 = arith.constant 0 : index
    %c0_20 = arith.constant 0 : index
    %8 = vector.load %arg1[%c0_17, %c0_18, %c0_19, %c0_20] : memref<2x16x16x2xf32, #tpu.memory_space<vmem>>, vector<2x16x16x2xf32>
    %9 = arith.truncf %8 : vector<2x16x16x2xf32> to vector<2x16x16x2xbf16>
    %c0_21 = arith.constant 0 : index
    %c1 = arith.constant 1 : index
    %c1_22 = arith.constant 1 : index
    %c0_23 = arith.constant 0 : index
    %10 = vector.load %arg9[%c0_21, %c1, %c1_22, %c0_23] : memref<2x18x18x2xbf16, #tpu.memory_space<vmem>>, vector<2x16x16x2xbf16>
    tpu.vector_store %arg9[%c0_21, %c1, %c1_22, %c0_23], %9 {strides = array<i32>} : memref<2x18x18x2xbf16, #tpu.memory_space<vmem>>, vector<2x16x16x2xbf16>,
    %c0_24 = arith.constant 0 : index
    %c0_25 = arith.constant 0 : index
    %c0_26 = arith.constant 0 : index
    %c0_27 = arith.constant 0 : index
    %11 = vector.load %arg9[%c0_24, %c0_25, %c0_26, %c0_27] : memref<2x18x18x2xbf16, #tpu.memory_space<vmem>>, vector<2x16x16x2xbf16>
    %c0_28 = arith.constant 0 : index
    %c0_29 = arith.constant 0 : index
    %c1_30 = arith.constant 1 : index
    %c0_31 = arith.constant 0 : index
    %12 = vector.load %arg9[%c0_28, %c0_29, %c1_30, %c0_31] : memref<2x18x18x2xbf16, #tpu.memory_space<vmem>>, vector<2x16x16x2xbf16>
    %c0_32 = arith.constant 0 : index
    %c0_33 = arith.constant 0 : index
    %c2 = arith.constant 2 : index
    %c0_34 = arith.constant 0 : index
    %13 = vector.load %arg9[%c0_32, %c0_33, %c2, %c0_34] : memref<2x18x18x2xbf16, #tpu.memory_space<vmem>>, vector<2x16x16x2xbf16>
    %c0_35 = arith.constant 0 : index
    %c1_36 = arith.constant 1 : index
    %c0_37 = arith.constant 0 : index
    %c0_38 = arith.constant 0 : index
    %14 = vector.load %arg9[%c0_35, %c1_36, %c0_37, %c0_38] : memref<2x18x18x2xbf16, #tpu.memory_space<vmem>>, vector<2x16x16x2xbf16>
    %c0_39 = arith.constant 0 : index
    %c1_40 = arith.constant 1 : index
    %c1_41 = arith.constant 1 : index
    %c0_42 = arith.constant 0 : index
    %15 = vector.load %arg9[%c0_39, %c1_40, %c1_41, %c0_42] : memref<2x18x18x2xbf16, #tpu.memory_space<vmem>>, vector<2x16x16x2xbf16>
    %c0_43 = arith.constant 0 : index
    %c1_44 = arith.constant 1 : index
    %c2_45 = arith.constant 2 : index
    %c0_46 = arith.constant 0 : index
    %16 = vector.load %arg9[%c0_43, %c1_44, %c2_45, %c0_46] : memref<2x18x18x2xbf16, #tpu.memory_space<vmem>>, vector<2x16x16x2xbf16>
    %c0_47 = arith.constant 0 : index
    %c2_48 = arith.constant 2 : index
    %c0_49 = arith.constant 0 : index
    %c0_50 = arith.constant 0 : index
    %17 = vector.load %arg9[%c0_47, %c2_48, %c0_49, %c0_50] : memref<2x18x18x2xbf16, #tpu.memory_space<vmem>>, vector<2x16x16x2xbf16>
    %c0_51 = arith.constant 0 : index
    %c2_52 = arith.constant 2 : index
    %c1_53 = arith.constant 1 : index
    %c0_54 = arith.constant 0 : index
    %18 = vector.load %arg9[%c0_51, %c2_52, %c1_53, %c0_54] : memref<2x18x18x2xbf16, #tpu.memory_space<vmem>>, vector<2x16x16x2xbf16>
    %c0_55 = arith.constant 0 : index
    %c2_56 = arith.constant 2 : index
    %c2_57 = arith.constant 2 : index
    %c0_58 = arith.constant 0 : index
    %19 = vector.load %arg9[%c0_55, %c2_56, %c2_57, %c0_58] : memref<2x18x18x2xbf16, #tpu.memory_space<vmem>>, vector<2x16x16x2xbf16>
    %20 = tpu.concatenate %11, %12, %13, %14, %15, %16, %17, %18, %19 in 3 : vector<2x16x16x2xbf16>, vector<2x16x16x2xbf16>, vector<2x16x16x2xbf16>, vector<2x16x16x2xbf16>, vector<2x16x16x2xbf16>, vector<2x16x16x2xbf16>, vector<2x16x16x2xbf16>, vector<2x16x16x2xbf16>, vector<2x16x16x2xbf16> -> vector<2x16x16x18xbf16>
    %21 = vector.shape_cast %20 : vector<2x16x16x18xbf16> to vector<512x18xbf16>
    %c0_59 = arith.constant 0 : index
    %c0_60 = arith.constant 0 : index
    %22 = vector.load %arg2[%c0_59, %c0_60] : memref<18x16xbf16, #tpu.memory_space<vmem>>, vector<18x16xbf16>
    %cst_61 = arith.constant dense<0.000000e+00> : vector<512x16xf32>
    %23 = tpu.matmul %21, %22, %cst_61 {dimension_numbers = #tpu.dot_dimension_numbers<[1], [0], [0], [1], [0, 0, 1, 1], [], []>} : vector<512x18xbf16>, vector<18x16xbf16>, vector<512x16xf32> -> vector<512x16xf32>
    %c0_62 = arith.constant 0 : index
    %c0_63 = arith.constant 0 : index
    %24 = vector.load %arg3[%c0_62, %c0_63] : memref<1x16xf32, #tpu.memory_space<vmem>>, vector<1x16xf32>
    %25 = vector.broadcast %24 : vector<1x16xf32> to vector<512x16xf32>
    %26 = arith.addf %23, %25 : vector<512x16xf32>
    %cst_64 = arith.constant 0.000000e+00 : f32
    %27 = vector.broadcast %cst_64 : f32 to vector<512x16xf32>
    %28 = arith.maximumf %26, %27 : vector<512x16xf32>
    %c0_65 = arith.constant 0 : index
    %c0_66 = arith.constant 0 : index
    %29 = vector.load %arg10[%c0_65, %c0_66] : memref<512x16xf32, #tpu.memory_space<vmem>>, vector<512x16xf32>
    tpu.vector_store %arg10[%c0_65, %c0_66], %28 {strides = array<i32>} : memref<512x16xf32, #tpu.memory_space<vmem>>, vector<512x16xf32>,
    %c0_67 = arith.constant 0 : index
    %c0_68 = arith.constant 0 : index
    %30 = tpu.strided_load %arg10[%c0_67, %c0_68] {strides = array<i32: 2, 1>} : memref<512x16xf32, #tpu.memory_space<vmem>>, vector<256x16xf32>
    %c1_69 = arith.constant 1 : index
    %c0_70 = arith.constant 0 : index
    %31 = tpu.strided_load %arg10[%c1_69, %c0_70] {strides = array<i32: 2, 1>} : memref<512x16xf32, #tpu.memory_space<vmem>>, vector<256x16xf32>
    %32 = arith.maximumf %30, %31 : vector<256x16xf32>
    %33 = vector.shape_cast %32 : vector<256x16xf32> to vector<2x8x2x8x16xf32>
    %34 = vector.extract_strided_slice %33 {offsets = [0, 0, 0, 0, 0], sizes = [2, 8, 1, 8, 16], strides = [1, 1, 1, 1, 1]} : vector<2x8x2x8x16xf32> to vector<2x8x1x8x16xf32>
    %35 = vector.shape_cast %34 : vector<2x8x1x8x16xf32> to vector<2x8x8x16xf32>
    %36 = vector.extract_strided_slice %33 {offsets = [0, 0, 1, 0, 0], sizes = [2, 8, 1, 8, 16], strides = [1, 1, 1, 1, 1]} : vector<2x8x2x8x16xf32> to vector<2x8x1x8x16xf32>
    %37 = vector.shape_cast %36 : vector<2x8x1x8x16xf32> to vector<2x8x8x16xf32>
    %38 = arith.maximumf %35, %37 : vector<2x8x8x16xf32>
    %cst_71 = arith.constant 0.000000e+00 : bf16
    %39 = vector.broadcast %cst_71 : bf16 to vector<2x1x10x16xbf16>
    %c0_72 = arith.constant 0 : index
    %c0_73 = arith.constant 0 : index
    %c0_74 = arith.constant 0 : index
    %c0_75 = arith.constant 0 : index
    %40 = vector.load %arg11[%c0_72, %c0_73, %c0_74, %c0_75] : memref<2x10x10x16xbf16, #tpu.memory_space<vmem>>, vector<2x1x10x16xbf16>
    tpu.vector_store %arg11[%c0_72, %c0_73, %c0_74, %c0_75], %39 {strides = array<i32>} : memref<2x10x10x16xbf16, #tpu.memory_space<vmem>>, vector<2x1x10x16xbf16>,
    %cst_76 = arith.constant 0.000000e+00 : bf16
    %41 = vector.broadcast %cst_76 : bf16 to vector<2x1x10x16xbf16>
    %c0_77 = arith.constant 0 : index
    %c9 = arith.constant 9 : index
    %c0_78 = arith.constant 0 : index
    %c0_79 = arith.constant 0 : index
    %42 = vector.load %arg11[%c0_77, %c9, %c0_78, %c0_79] : memref<2x10x10x16xbf16, #tpu.memory_space<vmem>>, vector<2x1x10x16xbf16>
    tpu.vector_store %arg11[%c0_77, %c9, %c0_78, %c0_79], %41 {strides = array<i32>} : memref<2x10x10x16xbf16, #tpu.memory_space<vmem>>, vector<2x1x10x16xbf16>,
    %cst_80 = arith.constant 0.000000e+00 : bf16
    %43 = vector.broadcast %cst_80 : bf16 to vector<2x10x1x16xbf16>
    %c0_81 = arith.constant 0 : index
    %c0_82 = arith.constant 0 : index
    %c0_83 = arith.constant 0 : index
    %c0_84 = arith.constant 0 : index
    %44 = vector.load %arg11[%c0_81, %c0_82, %c0_83, %c0_84] : memref<2x10x10x16xbf16, #tpu.memory_space<vmem>>, vector<2x10x1x16xbf16>
    tpu.vector_store %arg11[%c0_81, %c0_82, %c0_83, %c0_84], %43 {strides = array<i32>} : memref<2x10x10x16xbf16, #tpu.memory_space<vmem>>, vector<2x10x1x16xbf16>,
    %cst_85 = arith.constant 0.000000e+00 : bf16
    %45 = vector.broadcast %cst_85 : bf16 to vector<2x10x1x16xbf16>
    %c0_86 = arith.constant 0 : index
    %c0_87 = arith.constant 0 : index
    %c9_88 = arith.constant 9 : index
    %c0_89 = arith.constant 0 : index
    %46 = vector.load %arg11[%c0_86, %c0_87, %c9_88, %c0_89] : memref<2x10x10x16xbf16, #tpu.memory_space<vmem>>, vector<2x10x1x16xbf16>
    tpu.vector_store %arg11[%c0_86, %c0_87, %c9_88, %c0_89], %45 {strides = array<i32>} : memref<2x10x10x16xbf16, #tpu.memory_space<vmem>>, vector<2x10x1x16xbf16>,
    %47 = arith.truncf %38 : vector<2x8x8x16xf32> to vector<2x8x8x16xbf16>
    %c0_90 = arith.constant 0 : index
    %c1_91 = arith.constant 1 : index
    %c1_92 = arith.constant 1 : index
    %c0_93 = arith.constant 0 : index
    %48 = vector.load %arg11[%c0_90, %c1_91, %c1_92, %c0_93] : memref<2x10x10x16xbf16, #tpu.memory_space<vmem>>, vector<2x8x8x16xbf16>
    tpu.vector_store %arg11[%c0_90, %c1_91, %c1_92, %c0_93], %47 {strides = array<i32>} : memref<2x10x10x16xbf16, #tpu.memory_space<vmem>>, vector<2x8x8x16xbf16>,
    %c0_94 = arith.constant 0 : index
    %c0_95 = arith.constant 0 : index
    %c0_96 = arith.constant 0 : index
    %c0_97 = arith.constant 0 : index
    %49 = vector.load %arg11[%c0_94, %c0_95, %c0_96, %c0_97] : memref<2x10x10x16xbf16, #tpu.memory_space<vmem>>, vector<2x8x8x16xbf16>
    %c0_98 = arith.constant 0 : index
    %c0_99 = arith.constant 0 : index
    %c1_100 = arith.constant 1 : index
    %c0_101 = arith.constant 0 : index
    %50 = vector.load %arg11[%c0_98, %c0_99, %c1_100, %c0_101] : memref<2x10x10x16xbf16, #tpu.memory_space<vmem>>, vector<2x8x8x16xbf16>
    %c0_102 = arith.constant 0 : index
    %c0_103 = arith.constant 0 : index
    %c2_104 = arith.constant 2 : index
    %c0_105 = arith.constant 0 : index
    %51 = vector.load %arg11[%c0_102, %c0_103, %c2_104, %c0_105] : memref<2x10x10x16xbf16, #tpu.memory_space<vmem>>, vector<2x8x8x16xbf16>
    %c0_106 = arith.constant 0 : index
    %c1_107 = arith.constant 1 : index
    %c0_108 = arith.constant 0 : index
    %c0_109 = arith.constant 0 : index
    %52 = vector.load %arg11[%c0_106, %c1_107, %c0_108, %c0_109] : memref<2x10x10x16xbf16, #tpu.memory_space<vmem>>, vector<2x8x8x16xbf16>
    %c0_110 = arith.constant 0 : index
    %c1_111 = arith.constant 1 : index
    %c1_112 = arith.constant 1 : index
    %c0_113 = arith.constant 0 : index
    %53 = vector.load %arg11[%c0_110, %c1_111, %c1_112, %c0_113] : memref<2x10x10x16xbf16, #tpu.memory_space<vmem>>, vector<2x8x8x16xbf16>
    %c0_114 = arith.constant 0 : index
    %c1_115 = arith.constant 1 : index
    %c2_116 = arith.constant 2 : index
    %c0_117 = arith.constant 0 : index
    %54 = vector.load %arg11[%c0_114, %c1_115, %c2_116, %c0_117] : memref<2x10x10x16xbf16, #tpu.memory_space<vmem>>, vector<2x8x8x16xbf16>
    %c0_118 = arith.constant 0 : index
    %c2_119 = arith.constant 2 : index
    %c0_120 = arith.constant 0 : index
    %c0_121 = arith.constant 0 : index
    %55 = vector.load %arg11[%c0_118, %c2_119, %c0_120, %c0_121] : memref<2x10x10x16xbf16, #tpu.memory_space<vmem>>, vector<2x8x8x16xbf16>
    %c0_122 = arith.constant 0 : index
    %c2_123 = arith.constant 2 : index
    %c1_124 = arith.constant 1 : index
    %c0_125 = arith.constant 0 : index
    %56 = vector.load %arg11[%c0_122, %c2_123, %c1_124, %c0_125] : memref<2x10x10x16xbf16, #tpu.memory_space<vmem>>, vector<2x8x8x16xbf16>
    %c0_126 = arith.constant 0 : index
    %c2_127 = arith.constant 2 : index
    %c2_128 = arith.constant 2 : index
    %c0_129 = arith.constant 0 : index
    %57 = vector.load %arg11[%c0_126, %c2_127, %c2_128, %c0_129] : memref<2x10x10x16xbf16, #tpu.memory_space<vmem>>, vector<2x8x8x16xbf16>
    %58 = tpu.concatenate %49, %50, %51, %52, %53, %54, %55, %56, %57 in 3 : vector<2x8x8x16xbf16>, vector<2x8x8x16xbf16>, vector<2x8x8x16xbf16>, vector<2x8x8x16xbf16>, vector<2x8x8x16xbf16>, vector<2x8x8x16xbf16>, vector<2x8x8x16xbf16>, vector<2x8x8x16xbf16>, vector<2x8x8x16xbf16> -> vector<2x8x8x144xbf16>
    %59 = vector.shape_cast %58 : vector<2x8x8x144xbf16> to vector<128x144xbf16>
    %c0_130 = arith.constant 0 : index
    %c0_131 = arith.constant 0 : index
    %60 = vector.load %arg4[%c0_130, %c0_131] : memref<144x4xbf16, #tpu.memory_space<vmem>>, vector<144x4xbf16>
    %cst_132 = arith.constant dense<0.000000e+00> : vector<128x4xf32>
    %61 = tpu.matmul %59, %60, %cst_132 {dimension_numbers = #tpu.dot_dimension_numbers<[1], [0], [0], [1], [0, 0, 1, 1], [], []>} : vector<128x144xbf16>, vector<144x4xbf16>, vector<128x4xf32> -> vector<128x4xf32>
    %c0_133 = arith.constant 0 : index
    %c0_134 = arith.constant 0 : index
    %62 = vector.load %arg5[%c0_133, %c0_134] : memref<1x4xf32, #tpu.memory_space<vmem>>, vector<1x4xf32>
    %63 = vector.broadcast %62 : vector<1x4xf32> to vector<128x4xf32>
    %64 = arith.addf %61, %63 : vector<128x4xf32>
    %cst_135 = arith.constant 0.000000e+00 : f32
    %65 = vector.broadcast %cst_135 : f32 to vector<128x4xf32>
    %66 = arith.maximumf %64, %65 : vector<128x4xf32>
    %c0_136 = arith.constant 0 : index
    %c0_137 = arith.constant 0 : index
    %67 = vector.load %arg12[%c0_136, %c0_137] : memref<128x4xf32, #tpu.memory_space<vmem>>, vector<128x4xf32>
    tpu.vector_store %arg12[%c0_136, %c0_137], %66 {strides = array<i32>} : memref<128x4xf32, #tpu.memory_space<vmem>>, vector<128x4xf32>,
    %c0_138 = arith.constant 0 : index
    %c0_139 = arith.constant 0 : index
    %68 = tpu.strided_load %arg12[%c0_138, %c0_139] {strides = array<i32: 2, 1>} : memref<128x4xf32, #tpu.memory_space<vmem>>, vector<64x4xf32>
    %c1_140 = arith.constant 1 : index
    %c0_141 = arith.constant 0 : index
    %69 = tpu.strided_load %arg12[%c1_140, %c0_141] {strides = array<i32: 2, 1>} : memref<128x4xf32, #tpu.memory_space<vmem>>, vector<64x4xf32>
    %70 = arith.maximumf %68, %69 : vector<64x4xf32>
    %71 = vector.shape_cast %70 : vector<64x4xf32> to vector<2x4x2x4x4xf32>
    %72 = vector.extract_strided_slice %71 {offsets = [0, 0, 0, 0, 0], sizes = [2, 4, 1, 4, 4], strides = [1, 1, 1, 1, 1]} : vector<2x4x2x4x4xf32> to vector<2x4x1x4x4xf32>
    %73 = vector.shape_cast %72 : vector<2x4x1x4x4xf32> to vector<2x4x4x4xf32>
    %74 = vector.extract_strided_slice %71 {offsets = [0, 0, 1, 0, 0], sizes = [2, 4, 1, 4, 4], strides = [1, 1, 1, 1, 1]} : vector<2x4x2x4x4xf32> to vector<2x4x1x4x4xf32>
    %75 = vector.shape_cast %74 : vector<2x4x1x4x4xf32> to vector<2x4x4x4xf32>
    %76 = arith.maximumf %73, %75 : vector<2x4x4x4xf32>
    %77 = vector.extract_strided_slice %76 {offsets = [0, 0, 0, 0], sizes = [2, 1, 1, 4], strides = [1, 1, 1, 1]} : vector<2x4x4x4xf32> to vector<2x1x1x4xf32>
    %78 = vector.shape_cast %77 : vector<2x1x1x4xf32> to vector<2x4xf32>
    %79 = vector.extract_strided_slice %76 {offsets = [0, 0, 1, 0], sizes = [2, 1, 1, 4], strides = [1, 1, 1, 1]} : vector<2x4x4x4xf32> to vector<2x1x1x4xf32>
    %80 = vector.shape_cast %79 : vector<2x1x1x4xf32> to vector<2x4xf32>
    %81 = vector.extract_strided_slice %76 {offsets = [0, 0, 2, 0], sizes = [2, 1, 1, 4], strides = [1, 1, 1, 1]} : vector<2x4x4x4xf32> to vector<2x1x1x4xf32>
    %82 = vector.shape_cast %81 : vector<2x1x1x4xf32> to vector<2x4xf32>
    %83 = vector.extract_strided_slice %76 {offsets = [0, 0, 3, 0], sizes = [2, 1, 1, 4], strides = [1, 1, 1, 1]} : vector<2x4x4x4xf32> to vector<2x1x1x4xf32>
    %84 = vector.shape_cast %83 : vector<2x1x1x4xf32> to vector<2x4xf32>
    %85 = vector.extract_strided_slice %76 {offsets = [0, 1, 0, 0], sizes = [2, 1, 1, 4], strides = [1, 1, 1, 1]} : vector<2x4x4x4xf32> to vector<2x1x1x4xf32>
    %86 = vector.shape_cast %85 : vector<2x1x1x4xf32> to vector<2x4xf32>
    %87 = vector.extract_strided_slice %76 {offsets = [0, 1, 1, 0], sizes = [2, 1, 1, 4], strides = [1, 1, 1, 1]} : vector<2x4x4x4xf32> to vector<2x1x1x4xf32>
    %88 = vector.shape_cast %87 : vector<2x1x1x4xf32> to vector<2x4xf32>
    %89 = vector.extract_strided_slice %76 {offsets = [0, 1, 2, 0], sizes = [2, 1, 1, 4], strides = [1, 1, 1, 1]} : vector<2x4x4x4xf32> to vector<2x1x1x4xf32>
    %90 = vector.shape_cast %89 : vector<2x1x1x4xf32> to vector<2x4xf32>
    %91 = vector.extract_strided_slice %76 {offsets = [0, 1, 3, 0], sizes = [2, 1, 1, 4], strides = [1, 1, 1, 1]} : vector<2x4x4x4xf32> to vector<2x1x1x4xf32>
    %92 = vector.shape_cast %91 : vector<2x1x1x4xf32> to vector<2x4xf32>
    %93 = vector.extract_strided_slice %76 {offsets = [0, 2, 0, 0], sizes = [2, 1, 1, 4], strides = [1, 1, 1, 1]} : vector<2x4x4x4xf32> to vector<2x1x1x4xf32>
    %94 = vector.shape_cast %93 : vector<2x1x1x4xf32> to vector<2x4xf32>
    %95 = vector.extract_strided_slice %76 {offsets = [0, 2, 1, 0], sizes = [2, 1, 1, 4], strides = [1, 1, 1, 1]} : vector<2x4x4x4xf32> to vector<2x1x1x4xf32>
    %96 = vector.shape_cast %95 : vector<2x1x1x4xf32> to vector<2x4xf32>
    %97 = vector.extract_strided_slice %76 {offsets = [0, 2, 2, 0], sizes = [2, 1, 1, 4], strides = [1, 1, 1, 1]} : vector<2x4x4x4xf32> to vector<2x1x1x4xf32>
    %98 = vector.shape_cast %97 : vector<2x1x1x4xf32> to vector<2x4xf32>
    %99 = vector.extract_strided_slice %76 {offsets = [0, 2, 3, 0], sizes = [2, 1, 1, 4], strides = [1, 1, 1, 1]} : vector<2x4x4x4xf32> to vector<2x1x1x4xf32>
    %100 = vector.shape_cast %99 : vector<2x1x1x4xf32> to vector<2x4xf32>
    %101 = vector.extract_strided_slice %76 {offsets = [0, 3, 0, 0], sizes = [2, 1, 1, 4], strides = [1, 1, 1, 1]} : vector<2x4x4x4xf32> to vector<2x1x1x4xf32>
    %102 = vector.shape_cast %101 : vector<2x1x1x4xf32> to vector<2x4xf32>
    %103 = vector.extract_strided_slice %76 {offsets = [0, 3, 1, 0], sizes = [2, 1, 1, 4], strides = [1, 1, 1, 1]} : vector<2x4x4x4xf32> to vector<2x1x1x4xf32>
    %104 = vector.shape_cast %103 : vector<2x1x1x4xf32> to vector<2x4xf32>
    %105 = vector.extract_strided_slice %76 {offsets = [0, 3, 2, 0], sizes = [2, 1, 1, 4], strides = [1, 1, 1, 1]} : vector<2x4x4x4xf32> to vector<2x1x1x4xf32>
    %106 = vector.shape_cast %105 : vector<2x1x1x4xf32> to vector<2x4xf32>
    %107 = vector.extract_strided_slice %76 {offsets = [0, 3, 3, 0], sizes = [2, 1, 1, 4], strides = [1, 1, 1, 1]} : vector<2x4x4x4xf32> to vector<2x1x1x4xf32>
    %108 = vector.shape_cast %107 : vector<2x1x1x4xf32> to vector<2x4xf32>
    %109 = tpu.concatenate %78, %80, %82, %84, %86, %88, %90, %92, %94, %96, %98, %100, %102, %104, %106, %108 in 1 : vector<2x4xf32>, vector<2x4xf32>, vector<2x4xf32>, vector<2x4xf32>, vector<2x4xf32>, vector<2x4xf32>, vector<2x4xf32>, vector<2x4xf32>, vector<2x4xf32>, vector<2x4xf32>, vector<2x4xf32>, vector<2x4xf32>, vector<2x4xf32>, vector<2x4xf32>, vector<2x4xf32>, vector<2x4xf32> -> vector<2x64xf32>
    %c0_142 = arith.constant 0 : index
    %c0_143 = arith.constant 0 : index
    %110 = vector.load %arg6[%c0_142, %c0_143] : memref<64x16xf32, #tpu.memory_space<vmem>>, vector<64x16xf32>
    %cst_144 = arith.constant dense<0.000000e+00> : vector<2x16xf32>
    %111 = tpu.matmul %109, %110, %cst_144 {dimension_numbers = #tpu.dot_dimension_numbers<[1], [0], [0], [1], [0, 0, 1, 1], [], []>} : vector<2x64xf32>, vector<64x16xf32>, vector<2x16xf32> -> vector<2x16xf32>
    %c0_145 = arith.constant 0 : index
    %c0_146 = arith.constant 0 : index
    %112 = vector.load %arg7[%c0_145, %c0_146] : memref<1x16xf32, #tpu.memory_space<vmem>>, vector<1x16xf32>
    %113 = vector.broadcast %112 : vector<1x16xf32> to vector<2x16xf32>
    %114 = arith.addf %111, %113 : vector<2x16xf32>
    %c0_147 = arith.constant 0 : index
    %c0_148 = arith.constant 0 : index
    %c0_149 = arith.constant 0 : index
    %115 = vector.load %arg8[%c0_147, %c0_148, %c0_149] : memref<1x2x16xf32, #tpu.memory_space<vmem>>, vector<1x2x16xf32>
    %116 = vector.shape_cast %115 : vector<1x2x16xf32> to vector<2x16xf32>
    %117 = vector.shape_cast %114 : vector<2x16xf32> to vector<1x2x16xf32>
    tpu.vector_store %arg8[%c0_147, %c0_148, %c0_149], %117 {strides = array<i32>} : memref<1x2x16xf32, #tpu.memory_space<vmem>>, vector<1x2x16xf32>,
    return
  }
  func.func @transform_0(%arg0: i32) -> (i32, i32, i32, i32) {
    %c0_i32 = arith.constant 0 : i32
    %c0_i32_0 = arith.constant 0 : i32
    %c0_i32_1 = arith.constant 0 : i32
    %c0_i32_2 = arith.constant 0 : i32
    return %arg0, %c0_i32, %c0_i32_0, %c0_i32_1 : i32, i32, i32, i32
  }
  func.func @transform_1(%arg0: i32) -> (i32, i32) {
    %c0_i32 = arith.constant 0 : i32
    %c0_i32_0 = arith.constant 0 : i32
    %c0_i32_1 = arith.constant 0 : i32
    return %c0_i32, %c0_i32_0 : i32, i32
  }
  func.func @transform_2(%arg0: i32) -> (i32, i32) {
    %c0_i32 = arith.constant 0 : i32
    %c0_i32_0 = arith.constant 0 : i32
    %c0_i32_1 = arith.constant 0 : i32
    return %c0_i32, %c0_i32_0 : i32, i32
  }
  func.func @transform_3(%arg0: i32) -> (i32, i32) {
    %c0_i32 = arith.constant 0 : i32
    %c0_i32_0 = arith.constant 0 : i32
    %c0_i32_1 = arith.constant 0 : i32
    return %c0_i32, %c0_i32_0 : i32, i32
  }
  func.func @transform_4(%arg0: i32) -> (i32, i32) {
    %c0_i32 = arith.constant 0 : i32
    %c0_i32_0 = arith.constant 0 : i32
    %c0_i32_1 = arith.constant 0 : i32
    return %c0_i32, %c0_i32_0 : i32, i32
  }
  func.func @transform_5(%arg0: i32) -> (i32, i32) {
    %c0_i32 = arith.constant 0 : i32
    %c0_i32_0 = arith.constant 0 : i32
    %c0_i32_1 = arith.constant 0 : i32
    return %c0_i32, %c0_i32_0 : i32, i32
  }
  func.func @transform_6(%arg0: i32) -> (i32, i32) {
    %c0_i32 = arith.constant 0 : i32
    %c0_i32_0 = arith.constant 0 : i32
    %c0_i32_1 = arith.constant 0 : i32
    return %c0_i32, %c0_i32_0 : i32, i32
  }
  func.func @transform_7(%arg0: i32) -> (i32, i32, i32) {
    %c0_i32 = arith.constant 0 : i32
    %c0_i32_0 = arith.constant 0 : i32
    %c0_i32_1 = arith.constant 0 : i32
    return %arg0, %c0_i32, %c0_i32_0 : i32, i32, i32
  }
}

</mosaic_0001>

<llo_original>
// kernel: cnn_encoder1_forward.1
$region0: #{cnn_encoder1_forward.1}
  #allocation0 [shape = 'u32[]', space=smem, size = 0x4, offset = 0x4, fixed_abs, tag = 'smem constant byte address 0x4 - core index']
  #allocation1 [shape = 'u32[144,128]{1,0:T(1,128)}', space=vmem, size = 0x12000, scoped, tag = 'internal scratch']
  #allocation2 [shape = 'bf16[2,18,18,2]{3,2,1,0:T(8,128)(2,1)}', space=vmem, size = 0x36000, scoped, tag = 'scratch operand']
  #allocation3 [shape = 'f32[512,16]{1,0:T(8,128)}', space=vmem, size = 0x40000, scoped, tag = 'scratch operand']
  #allocation4 [shape = 'bf16[2,10,10,16]{3,2,1,0:T(8,128)(2,1)}', space=vmem, size = 0x14000, scoped, tag = 'scratch operand']
  #allocation5 [shape = 'f32[128,4]{1,0:T(8,128)}', space=vmem, size = 0x10000, scoped, tag = 'scratch operand']
  %s0 = inlined_call_operand.vmem [shape: f32[4,16,16,2], index: 0, kind: input, shape index: {}]
  %s1 = inlined_call_operand.vmem [shape: bf16[18,16], index: 1, kind: input, shape index: {}]
  %s2 = inlined_call_operand.vmem [shape: f32[1,16], index: 2, kind: input, shape index: {}]
  %s3 = inlined_call_operand.vmem [shape: bf16[144,4], index: 3, kind: input, shape index: {}]
  %s4 = inlined_call_operand.vmem [shape: f32[1,4], index: 4, kind: input, shape index: {}]
  %s5 = inlined_call_operand.vmem [shape: f32[64,16], index: 5, kind: input, shape index: {}]
  %s6 = inlined_call_operand.vmem [shape: f32[1,16], index: 6, kind: input, shape index: {}]
  %s7 = inlined_call_operand.vmem [shape: f32[2,2,16], index: 7, kind: output, shape index: {}]
  %s8 = sld [smem:[#allocation0]]
  $region61: #{cnn_encoder1_forward.1} parent=0
    _
  %s10 = ssub.s32 1, %s8
  %s11 = scalar_select 0, %s10, %s8
  loop: start=0, step=1, limit=4
  $region2: #{cnn_encoder1_forward.1} parent=0 // loop_pre_header
    _
  $region3: #{cnn_encoder1_forward.1} parent=0 // loop_header
    %s13 = sphi 0, %s17
    %p14 = scmp.ge.s32.totalorder %s13, 4
    %s23 = sphi 0, %s25
    %s26 = sphi 0, %s23
    %s27 = sphi 0, %s26
    %s43 = sphi 0, %s27
    %s47 = sphi 0, %s47
    %s49 = sphi 0, %s47
    %s50 = sphi 0, %s49
    %s64 = sphi 0, %s50
    %s68 = sphi 0, %s68
    %s70 = sphi 0, %s68
    %s71 = sphi 0, %s70
    %s85 = sphi 0, %s71
    %s89 = sphi 0, %s89
    %s91 = sphi 0, %s89
    %s92 = sphi 0, %s91
    %s106 = sphi 0, %s92
    %s110 = sphi 0, %s110
    %s112 = sphi 0, %s110
    %s113 = sphi 0, %s112
    %s127 = sphi 0, %s113
    %s131 = sphi 0, %s131
    %s133 = sphi 0, %s131
    %s134 = sphi 0, %s133
    %s148 = sphi 0, %s134
    %s152 = sphi 0, %s152
    %s154 = sphi 0, %s152
    %s155 = sphi 0, %s154
    %s169 = sphi 0, %s155
    %s175 = sphi 0, %s177
    %s178 = sphi 0, %s175
    %s179 = sphi 0, %s178
    %s195 = sphi 0, %s179
  $region4: #{cnn_encoder1_forward.1} parent=0 // loop_header_branch
    %16 = sbr.rel (%p14) target = $region8
  $region5: #{cnn_encoder1_forward.1} parent=0 // loop_body
    %s18 = ssub.s32 %s13, 1
    %s19 = ssub.s32 %s13, 2
    %s20 = sadd.s32 %s13, 1
    %s21 = ssub.s32 %s13, %s20
    %p22 = scmp.eq.s32.totalorder %s21, 0
    %s24 = sadd.s32 %s23, 1
    %s25 = scalar_select %p22, %s23, %s24
    %p28 = pneg %p22
    %p29 = scmp.eq.s32.totalorder %s13, 1
    %p30 = por %p28, %p29
    %p31 = scmp.ne.s32.totalorder %s23, %s26
    %p32 = scmp.eq.s32.totalorder %s13, 0
    %p33 = por %p31, %p32
    %p34 = scmp.ne.s32.totalorder %s23, %s26
    %p35 = scmp.eq.s32.totalorder %s18, 1
    %p36 = por %p34, %p35
    %p37 = scmp.ne.s32.totalorder %s26, %s27
    %p38 = scmp.eq.s32.totalorder %s18, 0
    %p39 = por %p37, %p38
    %p40 = scmp.ne.s32.totalorder %s26, %s27
    %p41 = scmp.eq.s32.totalorder %s19, 1
    %p42 = por %p40, %p41
    %p44 = scmp.ne.s32.totalorder %s27, %s43
    %p45 = scmp.eq.s32.totalorder %s19, 0
    %p46 = por %p44, %p45
    %s48 = sadd.s32 %s47, 1
    %p51 = scmp.eq.s32.totalorder %s13, 1
    %p52 = scmp.ne.s32.totalorder %s47, %s49
    %p53 = scmp.eq.s32.totalorder %s13, 0
    %p54 = por %p52, %p53
    %p55 = scmp.ne.s32.totalorder %s47, %s49
    %p56 = scmp.eq.s32.totalorder %s18, 1
    %p57 = por %p55, %p56
    %p58 = scmp.ne.s32.totalorder %s49, %s50
    %p59 = scmp.eq.s32.totalorder %s18, 0
    %p60 = por %p58, %p59
    %p61 = scmp.ne.s32.totalorder %s49, %s50
    %p62 = scmp.eq.s32.totalorder %s19, 1
    %p63 = por %p61, %p62
    %p65 = scmp.ne.s32.totalorder %s50, %s64
    %p66 = scmp.eq.s32.totalorder %s19, 0
    %p67 = por %p65, %p66
    %s69 = sadd.s32 %s68, 1
    %p72 = scmp.eq.s32.totalorder %s13, 1
    %p73 = scmp.ne.s32.totalorder %s68, %s70
    %p74 = scmp.eq.s32.totalorder %s13, 0
    %p75 = por %p73, %p74
    %p76 = scmp.ne.s32.totalorder %s68, %s70
    %p77 = scmp.eq.s32.totalorder %s18, 1
    %p78 = por %p76, %p77
    %p79 = scmp.ne.s32.totalorder %s70, %s71
    %p80 = scmp.eq.s32.totalorder %s18, 0
    %p81 = por %p79, %p80
    %p82 = scmp.ne.s32.totalorder %s70, %s71
    %p83 = scmp.eq.s32.totalorder %s19, 1
    %p84 = por %p82, %p83
    %p86 = scmp.ne.s32.totalorder %s71, %s85
    %p87 = scmp.eq.s32.totalorder %s19, 0
    %p88 = por %p86, %p87
    %s90 = sadd.s32 %s89, 1
    %p93 = scmp.eq.s32.totalorder %s13, 1
    %p94 = scmp.ne.s32.totalorder %s89, %s91
    %p95 = scmp.eq.s32.totalorder %s13, 0
    %p96 = por %p94, %p95
    %p97 = scmp.ne.s32.totalorder %s89, %s91
    %p98 = scmp.eq.s32.totalorder %s18, 1
    %p99 = por %p97, %p98
    %p100 = scmp.ne.s32.totalorder %s91, %s92
    %p101 = scmp.eq.s32.totalorder %s18, 0
    %p102 = por %p100, %p101
    %p103 = scmp.ne.s32.totalorder %s91, %s92
    %p104 = scmp.eq.s32.totalorder %s19, 1
    %p105 = por %p103, %p104
    %p107 = scmp.ne.s32.totalorder %s92, %s106
    %p108 = scmp.eq.s32.totalorder %s19, 0
    %p109 = por %p107, %p108
    %s111 = sadd.s32 %s110, 1
    %p114 = scmp.eq.s32.totalorder %s13, 1
    %p115 = scmp.ne.s32.totalorder %s110, %s112
    %p116 = scmp.eq.s32.totalorder %s13, 0
    %p117 = por %p115, %p116
    %p118 = scmp.ne.s32.totalorder %s110, %s112
    %p119 = scmp.eq.s32.totalorder %s18, 1
    %p120 = por %p118, %p119
    %p121 = scmp.ne.s32.totalorder %s112, %s113
    %p122 = scmp.eq.s32.totalorder %s18, 0
    %p123 = por %p121, %p122
    %p124 = scmp.ne.s32.totalorder %s112, %s113
    %p125 = scmp.eq.s32.totalorder %s19, 1
    %p126 = por %p124, %p125
    %p128 = scmp.ne.s32.totalorder %s113, %s127
    %p129 = scmp.eq.s32.totalorder %s19, 0
    %p130 = por %p128, %p129
    %s132 = sadd.s32 %s131, 1
    %p135 = scmp.eq.s32.totalorder %s13, 1
    %p136 = scmp.ne.s32.totalorder %s131, %s133
    %p137 = scmp.eq.s32.totalorder %s13, 0
    %p138 = por %p136, %p137
    %p139 = scmp.ne.s32.totalorder %s131, %s133
    %p140 = scmp.eq.s32.totalorder %s18, 1
    %p141 = por %p139, %p140
    %p142 = scmp.ne.s32.totalorder %s133, %s134
    %p143 = scmp.eq.s32.totalorder %s18, 0
    %p144 = por %p142, %p143
    %p145 = scmp.ne.s32.totalorder %s133, %s134
    %p146 = scmp.eq.s32.totalorder %s19, 1
    %p147 = por %p145, %p146
    %p149 = scmp.ne.s32.totalorder %s134, %s148
    %p150 = scmp.eq.s32.totalorder %s19, 0
    %p151 = por %p149, %p150
    %s153 = sadd.s32 %s152, 1
    %p156 = scmp.eq.s32.totalorder %s13, 1
    %p157 = scmp.ne.s32.totalorder %s152, %s154
    %p158 = scmp.eq.s32.totalorder %s13, 0
    %p159 = por %p157, %p158
    %p160 = scmp.ne.s32.totalorder %s152, %s154
    %p161 = scmp.eq.s32.totalorder %s18, 1
    %p162 = por %p160, %p161
    %p163 = scmp.ne.s32.totalorder %s154, %s155
    %p164 = scmp.eq.s32.totalorder %s18, 0
    %p165 = por %p163, %p164
    %p166 = scmp.ne.s32.totalorder %s154, %s155
    %p167 = scmp.eq.s32.totalorder %s19, 1
    %p168 = por %p166, %p167
    %p170 = scmp.ne.s32.totalorder %s155, %s169
    %p171 = scmp.eq.s32.totalorder %s19, 0
    %p172 = por %p170, %p171
    %s173 = ssub.s32 %s13, %s20
    %p174 = scmp.eq.s32.totalorder %s173, 0
    %s176 = sadd.s32 %s175, 1
    %s177 = scalar_select %p174, %s175, %s176
    %p180 = pneg %p174
    %p181 = scmp.eq.s32.totalorder %s13, 1
    %p182 = por %p180, %p181
    %p183 = scmp.ne.s32.totalorder %s175, %s178
    %p184 = scmp.eq.s32.totalorder %s13, 0
    %p185 = por %p183, %p184
    %p186 = scmp.ne.s32.totalorder %s175, %s178
    %p187 = scmp.eq.s32.totalorder %s18, 1
    %p188 = por %p186, %p187
    %p189 = scmp.ne.s32.totalorder %s178, %s179
    %p190 = scmp.eq.s32.totalorder %s18, 0
    %p191 = por %p189, %p190
    %p192 = scmp.ne.s32.totalorder %s178, %s179
    %p193 = scmp.eq.s32.totalorder %s19, 1
    %p194 = por %p192, %p193
    %p196 = scmp.ne.s32.totalorder %s179, %s195
    %p197 = scmp.eq.s32.totalorder %s19, 0
    %p198 = por %p196, %p197
    %p199 = scmp.le.s32.totalorder 1, %s13
    %p200 = scmp.lt.s32.totalorder %s13, 3
    %p201 = pnand %p199, %p200
    %p202 = pneg %p201
    // Predicated region
    $region9: #{cnn_encoder1_forward.1} parent=5 // pred_check
      _
    $region10: #{cnn_encoder1_forward.1} parent=5 // pred_check_branch
      %204 = sbr.rel (%p201) target = $region12
    $region11: #{cnn_encoder1_forward.1} parent=5 // pred_region
      %s205 = ssub.s32 %s13, 1
      // Predicated region
      $region13: #{cnn_encoder1_forward.1} parent=11 // pred_check
        %p206 = pneg %p60
      $region14: #{cnn_encoder1_forward.1} parent=11 // pred_check_branch
        %208 = sbr.rel (%p206) target = $region16
      $region15: #{cnn_encoder1_forward.1} parent=11 // pred_region
        _
      $region16: #{cnn_encoder1_forward.1} parent=11 // pred_fallthru
        _
      // Predicated region
      $region17: #{cnn_encoder1_forward.1} parent=11 // pred_check
        %p209 = pneg %p81
      $region18: #{cnn_encoder1_forward.1} parent=11 // pred_check_branch
        %211 = sbr.rel (%p209) target = $region20
      $region19: #{cnn_encoder1_forward.1} parent=11 // pred_region
        _
      $region20: #{cnn_encoder1_forward.1} parent=11 // pred_fallthru
        _
      // Predicated region
      $region21: #{cnn_encoder1_forward.1} parent=11 // pred_check
        %p212 = pneg %p102
      $region22: #{cnn_encoder1_forward.1} parent=11 // pred_check_branch
        %214 = sbr.rel (%p212) target = $region24
      $region23: #{cnn_encoder1_forward.1} parent=11 // pred_region
        _
      $region24: #{cnn_encoder1_forward.1} parent=11 // pred_fallthru
        _
      // Predicated region
      $region25: #{cnn_encoder1_forward.1} parent=11 // pred_check
        %p215 = pneg %p123
      $region26: #{cnn_encoder1_forward.1} parent=11 // pred_check_branch
        %217 = sbr.rel (%p215) target = $region28
      $region27: #{cnn_encoder1_forward.1} parent=11 // pred_region
        _
      $region28: #{cnn_encoder1_forward.1} parent=11 // pred_fallthru
        _
      // Predicated region
      $region29: #{cnn_encoder1_forward.1} parent=11 // pred_check
        %p218 = pneg %p144
      $region30: #{cnn_encoder1_forward.1} parent=11 // pred_check_branch
        %220 = sbr.rel (%p218) target = $region32
      $region31: #{cnn_encoder1_forward.1} parent=11 // pred_region
        _
      $region32: #{cnn_encoder1_forward.1} parent=11 // pred_fallthru
        _
      // Predicated region
      $region33: #{cnn_encoder1_forward.1} parent=11 // pred_check
        %p221 = pneg %p165
      $region34: #{cnn_encoder1_forward.1} parent=11 // pred_check_branch
        %223 = sbr.rel (%p221) target = $region36
      $region35: #{cnn_encoder1_forward.1} parent=11 // pred_region
        _
      $region36: #{cnn_encoder1_forward.1} parent=11 // pred_fallthru
        _
    $region12: #{cnn_encoder1_forward.1} parent=5 // pred_fallthru
      _
    %p224 = scmp.lt.s32.totalorder %s13, 2
    // Predicated region
    $region37: #{cnn_encoder1_forward.1} parent=5 // pred_check
      %p225 = pneg %p224
    $region38: #{cnn_encoder1_forward.1} parent=5 // pred_check_branch
      %227 = sbr.rel (%p225) target = $region40
    $region39: #{cnn_encoder1_forward.1} parent=5 // pred_region
      // Predicated region
      $region41: #{cnn_encoder1_forward.1} parent=39 // pred_check
        %p228 = pneg %p33
      $region42: #{cnn_encoder1_forward.1} parent=39 // pred_check_branch
        %230 = sbr.rel (%p228) target = $region44
      $region43: #{cnn_encoder1_forward.1} parent=39 // pred_region
        %s231 = smul.u32 2, %s13
        %p232 = scmp.lt.s32.totalorder %s231, 3
        %s233 = scalar_select %p232, %s231, 3
        %s234 = smul.addr %s233, 32
        %s235 = smul.addr %s234, 8
        %s236 = scalar_lea.vmem %s0, %s235
        %s237 = smul.u32 2, %s13
      $region44: #{cnn_encoder1_forward.1} parent=39 // pred_fallthru
        _
    $region40: #{cnn_encoder1_forward.1} parent=5 // pred_fallthru
      _
    %p238 = scmp.le.s32.totalorder 1, %s13
    %p239 = scmp.lt.s32.totalorder %s13, 3
    %p240 = pnand %p238, %p239
    %p241 = pneg %p240
    // Predicated region
    $region45: #{cnn_encoder1_forward.1} parent=5 // pred_check
      _
    $region46: #{cnn_encoder1_forward.1} parent=5 // pred_check_branch
      %243 = sbr.rel (%p240) target = $region48
    $region47: #{cnn_encoder1_forward.1} parent=5 // pred_region
      %s244 = ssub.s32 %s13, 1
      %s245 = smul.u32 2, %s18
      %p246 = scmp.lt.s32.totalorder %s245, 3
      %s247 = scalar_select %p246, %s245, 3
      %s248 = smul.addr %s247, 32
      %s249 = smul.addr %s248, 8
      %s250 = scalar_lea.vmem %s0, %s249
      %p251 = pneg %p39
      %p252 = pneg %p36
      %p253 = pneg %p60
      %p254 = pneg %p57
      %p255 = pneg %p81
      %p256 = pneg %p78
      %p257 = pneg %p102
      %p258 = pneg %p99
      %p259 = pneg %p123
      %p260 = pneg %p120
      %p261 = pneg %p144
      %p262 = pneg %p141
      %p263 = pneg %p165
      %p264 = pneg %p162
      %p265 = pneg %p191
      %p266 = pneg %p188
      %p267 = scmp.lt.s32.totalorder %s18, 1
      %s268 = scalar_select %p267, %s18, 1
      %s269 = smul.addr %s268, 2
      %s270 = scalar_lea.vmem %s7, %s269
      %s271 = smul.u32 2, %s18
      %p272 = scmp.lt.s32.totalorder %s271, 3
      %s273 = scalar_select %p272, %s271, 3
      %s274 = smul.addr %s273, 32
      %s275 = smul.addr %s274, 8
      %s276 = scalar_lea.vmem %s0, %s275
      %s277 = smul.u32 2, %s18
      %p278 = scmp.lt.s32.totalorder %s18, 1
      %s279 = scalar_select %p278, %s18, 1
      %s280 = smul.addr %s279, 2
      %s281 = scalar_lea.vmem %s7, %s280
      %vm283 = vcmask 11264
      %284 = vst.msk [vmem:[#allocation2] sm:$0xf] %vm283, 0
      %285 = vst.msk [vmem:[#allocation2 + $0x4] sm:$0xf] %vm283, 0
      %vm286 = vcmask 8192
      %287 = vst.msk [vmem:[#allocation2 + $0x8] sm:$0x1] %vm286, 0
      %288 = vst.msk [vmem:[#allocation2 + $0xd8] sm:$0xf] %vm283, 0
      %289 = vst.msk [vmem:[#allocation2 + $0xdc] sm:$0xf] %vm283, 0
      %290 = vst.msk [vmem:[#allocation2 + $0xe0] sm:$0x1] %vm286, 0
      %s291 = scalar_lea.vmem [#allocation2], 204
      %292 = vst.msk [vmem:[%s291] sm:$0xf] %vm283, 0
      %293 = vst.msk [vmem:[%s291 + $0x4] sm:$0xf] %vm283, 0
      %294 = vst.msk [vmem:[%s291 + $0x8] sm:$0x1] %vm286, 0
      %295 = vst.msk [vmem:[%s291 + $0xd8] sm:$0xf] %vm283, 0
      %296 = vst.msk [vmem:[%s291 + $0xdc] sm:$0xf] %vm283, 0
      %297 = vst.msk [vmem:[%s291 + $0xe0] sm:$0x1] %vm286, 0
      %vm298 = vcmask 8192
      %vm299 = vsmask.f32 256
      %vm300 = vmand %vm298, %vm299
      %v301 = vld [vmem:[#allocation2] sm:$0x1]
      %v302 = vsel %vm300, 0, %v301
      %303 = vst [vmem:[#allocation2] sm:$0x1] %v302
      %v304 = vld [vmem:[#allocation2 + $0xc] sm:$0x1]
      %v305 = vsel %vm300, 0, %v304
      %306 = vst [vmem:[#allocation2 + $0xc] sm:$0x1] %v305
      %v307 = vld [vmem:[#allocation2 + $0x18] sm:$0x1]
      %v308 = vsel %vm300, 0, %v307
      %309 = vst [vmem:[#allocation2 + $0x18] sm:$0x1] %v308
      %v310 = vld [vmem:[#allocation2 + $0x24] sm:$0x1]
      %v311 = vsel %vm300, 0, %v310
      %312 = vst [vmem:[#allocation2 + $0x24] sm:$0x1] %v311
      %v313 = vld [vmem:[#allocation2 + $0x30] sm:$0x1]
      %v314 = vsel %vm300, 0, %v313
      %315 = vst [vmem:[#allocation2 + $0x30] sm:$0x1] %v314
      %v316 = vld [vmem:[#allocation2 + $0x3c] sm:$0x1]
      %v317 = vsel %vm300, 0, %v316
      %318 = vst [vmem:[#allocation2 + $0x3c] sm:$0x1] %v317
      %v319 = vld [vmem:[#allocation2 + $0x48] sm:$0x1]
      %v320 = vsel %vm300, 0, %v319
      %321 = vst [vmem:[#allocation2 + $0x48] sm:$0x1] %v320
      %v322 = vld [vmem:[#allocation2 + $0x54] sm:$0x1]
      %v323 = vsel %vm300, 0, %v322
      %324 = vst [vmem:[#allocation2 + $0x54] sm:$0x1] %v323
      %v325 = vld [vmem:[#allocation2 + $0x60] sm:$0x1]
      %v326 = vsel %vm300, 0, %v325
      %327 = vst [vmem:[#allocation2 + $0x60] sm:$0x1] %v326
      %v328 = vld [vmem:[#allocation2 + $0x6c] sm:$0x1]
      %v329 = vsel %vm300, 0, %v328
      %330 = vst [vmem:[#allocation2 + $0x6c] sm:$0x1] %v329
      %v331 = vld [vmem:[#allocation2 + $0x78] sm:$0x1]
      %v332 = vsel %vm300, 0, %v331
      %333 = vst [vmem:[#allocation2 + $0x78] sm:$0x1] %v332
      %v334 = vld [vmem:[#allocation2 + $0x84] sm:$0x1]
      %v335 = vsel %vm300, 0, %v334
      %336 = vst [vmem:[#allocation2 + $0x84] sm:$0x1] %v335
      %v337 = vld [vmem:[#allocation2 + $0x90] sm:$0x1]
      %v338 = vsel %vm300, 0, %v337
      %339 = vst [vmem:[#allocation2 + $0x90] sm:$0x1] %v338
      %v340 = vld [vmem:[#allocation2 + $0x9c] sm:$0x1]
      %v341 = vsel %vm300, 0, %v340
      %342 = vst [vmem:[#allocation2 + $0x9c] sm:$0x1] %v341
      %v343 = vld [vmem:[#allocation2 + $0xa8] sm:$0x1]
      %v344 = vsel %vm300, 0, %v343
      %345 = vst [vmem:[#allocation2 + $0xa8] sm:$0x1] %v344
      %v346 = vld [vmem:[#allocation2 + $0xb4] sm:$0x1]
      %v347 = vsel %vm300, 0, %v346
      %348 = vst [vmem:[#allocation2 + $0xb4] sm:$0x1] %v347
      %v349 = vld [vmem:[#allocation2 + $0xc0] sm:$0x1]
      %v350 = vsel %vm300, 0, %v349
      %351 = vst [vmem:[#allocation2 + $0xc0] sm:$0x1] %v350
      %v352 = vld [vmem:[#allocation2 + $0xcc] sm:$0x1]
      %v353 = vsel %vm300, 0, %v352
      %354 = vst [vmem:[#allocation2 + $0xcc] sm:$0x1] %v353
      %v355 = vld [vmem:[#allocation2 + $0xd8] sm:$0x1]
      %v356 = vsel %vm300, 0, %v355
      %357 = vst [vmem:[#allocation2 + $0xd8] sm:$0x1] %v356
      %v358 = vld [vmem:[#allocation2 + $0xe4] sm:$0x1]
      %v359 = vsel %vm300, 0, %v358
      %360 = vst [vmem:[#allocation2 + $0xe4] sm:$0x1] %v359
      %v361 = vld [vmem:[#allocation2 + $0xf0] sm:$0x1]
      %v362 = vsel %vm300, 0, %v361
      %363 = vst [vmem:[#allocation2 + $0xf0] sm:$0x1] %v362
      %v364 = vld [vmem:[#allocation2 + $0xfc] sm:$0x1]
      %v365 = vsel %vm300, 0, %v364
      %366 = vst [vmem:[#allocation2 + $0xfc] sm:$0x1] %v365
      %v367 = vld [vmem:[#allocation2 + $0x108] sm:$0x1]
      %v368 = vsel %vm300, 0, %v367
      %369 = vst [vmem:[#allocation2 + $0x108] sm:$0x1] %v368
      %v370 = vld [vmem:[#allocation2 + $0x114] sm:$0x1]
      %v371 = vsel %vm300, 0, %v370
      %372 = vst [vmem:[#allocation2 + $0x114] sm:$0x1] %v371
      %v373 = vld [vmem:[#allocation2 + $0x120] sm:$0x1]
      %v374 = vsel %vm300, 0, %v373
      %375 = vst [vmem:[#allocation2 + $0x120] sm:$0x1] %v374
      %v376 = vld [vmem:[#allocation2 + $0x12c] sm:$0x1]
      %v377 = vsel %vm300, 0, %v376
      %378 = vst [vmem:[#allocation2 + $0x12c] sm:$0x1] %v377
      %v379 = vld [vmem:[#allocation2 + $0x138] sm:$0x1]
      %v380 = vsel %vm300, 0, %v379
      %381 = vst [vmem:[#allocation2 + $0x138] sm:$0x1] %v380
      %v382 = vld [vmem:[#allocation2 + $0x144] sm:$0x1]
      %v383 = vsel %vm300, 0, %v382
      %384 = vst [vmem:[#allocation2 + $0x144] sm:$0x1] %v383
      %v385 = vld [vmem:[#allocation2 + $0x150] sm:$0x1]
      %v386 = vsel %vm300, 0, %v385
      %387 = vst [vmem:[#allocation2 + $0x150] sm:$0x1] %v386
      %v388 = vld [vmem:[#allocation2 + $0x15c] sm:$0x1]
      %v389 = vsel %vm300, 0, %v388
      %390 = vst [vmem:[#allocation2 + $0x15c] sm:$0x1] %v389
      %v391 = vld [vmem:[#allocation2 + $0x168] sm:$0x1]
      %v392 = vsel %vm300, 0, %v391
      %393 = vst [vmem:[#allocation2 + $0x168] sm:$0x1] %v392
      %v394 = vld [vmem:[#allocation2 + $0x174] sm:$0x1]
      %v395 = vsel %vm300, 0, %v394
      %396 = vst [vmem:[#allocation2 + $0x174] sm:$0x1] %v395
      %v397 = vld [vmem:[#allocation2 + $0x180] sm:$0x1]
      %v398 = vsel %vm300, 0, %v397
      %399 = vst [vmem:[#allocation2 + $0x180] sm:$0x1] %v398
      %v400 = vld [vmem:[#allocation2 + $0x18c] sm:$0x1]
      %v401 = vsel %vm300, 0, %v400
      %402 = vst [vmem:[#allocation2 + $0x18c] sm:$0x1] %v401
      %v403 = vld [vmem:[#allocation2 + $0x198] sm:$0x1]
      %v404 = vsel %vm300, 0, %v403
      %405 = vst [vmem:[#allocation2 + $0x198] sm:$0x1] %v404
      %v406 = vld [vmem:[#allocation2 + $0x1a4] sm:$0x1]
      %v407 = vsel %vm300, 0, %v406
      %408 = vst [vmem:[#allocation2 + $0x1a4] sm:$0x1] %v407
      %vm409 = vsmask.f32 7938
      %vm410 = vmand %vm298, %vm409
      %v411 = vld [vmem:[#allocation2 + $0x8] sm:$0x1]
      %v412 = vsel %vm410, 0, %v411
      %413 = vst [vmem:[#allocation2 + $0x8] sm:$0x1] %v412
      %v414 = vld [vmem:[#allocation2 + $0x14] sm:$0x1]
      %v415 = vsel %vm410, 0, %v414
      %416 = vst [vmem:[#allocation2 + $0x14] sm:$0x1] %v415
      %v417 = vld [vmem:[#allocation2 + $0x20] sm:$0x1]
      %v418 = vsel %vm410, 0, %v417
      %419 = vst [vmem:[#allocation2 + $0x20] sm:$0x1] %v418
      %v420 = vld [vmem:[#allocation2 + $0x2c] sm:$0x1]
      %v421 = vsel %vm410, 0, %v420
      %422 = vst [vmem:[#allocation2 + $0x2c] sm:$0x1] %v421
      %v423 = vld [vmem:[#allocation2 + $0x38] sm:$0x1]
      %v424 = vsel %vm410, 0, %v423
      %425 = vst [vmem:[#allocation2 + $0x38] sm:$0x1] %v424
      %v426 = vld [vmem:[#allocation2 + $0x44] sm:$0x1]
      %v427 = vsel %vm410, 0, %v426
      %428 = vst [vmem:[#allocation2 + $0x44] sm:$0x1] %v427
      %v429 = vld [vmem:[#allocation2 + $0x50] sm:$0x1]
      %v430 = vsel %vm410, 0, %v429
      %431 = vst [vmem:[#allocation2 + $0x50] sm:$0x1] %v430
      %v432 = vld [vmem:[#allocation2 + $0x5c] sm:$0x1]
      %v433 = vsel %vm410, 0, %v432
      %434 = vst [vmem:[#allocation2 + $0x5c] sm:$0x1] %v433
      %v435 = vld [vmem:[#allocation2 + $0x68] sm:$0x1]
      %v436 = vsel %vm410, 0, %v435
      %437 = vst [vmem:[#allocation2 + $0x68] sm:$0x1] %v436
      %v438 = vld [vmem:[#allocation2 + $0x74] sm:$0x1]
      %v439 = vsel %vm410, 0, %v438
      %440 = vst [vmem:[#allocation2 + $0x74] sm:$0x1] %v439
      %v441 = vld [vmem:[#allocation2 + $0x80] sm:$0x1]
      %v442 = vsel %vm410, 0, %v441
      %443 = vst [vmem:[#allocation2 + $0x80] sm:$0x1] %v442
      %v444 = vld [vmem:[#allocation2 + $0x8c] sm:$0x1]
      %v445 = vsel %vm410, 0, %v444
      %446 = vst [vmem:[#allocation2 + $0x8c] sm:$0x1] %v445
      %v447 = vld [vmem:[#allocation2 + $0x98] sm:$0x1]
      %v448 = vsel %vm410, 0, %v447
      %449 = vst [vmem:[#allocation2 + $0x98] sm:$0x1] %v448
      %v450 = vld [vmem:[#allocation2 + $0xa4] sm:$0x1]
      %v451 = vsel %vm410, 0, %v450
      %452 = vst [vmem:[#allocation2 + $0xa4] sm:$0x1] %v451
      %v453 = vld [vmem:[#allocation2 + $0xb0] sm:$0x1]
      %v454 = vsel %vm410, 0, %v453
      %455 = vst [vmem:[#allocation2 + $0xb0] sm:$0x1] %v454
      %v456 = vld [vmem:[#allocation2 + $0xbc] sm:$0x1]
      %v457 = vsel %vm410, 0, %v456
      %458 = vst [vmem:[#allocation2 + $0xbc] sm:$0x1] %v457
      %v459 = vld [vmem:[#allocation2 + $0xc8] sm:$0x1]
      %v460 = vsel %vm410, 0, %v459
      %461 = vst [vmem:[#allocation2 + $0xc8] sm:$0x1] %v460
      %v462 = vld [vmem:[#allocation2 + $0xd4] sm:$0x1]
      %v463 = vsel %vm410, 0, %v462
      %464 = vst [vmem:[#allocation2 + $0xd4] sm:$0x1] %v463
      %v465 = vld [vmem:[#allocation2 + $0xe0] sm:$0x1]
      %v466 = vsel %vm410, 0, %v465
      %467 = vst [vmem:[#allocation2 + $0xe0] sm:$0x1] %v466
      %v468 = vld [vmem:[#allocation2 + $0xec] sm:$0x1]
      %v469 = vsel %vm410, 0, %v468
      %470 = vst [vmem:[#allocation2 + $0xec] sm:$0x1] %v469
      %v471 = vld [vmem:[#allocation2 + $0xf8] sm:$0x1]
      %v472 = vsel %vm410, 0, %v471
      %473 = vst [vmem:[#allocation2 + $0xf8] sm:$0x1] %v472
      %v474 = vld [vmem:[#allocation2 + $0x104] sm:$0x1]
      %v475 = vsel %vm410, 0, %v474
      %476 = vst [vmem:[#allocation2 + $0x104] sm:$0x1] %v475
      %v477 = vld [vmem:[#allocation2 + $0x110] sm:$0x1]
      %v478 = vsel %vm410, 0, %v477
      %479 = vst [vmem:[#allocation2 + $0x110] sm:$0x1] %v478
      %v480 = vld [vmem:[#allocation2 + $0x11c] sm:$0x1]
      %v481 = vsel %vm410, 0, %v480
      %482 = vst [vmem:[#allocation2 + $0x11c] sm:$0x1] %v481
      %v483 = vld [vmem:[#allocation2 + $0x128] sm:$0x1]
      %v484 = vsel %vm410, 0, %v483
      %485 = vst [vmem:[#allocation2 + $0x128] sm:$0x1] %v484
      %v486 = vld [vmem:[#allocation2 + $0x134] sm:$0x1]
      %v487 = vsel %vm410, 0, %v486
      %488 = vst [vmem:[#allocation2 + $0x134] sm:$0x1] %v487
      %v489 = vld [vmem:[#allocation2 + $0x140] sm:$0x1]
      %v490 = vsel %vm410, 0, %v489
      %491 = vst [vmem:[#allocation2 + $0x140] sm:$0x1] %v490
      %v492 = vld [vmem:[#allocation2 + $0x14c] sm:$0x1]
      %v493 = vsel %vm410, 0, %v492
      %494 = vst [vmem:[#allocation2 + $0x14c] sm:$0x1] %v493
      %v495 = vld [vmem:[#allocation2 + $0x158] sm:$0x1]
      %v496 = vsel %vm410, 0, %v495
      %497 = vst [vmem:[#allocation2 + $0x158] sm:$0x1] %v496
      %v498 = vld [vmem:[#allocation2 + $0x164] sm:$0x1]
      %v499 = vsel %vm410, 0, %v498
      %500 = vst [vmem:[#allocation2 + $0x164] sm:$0x1] %v499
      %v501 = vld [vmem:[#allocation2 + $0x170] sm:$0x1]
      %v502 = vsel %vm410, 0, %v501
      %503 = vst [vmem:[#allocation2 + $0x170] sm:$0x1] %v502
      %v504 = vld [vmem:[#allocation2 + $0x17c] sm:$0x1]
      %v505 = vsel %vm410, 0, %v504
      %506 = vst [vmem:[#allocation2 + $0x17c] sm:$0x1] %v505
      %v507 = vld [vmem:[#allocation2 + $0x188] sm:$0x1]
      %v508 = vsel %vm410, 0, %v507
      %509 = vst [vmem:[#allocation2 + $0x188] sm:$0x1] %v508
      %v510 = vld [vmem:[#allocation2 + $0x194] sm:$0x1]
      %v511 = vsel %vm410, 0, %v510
      %512 = vst [vmem:[#allocation2 + $0x194] sm:$0x1] %v511
      %v513 = vld [vmem:[#allocation2 + $0x1a0] sm:$0x1]
      %v514 = vsel %vm410, 0, %v513
      %515 = vst [vmem:[#allocation2 + $0x1a0] sm:$0x1] %v514
      %v516 = vld [vmem:[#allocation2 + $0x1ac] sm:$0x1]
      %v517 = vsel %vm410, 0, %v516
      %518 = vst [vmem:[#allocation2 + $0x1ac] sm:$0x1] %v517
      %v519 = vld [vmem:[%s276] sm:$0xff]
      %v520 = vld [vmem:[%s276 + $0x8] sm:$0xff]
      %v521 = vld [vmem:[%s276 + $0x10] sm:$0xff]
      %v522 = vld [vmem:[%s276 + $0x18] sm:$0xff]
      %v523 = vld [vmem:[%s276 + $0x20] sm:$0xff]
      %v524 = vld [vmem:[%s276 + $0x28] sm:$0xff]
      %v525 = vld [vmem:[%s276 + $0x30] sm:$0xff]
      %v526 = vld [vmem:[%s276 + $0x38] sm:$0xff]
      %v527 = vld [vmem:[%s276 + $0x40] sm:$0xff]
      %v528 = vld [vmem:[%s276 + $0x48] sm:$0xff]
      %v529 = vld [vmem:[%s276 + $0x50] sm:$0xff]
      %v530 = vld [vmem:[%s276 + $0x58] sm:$0xff]
      %v531 = vld [vmem:[%s276 + $0x60] sm:$0xff]
      %v532 = vld [vmem:[%s276 + $0x68] sm:$0xff]
      %v533 = vld [vmem:[%s276 + $0x70] sm:$0xff]
      %v534 = vld [vmem:[%s276 + $0x78] sm:$0xff]
      %v535 = vld [vmem:[%s276 + $0x80] sm:$0xff]
      %v536 = vld [vmem:[%s276 + $0x88] sm:$0xff]
      %v537 = vld [vmem:[%s276 + $0x90] sm:$0xff]
      %v538 = vld [vmem:[%s276 + $0x98] sm:$0xff]
      %v539 = vld [vmem:[%s276 + $0xa0] sm:$0xff]
      %v540 = vld [vmem:[%s276 + $0xa8] sm:$0xff]
      %v541 = vld [vmem:[%s276 + $0xb0] sm:$0xff]
      %v542 = vld [vmem:[%s276 + $0xb8] sm:$0xff]
      %v543 = vld [vmem:[%s276 + $0xc0] sm:$0xff]
      %v544 = vld [vmem:[%s276 + $0xc8] sm:$0xff]
      %v545 = vld [vmem:[%s276 + $0xd0] sm:$0xff]
      %v546 = vld [vmem:[%s276 + $0xd8] sm:$0xff]
      %v547 = vld [vmem:[%s276 + $0xe0] sm:$0xff]
      %v548 = vld [vmem:[%s276 + $0xe8] sm:$0xff]
      %v549 = vld [vmem:[%s276 + $0xf0] sm:$0xff]
      %v550 = vld [vmem:[%s276 + $0xf8] sm:$0xff]
      %v551 = vld [vmem:[%s276 + $0x100] sm:$0xff]
      %v552 = vld [vmem:[%s276 + $0x108] sm:$0xff]
      %v553 = vld [vmem:[%s276 + $0x110] sm:$0xff]
      %v554 = vld [vmem:[%s276 + $0x118] sm:$0xff]
      %v555 = vld [vmem:[%s276 + $0x120] sm:$0xff]
      %v556 = vld [vmem:[%s276 + $0x128] sm:$0xff]
      %v557 = vld [vmem:[%s276 + $0x130] sm:$0xff]
      %v558 = vld [vmem:[%s276 + $0x138] sm:$0xff]
      %v559 = vld [vmem:[%s276 + $0x140] sm:$0xff]
      %v560 = vld [vmem:[%s276 + $0x148] sm:$0xff]
      %v561 = vld [vmem:[%s276 + $0x150] sm:$0xff]
      %v562 = vld [vmem:[%s276 + $0x158] sm:$0xff]
      %v563 = vld [vmem:[%s276 + $0x160] sm:$0xff]
      %v564 = vld [vmem:[%s276 + $0x168] sm:$0xff]
      %v565 = vld [vmem:[%s276 + $0x170] sm:$0xff]
      %v566 = vld [vmem:[%s276 + $0x178] sm:$0xff]
      %v567 = vld [vmem:[%s276 + $0x180] sm:$0xff]
      %v568 = vld [vmem:[%s276 + $0x188] sm:$0xff]
      %v569 = vld [vmem:[%s276 + $0x190] sm:$0xff]
      %v570 = vld [vmem:[%s276 + $0x198] sm:$0xff]
      %v571 = vld [vmem:[%s276 + $0x1a0] sm:$0xff]
      %v572 = vld [vmem:[%s276 + $0x1a8] sm:$0xff]
      %v573 = vld [vmem:[%s276 + $0x1b0] sm:$0xff]
      %v574 = vld [vmem:[%s276 + $0x1b8] sm:$0xff]
      %v575 = vld [vmem:[%s276 + $0x1c0] sm:$0xff]
      %v576 = vld [vmem:[%s276 + $0x1c8] sm:$0xff]
      %v577 = vld [vmem:[%s276 + $0x1d0] sm:$0xff]
      %v578 = vld [vmem:[%s276 + $0x1d8] sm:$0xff]
      %v579 = vld [vmem:[%s276 + $0x1e0] sm:$0xff]
      %v580 = vld [vmem:[%s276 + $0x1e8] sm:$0xff]
      %v581 = vld [vmem:[%s276 + $0x1f0] sm:$0xff]
      %v582 = vld [vmem:[%s276 + $0x1f8] sm:$0xff]
      %v583 = vpack.c.bf16 %v520, %v519
      %v584 = vpack.c.bf16 %v522, %v521
      %v585 = vpack.c.bf16 %v524, %v523
      %v586 = vpack.c.bf16 %v526, %v525
      %v587 = vpack.c.bf16 %v528, %v527
      %v588 = vpack.c.bf16 %v530, %v529
      %v589 = vpack.c.bf16 %v532, %v531
      %v590 = vpack.c.bf16 %v534, %v533
      %v591 = vpack.c.bf16 %v536, %v535
      %v592 = vpack.c.bf16 %v538, %v537
      %v593 = vpack.c.bf16 %v540, %v539
      %v594 = vpack.c.bf16 %v542, %v541
      %v595 = vpack.c.bf16 %v544, %v543
      %v596 = vpack.c.bf16 %v546, %v545
      %v597 = vpack.c.bf16 %v548, %v547
      %v598 = vpack.c.bf16 %v550, %v549
      %v599 = vpack.c.bf16 %v552, %v551
      %v600 = vpack.c.bf16 %v554, %v553
      %v601 = vpack.c.bf16 %v556, %v555
      %v602 = vpack.c.bf16 %v558, %v557
      %v603 = vpack.c.bf16 %v560, %v559
      %v604 = vpack.c.bf16 %v562, %v561
      %v605 = vpack.c.bf16 %v564, %v563
      %v606 = vpack.c.bf16 %v566, %v565
      %v607 = vpack.c.bf16 %v568, %v567
      %v608 = vpack.c.bf16 %v570, %v569
      %v609 = vpack.c.bf16 %v572, %v571
      %v610 = vpack.c.bf16 %v574, %v573
      %v611 = vpack.c.bf16 %v576, %v575
      %v612 = vpack.c.bf16 %v578, %v577
      %v613 = vpack.c.bf16 %v580, %v579
      %v614 = vpack.c.bf16 %v582, %v581
      %v647 = vunpack.c.l.b16 %v583
      %v648 = vunpack.c.h.b16 %v583
      %v649 = vunpack.c.l.b16 %v584
      %v650 = vunpack.c.h.b16 %v584
      %v651 = vunpack.c.l.b16 %v585
      %v652 = vunpack.c.h.b16 %v585
      %v653 = vunpack.c.l.b16 %v586
      %v654 = vunpack.c.h.b16 %v586
      %v655 = vunpack.c.l.b16 %v587
      %v656 = vunpack.c.h.b16 %v587
      %v657 = vunpack.c.l.b16 %v588
      %v658 = vunpack.c.h.b16 %v588
      %v659 = vunpack.c.l.b16 %v589
      %v660 = vunpack.c.h.b16 %v589
      %v661 = vunpack.c.l.b16 %v590
      %v662 = vunpack.c.h.b16 %v590
      %v663 = vunpack.c.l.b16 %v591
      %v664 = vunpack.c.h.b16 %v591
      %v665 = vunpack.c.l.b16 %v592
      %v666 = vunpack.c.h.b16 %v592
      %v667 = vunpack.c.l.b16 %v593
      %v668 = vunpack.c.h.b16 %v593
      %v669 = vunpack.c.l.b16 %v594
      %v670 = vunpack.c.h.b16 %v594
      %v671 = vunpack.c.l.b16 %v595
      %v672 = vunpack.c.h.b16 %v595
      %v673 = vunpack.c.l.b16 %v596
      %v674 = vunpack.c.h.b16 %v596
      %v675 = vunpack.c.l.b16 %v597
      %v676 = vunpack.c.h.b16 %v597
      %v677 = vunpack.c.l.b16 %v598
      %v678 = vunpack.c.h.b16 %v598
      %v679 = vunpack.c.l.b16 %v599
      %v680 = vunpack.c.h.b16 %v599
      %v681 = vunpack.c.l.b16 %v600
      %v682 = vunpack.c.h.b16 %v600
      %v683 = vunpack.c.l.b16 %v601
      %v684 = vunpack.c.h.b16 %v601
      %v685 = vunpack.c.l.b16 %v602
      %v686 = vunpack.c.h.b16 %v602
      %v687 = vunpack.c.l.b16 %v603
      %v688 = vunpack.c.h.b16 %v603
      %v689 = vunpack.c.l.b16 %v604
      %v690 = vunpack.c.h.b16 %v604
      %v691 = vunpack.c.l.b16 %v605
      %v692 = vunpack.c.h.b16 %v605
      %v693 = vunpack.c.l.b16 %v606
      %v694 = vunpack.c.h.b16 %v606
      %v695 = vunpack.c.l.b16 %v607
      %v696 = vunpack.c.h.b16 %v607
      %v697 = vunpack.c.l.b16 %v608
      %v698 = vunpack.c.h.b16 %v608
      %v699 = vunpack.c.l.b16 %v609
      %v700 = vunpack.c.h.b16 %v609
      %v701 = vunpack.c.l.b16 %v610
      %v702 = vunpack.c.h.b16 %v610
      %v703 = vunpack.c.l.b16 %v611
      %v704 = vunpack.c.h.b16 %v611
      %v705 = vunpack.c.l.b16 %v612
      %v706 = vunpack.c.h.b16 %v612
      %v707 = vunpack.c.l.b16 %v613
      %v708 = vunpack.c.h.b16 %v613
      %v709 = vunpack.c.l.b16 %v614
      %v710 = vunpack.c.h.b16 %v614
      %v711 = vpack.c.b16 %v647, %v647
      %v712 = vpack.c.b16 %v648, %v648
      %v713 = vpack.c.b16 %v649, %v649
      %v714 = vpack.c.b16 %v650, %v650
      %v715 = vpack.c.b16 %v651, %v651
      %v716 = vpack.c.b16 %v652, %v652
      %v717 = vpack.c.b16 %v653, %v653
      %v718 = vpack.c.b16 %v654, %v654
      %v719 = vpack.c.b16 %v655, %v655
      %v720 = vpack.c.b16 %v656, %v656
      %v721 = vpack.c.b16 %v657, %v657
      %v722 = vpack.c.b16 %v658, %v658
      %v723 = vpack.c.b16 %v659, %v659
      %v724 = vpack.c.b16 %v660, %v660
      %v725 = vpack.c.b16 %v661, %v661
      %v726 = vpack.c.b16 %v662, %v662
      %v727 = vpack.c.b16 %v663, %v663
      %v728 = vpack.c.b16 %v664, %v664
      %v729 = vpack.c.b16 %v665, %v665
      %v730 = vpack.c.b16 %v666, %v666
      %v731 = vpack.c.b16 %v667, %v667
      %v732 = vpack.c.b16 %v668, %v668
      %v733 = vpack.c.b16 %v669, %v669
      %v734 = vpack.c.b16 %v670, %v670
      %v735 = vpack.c.b16 %v671, %v671
      %v736 = vpack.c.b16 %v672, %v672
      %v737 = vpack.c.b16 %v673, %v673
      %v738 = vpack.c.b16 %v674, %v674
      %v739 = vpack.c.b16 %v675, %v675
      %v740 = vpack.c.b16 %v676, %v676
      %v741 = vpack.c.b16 %v677, %v677
      %v742 = vpack.c.b16 %v678, %v678
      %v743 = vpack.c.b16 %v679, %v679
      %v744 = vpack.c.b16 %v680, %v680
      %v745 = vpack.c.b16 %v681, %v681
      %v746 = vpack.c.b16 %v682, %v682
      %v747 = vpack.c.b16 %v683, %v683
      %v748 = vpack.c.b16 %v684, %v684
      %v749 = vpack.c.b16 %v685, %v685
      %v750 = vpack.c.b16 %v686, %v686
      %v751 = vpack.c.b16 %v687, %v687
      %v752 = vpack.c.b16 %v688, %v688
      %v753 = vpack.c.b16 %v689, %v689
      %v754 = vpack.c.b16 %v690, %v690
      %v755 = vpack.c.b16 %v691, %v691
      %v756 = vpack.c.b16 %v692, %v692
      %v757 = vpack.c.b16 %v693, %v693
      %v758 = vpack.c.b16 %v694, %v694
      %v759 = vpack.c.b16 %v695, %v695
      %v760 = vpack.c.b16 %v696, %v696
      %v761 = vpack.c.b16 %v697, %v697
      %v762 = vpack.c.b16 %v698, %v698
      %v763 = vpack.c.b16 %v699, %v699
      %v764 = vpack.c.b16 %v700, %v700
      %v765 = vpack.c.b16 %v701, %v701
      %v766 = vpack.c.b16 %v702, %v702
      %v767 = vpack.c.b16 %v703, %v703
      %v768 = vpack.c.b16 %v704, %v704
      %v769 = vpack.c.b16 %v705, %v705
      %v770 = vpack.c.b16 %v706, %v706
      %v771 = vpack.c.b16 %v707, %v707
      %v772 = vpack.c.b16 %v708, %v708
      %v773 = vpack.c.b16 %v709, %v709
      %v774 = vpack.c.b16 %v710, %v710
      %vm775 = vsmask.f32 4368
      %vm776 = vmor %vm299, %vm775
      %v778 = vshrl.u32 %v711, 16
      %v780 = vrot.slane %v778, 7
      %v781 = vshll.u32 %v711, 16
      %v783 = vor.u32 %v780, %v781
      %v784 = vrot.slane %v780, 4
      %v786 = vshrl.u32 %v712, 16
      %v788 = vrot.slane %v786, 7
      %v789 = vshll.u32 %v712, 16
      %v791 = vor.u32 %v788, %v789
      %v792 = vsel %vm776, %v784, %v791
      %v793 = vrot.slane %v788, 4
      %v795 = vshrl.u32 %v713, 16
      %v797 = vrot.slane %v795, 7
      %v798 = vshll.u32 %v713, 16
      %v800 = vor.u32 %v797, %v798
      %v801 = vrot.slane %v797, 4
      %v803 = vshrl.u32 %v714, 16
      %v805 = vrot.slane %v803, 7
      %v806 = vshll.u32 %v714, 16
      %v808 = vor.u32 %v805, %v806
      %v809 = vsel %vm776, %v801, %v808
      %v810 = vrot.slane %v805, 4
      %v812 = vshrl.u32 %v715, 16
      %v814 = vrot.slane %v812, 7
      %v815 = vshll.u32 %v715, 16
      %v817 = vor.u32 %v814, %v815
      %v818 = vrot.slane %v814, 4
      %v820 = vshrl.u32 %v716, 16
      %v822 = vrot.slane %v820, 7
      %v823 = vshll.u32 %v716, 16
      %v825 = vor.u32 %v822, %v823
      %v826 = vsel %vm776, %v818, %v825
      %v827 = vrot.slane %v822, 4
      %v829 = vshrl.u32 %v717, 16
      %v831 = vrot.slane %v829, 7
      %v832 = vshll.u32 %v717, 16
      %v834 = vor.u32 %v831, %v832
      %v835 = vrot.slane %v831, 4
      %v837 = vshrl.u32 %v718, 16
      %v839 = vrot.slane %v837, 7
      %v840 = vshll.u32 %v718, 16
      %v842 = vor.u32 %v839, %v840
      %v843 = vsel %vm776, %v835, %v842
      %v844 = vrot.slane %v839, 4
      %v846 = vshrl.u32 %v719, 16
      %v848 = vrot.slane %v846, 7
      %v849 = vshll.u32 %v719, 16
      %v851 = vor.u32 %v848, %v849
      %v852 = vrot.slane %v848, 4
      %v854 = vshrl.u32 %v720, 16
      %v856 = vrot.slane %v854, 7
      %v857 = vshll.u32 %v720, 16
      %v859 = vor.u32 %v856, %v857
      %v860 = vsel %vm776, %v852, %v859
      %v861 = vrot.slane %v856, 4
      %v863 = vshrl.u32 %v721, 16
      %v865 = vrot.slane %v863, 7
      %v866 = vshll.u32 %v721, 16
      %v868 = vor.u32 %v865, %v866
      %v869 = vrot.slane %v865, 4
      %v871 = vshrl.u32 %v722, 16
      %v873 = vrot.slane %v871, 7
      %v874 = vshll.u32 %v722, 16
      %v876 = vor.u32 %v873, %v874
      %v877 = vsel %vm776, %v869, %v876
      %v878 = vrot.slane %v873, 4
      %v880 = vshrl.u32 %v723, 16
      %v882 = vrot.slane %v880, 7
      %v883 = vshll.u32 %v723, 16
      %v885 = vor.u32 %v882, %v883
      %v886 = vrot.slane %v882, 4
      %v888 = vshrl.u32 %v724, 16
      %v890 = vrot.slane %v888, 7
      %v891 = vshll.u32 %v724, 16
      %v893 = vor.u32 %v890, %v891
      %v894 = vsel %vm776, %v886, %v893
      %v895 = vrot.slane %v890, 4
      %v897 = vshrl.u32 %v725, 16
      %v899 = vrot.slane %v897, 7
      %v900 = vshll.u32 %v725, 16
      %v902 = vor.u32 %v899, %v900
      %v903 = vrot.slane %v899, 4
      %v905 = vshrl.u32 %v726, 16
      %v907 = vrot.slane %v905, 7
      %v908 = vshll.u32 %v726, 16
      %v910 = vor.u32 %v907, %v908
      %v911 = vsel %vm776, %v903, %v910
      %v912 = vrot.slane %v907, 4
      %v914 = vshrl.u32 %v727, 16
      %v916 = vrot.slane %v914, 7
      %v917 = vshll.u32 %v727, 16
      %v919 = vor.u32 %v916, %v917
      %v920 = vrot.slane %v916, 4
      %v922 = vshrl.u32 %v728, 16
      %v924 = vrot.slane %v922, 7
      %v925 = vshll.u32 %v728, 16
      %v927 = vor.u32 %v924, %v925
      %v928 = vsel %vm776, %v920, %v927
      %v929 = vrot.slane %v924, 4
      %v931 = vshrl.u32 %v729, 16
      %v933 = vrot.slane %v931, 7
      %v934 = vshll.u32 %v729, 16
      %v936 = vor.u32 %v933, %v934
      %v937 = vrot.slane %v933, 4
      %v939 = vshrl.u32 %v730, 16
      %v941 = vrot.slane %v939, 7
      %v942 = vshll.u32 %v730, 16
      %v944 = vor.u32 %v941, %v942
      %v945 = vsel %vm776, %v937, %v944
      %v946 = vrot.slane %v941, 4
      %v948 = vshrl.u32 %v731, 16
      %v950 = vrot.slane %v948, 7
      %v951 = vshll.u32 %v731, 16
      %v953 = vor.u32 %v950, %v951
      %v954 = vrot.slane %v950, 4
      %v956 = vshrl.u32 %v732, 16
      %v958 = vrot.slane %v956, 7
      %v959 = vshll.u32 %v732, 16
      %v961 = vor.u32 %v958, %v959
      %v962 = vsel %vm776, %v954, %v961
      %v963 = vrot.slane %v958, 4
      %v965 = vshrl.u32 %v733, 16
      %v967 = vrot.slane %v965, 7
      %v968 = vshll.u32 %v733, 16
      %v970 = vor.u32 %v967, %v968
      %v971 = vrot.slane %v967, 4
      %v973 = vshrl.u32 %v734, 16
      %v975 = vrot.slane %v973, 7
      %v976 = vshll.u32 %v734, 16
      %v978 = vor.u32 %v975, %v976
      %v979 = vsel %vm776, %v971, %v978
      %v980 = vrot.slane %v975, 4
      %v982 = vshrl.u32 %v735, 16
      %v984 = vrot.slane %v982, 7
      %v985 = vshll.u32 %v735, 16
      %v987 = vor.u32 %v984, %v985
      %v988 = vrot.slane %v984, 4
      %v990 = vshrl.u32 %v736, 16
      %v992 = vrot.slane %v990, 7
      %v993 = vshll.u32 %v736, 16
      %v995 = vor.u32 %v992, %v993
      %v996 = vsel %vm776, %v988, %v995
      %v997 = vrot.slane %v992, 4
      %v999 = vshrl.u32 %v737, 16
      %v1001 = vrot.slane %v999, 7
      %v1002 = vshll.u32 %v737, 16
      %v1004 = vor.u32 %v1001, %v1002
      %v1005 = vrot.slane %v1001, 4
      %v1007 = vshrl.u32 %v738, 16
      %v1009 = vrot.slane %v1007, 7
      %v1010 = vshll.u32 %v738, 16
      %v1012 = vor.u32 %v1009, %v1010
      %v1013 = vsel %vm776, %v1005, %v1012
      %v1014 = vrot.slane %v1009, 4
      %v1016 = vshrl.u32 %v739, 16
      %v1018 = vrot.slane %v1016, 7
      %v1019 = vshll.u32 %v739, 16
      %v1021 = vor.u32 %v1018, %v1019
      %v1022 = vrot.slane %v1018, 4
      %v1024 = vshrl.u32 %v740, 16
      %v1026 = vrot.slane %v1024, 7
      %v1027 = vshll.u32 %v740, 16
      %v1029 = vor.u32 %v1026, %v1027
      %v1030 = vsel %vm776, %v1022, %v1029
      %v1031 = vrot.slane %v1026, 4
      %v1033 = vshrl.u32 %v741, 16
      %v1035 = vrot.slane %v1033, 7
      %v1036 = vshll.u32 %v741, 16
      %v1038 = vor.u32 %v1035, %v1036
      %v1039 = vrot.slane %v1035, 4
      %v1041 = vshrl.u32 %v742, 16
      %v1043 = vrot.slane %v1041, 7
      %v1044 = vshll.u32 %v742, 16
      %v1046 = vor.u32 %v1043, %v1044
      %v1047 = vsel %vm776, %v1039, %v1046
      %v1048 = vrot.slane %v1043, 4
      %v1050 = vshrl.u32 %v743, 16
      %v1052 = vrot.slane %v1050, 7
      %v1053 = vshll.u32 %v743, 16
      %v1055 = vor.u32 %v1052, %v1053
      %v1056 = vrot.slane %v1052, 4
      %v1058 = vshrl.u32 %v744, 16
      %v1060 = vrot.slane %v1058, 7
      %v1061 = vshll.u32 %v744, 16
      %v1063 = vor.u32 %v1060, %v1061
      %v1064 = vsel %vm776, %v1056, %v1063
      %v1065 = vrot.slane %v1060, 4
      %v1067 = vshrl.u32 %v745, 16
      %v1069 = vrot.slane %v1067, 7
      %v1070 = vshll.u32 %v745, 16
      %v1072 = vor.u32 %v1069, %v1070
      %v1073 = vrot.slane %v1069, 4
      %v1075 = vshrl.u32 %v746, 16
      %v1077 = vrot.slane %v1075, 7
      %v1078 = vshll.u32 %v746, 16
      %v1080 = vor.u32 %v1077, %v1078
      %v1081 = vsel %vm776, %v1073, %v1080
      %v1082 = vrot.slane %v1077, 4
      %v1084 = vshrl.u32 %v747, 16
      %v1086 = vrot.slane %v1084, 7
      %v1087 = vshll.u32 %v747, 16
      %v1089 = vor.u32 %v1086, %v1087
      %v1090 = vrot.slane %v1086, 4
      %v1092 = vshrl.u32 %v748, 16
      %v1094 = vrot.slane %v1092, 7
      %v1095 = vshll.u32 %v748, 16
      %v1097 = vor.u32 %v1094, %v1095
      %v1098 = vsel %vm776, %v1090, %v1097
      %v1099 = vrot.slane %v1094, 4
      %v1101 = vshrl.u32 %v749, 16
      %v1103 = vrot.slane %v1101, 7
      %v1104 = vshll.u32 %v749, 16
      %v1106 = vor.u32 %v1103, %v1104
      %v1107 = vrot.slane %v1103, 4
      %v1109 = vshrl.u32 %v750, 16
      %v1111 = vrot.slane %v1109, 7
      %v1112 = vshll.u32 %v750, 16
      %v1114 = vor.u32 %v1111, %v1112
      %v1115 = vsel %vm776, %v1107, %v1114
      %v1116 = vrot.slane %v1111, 4
      %v1118 = vshrl.u32 %v751, 16
      %v1120 = vrot.slane %v1118, 7
      %v1121 = vshll.u32 %v751, 16
      %v1123 = vor.u32 %v1120, %v1121
      %v1124 = vrot.slane %v1120, 4
      %v1126 = vshrl.u32 %v752, 16
      %v1128 = vrot.slane %v1126, 7
      %v1129 = vshll.u32 %v752, 16
      %v1131 = vor.u32 %v1128, %v1129
      %v1132 = vsel %vm776, %v1124, %v1131
      %v1133 = vrot.slane %v1128, 4
      %v1135 = vshrl.u32 %v753, 16
      %v1137 = vrot.slane %v1135, 7
      %v1138 = vshll.u32 %v753, 16
      %v1140 = vor.u32 %v1137, %v1138
      %v1141 = vrot.slane %v1137, 4
      %v1143 = vshrl.u32 %v754, 16
      %v1145 = vrot.slane %v1143, 7
      %v1146 = vshll.u32 %v754, 16
      %v1148 = vor.u32 %v1145, %v1146
      %v1149 = vsel %vm776, %v1141, %v1148
      %v1150 = vrot.slane %v1145, 4
      %v1152 = vshrl.u32 %v755, 16
      %v1154 = vrot.slane %v1152, 7
      %v1155 = vshll.u32 %v755, 16
      %v1157 = vor.u32 %v1154, %v1155
      %v1158 = vrot.slane %v1154, 4
      %v1160 = vshrl.u32 %v756, 16
      %v1162 = vrot.slane %v1160, 7
      %v1163 = vshll.u32 %v756, 16
      %v1165 = vor.u32 %v1162, %v1163
      %v1166 = vsel %vm776, %v1158, %v1165
      %v1167 = vrot.slane %v1162, 4
      %v1169 = vshrl.u32 %v757, 16
      %v1171 = vrot.slane %v1169, 7
      %v1172 = vshll.u32 %v757, 16
      %v1174 = vor.u32 %v1171, %v1172
      %v1175 = vrot.slane %v1171, 4
      %v1177 = vshrl.u32 %v758, 16
      %v1179 = vrot.slane %v1177, 7
      %v1180 = vshll.u32 %v758, 16
      %v1182 = vor.u32 %v1179, %v1180
      %v1183 = vsel %vm776, %v1175, %v1182
      %v1184 = vrot.slane %v1179, 4
      %v1186 = vshrl.u32 %v759, 16
      %v1188 = vrot.slane %v1186, 7
      %v1189 = vshll.u32 %v759, 16
      %v1191 = vor.u32 %v1188, %v1189
      %v1192 = vrot.slane %v1188, 4
      %v1194 = vshrl.u32 %v760, 16
      %v1196 = vrot.slane %v1194, 7
      %v1197 = vshll.u32 %v760, 16
      %v1199 = vor.u32 %v1196, %v1197
      %v1200 = vsel %vm776, %v1192, %v1199
      %v1201 = vrot.slane %v1196, 4
      %v1203 = vshrl.u32 %v761, 16
      %v1205 = vrot.slane %v1203, 7
      %v1206 = vshll.u32 %v761, 16
      %v1208 = vor.u32 %v1205, %v1206
      %v1209 = vrot.slane %v1205, 4
      %v1211 = vshrl.u32 %v762, 16
      %v1213 = vrot.slane %v1211, 7
      %v1214 = vshll.u32 %v762, 16
      %v1216 = vor.u32 %v1213, %v1214
      %v1217 = vsel %vm776, %v1209, %v1216
      %v1218 = vrot.slane %v1213, 4
      %v1220 = vshrl.u32 %v763, 16
      %v1222 = vrot.slane %v1220, 7
      %v1223 = vshll.u32 %v763, 16
      %v1225 = vor.u32 %v1222, %v1223
      %v1226 = vrot.slane %v1222, 4
      %v1228 = vshrl.u32 %v764, 16
      %v1230 = vrot.slane %v1228, 7
      %v1231 = vshll.u32 %v764, 16
      %v1233 = vor.u32 %v1230, %v1231
      %v1234 = vsel %vm776, %v1226, %v1233
      %v1235 = vrot.slane %v1230, 4
      %v1237 = vshrl.u32 %v765, 16
      %v1239 = vrot.slane %v1237, 7
      %v1240 = vshll.u32 %v765, 16
      %v1242 = vor.u32 %v1239, %v1240
      %v1243 = vrot.slane %v1239, 4
      %v1245 = vshrl.u32 %v766, 16
      %v1247 = vrot.slane %v1245, 7
      %v1248 = vshll.u32 %v766, 16
      %v1250 = vor.u32 %v1247, %v1248
      %v1251 = vsel %vm776, %v1243, %v1250
      %v1252 = vrot.slane %v1247, 4
      %v1254 = vshrl.u32 %v767, 16
      %v1256 = vrot.slane %v1254, 7
      %v1257 = vshll.u32 %v767, 16
      %v1259 = vor.u32 %v1256, %v1257
      %v1260 = vrot.slane %v1256, 4
      %v1262 = vshrl.u32 %v768, 16
      %v1264 = vrot.slane %v1262, 7
      %v1265 = vshll.u32 %v768, 16
      %v1267 = vor.u32 %v1264, %v1265
      %v1268 = vsel %vm776, %v1260, %v1267
      %v1269 = vrot.slane %v1264, 4
      %v1271 = vshrl.u32 %v769, 16
      %v1273 = vrot.slane %v1271, 7
      %v1274 = vshll.u32 %v769, 16
      %v1276 = vor.u32 %v1273, %v1274
      %v1277 = vrot.slane %v1273, 4
      %v1279 = vshrl.u32 %v770, 16
      %v1281 = vrot.slane %v1279, 7
      %v1282 = vshll.u32 %v770, 16
      %v1284 = vor.u32 %v1281, %v1282
      %v1285 = vsel %vm776, %v1277, %v1284
      %v1286 = vrot.slane %v1281, 4
      %v1288 = vshrl.u32 %v771, 16
      %v1290 = vrot.slane %v1288, 7
      %v1291 = vshll.u32 %v771, 16
      %v1293 = vor.u32 %v1290, %v1291
      %v1294 = vrot.slane %v1290, 4
      %v1296 = vshrl.u32 %v772, 16
      %v1298 = vrot.slane %v1296, 7
      %v1299 = vshll.u32 %v772, 16
      %v1301 = vor.u32 %v1298, %v1299
      %v1302 = vsel %vm776, %v1294, %v1301
      %v1303 = vrot.slane %v1298, 4
      %v1305 = vshrl.u32 %v773, 16
      %v1307 = vrot.slane %v1305, 7
      %v1308 = vshll.u32 %v773, 16
      %v1310 = vor.u32 %v1307, %v1308
      %v1311 = vrot.slane %v1307, 4
      %v1313 = vshrl.u32 %v774, 16
      %v1315 = vrot.slane %v1313, 7
      %v1316 = vshll.u32 %v774, 16
      %v1318 = vor.u32 %v1315, %v1316
      %v1319 = vsel %vm776, %v1311, %v1318
      %v1320 = vrot.slane %v1315, 4
      %s1417 = scalar_lea.vmem [#allocation2], 12
      %vm1418 = vcmask 11264
      %vm1419 = vmand %vm1418, %vm409
      %v1420 = vld [vmem:[%s1417] sm:$0xf]
      %v1421 = vsel %vm1419, %v783, %v1420
      %1422 = vst [vmem:[%s1417] sm:$0xf] %v1421
      %1423 = vst.msk [vmem:[%s1417 + $0x4] sm:$0xf] %vm283, %v792
      %v1424 = vld [vmem:[%s1417 + $0x8] sm:$0x1]
      %v1425 = vsel %vm300, %v793, %v1424
      %1426 = vst [vmem:[%s1417 + $0x8] sm:$0x1] %v1425
      %v1427 = vld [vmem:[%s1417 + $0xc] sm:$0xf]
      %v1428 = vsel %vm1419, %v800, %v1427
      %1429 = vst [vmem:[%s1417 + $0xc] sm:$0xf] %v1428
      %1430 = vst.msk [vmem:[%s1417 + $0x10] sm:$0xf] %vm283, %v809
      %v1431 = vld [vmem:[%s1417 + $0x14] sm:$0x1]
      %v1432 = vsel %vm300, %v810, %v1431
      %1433 = vst [vmem:[%s1417 + $0x14] sm:$0x1] %v1432
      %v1434 = vld [vmem:[%s1417 + $0x18] sm:$0xf]
      %v1435 = vsel %vm1419, %v817, %v1434
      %1436 = vst [vmem:[%s1417 + $0x18] sm:$0xf] %v1435
      %1437 = vst.msk [vmem:[%s1417 + $0x1c] sm:$0xf] %vm283, %v826
      %v1438 = vld [vmem:[%s1417 + $0x20] sm:$0x1]
      %v1439 = vsel %vm300, %v827, %v1438
      %1440 = vst [vmem:[%s1417 + $0x20] sm:$0x1] %v1439
      %v1441 = vld [vmem:[%s1417 + $0x24] sm:$0xf]
      %v1442 = vsel %vm1419, %v834, %v1441
      %1443 = vst [vmem:[%s1417 + $0x24] sm:$0xf] %v1442
      %1444 = vst.msk [vmem:[%s1417 + $0x28] sm:$0xf] %vm283, %v843
      %v1445 = vld [vmem:[%s1417 + $0x2c] sm:$0x1]
      %v1446 = vsel %vm300, %v844, %v1445
      %1447 = vst [vmem:[%s1417 + $0x2c] sm:$0x1] %v1446
      %v1448 = vld [vmem:[%s1417 + $0x30] sm:$0xf]
      %v1449 = vsel %vm1419, %v851, %v1448
      %1450 = vst [vmem:[%s1417 + $0x30] sm:$0xf] %v1449
      %1451 = vst.msk [vmem:[%s1417 + $0x34] sm:$0xf] %vm283, %v860
      %v1452 = vld [vmem:[%s1417 + $0x38] sm:$0x1]
      %v1453 = vsel %vm300, %v861, %v1452
      %1454 = vst [vmem:[%s1417 + $0x38] sm:$0x1] %v1453
      %v1455 = vld [vmem:[%s1417 + $0x3c] sm:$0xf]
      %v1456 = vsel %vm1419, %v868, %v1455
      %1457 = vst [vmem:[%s1417 + $0x3c] sm:$0xf] %v1456
      %1458 = vst.msk [vmem:[%s1417 + $0x40] sm:$0xf] %vm283, %v877
      %v1459 = vld [vmem:[%s1417 + $0x44] sm:$0x1]
      %v1460 = vsel %vm300, %v878, %v1459
      %1461 = vst [vmem:[%s1417 + $0x44] sm:$0x1] %v1460
      %v1462 = vld [vmem:[%s1417 + $0x48] sm:$0xf]
      %v1463 = vsel %vm1419, %v885, %v1462
      %1464 = vst [vmem:[%s1417 + $0x48] sm:$0xf] %v1463
      %1465 = vst.msk [vmem:[%s1417 + $0x4c] sm:$0xf] %vm283, %v894
      %v1466 = vld [vmem:[%s1417 + $0x50] sm:$0x1]
      %v1467 = vsel %vm300, %v895, %v1466
      %1468 = vst [vmem:[%s1417 + $0x50] sm:$0x1] %v1467
      %v1469 = vld [vmem:[%s1417 + $0x54] sm:$0xf]
      %v1470 = vsel %vm1419, %v902, %v1469
      %1471 = vst [vmem:[%s1417 + $0x54] sm:$0xf] %v1470
      %1472 = vst.msk [vmem:[%s1417 + $0x58] sm:$0xf] %vm283, %v911
      %v1473 = vld [vmem:[%s1417 + $0x5c] sm:$0x1]
      %v1474 = vsel %vm300, %v912, %v1473
      %1475 = vst [vmem:[%s1417 + $0x5c] sm:$0x1] %v1474
      %v1476 = vld [vmem:[%s1417 + $0x60] sm:$0xf]
      %v1477 = vsel %vm1419, %v919, %v1476
      %1478 = vst [vmem:[%s1417 + $0x60] sm:$0xf] %v1477
      %1479 = vst.msk [vmem:[%s1417 + $0x64] sm:$0xf] %vm283, %v928
      %v1480 = vld [vmem:[%s1417 + $0x68] sm:$0x1]
      %v1481 = vsel %vm300, %v929, %v1480
      %1482 = vst [vmem:[%s1417 + $0x68] sm:$0x1] %v1481
      %v1483 = vld [vmem:[%s1417 + $0x6c] sm:$0xf]
      %v1484 = vsel %vm1419, %v936, %v1483
      %1485 = vst [vmem:[%s1417 + $0x6c] sm:$0xf] %v1484
      %1486 = vst.msk [vmem:[%s1417 + $0x70] sm:$0xf] %vm283, %v945
      %v1487 = vld [vmem:[%s1417 + $0x74] sm:$0x1]
      %v1488 = vsel %vm300, %v946, %v1487
      %1489 = vst [vmem:[%s1417 + $0x74] sm:$0x1] %v1488
      %v1490 = vld [vmem:[%s1417 + $0x78] sm:$0xf]
      %v1491 = vsel %vm1419, %v953, %v1490
      %1492 = vst [vmem:[%s1417 + $0x78] sm:$0xf] %v1491
      %1493 = vst.msk [vmem:[%s1417 + $0x7c] sm:$0xf] %vm283, %v962
      %v1494 = vld [vmem:[%s1417 + $0x80] sm:$0x1]
      %v1495 = vsel %vm300, %v963, %v1494
      %1496 = vst [vmem:[%s1417 + $0x80] sm:$0x1] %v1495
      %v1497 = vld [vmem:[%s1417 + $0x84] sm:$0xf]
      %v1498 = vsel %vm1419, %v970, %v1497
      %1499 = vst [vmem:[%s1417 + $0x84] sm:$0xf] %v1498
      %1500 = vst.msk [vmem:[%s1417 + $0x88] sm:$0xf] %vm283, %v979
      %v1501 = vld [vmem:[%s1417 + $0x8c] sm:$0x1]
      %v1502 = vsel %vm300, %v980, %v1501
      %1503 = vst [vmem:[%s1417 + $0x8c] sm:$0x1] %v1502
      %v1504 = vld [vmem:[%s1417 + $0x90] sm:$0xf]
      %v1505 = vsel %vm1419, %v987, %v1504
      %1506 = vst [vmem:[%s1417 + $0x90] sm:$0xf] %v1505
      %1507 = vst.msk [vmem:[%s1417 + $0x94] sm:$0xf] %vm283, %v996
      %v1508 = vld [vmem:[%s1417 + $0x98] sm:$0x1]
      %v1509 = vsel %vm300, %v997, %v1508
      %1510 = vst [vmem:[%s1417 + $0x98] sm:$0x1] %v1509
      %v1511 = vld [vmem:[%s1417 + $0x9c] sm:$0xf]
      %v1512 = vsel %vm1419, %v1004, %v1511
      %1513 = vst [vmem:[%s1417 + $0x9c] sm:$0xf] %v1512
      %1514 = vst.msk [vmem:[%s1417 + $0xa0] sm:$0xf] %vm283, %v1013
      %v1515 = vld [vmem:[%s1417 + $0xa4] sm:$0x1]
      %v1516 = vsel %vm300, %v1014, %v1515
      %1517 = vst [vmem:[%s1417 + $0xa4] sm:$0x1] %v1516
      %v1518 = vld [vmem:[%s1417 + $0xa8] sm:$0xf]
      %v1519 = vsel %vm1419, %v1021, %v1518
      %1520 = vst [vmem:[%s1417 + $0xa8] sm:$0xf] %v1519
      %1521 = vst.msk [vmem:[%s1417 + $0xac] sm:$0xf] %vm283, %v1030
      %v1522 = vld [vmem:[%s1417 + $0xb0] sm:$0x1]
      %v1523 = vsel %vm300, %v1031, %v1522
      %1524 = vst [vmem:[%s1417 + $0xb0] sm:$0x1] %v1523
      %v1525 = vld [vmem:[%s1417 + $0xb4] sm:$0xf]
      %v1526 = vsel %vm1419, %v1038, %v1525
      %1527 = vst [vmem:[%s1417 + $0xb4] sm:$0xf] %v1526
      %1528 = vst.msk [vmem:[%s1417 + $0xb8] sm:$0xf] %vm283, %v1047
      %v1529 = vld [vmem:[%s1417 + $0xbc] sm:$0x1]
      %v1530 = vsel %vm300, %v1048, %v1529
      %1531 = vst [vmem:[%s1417 + $0xbc] sm:$0x1] %v1530
      %v1532 = vld [vmem:[%s1417 + $0xd8] sm:$0xf]
      %v1533 = vsel %vm1419, %v1055, %v1532
      %1534 = vst [vmem:[%s1417 + $0xd8] sm:$0xf] %v1533
      %1535 = vst.msk [vmem:[%s1417 + $0xdc] sm:$0xf] %vm283, %v1064
      %v1536 = vld [vmem:[%s1417 + $0xe0] sm:$0x1]
      %v1537 = vsel %vm300, %v1065, %v1536
      %1538 = vst [vmem:[%s1417 + $0xe0] sm:$0x1] %v1537
      %v1539 = vld [vmem:[%s1417 + $0xe4] sm:$0xf]
      %v1540 = vsel %vm1419, %v1072, %v1539
      %1541 = vst [vmem:[%s1417 + $0xe4] sm:$0xf] %v1540
      %1542 = vst.msk [vmem:[%s1417 + $0xe8] sm:$0xf] %vm283, %v1081
      %v1543 = vld [vmem:[%s1417 + $0xec] sm:$0x1]
      %v1544 = vsel %vm300, %v1082, %v1543
      %1545 = vst [vmem:[%s1417 + $0xec] sm:$0x1] %v1544
      %v1546 = vld [vmem:[%s1417 + $0xf0] sm:$0xf]
      %v1547 = vsel %vm1419, %v1089, %v1546
      %1548 = vst [vmem:[%s1417 + $0xf0] sm:$0xf] %v1547
      %1549 = vst.msk [vmem:[%s1417 + $0xf4] sm:$0xf] %vm283, %v1098
      %v1550 = vld [vmem:[%s1417 + $0xf8] sm:$0x1]
      %v1551 = vsel %vm300, %v1099, %v1550
      %1552 = vst [vmem:[%s1417 + $0xf8] sm:$0x1] %v1551
      %v1553 = vld [vmem:[%s1417 + $0xfc] sm:$0xf]
      %v1554 = vsel %vm1419, %v1106, %v1553
      %1555 = vst [vmem:[%s1417 + $0xfc] sm:$0xf] %v1554
      %1556 = vst.msk [vmem:[%s1417 + $0x100] sm:$0xf] %vm283, %v1115
      %v1557 = vld [vmem:[%s1417 + $0x104] sm:$0x1]
      %v1558 = vsel %vm300, %v1116, %v1557
      %1559 = vst [vmem:[%s1417 + $0x104] sm:$0x1] %v1558
      %v1560 = vld [vmem:[%s1417 + $0x108] sm:$0xf]
      %v1561 = vsel %vm1419, %v1123, %v1560
      %1562 = vst [vmem:[%s1417 + $0x108] sm:$0xf] %v1561
      %1563 = vst.msk [vmem:[%s1417 + $0x10c] sm:$0xf] %vm283, %v1132
      %v1564 = vld [vmem:[%s1417 + $0x110] sm:$0x1]
      %v1565 = vsel %vm300, %v1133, %v1564
      %1566 = vst [vmem:[%s1417 + $0x110] sm:$0x1] %v1565
      %v1567 = vld [vmem:[%s1417 + $0x114] sm:$0xf]
      %v1568 = vsel %vm1419, %v1140, %v1567
      %1569 = vst [vmem:[%s1417 + $0x114] sm:$0xf] %v1568
      %1570 = vst.msk [vmem:[%s1417 + $0x118] sm:$0xf] %vm283, %v1149
      %v1571 = vld [vmem:[%s1417 + $0x11c] sm:$0x1]
      %v1572 = vsel %vm300, %v1150, %v1571
      %1573 = vst [vmem:[%s1417 + $0x11c] sm:$0x1] %v1572
      %v1574 = vld [vmem:[%s1417 + $0x120] sm:$0xf]
      %v1575 = vsel %vm1419, %v1157, %v1574
      %1576 = vst [vmem:[%s1417 + $0x120] sm:$0xf] %v1575
      %1577 = vst.msk [vmem:[%s1417 + $0x124] sm:$0xf] %vm283, %v1166
      %v1578 = vld [vmem:[%s1417 + $0x128] sm:$0x1]
      %v1579 = vsel %vm300, %v1167, %v1578
      %1580 = vst [vmem:[%s1417 + $0x128] sm:$0x1] %v1579
      %v1581 = vld [vmem:[%s1417 + $0x12c] sm:$0xf]
      %v1582 = vsel %vm1419, %v1174, %v1581
      %1583 = vst [vmem:[%s1417 + $0x12c] sm:$0xf] %v1582
      %1584 = vst.msk [vmem:[%s1417 + $0x130] sm:$0xf] %vm283, %v1183
      %v1585 = vld [vmem:[%s1417 + $0x134] sm:$0x1]
      %v1586 = vsel %vm300, %v1184, %v1585
      %1587 = vst [vmem:[%s1417 + $0x134] sm:$0x1] %v1586
      %v1588 = vld [vmem:[%s1417 + $0x138] sm:$0xf]
      %v1589 = vsel %vm1419, %v1191, %v1588
      %1590 = vst [vmem:[%s1417 + $0x138] sm:$0xf] %v1589
      %1591 = vst.msk [vmem:[%s1417 + $0x13c] sm:$0xf] %vm283, %v1200
      %v1592 = vld [vmem:[%s1417 + $0x140] sm:$0x1]
      %v1593 = vsel %vm300, %v1201, %v1592
      %1594 = vst [vmem:[%s1417 + $0x140] sm:$0x1] %v1593
      %v1595 = vld [vmem:[%s1417 + $0x144] sm:$0xf]
      %v1596 = vsel %vm1419, %v1208, %v1595
      %1597 = vst [vmem:[%s1417 + $0x144] sm:$0xf] %v1596
      %1598 = vst.msk [vmem:[%s1417 + $0x148] sm:$0xf] %vm283, %v1217
      %v1599 = vld [vmem:[%s1417 + $0x14c] sm:$0x1]
      %v1600 = vsel %vm300, %v1218, %v1599
      %1601 = vst [vmem:[%s1417 + $0x14c] sm:$0x1] %v1600
      %v1602 = vld [vmem:[%s1417 + $0x150] sm:$0xf]
      %v1603 = vsel %vm1419, %v1225, %v1602
      %1604 = vst [vmem:[%s1417 + $0x150] sm:$0xf] %v1603
      %1605 = vst.msk [vmem:[%s1417 + $0x154] sm:$0xf] %vm283, %v1234
      %v1606 = vld [vmem:[%s1417 + $0x158] sm:$0x1]
      %v1607 = vsel %vm300, %v1235, %v1606
      %1608 = vst [vmem:[%s1417 + $0x158] sm:$0x1] %v1607
      %v1609 = vld [vmem:[%s1417 + $0x15c] sm:$0xf]
      %v1610 = vsel %vm1419, %v1242, %v1609
      %1611 = vst [vmem:[%s1417 + $0x15c] sm:$0xf] %v1610
      %1612 = vst.msk [vmem:[%s1417 + $0x160] sm:$0xf] %vm283, %v1251
      %v1613 = vld [vmem:[%s1417 + $0x164] sm:$0x1]
      %v1614 = vsel %vm300, %v1252, %v1613
      %1615 = vst [vmem:[%s1417 + $0x164] sm:$0x1] %v1614
      %v1616 = vld [vmem:[%s1417 + $0x168] sm:$0xf]
      %v1617 = vsel %vm1419, %v1259, %v1616
      %1618 = vst [vmem:[%s1417 + $0x168] sm:$0xf] %v1617
      %1619 = vst.msk [vmem:[%s1417 + $0x16c] sm:$0xf] %vm283, %v1268
      %v1620 = vld [vmem:[%s1417 + $0x170] sm:$0x1]
      %v1621 = vsel %vm300, %v1269, %v1620
      %1622 = vst [vmem:[%s1417 + $0x170] sm:$0x1] %v1621
      %v1623 = vld [vmem:[%s1417 + $0x174] sm:$0xf]
      %v1624 = vsel %vm1419, %v1276, %v1623
      %1625 = vst [vmem:[%s1417 + $0x174] sm:$0xf] %v1624
      %1626 = vst.msk [vmem:[%s1417 + $0x178] sm:$0xf] %vm283, %v1285
      %v1627 = vld [vmem:[%s1417 + $0x17c] sm:$0x1]
      %v1628 = vsel %vm300, %v1286, %v1627
      %1629 = vst [vmem:[%s1417 + $0x17c] sm:$0x1] %v1628
      %v1630 = vld [vmem:[%s1417 + $0x180] sm:$0xf]
      %v1631 = vsel %vm1419, %v1293, %v1630
      %1632 = vst [vmem:[%s1417 + $0x180] sm:$0xf] %v1631
      %1633 = vst.msk [vmem:[%s1417 + $0x184] sm:$0xf] %vm283, %v1302
      %v1634 = vld [vmem:[%s1417 + $0x188] sm:$0x1]
      %v1635 = vsel %vm300, %v1303, %v1634
      %1636 = vst [vmem:[%s1417 + $0x188] sm:$0x1] %v1635
      %v1637 = vld [vmem:[%s1417 + $0x18c] sm:$0xf]
      %v1638 = vsel %vm1419, %v1310, %v1637
      %1639 = vst [vmem:[%s1417 + $0x18c] sm:$0xf] %v1638
      %1640 = vst.msk [vmem:[%s1417 + $0x190] sm:$0xf] %vm283, %v1319
      %v1641 = vld [vmem:[%s1417 + $0x194] sm:$0x1]
      %v1642 = vsel %vm300, %v1320, %v1641
      %1643 = vst [vmem:[%s1417 + $0x194] sm:$0x1] %v1642
      %v1644 = vld [vmem:[#allocation2] sm:$0xf]
      %v1645 = vld [vmem:[#allocation2 + $0x4] sm:$0xf]
      %v1646 = vld [vmem:[#allocation2 + $0xc] sm:$0xf]
      %v1647 = vld [vmem:[#allocation2 + $0x10] sm:$0xf]
      %v1648 = vld [vmem:[#allocation2 + $0x18] sm:$0xf]
      %v1649 = vld [vmem:[#allocation2 + $0x1c] sm:$0xf]
      %v1650 = vld [vmem:[#allocation2 + $0x24] sm:$0xf]
      %v1651 = vld [vmem:[#allocation2 + $0x28] sm:$0xf]
      %v1652 = vld [vmem:[#allocation2 + $0x30] sm:$0xf]
      %v1653 = vld [vmem:[#allocation2 + $0x34] sm:$0xf]
      %v1654 = vld [vmem:[#allocation2 + $0x3c] sm:$0xf]
      %v1655 = vld [vmem:[#allocation2 + $0x40] sm:$0xf]
      %v1656 = vld [vmem:[#allocation2 + $0x48] sm:$0xf]
      %v1657 = vld [vmem:[#allocation2 + $0x4c] sm:$0xf]
      %v1658 = vld [vmem:[#allocation2 + $0x54] sm:$0xf]
      %v1659 = vld [vmem:[#allocation2 + $0x58] sm:$0xf]
      %v1660 = vld [vmem:[#allocation2 + $0x60] sm:$0xf]
      %v1661 = vld [vmem:[#allocation2 + $0x64] sm:$0xf]
      %v1662 = vld [vmem:[#allocation2 + $0x6c] sm:$0xf]
      %v1663 = vld [vmem:[#allocation2 + $0x70] sm:$0xf]
      %v1664 = vld [vmem:[#allocation2 + $0x78] sm:$0xf]
      %v1665 = vld [vmem:[#allocation2 + $0x7c] sm:$0xf]
      %v1666 = vld [vmem:[#allocation2 + $0x84] sm:$0xf]
      %v1667 = vld [vmem:[#allocation2 + $0x88] sm:$0xf]
      %v1668 = vld [vmem:[#allocation2 + $0x90] sm:$0xf]
      %v1669 = vld [vmem:[#allocation2 + $0x94] sm:$0xf]
      %v1670 = vld [vmem:[#allocation2 + $0x9c] sm:$0xf]
      %v1671 = vld [vmem:[#allocation2 + $0xa0] sm:$0xf]
      %v1672 = vld [vmem:[#allocation2 + $0xa8] sm:$0xf]
      %v1673 = vld [vmem:[#allocation2 + $0xac] sm:$0xf]
      %v1674 = vld [vmem:[#allocation2 + $0xb4] sm:$0xf]
      %v1675 = vld [vmem:[#allocation2 + $0xb8] sm:$0xf]
      %v1676 = vld [vmem:[#allocation2 + $0xd8] sm:$0xf]
      %v1677 = vld [vmem:[#allocation2 + $0xdc] sm:$0xf]
      %v1678 = vld [vmem:[#allocation2 + $0xe4] sm:$0xf]
      %v1679 = vld [vmem:[#allocation2 + $0xe8] sm:$0xf]
      %v1680 = vld [vmem:[#allocation2 + $0xf0] sm:$0xf]
      %v1681 = vld [vmem:[#allocation2 + $0xf4] sm:$0xf]
      %v1682 = vld [vmem:[#allocation2 + $0xfc] sm:$0xf]
      %v1683 = vld [vmem:[#allocation2 + $0x100] sm:$0xf]
      %v1684 = vld [vmem:[#allocation2 + $0x108] sm:$0xf]
      %v1685 = vld [vmem:[#allocation2 + $0x10c] sm:$0xf]
      %v1686 = vld [vmem:[#allocation2 + $0x114] sm:$0xf]
      %v1687 = vld [vmem:[#allocation2 + $0x118] sm:$0xf]
      %v1688 = vld [vmem:[#allocation2 + $0x120] sm:$0xf]
      %v1689 = vld [vmem:[#allocation2 + $0x124] sm:$0xf]
      %v1690 = vld [vmem:[#allocation2 + $0x12c] sm:$0xf]
      %v1691 = vld [vmem:[#allocation2 + $0x130] sm:$0xf]
      %v1692 = vld [vmem:[#allocation2 + $0x138] sm:$0xf]
      %v1693 = vld [vmem:[#allocation2 + $0x13c] sm:$0xf]
      %v1694 = vld [vmem:[#allocation2 + $0x144] sm:$0xf]
      %v1695 = vld [vmem:[#allocation2 + $0x148] sm:$0xf]
      %v1696 = vld [vmem:[#allocation2 + $0x150] sm:$0xf]
      %v1697 = vld [vmem:[#allocation2 + $0x154] sm:$0xf]
      %v1698 = vld [vmem:[#allocation2 + $0x15c] sm:$0xf]
      %v1699 = vld [vmem:[#allocation2 + $0x160] sm:$0xf]
      %v1700 = vld [vmem:[#allocation2 + $0x168] sm:$0xf]
      %v1701 = vld [vmem:[#allocation2 + $0x16c] sm:$0xf]
      %v1702 = vld [vmem:[#allocation2 + $0x174] sm:$0xf]
      %v1703 = vld [vmem:[#allocation2 + $0x178] sm:$0xf]
      %v1704 = vld [vmem:[#allocation2 + $0x180] sm:$0xf]
      %v1705 = vld [vmem:[#allocation2 + $0x184] sm:$0xf]
      %v1706 = vld [vmem:[#allocation2 + $0x18c] sm:$0xf]
      %v1707 = vld [vmem:[#allocation2 + $0x190] sm:$0xf]
      %v1708 = vld [vmem:[#allocation2 + $0x8] sm:$0x1]
      %v1709 = vld [vmem:[#allocation2 + $0x14] sm:$0x1]
      %v1710 = vld [vmem:[#allocation2 + $0x20] sm:$0x1]
      %v1711 = vld [vmem:[#allocation2 + $0x2c] sm:$0x1]
      %v1712 = vld [vmem:[#allocation2 + $0x38] sm:$0x1]
      %v1713 = vld [vmem:[#allocation2 + $0x44] sm:$0x1]
      %v1714 = vld [vmem:[#allocation2 + $0x50] sm:$0x1]
      %v1715 = vld [vmem:[#allocation2 + $0x5c] sm:$0x1]
      %v1716 = vld [vmem:[#allocation2 + $0x68] sm:$0x1]
      %v1717 = vld [vmem:[#allocation2 + $0x74] sm:$0x1]
      %v1718 = vld [vmem:[#allocation2 + $0x80] sm:$0x1]
      %v1719 = vld [vmem:[#allocation2 + $0x8c] sm:$0x1]
      %v1720 = vld [vmem:[#allocation2 + $0x98] sm:$0x1]
      %v1721 = vld [vmem:[#allocation2 + $0xa4] sm:$0x1]
      %v1722 = vld [vmem:[#allocation2 + $0xb0] sm:$0x1]
      %v1723 = vld [vmem:[#allocation2 + $0xbc] sm:$0x1]
      %v1724 = vld [vmem:[#allocation2 + $0xe0] sm:$0x1]
      %v1725 = vld [vmem:[#allocation2 + $0xec] sm:$0x1]
      %v1726 = vld [vmem:[#allocation2 + $0xf8] sm:$0x1]
      %v1727 = vld [vmem:[#allocation2 + $0x104] sm:$0x1]
      %v1728 = vld [vmem:[#allocation2 + $0x110] sm:$0x1]
      %v1729 = vld [vmem:[#allocation2 + $0x11c] sm:$0x1]
      %v1730 = vld [vmem:[#allocation2 + $0x128] sm:$0x1]
      %v1731 = vld [vmem:[#allocation2 + $0x134] sm:$0x1]
      %v1732 = vld [vmem:[#allocation2 + $0x140] sm:$0x1]
      %v1733 = vld [vmem:[#allocation2 + $0x14c] sm:$0x1]
      %v1734 = vld [vmem:[#allocation2 + $0x158] sm:$0x1]
      %v1735 = vld [vmem:[#allocation2 + $0x164] sm:$0x1]
      %v1736 = vld [vmem:[#allocation2 + $0x170] sm:$0x1]
      %v1737 = vld [vmem:[#allocation2 + $0x17c] sm:$0x1]
      %v1738 = vld [vmem:[#allocation2 + $0x188] sm:$0x1]
      %v1739 = vld [vmem:[#allocation2 + $0x194] sm:$0x1]
      %v1740 = vld [vmem:[#allocation2] sm:$0xe]
      %v1741 = vld [vmem:[#allocation2 + $0xc] sm:$0xe]
      %v1742 = vld [vmem:[#allocation2 + $0x18] sm:$0xe]
      %v1743 = vld [vmem:[#allocation2 + $0x24] sm:$0xe]
      %v1744 = vld [vmem:[#allocation2 + $0x30] sm:$0xe]
      %v1745 = vld [vmem:[#allocation2 + $0x3c] sm:$0xe]
      %v1746 = vld [vmem:[#allocation2 + $0x48] sm:$0xe]
      %v1747 = vld [vmem:[#allocation2 + $0x54] sm:$0xe]
      %v1748 = vld [vmem:[#allocation2 + $0x60] sm:$0xe]
      %v1749 = vld [vmem:[#allocation2 + $0x6c] sm:$0xe]
      %v1750 = vld [vmem:[#allocation2 + $0x78] sm:$0xe]
      %v1751 = vld [vmem:[#allocation2 + $0x84] sm:$0xe]
      %v1752 = vld [vmem:[#allocation2 + $0x90] sm:$0xe]
      %v1753 = vld [vmem:[#allocation2 + $0x9c] sm:$0xe]
      %v1754 = vld [vmem:[#allocation2 + $0xa8] sm:$0xe]
      %v1755 = vld [vmem:[#allocation2 + $0xb4] sm:$0xe]
      %v1756 = vld [vmem:[#allocation2 + $0xd8] sm:$0xe]
      %v1757 = vld [vmem:[#allocation2 + $0xe4] sm:$0xe]
      %v1758 = vld [vmem:[#allocation2 + $0xf0] sm:$0xe]
      %v1759 = vld [vmem:[#allocation2 + $0xfc] sm:$0xe]
      %v1760 = vld [vmem:[#allocation2 + $0x108] sm:$0xe]
      %v1761 = vld [vmem:[#allocation2 + $0x114] sm:$0xe]
      %v1762 = vld [vmem:[#allocation2 + $0x120] sm:$0xe]
      %v1763 = vld [vmem:[#allocation2 + $0x12c] sm:$0xe]
      %v1764 = vld [vmem:[#allocation2 + $0x138] sm:$0xe]
      %v1765 = vld [vmem:[#allocation2 + $0x144] sm:$0xe]
      %v1766 = vld [vmem:[#allocation2 + $0x150] sm:$0xe]
      %v1767 = vld [vmem:[#allocation2 + $0x15c] sm:$0xe]
      %v1768 = vld [vmem:[#allocation2 + $0x168] sm:$0xe]
      %v1769 = vld [vmem:[#allocation2 + $0x174] sm:$0xe]
      %v1770 = vld [vmem:[#allocation2 + $0x180] sm:$0xe]
      %v1771 = vld [vmem:[#allocation2 + $0x18c] sm:$0xe]
      %v1772 = vld [vmem:[%s1417] sm:$0xf]
      %v1773 = vld [vmem:[%s1417 + $0x4] sm:$0xf]
      %v1774 = vld [vmem:[%s1417 + $0xc] sm:$0xf]
      %v1775 = vld [vmem:[%s1417 + $0x10] sm:$0xf]
      %v1776 = vld [vmem:[%s1417 + $0x18] sm:$0xf]
      %v1777 = vld [vmem:[%s1417 + $0x1c] sm:$0xf]
      %v1778 = vld [vmem:[%s1417 + $0x24] sm:$0xf]
      %v1779 = vld [vmem:[%s1417 + $0x28] sm:$0xf]
      %v1780 = vld [vmem:[%s1417 + $0x30] sm:$0xf]
      %v1781 = vld [vmem:[%s1417 + $0x34] sm:$0xf]
      %v1782 = vld [vmem:[%s1417 + $0x3c] sm:$0xf]
      %v1783 = vld [vmem:[%s1417 + $0x40] sm:$0xf]
      %v1784 = vld [vmem:[%s1417 + $0x48] sm:$0xf]
      %v1785 = vld [vmem:[%s1417 + $0x4c] sm:$0xf]
      %v1786 = vld [vmem:[%s1417 + $0x54] sm:$0xf]
      %v1787 = vld [vmem:[%s1417 + $0x58] sm:$0xf]
      %v1788 = vld [vmem:[%s1417 + $0x60] sm:$0xf]
      %v1789 = vld [vmem:[%s1417 + $0x64] sm:$0xf]
      %v1790 = vld [vmem:[%s1417 + $0x6c] sm:$0xf]
      %v1791 = vld [vmem:[%s1417 + $0x70] sm:$0xf]
      %v1792 = vld [vmem:[%s1417 + $0x78] sm:$0xf]
      %v1793 = vld [vmem:[%s1417 + $0x7c] sm:$0xf]
      %v1794 = vld [vmem:[%s1417 + $0x84] sm:$0xf]
      %v1795 = vld [vmem:[%s1417 + $0x88] sm:$0xf]
      %v1796 = vld [vmem:[%s1417 + $0x90] sm:$0xf]
      %v1797 = vld [vmem:[%s1417 + $0x94] sm:$0xf]
      %v1798 = vld [vmem:[%s1417 + $0x9c] sm:$0xf]
      %v1799 = vld [vmem:[%s1417 + $0xa0] sm:$0xf]
      %v1800 = vld [vmem:[%s1417 + $0xa8] sm:$0xf]
      %v1801 = vld [vmem:[%s1417 + $0xac] sm:$0xf]
      %v1802 = vld [vmem:[%s1417 + $0xb4] sm:$0xf]
      %v1803 = vld [vmem:[%s1417 + $0xb8] sm:$0xf]
      %v1804 = vld [vmem:[%s1417 + $0xd8] sm:$0xf]
      %v1805 = vld [vmem:[%s1417 + $0xdc] sm:$0xf]
      %v1806 = vld [vmem:[%s1417 + $0xe4] sm:$0xf]
      %v1807 = vld [vmem:[%s1417 + $0xe8] sm:$0xf]
      %v1808 = vld [vmem:[%s1417 + $0xf0] sm:$0xf]
      %v1809 = vld [vmem:[%s1417 + $0xf4] sm:$0xf]
      %v1810 = vld [vmem:[%s1417 + $0xfc] sm:$0xf]
      %v1811 = vld [vmem:[%s1417 + $0x100] sm:$0xf]
      %v1812 = vld [vmem:[%s1417 + $0x108] sm:$0xf]
      %v1813 = vld [vmem:[%s1417 + $0x10c] sm:$0xf]
      %v1814 = vld [vmem:[%s1417 + $0x114] sm:$0xf]
      %v1815 = vld [vmem:[%s1417 + $0x118] sm:$0xf]
      %v1816 = vld [vmem:[%s1417 + $0x120] sm:$0xf]
      %v1817 = vld [vmem:[%s1417 + $0x124] sm:$0xf]
      %v1818 = vld [vmem:[%s1417 + $0x12c] sm:$0xf]
      %v1819 = vld [vmem:[%s1417 + $0x130] sm:$0xf]
      %v1820 = vld [vmem:[%s1417 + $0x138] sm:$0xf]
      %v1821 = vld [vmem:[%s1417 + $0x13c] sm:$0xf]
      %v1822 = vld [vmem:[%s1417 + $0x144] sm:$0xf]
      %v1823 = vld [vmem:[%s1417 + $0x148] sm:$0xf]
      %v1824 = vld [vmem:[%s1417 + $0x150] sm:$0xf]
      %v1825 = vld [vmem:[%s1417 + $0x154] sm:$0xf]
      %v1826 = vld [vmem:[%s1417 + $0x15c] sm:$0xf]
      %v1827 = vld [vmem:[%s1417 + $0x160] sm:$0xf]
      %v1828 = vld [vmem:[%s1417 + $0x168] sm:$0xf]
      %v1829 = vld [vmem:[%s1417 + $0x16c] sm:$0xf]
      %v1830 = vld [vmem:[%s1417 + $0x174] sm:$0xf]
      %v1831 = vld [vmem:[%s1417 + $0x178] sm:$0xf]
      %v1832 = vld [vmem:[%s1417 + $0x180] sm:$0xf]
      %v1833 = vld [vmem:[%s1417 + $0x184] sm:$0xf]
      %v1834 = vld [vmem:[%s1417 + $0x18c] sm:$0xf]
      %v1835 = vld [vmem:[%s1417 + $0x190] sm:$0xf]
      %v1836 = vld [vmem:[%s1417 + $0x8] sm:$0x1]
      %v1837 = vld [vmem:[%s1417 + $0x14] sm:$0x1]
      %v1838 = vld [vmem:[%s1417 + $0x20] sm:$0x1]
      %v1839 = vld [vmem:[%s1417 + $0x2c] sm:$0x1]
      %v1840 = vld [vmem:[%s1417 + $0x38] sm:$0x1]
      %v1841 = vld [vmem:[%s1417 + $0x44] sm:$0x1]
      %v1842 = vld [vmem:[%s1417 + $0x50] sm:$0x1]
      %v1843 = vld [vmem:[%s1417 + $0x5c] sm:$0x1]
      %v1844 = vld [vmem:[%s1417 + $0x68] sm:$0x1]
      %v1845 = vld [vmem:[%s1417 + $0x74] sm:$0x1]
      %v1846 = vld [vmem:[%s1417 + $0x80] sm:$0x1]
      %v1847 = vld [vmem:[%s1417 + $0x8c] sm:$0x1]
      %v1848 = vld [vmem:[%s1417 + $0x98] sm:$0x1]
      %v1849 = vld [vmem:[%s1417 + $0xa4] sm:$0x1]
      %v1850 = vld [vmem:[%s1417 + $0xb0] sm:$0x1]
      %v1851 = vld [vmem:[%s1417 + $0xbc] sm:$0x1]
      %v1852 = vld [vmem:[%s1417 + $0xe0] sm:$0x1]
      %v1853 = vld [vmem:[%s1417 + $0xec] sm:$0x1]
      %v1854 = vld [vmem:[%s1417 + $0xf8] sm:$0x1]
      %v1855 = vld [vmem:[%s1417 + $0x104] sm:$0x1]
      %v1856 = vld [vmem:[%s1417 + $0x110] sm:$0x1]
      %v1857 = vld [vmem:[%s1417 + $0x11c] sm:$0x1]
      %v1858 = vld [vmem:[%s1417 + $0x128] sm:$0x1]
      %v1859 = vld [vmem:[%s1417 + $0x134] sm:$0x1]
      %v1860 = vld [vmem:[%s1417 + $0x140] sm:$0x1]
      %v1861 = vld [vmem:[%s1417 + $0x14c] sm:$0x1]
      %v1862 = vld [vmem:[%s1417 + $0x158] sm:$0x1]
      %v1863 = vld [vmem:[%s1417 + $0x164] sm:$0x1]
      %v1864 = vld [vmem:[%s1417 + $0x170] sm:$0x1]
      %v1865 = vld [vmem:[%s1417 + $0x17c] sm:$0x1]
      %v1866 = vld [vmem:[%s1417 + $0x188] sm:$0x1]
      %v1867 = vld [vmem:[%s1417 + $0x194] sm:$0x1]
      %v1868 = vld [vmem:[%s1417] sm:$0xe]
      %v1869 = vld [vmem:[%s1417 + $0xc] sm:$0xe]
      %v1870 = vld [vmem:[%s1417 + $0x18] sm:$0xe]
      %v1871 = vld [vmem:[%s1417 + $0x24] sm:$0xe]
      %v1872 = vld [vmem:[%s1417 + $0x30] sm:$0xe]
      %v1873 = vld [vmem:[%s1417 + $0x3c] sm:$0xe]
      %v1874 = vld [vmem:[%s1417 + $0x48] sm:$0xe]
      %v1875 = vld [vmem:[%s1417 + $0x54] sm:$0xe]
      %v1876 = vld [vmem:[%s1417 + $0x60] sm:$0xe]
      %v1877 = vld [vmem:[%s1417 + $0x6c] sm:$0xe]
      %v1878 = vld [vmem:[%s1417 + $0x78] sm:$0xe]
      %v1879 = vld [vmem:[%s1417 + $0x84] sm:$0xe]
      %v1880 = vld [vmem:[%s1417 + $0x90] sm:$0xe]
      %v1881 = vld [vmem:[%s1417 + $0x9c] sm:$0xe]
      %v1882 = vld [vmem:[%s1417 + $0xa8] sm:$0xe]
      %v1883 = vld [vmem:[%s1417 + $0xb4] sm:$0xe]
      %v1884 = vld [vmem:[%s1417 + $0xd8] sm:$0xe]
      %v1885 = vld [vmem:[%s1417 + $0xe4] sm:$0xe]
      %v1886 = vld [vmem:[%s1417 + $0xf0] sm:$0xe]
      %v1887 = vld [vmem:[%s1417 + $0xfc] sm:$0xe]
      %v1888 = vld [vmem:[%s1417 + $0x108] sm:$0xe]
      %v1889 = vld [vmem:[%s1417 + $0x114] sm:$0xe]
      %v1890 = vld [vmem:[%s1417 + $0x120] sm:$0xe]
      %v1891 = vld [vmem:[%s1417 + $0x12c] sm:$0xe]
      %v1892 = vld [vmem:[%s1417 + $0x138] sm:$0xe]
      %v1893 = vld [vmem:[%s1417 + $0x144] sm:$0xe]
      %v1894 = vld [vmem:[%s1417 + $0x150] sm:$0xe]
      %v1895 = vld [vmem:[%s1417 + $0x15c] sm:$0xe]
      %v1896 = vld [vmem:[%s1417 + $0x168] sm:$0xe]
      %v1897 = vld [vmem:[%s1417 + $0x174] sm:$0xe]
      %v1898 = vld [vmem:[%s1417 + $0x180] sm:$0xe]
      %v1899 = vld [vmem:[%s1417 + $0x18c] sm:$0xe]
      %s1900 = scalar_lea.vmem [#allocation2], 24
      %v1901 = vld [vmem:[%s1900] sm:$0xf]
      %v1902 = vld [vmem:[%s1900 + $0x4] sm:$0xf]
      %v1903 = vld [vmem:[%s1900 + $0xc] sm:$0xf]
      %v1904 = vld [vmem:[%s1900 + $0x10] sm:$0xf]
      %v1905 = vld [vmem:[%s1900 + $0x18] sm:$0xf]
      %v1906 = vld [vmem:[%s1900 + $0x1c] sm:$0xf]
      %v1907 = vld [vmem:[%s1900 + $0x24] sm:$0xf]
      %v1908 = vld [vmem:[%s1900 + $0x28] sm:$0xf]
      %v1909 = vld [vmem:[%s1900 + $0x30] sm:$0xf]
      %v1910 = vld [vmem:[%s1900 + $0x34] sm:$0xf]
      %v1911 = vld [vmem:[%s1900 + $0x3c] sm:$0xf]
      %v1912 = vld [vmem:[%s1900 + $0x40] sm:$0xf]
      %v1913 = vld [vmem:[%s1900 + $0x48] sm:$0xf]
      %v1914 = vld [vmem:[%s1900 + $0x4c] sm:$0xf]
      %v1915 = vld [vmem:[%s1900 + $0x54] sm:$0xf]
      %v1916 = vld [vmem:[%s1900 + $0x58] sm:$0xf]
      %v1917 = vld [vmem:[%s1900 + $0x60] sm:$0xf]
      %v1918 = vld [vmem:[%s1900 + $0x64] sm:$0xf]
      %v1919 = vld [vmem:[%s1900 + $0x6c] sm:$0xf]
      %v1920 = vld [vmem:[%s1900 + $0x70] sm:$0xf]
      %v1921 = vld [vmem:[%s1900 + $0x78] sm:$0xf]
      %v1922 = vld [vmem:[%s1900 + $0x7c] sm:$0xf]
      %v1923 = vld [vmem:[%s1900 + $0x84] sm:$0xf]
      %v1924 = vld [vmem:[%s1900 + $0x88] sm:$0xf]
      %v1925 = vld [vmem:[%s1900 + $0x90] sm:$0xf]
      %v1926 = vld [vmem:[%s1900 + $0x94] sm:$0xf]
      %v1927 = vld [vmem:[%s1900 + $0x9c] sm:$0xf]
      %v1928 = vld [vmem:[%s1900 + $0xa0] sm:$0xf]
      %v1929 = vld [vmem:[%s1900 + $0xa8] sm:$0xf]
      %v1930 = vld [vmem:[%s1900 + $0xac] sm:$0xf]
      %v1931 = vld [vmem:[%s1900 + $0xb4] sm:$0xf]
      %v1932 = vld [vmem:[%s1900 + $0xb8] sm:$0xf]
      %v1933 = vld [vmem:[%s1900 + $0xd8] sm:$0xf]
      %v1934 = vld [vmem:[%s1900 + $0xdc] sm:$0xf]
      %v1935 = vld [vmem:[%s1900 + $0xe4] sm:$0xf]
      %v1936 = vld [vmem:[%s1900 + $0xe8] sm:$0xf]
      %v1937 = vld [vmem:[%s1900 + $0xf0] sm:$0xf]
      %v1938 = vld [vmem:[%s1900 + $0xf4] sm:$0xf]
      %v1939 = vld [vmem:[%s1900 + $0xfc] sm:$0xf]
      %v1940 = vld [vmem:[%s1900 + $0x100] sm:$0xf]
      %v1941 = vld [vmem:[%s1900 + $0x108] sm:$0xf]
      %v1942 = vld [vmem:[%s1900 + $0x10c] sm:$0xf]
      %v1943 = vld [vmem:[%s1900 + $0x114] sm:$0xf]
      %v1944 = vld [vmem:[%s1900 + $0x118] sm:$0xf]
      %v1945 = vld [vmem:[%s1900 + $0x120] sm:$0xf]
      %v1946 = vld [vmem:[%s1900 + $0x124] sm:$0xf]
      %v1947 = vld [vmem:[%s1900 + $0x12c] sm:$0xf]
      %v1948 = vld [vmem:[%s1900 + $0x130] sm:$0xf]
      %v1949 = vld [vmem:[%s1900 + $0x138] sm:$0xf]
      %v1950 = vld [vmem:[%s1900 + $0x13c] sm:$0xf]
      %v1951 = vld [vmem:[%s1900 + $0x144] sm:$0xf]
      %v1952 = vld [vmem:[%s1900 + $0x148] sm:$0xf]
      %v1953 = vld [vmem:[%s1900 + $0x150] sm:$0xf]
      %v1954 = vld [vmem:[%s1900 + $0x154] sm:$0xf]
      %v1955 = vld [vmem:[%s1900 + $0x15c] sm:$0xf]
      %v1956 = vld [vmem:[%s1900 + $0x160] sm:$0xf]
      %v1957 = vld [vmem:[%s1900 + $0x168] sm:$0xf]
      %v1958 = vld [vmem:[%s1900 + $0x16c] sm:$0xf]
      %v1959 = vld [vmem:[%s1900 + $0x174] sm:$0xf]
      %v1960 = vld [vmem:[%s1900 + $0x178] sm:$0xf]
      %v1961 = vld [vmem:[%s1900 + $0x180] sm:$0xf]
      %v1962 = vld [vmem:[%s1900 + $0x184] sm:$0xf]
      %v1963 = vld [vmem:[%s1900 + $0x18c] sm:$0xf]
      %v1964 = vld [vmem:[%s1900 + $0x190] sm:$0xf]
      %v1965 = vld [vmem:[%s1900 + $0x8] sm:$0x1]
      %v1966 = vld [vmem:[%s1900 + $0x14] sm:$0x1]
      %v1967 = vld [vmem:[%s1900 + $0x20] sm:$0x1]
      %v1968 = vld [vmem:[%s1900 + $0x2c] sm:$0x1]
      %v1969 = vld [vmem:[%s1900 + $0x38] sm:$0x1]
      %v1970 = vld [vmem:[%s1900 + $0x44] sm:$0x1]
      %v1971 = vld [vmem:[%s1900 + $0x50] sm:$0x1]
      %v1972 = vld [vmem:[%s1900 + $0x5c] sm:$0x1]
      %v1973 = vld [vmem:[%s1900 + $0x68] sm:$0x1]
      %v1974 = vld [vmem:[%s1900 + $0x74] sm:$0x1]
      %v1975 = vld [vmem:[%s1900 + $0x80] sm:$0x1]
      %v1976 = vld [vmem:[%s1900 + $0x8c] sm:$0x1]
      %v1977 = vld [vmem:[%s1900 + $0x98] sm:$0x1]
      %v1978 = vld [vmem:[%s1900 + $0xa4] sm:$0x1]
      %v1979 = vld [vmem:[%s1900 + $0xb0] sm:$0x1]
      %v1980 = vld [vmem:[%s1900 + $0xbc] sm:$0x1]
      %v1981 = vld [vmem:[%s1900 + $0xe0] sm:$0x1]
      %v1982 = vld [vmem:[%s1900 + $0xec] sm:$0x1]
      %v1983 = vld [vmem:[%s1900 + $0xf8] sm:$0x1]
      %v1984 = vld [vmem:[%s1900 + $0x104] sm:$0x1]
      %v1985 = vld [vmem:[%s1900 + $0x110] sm:$0x1]
      %v1986 = vld [vmem:[%s1900 + $0x11c] sm:$0x1]
      %v1987 = vld [vmem:[%s1900 + $0x128] sm:$0x1]
      %v1988 = vld [vmem:[%s1900 + $0x134] sm:$0x1]
      %v1989 = vld [vmem:[%s1900 + $0x140] sm:$0x1]
      %v1990 = vld [vmem:[%s1900 + $0x14c] sm:$0x1]
      %v1991 = vld [vmem:[%s1900 + $0x158] sm:$0x1]
      %v1992 = vld [vmem:[%s1900 + $0x164] sm:$0x1]
      %v1993 = vld [vmem:[%s1900 + $0x170] sm:$0x1]
      %v1994 = vld [vmem:[%s1900 + $0x17c] sm:$0x1]
      %v1995 = vld [vmem:[%s1900 + $0x188] sm:$0x1]
      %v1996 = vld [vmem:[%s1900 + $0x194] sm:$0x1]
      %v1997 = vld [vmem:[%s1900] sm:$0xe]
      %v1998 = vld [vmem:[%s1900 + $0xc] sm:$0xe]
      %v1999 = vld [vmem:[%s1900 + $0x18] sm:$0xe]
      %v2000 = vld [vmem:[%s1900 + $0x24] sm:$0xe]
      %v2001 = vld [vmem:[%s1900 + $0x30] sm:$0xe]
      %v2002 = vld [vmem:[%s1900 + $0x3c] sm:$0xe]
      %v2003 = vld [vmem:[%s1900 + $0x48] sm:$0xe]
      %v2004 = vld [vmem:[%s1900 + $0x54] sm:$0xe]
      %v2005 = vld [vmem:[%s1900 + $0x60] sm:$0xe]
      %v2006 = vld [vmem:[%s1900 + $0x6c] sm:$0xe]
      %v2007 = vld [vmem:[%s1900 + $0x78] sm:$0xe]
      %v2008 = vld [vmem:[%s1900 + $0x84] sm:$0xe]
      %v2009 = vld [vmem:[%s1900 + $0x90] sm:$0xe]
      %v2010 = vld [vmem:[%s1900 + $0x9c] sm:$0xe]
      %v2011 = vld [vmem:[%s1900 + $0xa8] sm:$0xe]
      %v2012 = vld [vmem:[%s1900 + $0xb4] sm:$0xe]
      %v2013 = vld [vmem:[%s1900 + $0xd8] sm:$0xe]
      %v2014 = vld [vmem:[%s1900 + $0xe4] sm:$0xe]
      %v2015 = vld [vmem:[%s1900 + $0xf0] sm:$0xe]
      %v2016 = vld [vmem:[%s1900 + $0xfc] sm:$0xe]
      %v2017 = vld [vmem:[%s1900 + $0x108] sm:$0xe]
      %v2018 = vld [vmem:[%s1900 + $0x114] sm:$0xe]
      %v2019 = vld [vmem:[%s1900 + $0x120] sm:$0xe]
      %v2020 = vld [vmem:[%s1900 + $0x12c] sm:$0xe]
      %v2021 = vld [vmem:[%s1900 + $0x138] sm:$0xe]
      %v2022 = vld [vmem:[%s1900 + $0x144] sm:$0xe]
      %v2023 = vld [vmem:[%s1900 + $0x150] sm:$0xe]
      %v2024 = vld [vmem:[%s1900 + $0x15c] sm:$0xe]
      %v2025 = vld [vmem:[%s1900 + $0x168] sm:$0xe]
      %v2026 = vld [vmem:[%s1900 + $0x174] sm:$0xe]
      %v2027 = vld [vmem:[%s1900 + $0x180] sm:$0xe]
      %v2028 = vld [vmem:[%s1900 + $0x18c] sm:$0xe]
      %v2093 = vunpack.c.l.b16 %v1644
      %v2094 = vunpack.c.l.b16 %v1645
      %v2095 = vunpack.c.l.b16 %v1646
      %v2096 = vunpack.c.l.b16 %v1647
      %v2097 = vunpack.c.l.b16 %v1648
      %v2098 = vunpack.c.l.b16 %v1649
      %v2099 = vunpack.c.l.b16 %v1650
      %v2100 = vunpack.c.l.b16 %v1651
      %v2101 = vunpack.c.l.b16 %v1652
      %v2102 = vunpack.c.l.b16 %v1653
      %v2103 = vunpack.c.l.b16 %v1654
      %v2104 = vunpack.c.l.b16 %v1655
      %v2105 = vunpack.c.l.b16 %v1656
      %v2106 = vunpack.c.l.b16 %v1657
      %v2107 = vunpack.c.l.b16 %v1658
      %v2108 = vunpack.c.l.b16 %v1659
      %v2109 = vunpack.c.l.b16 %v1660
      %v2110 = vunpack.c.l.b16 %v1661
      %v2111 = vunpack.c.l.b16 %v1662
      %v2112 = vunpack.c.l.b16 %v1663
      %v2113 = vunpack.c.l.b16 %v1664
      %v2114 = vunpack.c.l.b16 %v1665
      %v2115 = vunpack.c.l.b16 %v1666
      %v2116 = vunpack.c.l.b16 %v1667
      %v2117 = vunpack.c.l.b16 %v1668
      %v2118 = vunpack.c.l.b16 %v1669
      %v2119 = vunpack.c.l.b16 %v1670
      %v2120 = vunpack.c.l.b16 %v1671
      %v2121 = vunpack.c.l.b16 %v1672
      %v2122 = vunpack.c.l.b16 %v1673
      %v2123 = vunpack.c.l.b16 %v1674
      %v2124 = vunpack.c.l.b16 %v1675
      %v2125 = vunpack.c.l.b16 %v1676
      %v2126 = vunpack.c.l.b16 %v1677
      %v2127 = vunpack.c.l.b16 %v1678
      %v2128 = vunpack.c.l.b16 %v1679
      %v2129 = vunpack.c.l.b16 %v1680
      %v2130 = vunpack.c.l.b16 %v1681
      %v2131 = vunpack.c.l.b16 %v1682
      %v2132 = vunpack.c.l.b16 %v1683
      %v2133 = vunpack.c.l.b16 %v1684
      %v2134 = vunpack.c.l.b16 %v1685
      %v2135 = vunpack.c.l.b16 %v1686
      %v2136 = vunpack.c.l.b16 %v1687
      %v2137 = vunpack.c.l.b16 %v1688
      %v2138 = vunpack.c.l.b16 %v1689
      %v2139 = vunpack.c.l.b16 %v1690
      %v2140 = vunpack.c.l.b16 %v1691
      %v2141 = vunpack.c.l.b16 %v1692
      %v2142 = vunpack.c.l.b16 %v1693
      %v2143 = vunpack.c.l.b16 %v1694
      %v2144 = vunpack.c.l.b16 %v1695
      %v2145 = vunpack.c.l.b16 %v1696
      %v2146 = vunpack.c.l.b16 %v1697
      %v2147 = vunpack.c.l.b16 %v1698
      %v2148 = vunpack.c.l.b16 %v1699
      %v2149 = vunpack.c.l.b16 %v1700
      %v2150 = vunpack.c.l.b16 %v1701
      %v2151 = vunpack.c.l.b16 %v1702
      %v2152 = vunpack.c.l.b16 %v1703
      %v2153 = vunpack.c.l.b16 %v1704
      %v2154 = vunpack.c.l.b16 %v1705
      %v2155 = vunpack.c.l.b16 %v1706
      %v2156 = vunpack.c.l.b16 %v1707
      %v2157 = vpack.c.b16 %v2094, %v2093
      %v2158 = vpack.c.b16 %v2096, %v2095
      %v2159 = vpack.c.b16 %v2098, %v2097
      %v2160 = vpack.c.b16 %v2100, %v2099
      %v2161 = vpack.c.b16 %v2102, %v2101
      %v2162 = vpack.c.b16 %v2104, %v2103
      %v2163 = vpack.c.b16 %v2106, %v2105
      %v2164 = vpack.c.b16 %v2108, %v2107
      %v2165 = vpack.c.b16 %v2110, %v2109
      %v2166 = vpack.c.b16 %v2112, %v2111
      %v2167 = vpack.c.b16 %v2114, %v2113
      %v2168 = vpack.c.b16 %v2116, %v2115
      %v2169 = vpack.c.b16 %v2118, %v2117
      %v2170 = vpack.c.b16 %v2120, %v2119
      %v2171 = vpack.c.b16 %v2122, %v2121
      %v2172 = vpack.c.b16 %v2124, %v2123
      %v2173 = vpack.c.b16 %v2126, %v2125
      %v2174 = vpack.c.b16 %v2128, %v2127
      %v2175 = vpack.c.b16 %v2130, %v2129
      %v2176 = vpack.c.b16 %v2132, %v2131
      %v2177 = vpack.c.b16 %v2134, %v2133
      %v2178 = vpack.c.b16 %v2136, %v2135
      %v2179 = vpack.c.b16 %v2138, %v2137
      %v2180 = vpack.c.b16 %v2140, %v2139
      %v2181 = vpack.c.b16 %v2142, %v2141
      %v2182 = vpack.c.b16 %v2144, %v2143
      %v2183 = vpack.c.b16 %v2146, %v2145
      %v2184 = vpack.c.b16 %v2148, %v2147
      %v2185 = vpack.c.b16 %v2150, %v2149
      %v2186 = vpack.c.b16 %v2152, %v2151
      %v2187 = vpack.c.b16 %v2154, %v2153
      %v2188 = vpack.c.b16 %v2156, %v2155
      %v2221 = vunpack.c.l.b16 %v1708
      %v2222 = vunpack.c.l.b16 %v1709
      %v2223 = vunpack.c.l.b16 %v1710
      %v2224 = vunpack.c.l.b16 %v1711
      %v2225 = vunpack.c.l.b16 %v1712
      %v2226 = vunpack.c.l.b16 %v1713
      %v2227 = vunpack.c.l.b16 %v1714
      %v2228 = vunpack.c.l.b16 %v1715
      %v2229 = vunpack.c.l.b16 %v1716
      %v2230 = vunpack.c.l.b16 %v1717
      %v2231 = vunpack.c.l.b16 %v1718
      %v2232 = vunpack.c.l.b16 %v1719
      %v2233 = vunpack.c.l.b16 %v1720
      %v2234 = vunpack.c.l.b16 %v1721
      %v2235 = vunpack.c.l.b16 %v1722
      %v2236 = vunpack.c.l.b16 %v1723
      %v2237 = vunpack.c.l.b16 %v1724
      %v2238 = vunpack.c.l.b16 %v1725
      %v2239 = vunpack.c.l.b16 %v1726
      %v2240 = vunpack.c.l.b16 %v1727
      %v2241 = vunpack.c.l.b16 %v1728
      %v2242 = vunpack.c.l.b16 %v1729
      %v2243 = vunpack.c.l.b16 %v1730
      %v2244 = vunpack.c.l.b16 %v1731
      %v2245 = vunpack.c.l.b16 %v1732
      %v2246 = vunpack.c.l.b16 %v1733
      %v2247 = vunpack.c.l.b16 %v1734
      %v2248 = vunpack.c.l.b16 %v1735
      %v2249 = vunpack.c.l.b16 %v1736
      %v2250 = vunpack.c.l.b16 %v1737
      %v2251 = vunpack.c.l.b16 %v1738
      %v2252 = vunpack.c.l.b16 %v1739
      %v2253 = vpack.c.b16 %v2221, %v2221
      %v2254 = vpack.c.b16 %v2222, %v2222
      %v2255 = vpack.c.b16 %v2223, %v2223
      %v2256 = vpack.c.b16 %v2224, %v2224
      %v2257 = vpack.c.b16 %v2225, %v2225
      %v2258 = vpack.c.b16 %v2226, %v2226
      %v2259 = vpack.c.b16 %v2227, %v2227
      %v2260 = vpack.c.b16 %v2228, %v2228
      %v2261 = vpack.c.b16 %v2229, %v2229
      %v2262 = vpack.c.b16 %v2230, %v2230
      %v2263 = vpack.c.b16 %v2231, %v2231
      %v2264 = vpack.c.b16 %v2232, %v2232
      %v2265 = vpack.c.b16 %v2233, %v2233
      %v2266 = vpack.c.b16 %v2234, %v2234
      %v2267 = vpack.c.b16 %v2235, %v2235
      %v2268 = vpack.c.b16 %v2236, %v2236
      %v2269 = vpack.c.b16 %v2237, %v2237
      %v2270 = vpack.c.b16 %v2238, %v2238
      %v2271 = vpack.c.b16 %v2239, %v2239
      %v2272 = vpack.c.b16 %v2240, %v2240
      %v2273 = vpack.c.b16 %v2241, %v2241
      %v2274 = vpack.c.b16 %v2242, %v2242
      %v2275 = vpack.c.b16 %v2243, %v2243
      %v2276 = vpack.c.b16 %v2244, %v2244
      %v2277 = vpack.c.b16 %v2245, %v2245
      %v2278 = vpack.c.b16 %v2246, %v2246
      %v2279 = vpack.c.b16 %v2247, %v2247
      %v2280 = vpack.c.b16 %v2248, %v2248
      %v2281 = vpack.c.b16 %v2249, %v2249
      %v2282 = vpack.c.b16 %v2250, %v2250
      %v2283 = vpack.c.b16 %v2251, %v2251
      %v2284 = vpack.c.b16 %v2252, %v2252
      %vm2285 = vsmask.f32 7424
      %v2287 = vshrl.u32 %v2157, 16
      %v2289 = vshll.u32 %v2157, 16
      %v2291 = vrot.slane %v2289, 1
      %v2292 = vor.u32 %v2287, %v2291
      %v2294 = vshll.u32 %v2253, 16
      %v2296 = vrot.slane %v2294, 1
      %v2297 = vsel %vm2285, %v2292, %v2296
      %v2299 = vshrl.u32 %v2158, 16
      %v2301 = vshll.u32 %v2158, 16
      %v2303 = vrot.slane %v2301, 1
      %v2304 = vor.u32 %v2299, %v2303
      %v2306 = vshll.u32 %v2254, 16
      %v2308 = vrot.slane %v2306, 1
      %v2309 = vsel %vm2285, %v2304, %v2308
      %v2311 = vshrl.u32 %v2159, 16
      %v2313 = vshll.u32 %v2159, 16
      %v2315 = vrot.slane %v2313, 1
      %v2316 = vor.u32 %v2311, %v2315
      %v2318 = vshll.u32 %v2255, 16
      %v2320 = vrot.slane %v2318, 1
      %v2321 = vsel %vm2285, %v2316, %v2320
      %v2323 = vshrl.u32 %v2160, 16
      %v2325 = vshll.u32 %v2160, 16
      %v2327 = vrot.slane %v2325, 1
      %v2328 = vor.u32 %v2323, %v2327
      %v2330 = vshll.u32 %v2256, 16
      %v2332 = vrot.slane %v2330, 1
      %v2333 = vsel %vm2285, %v2328, %v2332
      %v2335 = vshrl.u32 %v2161, 16
      %v2337 = vshll.u32 %v2161, 16
      %v2339 = vrot.slane %v2337, 1
      %v2340 = vor.u32 %v2335, %v2339
      %v2342 = vshll.u32 %v2257, 16
      %v2344 = vrot.slane %v2342, 1
      %v2345 = vsel %vm2285, %v2340, %v2344
      %v2347 = vshrl.u32 %v2162, 16
      %v2349 = vshll.u32 %v2162, 16
      %v2351 = vrot.slane %v2349, 1
      %v2352 = vor.u32 %v2347, %v2351
      %v2354 = vshll.u32 %v2258, 16
      %v2356 = vrot.slane %v2354, 1
      %v2357 = vsel %vm2285, %v2352, %v2356
      %v2359 = vshrl.u32 %v2163, 16
      %v2361 = vshll.u32 %v2163, 16
      %v2363 = vrot.slane %v2361, 1
      %v2364 = vor.u32 %v2359, %v2363
      %v2366 = vshll.u32 %v2259, 16
      %v2368 = vrot.slane %v2366, 1
      %v2369 = vsel %vm2285, %v2364, %v2368
      %v2371 = vshrl.u32 %v2164, 16
      %v2373 = vshll.u32 %v2164, 16
      %v2375 = vrot.slane %v2373, 1
      %v2376 = vor.u32 %v2371, %v2375
      %v2378 = vshll.u32 %v2260, 16
      %v2380 = vrot.slane %v2378, 1
      %v2381 = vsel %vm2285, %v2376, %v2380
      %v2383 = vshrl.u32 %v2165, 16
      %v2385 = vshll.u32 %v2165, 16
      %v2387 = vrot.slane %v2385, 1
      %v2388 = vor.u32 %v2383, %v2387
      %v2390 = vshll.u32 %v2261, 16
      %v2392 = vrot.slane %v2390, 1
      %v2393 = vsel %vm2285, %v2388, %v2392
      %v2395 = vshrl.u32 %v2166, 16
      %v2397 = vshll.u32 %v2166, 16
      %v2399 = vrot.slane %v2397, 1
      %v2400 = vor.u32 %v2395, %v2399
      %v2402 = vshll.u32 %v2262, 16
      %v2404 = vrot.slane %v2402, 1
      %v2405 = vsel %vm2285, %v2400, %v2404
      %v2407 = vshrl.u32 %v2167, 16
      %v2409 = vshll.u32 %v2167, 16
      %v2411 = vrot.slane %v2409, 1
      %v2412 = vor.u32 %v2407, %v2411
      %v2414 = vshll.u32 %v2263, 16
      %v2416 = vrot.slane %v2414, 1
      %v2417 = vsel %vm2285, %v2412, %v2416
      %v2419 = vshrl.u32 %v2168, 16
      %v2421 = vshll.u32 %v2168, 16
      %v2423 = vrot.slane %v2421, 1
      %v2424 = vor.u32 %v2419, %v2423
      %v2426 = vshll.u32 %v2264, 16
      %v2428 = vrot.slane %v2426, 1
      %v2429 = vsel %vm2285, %v2424, %v2428
      %v2431 = vshrl.u32 %v2169, 16
      %v2433 = vshll.u32 %v2169, 16
      %v2435 = vrot.slane %v2433, 1
      %v2436 = vor.u32 %v2431, %v2435
      %v2438 = vshll.u32 %v2265, 16
      %v2440 = vrot.slane %v2438, 1
      %v2441 = vsel %vm2285, %v2436, %v2440
      %v2443 = vshrl.u32 %v2170, 16
      %v2445 = vshll.u32 %v2170, 16
      %v2447 = vrot.slane %v2445, 1
      %v2448 = vor.u32 %v2443, %v2447
      %v2450 = vshll.u32 %v2266, 16
      %v2452 = vrot.slane %v2450, 1
      %v2453 = vsel %vm2285, %v2448, %v2452
      %v2455 = vshrl.u32 %v2171, 16
      %v2457 = vshll.u32 %v2171, 16
      %v2459 = vrot.slane %v2457, 1
      %v2460 = vor.u32 %v2455, %v2459
      %v2462 = vshll.u32 %v2267, 16
      %v2464 = vrot.slane %v2462, 1
      %v2465 = vsel %vm2285, %v2460, %v2464
      %v2467 = vshrl.u32 %v2172, 16
      %v2469 = vshll.u32 %v2172, 16
      %v2471 = vrot.slane %v2469, 1
      %v2472 = vor.u32 %v2467, %v2471
      %v2474 = vshll.u32 %v2268, 16
      %v2476 = vrot.slane %v2474, 1
      %v2477 = vsel %vm2285, %v2472, %v2476
      %v2479 = vshrl.u32 %v2173, 16
      %v2481 = vshll.u32 %v2173, 16
      %v2483 = vrot.slane %v2481, 1
      %v2484 = vor.u32 %v2479, %v2483
      %v2486 = vshll.u32 %v2269, 16
      %v2488 = vrot.slane %v2486, 1
      %v2489 = vsel %vm2285, %v2484, %v2488
      %v2491 = vshrl.u32 %v2174, 16
      %v2493 = vshll.u32 %v2174, 16
      %v2495 = vrot.slane %v2493, 1
      %v2496 = vor.u32 %v2491, %v2495
      %v2498 = vshll.u32 %v2270, 16
      %v2500 = vrot.slane %v2498, 1
      %v2501 = vsel %vm2285, %v2496, %v2500
      %v2503 = vshrl.u32 %v2175, 16
      %v2505 = vshll.u32 %v2175, 16
      %v2507 = vrot.slane %v2505, 1
      %v2508 = vor.u32 %v2503, %v2507
      %v2510 = vshll.u32 %v2271, 16
      %v2512 = vrot.slane %v2510, 1
      %v2513 = vsel %vm2285, %v2508, %v2512
      %v2515 = vshrl.u32 %v2176, 16
      %v2517 = vshll.u32 %v2176, 16
      %v2519 = vrot.slane %v2517, 1
      %v2520 = vor.u32 %v2515, %v2519
      %v2522 = vshll.u32 %v2272, 16
      %v2524 = vrot.slane %v2522, 1
      %v2525 = vsel %vm2285, %v2520, %v2524
      %v2527 = vshrl.u32 %v2177, 16
      %v2529 = vshll.u32 %v2177, 16
      %v2531 = vrot.slane %v2529, 1
      %v2532 = vor.u32 %v2527, %v2531
      %v2534 = vshll.u32 %v2273, 16
      %v2536 = vrot.slane %v2534, 1
      %v2537 = vsel %vm2285, %v2532, %v2536
      %v2539 = vshrl.u32 %v2178, 16
      %v2541 = vshll.u32 %v2178, 16
      %v2543 = vrot.slane %v2541, 1
      %v2544 = vor.u32 %v2539, %v2543
      %v2546 = vshll.u32 %v2274, 16
      %v2548 = vrot.slane %v2546, 1
      %v2549 = vsel %vm2285, %v2544, %v2548
      %v2551 = vshrl.u32 %v2179, 16
      %v2553 = vshll.u32 %v2179, 16
      %v2555 = vrot.slane %v2553, 1
      %v2556 = vor.u32 %v2551, %v2555
      %v2558 = vshll.u32 %v2275, 16
      %v2560 = vrot.slane %v2558, 1
      %v2561 = vsel %vm2285, %v2556, %v2560
      %v2563 = vshrl.u32 %v2180, 16
      %v2565 = vshll.u32 %v2180, 16
      %v2567 = vrot.slane %v2565, 1
      %v2568 = vor.u32 %v2563, %v2567
      %v2570 = vshll.u32 %v2276, 16
      %v2572 = vrot.slane %v2570, 1
      %v2573 = vsel %vm2285, %v2568, %v2572
      %v2575 = vshrl.u32 %v2181, 16
      %v2577 = vshll.u32 %v2181, 16
      %v2579 = vrot.slane %v2577, 1
      %v2580 = vor.u32 %v2575, %v2579
      %v2582 = vshll.u32 %v2277, 16
      %v2584 = vrot.slane %v2582, 1
      %v2585 = vsel %vm2285, %v2580, %v2584
      %v2587 = vshrl.u32 %v2182, 16
      %v2589 = vshll.u32 %v2182, 16
      %v2591 = vrot.slane %v2589, 1
      %v2592 = vor.u32 %v2587, %v2591
      %v2594 = vshll.u32 %v2278, 16
      %v2596 = vrot.slane %v2594, 1
      %v2597 = vsel %vm2285, %v2592, %v2596
      %v2599 = vshrl.u32 %v2183, 16
      %v2601 = vshll.u32 %v2183, 16
      %v2603 = vrot.slane %v2601, 1
      %v2604 = vor.u32 %v2599, %v2603
      %v2606 = vshll.u32 %v2279, 16
      %v2608 = vrot.slane %v2606, 1
      %v2609 = vsel %vm2285, %v2604, %v2608
      %v2611 = vshrl.u32 %v2184, 16
      %v2613 = vshll.u32 %v2184, 16
      %v2615 = vrot.slane %v2613, 1
      %v2616 = vor.u32 %v2611, %v2615
      %v2618 = vshll.u32 %v2280, 16
      %v2620 = vrot.slane %v2618, 1
      %v2621 = vsel %vm2285, %v2616, %v2620
      %v2623 = vshrl.u32 %v2185, 16
      %v2625 = vshll.u32 %v2185, 16
      %v2627 = vrot.slane %v2625, 1
      %v2628 = vor.u32 %v2623, %v2627
      %v2630 = vshll.u32 %v2281, 16
      %v2632 = vrot.slane %v2630, 1
      %v2633 = vsel %vm2285, %v2628, %v2632
      %v2635 = vshrl.u32 %v2186, 16
      %v2637 = vshll.u32 %v2186, 16
      %v2639 = vrot.slane %v2637, 1
      %v2640 = vor.u32 %v2635, %v2639
      %v2642 = vshll.u32 %v2282, 16
      %v2644 = vrot.slane %v2642, 1
      %v2645 = vsel %vm2285, %v2640, %v2644
      %v2647 = vshrl.u32 %v2187, 16
      %v2649 = vshll.u32 %v2187, 16
      %v2651 = vrot.slane %v2649, 1
      %v2652 = vor.u32 %v2647, %v2651
      %v2654 = vshll.u32 %v2283, 16
      %v2656 = vrot.slane %v2654, 1
      %v2657 = vsel %vm2285, %v2652, %v2656
      %v2659 = vshrl.u32 %v2188, 16
      %v2661 = vshll.u32 %v2188, 16
      %v2663 = vrot.slane %v2661, 1
      %v2664 = vor.u32 %v2659, %v2663
      %v2666 = vshll.u32 %v2284, 16
      %v2668 = vrot.slane %v2666, 1
      %v2669 = vsel %vm2285, %v2664, %v2668
      %2670 = vrot.lane.b32.xlu0 %v2297, 2
      %v2671 = vpop.permute.xlu0 %2670
      %2672 = vrot.lane.b32.xlu0 %v2309, 2
      %v2673 = vpop.permute.xlu0 %2672
      %2674 = vrot.lane.b32.xlu0 %v2321, 2
      %v2675 = vpop.permute.xlu0 %2674
      %2676 = vrot.lane.b32.xlu0 %v2333, 2
      %v2677 = vpop.permute.xlu0 %2676
      %2678 = vrot.lane.b32.xlu0 %v2345, 2
      %v2679 = vpop.permute.xlu0 %2678
      %2680 = vrot.lane.b32.xlu0 %v2357, 2
      %v2681 = vpop.permute.xlu0 %2680
      %2682 = vrot.lane.b32.xlu0 %v2369, 2
      %v2683 = vpop.permute.xlu0 %2682
      %2684 = vrot.lane.b32.xlu0 %v2381, 2
      %v2685 = vpop.permute.xlu0 %2684
      %2686 = vrot.lane.b32.xlu0 %v2393, 2
      %v2687 = vpop.permute.xlu0 %2686
      %2688 = vrot.lane.b32.xlu0 %v2405, 2
      %v2689 = vpop.permute.xlu0 %2688
      %2690 = vrot.lane.b32.xlu0 %v2417, 2
      %v2691 = vpop.permute.xlu0 %2690
      %2692 = vrot.lane.b32.xlu0 %v2429, 2
      %v2693 = vpop.permute.xlu0 %2692
      %2694 = vrot.lane.b32.xlu0 %v2441, 2
      %v2695 = vpop.permute.xlu0 %2694
      %2696 = vrot.lane.b32.xlu0 %v2453, 2
      %v2697 = vpop.permute.xlu0 %2696
      %2698 = vrot.lane.b32.xlu0 %v2465, 2
      %v2699 = vpop.permute.xlu0 %2698
      %2700 = vrot.lane.b32.xlu0 %v2477, 2
      %v2701 = vpop.permute.xlu0 %2700
      %2702 = vrot.lane.b32.xlu0 %v2489, 2
      %v2703 = vpop.permute.xlu0 %2702
      %2704 = vrot.lane.b32.xlu0 %v2501, 2
      %v2705 = vpop.permute.xlu0 %2704
      %2706 = vrot.lane.b32.xlu0 %v2513, 2
      %v2707 = vpop.permute.xlu0 %2706
      %2708 = vrot.lane.b32.xlu0 %v2525, 2
      %v2709 = vpop.permute.xlu0 %2708
      %2710 = vrot.lane.b32.xlu0 %v2537, 2
      %v2711 = vpop.permute.xlu0 %2710
      %2712 = vrot.lane.b32.xlu0 %v2549, 2
      %v2713 = vpop.permute.xlu0 %2712
      %2714 = vrot.lane.b32.xlu0 %v2561, 2
      %v2715 = vpop.permute.xlu0 %2714
      %2716 = vrot.lane.b32.xlu0 %v2573, 2
      %v2717 = vpop.permute.xlu0 %2716
      %2718 = vrot.lane.b32.xlu0 %v2585, 2
      %v2719 = vpop.permute.xlu0 %2718
      %2720 = vrot.lane.b32.xlu0 %v2597, 2
      %v2721 = vpop.permute.xlu0 %2720
      %2722 = vrot.lane.b32.xlu0 %v2609, 2
      %v2723 = vpop.permute.xlu0 %2722
      %2724 = vrot.lane.b32.xlu0 %v2621, 2
      %v2725 = vpop.permute.xlu0 %2724
      %2726 = vrot.lane.b32.xlu0 %v2633, 2
      %v2727 = vpop.permute.xlu0 %2726
      %2728 = vrot.lane.b32.xlu0 %v2645, 2
      %v2729 = vpop.permute.xlu0 %2728
      %2730 = vrot.lane.b32.xlu0 %v2657, 2
      %v2731 = vpop.permute.xlu0 %2730
      %2732 = vrot.lane.b32.xlu0 %v2669, 2
      %v2733 = vpop.permute.xlu0 %2732
      %v2766 = vunpack.c.l.b16 %v1740
      %v2767 = vunpack.c.l.b16 %v1741
      %v2768 = vunpack.c.l.b16 %v1742
      %v2769 = vunpack.c.l.b16 %v1743
      %v2770 = vunpack.c.l.b16 %v1744
      %v2771 = vunpack.c.l.b16 %v1745
      %v2772 = vunpack.c.l.b16 %v1746
      %v2773 = vunpack.c.l.b16 %v1747
      %v2774 = vunpack.c.l.b16 %v1748
      %v2775 = vunpack.c.l.b16 %v1749
      %v2776 = vunpack.c.l.b16 %v1750
      %v2777 = vunpack.c.l.b16 %v1751
      %v2778 = vunpack.c.l.b16 %v1752
      %v2779 = vunpack.c.l.b16 %v1753
      %v2780 = vunpack.c.l.b16 %v1754
      %v2781 = vunpack.c.l.b16 %v1755
      %v2782 = vunpack.c.l.b16 %v1756
      %v2783 = vunpack.c.l.b16 %v1757
      %v2784 = vunpack.c.l.b16 %v1758
      %v2785 = vunpack.c.l.b16 %v1759
      %v2786 = vunpack.c.l.b16 %v1760
      %v2787 = vunpack.c.l.b16 %v1761
      %v2788 = vunpack.c.l.b16 %v1762
      %v2789 = vunpack.c.l.b16 %v1763
      %v2790 = vunpack.c.l.b16 %v1764
      %v2791 = vunpack.c.l.b16 %v1765
      %v2792 = vunpack.c.l.b16 %v1766
      %v2793 = vunpack.c.l.b16 %v1767
      %v2794 = vunpack.c.l.b16 %v1768
      %v2795 = vunpack.c.l.b16 %v1769
      %v2796 = vunpack.c.l.b16 %v1770
      %v2797 = vunpack.c.l.b16 %v1771
      %v2798 = vpack.c.b16 %v2094, %v2766
      %v2799 = vpack.c.b16 %v2096, %v2767
      %v2800 = vpack.c.b16 %v2098, %v2768
      %v2801 = vpack.c.b16 %v2100, %v2769
      %v2802 = vpack.c.b16 %v2102, %v2770
      %v2803 = vpack.c.b16 %v2104, %v2771
      %v2804 = vpack.c.b16 %v2106, %v2772
      %v2805 = vpack.c.b16 %v2108, %v2773
      %v2806 = vpack.c.b16 %v2110, %v2774
      %v2807 = vpack.c.b16 %v2112, %v2775
      %v2808 = vpack.c.b16 %v2114, %v2776
      %v2809 = vpack.c.b16 %v2116, %v2777
      %v2810 = vpack.c.b16 %v2118, %v2778
      %v2811 = vpack.c.b16 %v2120, %v2779
      %v2812 = vpack.c.b16 %v2122, %v2780
      %v2813 = vpack.c.b16 %v2124, %v2781
      %v2814 = vpack.c.b16 %v2126, %v2782
      %v2815 = vpack.c.b16 %v2128, %v2783
      %v2816 = vpack.c.b16 %v2130, %v2784
      %v2817 = vpack.c.b16 %v2132, %v2785
      %v2818 = vpack.c.b16 %v2134, %v2786
      %v2819 = vpack.c.b16 %v2136, %v2787
      %v2820 = vpack.c.b16 %v2138, %v2788
      %v2821 = vpack.c.b16 %v2140, %v2789
      %v2822 = vpack.c.b16 %v2142, %v2790
      %v2823 = vpack.c.b16 %v2144, %v2791
      %v2824 = vpack.c.b16 %v2146, %v2792
      %v2825 = vpack.c.b16 %v2148, %v2793
      %v2826 = vpack.c.b16 %v2150, %v2794
      %v2827 = vpack.c.b16 %v2152, %v2795
      %v2828 = vpack.c.b16 %v2154, %v2796
      %v2829 = vpack.c.b16 %v2156, %v2797
      %vm2830 = vcmask 1046528
      %v2831 = vrot.slane %v2798, 1
      %v2832 = vrot.slane %v2253, 1
      %v2833 = vsel %vm2830, %v2831, %v2832
      %v2834 = vrot.slane %v2799, 1
      %v2835 = vrot.slane %v2254, 1
      %v2836 = vsel %vm2830, %v2834, %v2835
      %v2837 = vrot.slane %v2800, 1
      %v2838 = vrot.slane %v2255, 1
      %v2839 = vsel %vm2830, %v2837, %v2838
      %v2840 = vrot.slane %v2801, 1
      %v2841 = vrot.slane %v2256, 1
      %v2842 = vsel %vm2830, %v2840, %v2841
      %v2843 = vrot.slane %v2802, 1
      %v2844 = vrot.slane %v2257, 1
      %v2845 = vsel %vm2830, %v2843, %v2844
      %v2846 = vrot.slane %v2803, 1
      %v2847 = vrot.slane %v2258, 1
      %v2848 = vsel %vm2830, %v2846, %v2847
      %v2849 = vrot.slane %v2804, 1
      %v2850 = vrot.slane %v2259, 1
      %v2851 = vsel %vm2830, %v2849, %v2850
      %v2852 = vrot.slane %v2805, 1
      %v2853 = vrot.slane %v2260, 1
      %v2854 = vsel %vm2830, %v2852, %v2853
      %v2855 = vrot.slane %v2806, 1
      %v2856 = vrot.slane %v2261, 1
      %v2857 = vsel %vm2830, %v2855, %v2856
      %v2858 = vrot.slane %v2807, 1
      %v2859 = vrot.slane %v2262, 1
      %v2860 = vsel %vm2830, %v2858, %v2859
      %v2861 = vrot.slane %v2808, 1
      %v2862 = vrot.slane %v2263, 1
      %v2863 = vsel %vm2830, %v2861, %v2862
      %v2864 = vrot.slane %v2809, 1
      %v2865 = vrot.slane %v2264, 1
      %v2866 = vsel %vm2830, %v2864, %v2865
      %v2867 = vrot.slane %v2810, 1
      %v2868 = vrot.slane %v2265, 1
      %v2869 = vsel %vm2830, %v2867, %v2868
      %v2870 = vrot.slane %v2811, 1
      %v2871 = vrot.slane %v2266, 1
      %v2872 = vsel %vm2830, %v2870, %v2871
      %v2873 = vrot.slane %v2812, 1
      %v2874 = vrot.slane %v2267, 1
      %v2875 = vsel %vm2830, %v2873, %v2874
      %v2876 = vrot.slane %v2813, 1
      %v2877 = vrot.slane %v2268, 1
      %v2878 = vsel %vm2830, %v2876, %v2877
      %v2879 = vrot.slane %v2814, 1
      %v2880 = vrot.slane %v2269, 1
      %v2881 = vsel %vm2830, %v2879, %v2880
      %v2882 = vrot.slane %v2815, 1
      %v2883 = vrot.slane %v2270, 1
      %v2884 = vsel %vm2830, %v2882, %v2883
      %v2885 = vrot.slane %v2816, 1
      %v2886 = vrot.slane %v2271, 1
      %v2887 = vsel %vm2830, %v2885, %v2886
      %v2888 = vrot.slane %v2817, 1
      %v2889 = vrot.slane %v2272, 1
      %v2890 = vsel %vm2830, %v2888, %v2889
      %v2891 = vrot.slane %v2818, 1
      %v2892 = vrot.slane %v2273, 1
      %v2893 = vsel %vm2830, %v2891, %v2892
      %v2894 = vrot.slane %v2819, 1
      %v2895 = vrot.slane %v2274, 1
      %v2896 = vsel %vm2830, %v2894, %v2895
      %v2897 = vrot.slane %v2820, 1
      %v2898 = vrot.slane %v2275, 1
      %v2899 = vsel %vm2830, %v2897, %v2898
      %v2900 = vrot.slane %v2821, 1
      %v2901 = vrot.slane %v2276, 1
      %v2902 = vsel %vm2830, %v2900, %v2901
      %v2903 = vrot.slane %v2822, 1
      %v2904 = vrot.slane %v2277, 1
      %v2905 = vsel %vm2830, %v2903, %v2904
      %v2906 = vrot.slane %v2823, 1
      %v2907 = vrot.slane %v2278, 1
      %v2908 = vsel %vm2830, %v2906, %v2907
      %v2909 = vrot.slane %v2824, 1
      %v2910 = vrot.slane %v2279, 1
      %v2911 = vsel %vm2830, %v2909, %v2910
      %v2912 = vrot.slane %v2825, 1
      %v2913 = vrot.slane %v2280, 1
      %v2914 = vsel %vm2830, %v2912, %v2913
      %v2915 = vrot.slane %v2826, 1
      %v2916 = vrot.slane %v2281, 1
      %v2917 = vsel %vm2830, %v2915, %v2916
      %v2918 = vrot.slane %v2827, 1
      %v2919 = vrot.slane %v2282, 1
      %v2920 = vsel %vm2830, %v2918, %v2919
      %v2921 = vrot.slane %v2828, 1
      %v2922 = vrot.slane %v2283, 1
      %v2923 = vsel %vm2830, %v2921, %v2922
      %v2924 = vrot.slane %v2829, 1
      %v2925 = vrot.slane %v2284, 1
      %v2926 = vsel %vm2830, %v2924, %v2925
      %2927 = vrot.lane.b32.xlu0 %v2833, 4
      %v2928 = vpop.permute.xlu0 %2927
      %2929 = vrot.lane.b32.xlu0 %v2836, 4
      %v2930 = vpop.permute.xlu0 %2929
      %2931 = vrot.lane.b32.xlu0 %v2839, 4
      %v2932 = vpop.permute.xlu0 %2931
      %2933 = vrot.lane.b32.xlu0 %v2842, 4
      %v2934 = vpop.permute.xlu0 %2933
      %2935 = vrot.lane.b32.xlu0 %v2845, 4
      %v2936 = vpop.permute.xlu0 %2935
      %2937 = vrot.lane.b32.xlu0 %v2848, 4
      %v2938 = vpop.permute.xlu0 %2937
      %2939 = vrot.lane.b32.xlu0 %v2851, 4
      %v2940 = vpop.permute.xlu0 %2939
      %2941 = vrot.lane.b32.xlu0 %v2854, 4
      %v2942 = vpop.permute.xlu0 %2941
      %2943 = vrot.lane.b32.xlu0 %v2857, 4
      %v2944 = vpop.permute.xlu0 %2943
      %2945 = vrot.lane.b32.xlu0 %v2860, 4
      %v2946 = vpop.permute.xlu0 %2945
      %2947 = vrot.lane.b32.xlu0 %v2863, 4
      %v2948 = vpop.permute.xlu0 %2947
      %2949 = vrot.lane.b32.xlu0 %v2866, 4
      %v2950 = vpop.permute.xlu0 %2949
      %2951 = vrot.lane.b32.xlu0 %v2869, 4
      %v2952 = vpop.permute.xlu0 %2951
      %2953 = vrot.lane.b32.xlu0 %v2872, 4
      %v2954 = vpop.permute.xlu0 %2953
      %2955 = vrot.lane.b32.xlu0 %v2875, 4
      %v2956 = vpop.permute.xlu0 %2955
      %2957 = vrot.lane.b32.xlu0 %v2878, 4
      %v2958 = vpop.permute.xlu0 %2957
      %2959 = vrot.lane.b32.xlu0 %v2881, 4
      %v2960 = vpop.permute.xlu0 %2959
      %2961 = vrot.lane.b32.xlu0 %v2884, 4
      %v2962 = vpop.permute.xlu0 %2961
      %2963 = vrot.lane.b32.xlu0 %v2887, 4
      %v2964 = vpop.permute.xlu0 %2963
      %2965 = vrot.lane.b32.xlu0 %v2890, 4
      %v2966 = vpop.permute.xlu0 %2965
      %2967 = vrot.lane.b32.xlu0 %v2893, 4
      %v2968 = vpop.permute.xlu0 %2967
      %2969 = vrot.lane.b32.xlu0 %v2896, 4
      %v2970 = vpop.permute.xlu0 %2969
      %2971 = vrot.lane.b32.xlu0 %v2899, 4
      %v2972 = vpop.permute.xlu0 %2971
      %2973 = vrot.lane.b32.xlu0 %v2902, 4
      %v2974 = vpop.permute.xlu0 %2973
      %2975 = vrot.lane.b32.xlu0 %v2905, 4
      %v2976 = vpop.permute.xlu0 %2975
      %2977 = vrot.lane.b32.xlu0 %v2908, 4
      %v2978 = vpop.permute.xlu0 %2977
      %2979 = vrot.lane.b32.xlu0 %v2911, 4
      %v2980 = vpop.permute.xlu0 %2979
      %2981 = vrot.lane.b32.xlu0 %v2914, 4
      %v2982 = vpop.permute.xlu0 %2981
      %2983 = vrot.lane.b32.xlu0 %v2917, 4
      %v2984 = vpop.permute.xlu0 %2983
      %2985 = vrot.lane.b32.xlu0 %v2920, 4
      %v2986 = vpop.permute.xlu0 %2985
      %2987 = vrot.lane.b32.xlu0 %v2923, 4
      %v2988 = vpop.permute.xlu0 %2987
      %2989 = vrot.lane.b32.xlu0 %v2926, 4
      %v2990 = vpop.permute.xlu0 %2989
      %v3055 = vunpack.c.l.b16 %v1772
      %v3056 = vunpack.c.l.b16 %v1773
      %v3057 = vunpack.c.l.b16 %v1774
      %v3058 = vunpack.c.l.b16 %v1775
      %v3059 = vunpack.c.l.b16 %v1776
      %v3060 = vunpack.c.l.b16 %v1777
      %v3061 = vunpack.c.l.b16 %v1778
      %v3062 = vunpack.c.l.b16 %v1779
      %v3063 = vunpack.c.l.b16 %v1780
      %v3064 = vunpack.c.l.b16 %v1781
      %v3065 = vunpack.c.l.b16 %v1782
      %v3066 = vunpack.c.l.b16 %v1783
      %v3067 = vunpack.c.l.b16 %v1784
      %v3068 = vunpack.c.l.b16 %v1785
      %v3069 = vunpack.c.l.b16 %v1786
      %v3070 = vunpack.c.l.b16 %v1787
      %v3071 = vunpack.c.l.b16 %v1788
      %v3072 = vunpack.c.l.b16 %v1789
      %v3073 = vunpack.c.l.b16 %v1790
      %v3074 = vunpack.c.l.b16 %v1791
      %v3075 = vunpack.c.l.b16 %v1792
      %v3076 = vunpack.c.l.b16 %v1793
      %v3077 = vunpack.c.l.b16 %v1794
      %v3078 = vunpack.c.l.b16 %v1795
      %v3079 = vunpack.c.l.b16 %v1796
      %v3080 = vunpack.c.l.b16 %v1797
      %v3081 = vunpack.c.l.b16 %v1798
      %v3082 = vunpack.c.l.b16 %v1799
      %v3083 = vunpack.c.l.b16 %v1800
      %v3084 = vunpack.c.l.b16 %v1801
      %v3085 = vunpack.c.l.b16 %v1802
      %v3086 = vunpack.c.l.b16 %v1803
      %v3087 = vunpack.c.l.b16 %v1804
      %v3088 = vunpack.c.l.b16 %v1805
      %v3089 = vunpack.c.l.b16 %v1806
      %v3090 = vunpack.c.l.b16 %v1807
      %v3091 = vunpack.c.l.b16 %v1808
      %v3092 = vunpack.c.l.b16 %v1809
      %v3093 = vunpack.c.l.b16 %v1810
      %v3094 = vunpack.c.l.b16 %v1811
      %v3095 = vunpack.c.l.b16 %v1812
      %v3096 = vunpack.c.l.b16 %v1813
      %v3097 = vunpack.c.l.b16 %v1814
      %v3098 = vunpack.c.l.b16 %v1815
      %v3099 = vunpack.c.l.b16 %v1816
      %v3100 = vunpack.c.l.b16 %v1817
      %v3101 = vunpack.c.l.b16 %v1818
      %v3102 = vunpack.c.l.b16 %v1819
      %v3103 = vunpack.c.l.b16 %v1820
      %v3104 = vunpack.c.l.b16 %v1821
      %v3105 = vunpack.c.l.b16 %v1822
      %v3106 = vunpack.c.l.b16 %v1823
      %v3107 = vunpack.c.l.b16 %v1824
      %v3108 = vunpack.c.l.b16 %v1825
      %v3109 = vunpack.c.l.b16 %v1826
      %v3110 = vunpack.c.l.b16 %v1827
      %v3111 = vunpack.c.l.b16 %v1828
      %v3112 = vunpack.c.l.b16 %v1829
      %v3113 = vunpack.c.l.b16 %v1830
      %v3114 = vunpack.c.l.b16 %v1831
      %v3115 = vunpack.c.l.b16 %v1832
      %v3116 = vunpack.c.l.b16 %v1833
      %v3117 = vunpack.c.l.b16 %v1834
      %v3118 = vunpack.c.l.b16 %v1835
      %v3119 = vpack.c.b16 %v3056, %v3055
      %v3120 = vpack.c.b16 %v3058, %v3057
      %v3121 = vpack.c.b16 %v3060, %v3059
      %v3122 = vpack.c.b16 %v3062, %v3061
      %v3123 = vpack.c.b16 %v3064, %v3063
      %v3124 = vpack.c.b16 %v3066, %v3065
      %v3125 = vpack.c.b16 %v3068, %v3067
      %v3126 = vpack.c.b16 %v3070, %v3069
      %v3127 = vpack.c.b16 %v3072, %v3071
      %v3128 = vpack.c.b16 %v3074, %v3073
      %v3129 = vpack.c.b16 %v3076, %v3075
      %v3130 = vpack.c.b16 %v3078, %v3077
      %v3131 = vpack.c.b16 %v3080, %v3079
      %v3132 = vpack.c.b16 %v3082, %v3081
      %v3133 = vpack.c.b16 %v3084, %v3083
      %v3134 = vpack.c.b16 %v3086, %v3085
      %v3135 = vpack.c.b16 %v3088, %v3087
      %v3136 = vpack.c.b16 %v3090, %v3089
      %v3137 = vpack.c.b16 %v3092, %v3091
      %v3138 = vpack.c.b16 %v3094, %v3093
      %v3139 = vpack.c.b16 %v3096, %v3095
      %v3140 = vpack.c.b16 %v3098, %v3097
      %v3141 = vpack.c.b16 %v3100, %v3099
      %v3142 = vpack.c.b16 %v3102, %v3101
      %v3143 = vpack.c.b16 %v3104, %v3103
      %v3144 = vpack.c.b16 %v3106, %v3105
      %v3145 = vpack.c.b16 %v3108, %v3107
      %v3146 = vpack.c.b16 %v3110, %v3109
      %v3147 = vpack.c.b16 %v3112, %v3111
      %v3148 = vpack.c.b16 %v3114, %v3113
      %v3149 = vpack.c.b16 %v3116, %v3115
      %v3150 = vpack.c.b16 %v3118, %v3117
      %3151 = vrot.lane.b32.xlu0 %v3119, 6
      %v3152 = vpop.permute.xlu0 %3151
      %3153 = vrot.lane.b32.xlu0 %v3120, 6
      %v3154 = vpop.permute.xlu0 %3153
      %3155 = vrot.lane.b32.xlu0 %v3121, 6
      %v3156 = vpop.permute.xlu0 %3155
      %3157 = vrot.lane.b32.xlu0 %v3122, 6
      %v3158 = vpop.permute.xlu0 %3157
      %3159 = vrot.lane.b32.xlu0 %v3123, 6
      %v3160 = vpop.permute.xlu0 %3159
      %3161 = vrot.lane.b32.xlu0 %v3124, 6
      %v3162 = vpop.permute.xlu0 %3161
      %3163 = vrot.lane.b32.xlu0 %v3125, 6
      %v3164 = vpop.permute.xlu0 %3163
      %3165 = vrot.lane.b32.xlu0 %v3126, 6
      %v3166 = vpop.permute.xlu0 %3165
      %3167 = vrot.lane.b32.xlu0 %v3127, 6
      %v3168 = vpop.permute.xlu0 %3167
      %3169 = vrot.lane.b32.xlu0 %v3128, 6
      %v3170 = vpop.permute.xlu0 %3169
      %3171 = vrot.lane.b32.xlu0 %v3129, 6
      %v3172 = vpop.permute.xlu0 %3171
      %3173 = vrot.lane.b32.xlu0 %v3130, 6
      %v3174 = vpop.permute.xlu0 %3173
      %3175 = vrot.lane.b32.xlu0 %v3131, 6
      %v3176 = vpop.permute.xlu0 %3175
      %3177 = vrot.lane.b32.xlu0 %v3132, 6
      %v3178 = vpop.permute.xlu0 %3177
      %3179 = vrot.lane.b32.xlu0 %v3133, 6
      %v3180 = vpop.permute.xlu0 %3179
      %3181 = vrot.lane.b32.xlu0 %v3134, 6
      %v3182 = vpop.permute.xlu0 %3181
      %3183 = vrot.lane.b32.xlu0 %v3135, 6
      %v3184 = vpop.permute.xlu0 %3183
      %3185 = vrot.lane.b32.xlu0 %v3136, 6
      %v3186 = vpop.permute.xlu0 %3185
      %3187 = vrot.lane.b32.xlu0 %v3137, 6
      %v3188 = vpop.permute.xlu0 %3187
      %3189 = vrot.lane.b32.xlu0 %v3138, 6
      %v3190 = vpop.permute.xlu0 %3189
      %3191 = vrot.lane.b32.xlu0 %v3139, 6
      %v3192 = vpop.permute.xlu0 %3191
      %3193 = vrot.lane.b32.xlu0 %v3140, 6
      %v3194 = vpop.permute.xlu0 %3193
      %3195 = vrot.lane.b32.xlu0 %v3141, 6
      %v3196 = vpop.permute.xlu0 %3195
      %3197 = vrot.lane.b32.xlu0 %v3142, 6
      %v3198 = vpop.permute.xlu0 %3197
      %3199 = vrot.lane.b32.xlu0 %v3143, 6
      %v3200 = vpop.permute.xlu0 %3199
      %3201 = vrot.lane.b32.xlu0 %v3144, 6
      %v3202 = vpop.permute.xlu0 %3201
      %3203 = vrot.lane.b32.xlu0 %v3145, 6
      %v3204 = vpop.permute.xlu0 %3203
      %3205 = vrot.lane.b32.xlu0 %v3146, 6
      %v3206 = vpop.permute.xlu0 %3205
      %3207 = vrot.lane.b32.xlu0 %v3147, 6
      %v3208 = vpop.permute.xlu0 %3207
      %3209 = vrot.lane.b32.xlu0 %v3148, 6
      %v3210 = vpop.permute.xlu0 %3209
      %3211 = vrot.lane.b32.xlu0 %v3149, 6
      %v3212 = vpop.permute.xlu0 %3211
      %3213 = vrot.lane.b32.xlu0 %v3150, 6
      %v3214 = vpop.permute.xlu0 %3213
      %v3247 = vunpack.c.l.b16 %v1836
      %v3248 = vunpack.c.l.b16 %v1837
      %v3249 = vunpack.c.l.b16 %v1838
      %v3250 = vunpack.c.l.b16 %v1839
      %v3251 = vunpack.c.l.b16 %v1840
      %v3252 = vunpack.c.l.b16 %v1841
      %v3253 = vunpack.c.l.b16 %v1842
      %v3254 = vunpack.c.l.b16 %v1843
      %v3255 = vunpack.c.l.b16 %v1844
      %v3256 = vunpack.c.l.b16 %v1845
      %v3257 = vunpack.c.l.b16 %v1846
      %v3258 = vunpack.c.l.b16 %v1847
      %v3259 = vunpack.c.l.b16 %v1848
      %v3260 = vunpack.c.l.b16 %v1849
      %v3261 = vunpack.c.l.b16 %v1850
      %v3262 = vunpack.c.l.b16 %v1851
      %v3263 = vunpack.c.l.b16 %v1852
      %v3264 = vunpack.c.l.b16 %v1853
      %v3265 = vunpack.c.l.b16 %v1854
      %v3266 = vunpack.c.l.b16 %v1855
      %v3267 = vunpack.c.l.b16 %v1856
      %v3268 = vunpack.c.l.b16 %v1857
      %v3269 = vunpack.c.l.b16 %v1858
      %v3270 = vunpack.c.l.b16 %v1859
      %v3271 = vunpack.c.l.b16 %v1860
      %v3272 = vunpack.c.l.b16 %v1861
      %v3273 = vunpack.c.l.b16 %v1862
      %v3274 = vunpack.c.l.b16 %v1863
      %v3275 = vunpack.c.l.b16 %v1864
      %v3276 = vunpack.c.l.b16 %v1865
      %v3277 = vunpack.c.l.b16 %v1866
      %v3278 = vunpack.c.l.b16 %v1867
      %v3279 = vpack.c.b16 %v3247, %v3247
      %v3280 = vpack.c.b16 %v3248, %v3248
      %v3281 = vpack.c.b16 %v3249, %v3249
      %v3282 = vpack.c.b16 %v3250, %v3250
      %v3283 = vpack.c.b16 %v3251, %v3251
      %v3284 = vpack.c.b16 %v3252, %v3252
      %v3285 = vpack.c.b16 %v3253, %v3253
      %v3286 = vpack.c.b16 %v3254, %v3254
      %v3287 = vpack.c.b16 %v3255, %v3255
      %v3288 = vpack.c.b16 %v3256, %v3256
      %v3289 = vpack.c.b16 %v3257, %v3257
      %v3290 = vpack.c.b16 %v3258, %v3258
      %v3291 = vpack.c.b16 %v3259, %v3259
      %v3292 = vpack.c.b16 %v3260, %v3260
      %v3293 = vpack.c.b16 %v3261, %v3261
      %v3294 = vpack.c.b16 %v3262, %v3262
      %v3295 = vpack.c.b16 %v3263, %v3263
      %v3296 = vpack.c.b16 %v3264, %v3264
      %v3297 = vpack.c.b16 %v3265, %v3265
      %v3298 = vpack.c.b16 %v3266, %v3266
      %v3299 = vpack.c.b16 %v3267, %v3267
      %v3300 = vpack.c.b16 %v3268, %v3268
      %v3301 = vpack.c.b16 %v3269, %v3269
      %v3302 = vpack.c.b16 %v3270, %v3270
      %v3303 = vpack.c.b16 %v3271, %v3271
      %v3304 = vpack.c.b16 %v3272, %v3272
      %v3305 = vpack.c.b16 %v3273, %v3273
      %v3306 = vpack.c.b16 %v3274, %v3274
      %v3307 = vpack.c.b16 %v3275, %v3275
      %v3308 = vpack.c.b16 %v3276, %v3276
      %v3309 = vpack.c.b16 %v3277, %v3277
      %v3310 = vpack.c.b16 %v3278, %v3278
      %v3312 = vshrl.u32 %v3119, 16
      %v3314 = vshll.u32 %v3119, 16
      %v3316 = vrot.slane %v3314, 1
      %v3317 = vor.u32 %v3312, %v3316
      %v3319 = vshll.u32 %v3279, 16
      %v3321 = vrot.slane %v3319, 1
      %v3322 = vsel %vm2285, %v3317, %v3321
      %v3324 = vshrl.u32 %v3120, 16
      %v3326 = vshll.u32 %v3120, 16
      %v3328 = vrot.slane %v3326, 1
      %v3329 = vor.u32 %v3324, %v3328
      %v3331 = vshll.u32 %v3280, 16
      %v3333 = vrot.slane %v3331, 1
      %v3334 = vsel %vm2285, %v3329, %v3333
      %v3336 = vshrl.u32 %v3121, 16
      %v3338 = vshll.u32 %v3121, 16
      %v3340 = vrot.slane %v3338, 1
      %v3341 = vor.u32 %v3336, %v3340
      %v3343 = vshll.u32 %v3281, 16
      %v3345 = vrot.slane %v3343, 1
      %v3346 = vsel %vm2285, %v3341, %v3345
      %v3348 = vshrl.u32 %v3122, 16
      %v3350 = vshll.u32 %v3122, 16
      %v3352 = vrot.slane %v3350, 1
      %v3353 = vor.u32 %v3348, %v3352
      %v3355 = vshll.u32 %v3282, 16
      %v3357 = vrot.slane %v3355, 1
      %v3358 = vsel %vm2285, %v3353, %v3357
      %v3360 = vshrl.u32 %v3123, 16
      %v3362 = vshll.u32 %v3123, 16
      %v3364 = vrot.slane %v3362, 1
      %v3365 = vor.u32 %v3360, %v3364
      %v3367 = vshll.u32 %v3283, 16
      %v3369 = vrot.slane %v3367, 1
      %v3370 = vsel %vm2285, %v3365, %v3369
      %v3372 = vshrl.u32 %v3124, 16
      %v3374 = vshll.u32 %v3124, 16
      %v3376 = vrot.slane %v3374, 1
      %v3377 = vor.u32 %v3372, %v3376
      %v3379 = vshll.u32 %v3284, 16
      %v3381 = vrot.slane %v3379, 1
      %v3382 = vsel %vm2285, %v3377, %v3381
      %v3384 = vshrl.u32 %v3125, 16
      %v3386 = vshll.u32 %v3125, 16
      %v3388 = vrot.slane %v3386, 1
      %v3389 = vor.u32 %v3384, %v3388
      %v3391 = vshll.u32 %v3285, 16
      %v3393 = vrot.slane %v3391, 1
      %v3394 = vsel %vm2285, %v3389, %v3393
      %v3396 = vshrl.u32 %v3126, 16
      %v3398 = vshll.u32 %v3126, 16
      %v3400 = vrot.slane %v3398, 1
      %v3401 = vor.u32 %v3396, %v3400
      %v3403 = vshll.u32 %v3286, 16
      %v3405 = vrot.slane %v3403, 1
      %v3406 = vsel %vm2285, %v3401, %v3405
      %v3408 = vshrl.u32 %v3127, 16
      %v3410 = vshll.u32 %v3127, 16
      %v3412 = vrot.slane %v3410, 1
      %v3413 = vor.u32 %v3408, %v3412
      %v3415 = vshll.u32 %v3287, 16
      %v3417 = vrot.slane %v3415, 1
      %v3418 = vsel %vm2285, %v3413, %v3417
      %v3420 = vshrl.u32 %v3128, 16
      %v3422 = vshll.u32 %v3128, 16
      %v3424 = vrot.slane %v3422, 1
      %v3425 = vor.u32 %v3420, %v3424
      %v3427 = vshll.u32 %v3288, 16
      %v3429 = vrot.slane %v3427, 1
      %v3430 = vsel %vm2285, %v3425, %v3429
      %v3432 = vshrl.u32 %v3129, 16
      %v3434 = vshll.u32 %v3129, 16
      %v3436 = vrot.slane %v3434, 1
      %v3437 = vor.u32 %v3432, %v3436
      %v3439 = vshll.u32 %v3289, 16
      %v3441 = vrot.slane %v3439, 1
      %v3442 = vsel %vm2285, %v3437, %v3441
      %v3444 = vshrl.u32 %v3130, 16
      %v3446 = vshll.u32 %v3130, 16
      %v3448 = vrot.slane %v3446, 1
      %v3449 = vor.u32 %v3444, %v3448
      %v3451 = vshll.u32 %v3290, 16
      %v3453 = vrot.slane %v3451, 1
      %v3454 = vsel %vm2285, %v3449, %v3453
      %v3456 = vshrl.u32 %v3131, 16
      %v3458 = vshll.u32 %v3131, 16
      %v3460 = vrot.slane %v3458, 1
      %v3461 = vor.u32 %v3456, %v3460
      %v3463 = vshll.u32 %v3291, 16
      %v3465 = vrot.slane %v3463, 1
      %v3466 = vsel %vm2285, %v3461, %v3465
      %v3468 = vshrl.u32 %v3132, 16
      %v3470 = vshll.u32 %v3132, 16
      %v3472 = vrot.slane %v3470, 1
      %v3473 = vor.u32 %v3468, %v3472
      %v3475 = vshll.u32 %v3292, 16
      %v3477 = vrot.slane %v3475, 1
      %v3478 = vsel %vm2285, %v3473, %v3477
      %v3480 = vshrl.u32 %v3133, 16
      %v3482 = vshll.u32 %v3133, 16
      %v3484 = vrot.slane %v3482, 1
      %v3485 = vor.u32 %v3480, %v3484
      %v3487 = vshll.u32 %v3293, 16
      %v3489 = vrot.slane %v3487, 1
      %v3490 = vsel %vm2285, %v3485, %v3489
      %v3492 = vshrl.u32 %v3134, 16
      %v3494 = vshll.u32 %v3134, 16
      %v3496 = vrot.slane %v3494, 1
      %v3497 = vor.u32 %v3492, %v3496
      %v3499 = vshll.u32 %v3294, 16
      %v3501 = vrot.slane %v3499, 1
      %v3502 = vsel %vm2285, %v3497, %v3501
      %v3504 = vshrl.u32 %v3135, 16
      %v3506 = vshll.u32 %v3135, 16
      %v3508 = vrot.slane %v3506, 1
      %v3509 = vor.u32 %v3504, %v3508
      %v3511 = vshll.u32 %v3295, 16
      %v3513 = vrot.slane %v3511, 1
      %v3514 = vsel %vm2285, %v3509, %v3513
      %v3516 = vshrl.u32 %v3136, 16
      %v3518 = vshll.u32 %v3136, 16
      %v3520 = vrot.slane %v3518, 1
      %v3521 = vor.u32 %v3516, %v3520
      %v3523 = vshll.u32 %v3296, 16
      %v3525 = vrot.slane %v3523, 1
      %v3526 = vsel %vm2285, %v3521, %v3525
      %v3528 = vshrl.u32 %v3137, 16
      %v3530 = vshll.u32 %v3137, 16
      %v3532 = vrot.slane %v3530, 1
      %v3533 = vor.u32 %v3528, %v3532
      %v3535 = vshll.u32 %v3297, 16
      %v3537 = vrot.slane %v3535, 1
      %v3538 = vsel %vm2285, %v3533, %v3537
      %v3540 = vshrl.u32 %v3138, 16
      %v3542 = vshll.u32 %v3138, 16
      %v3544 = vrot.slane %v3542, 1
      %v3545 = vor.u32 %v3540, %v3544
      %v3547 = vshll.u32 %v3298, 16
      %v3549 = vrot.slane %v3547, 1
      %v3550 = vsel %vm2285, %v3545, %v3549
      %v3552 = vshrl.u32 %v3139, 16
      %v3554 = vshll.u32 %v3139, 16
      %v3556 = vrot.slane %v3554, 1
      %v3557 = vor.u32 %v3552, %v3556
      %v3559 = vshll.u32 %v3299, 16
      %v3561 = vrot.slane %v3559, 1
      %v3562 = vsel %vm2285, %v3557, %v3561
      %v3564 = vshrl.u32 %v3140, 16
      %v3566 = vshll.u32 %v3140, 16
      %v3568 = vrot.slane %v3566, 1
      %v3569 = vor.u32 %v3564, %v3568
      %v3571 = vshll.u32 %v3300, 16
      %v3573 = vrot.slane %v3571, 1
      %v3574 = vsel %vm2285, %v3569, %v3573
      %v3576 = vshrl.u32 %v3141, 16
      %v3578 = vshll.u32 %v3141, 16
      %v3580 = vrot.slane %v3578, 1
      %v3581 = vor.u32 %v3576, %v3580
      %v3583 = vshll.u32 %v3301, 16
      %v3585 = vrot.slane %v3583, 1
      %v3586 = vsel %vm2285, %v3581, %v3585
      %v3588 = vshrl.u32 %v3142, 16
      %v3590 = vshll.u32 %v3142, 16
      %v3592 = vrot.slane %v3590, 1
      %v3593 = vor.u32 %v3588, %v3592
      %v3595 = vshll.u32 %v3302, 16
      %v3597 = vrot.slane %v3595, 1
      %v3598 = vsel %vm2285, %v3593, %v3597
      %v3600 = vshrl.u32 %v3143, 16
      %v3602 = vshll.u32 %v3143, 16
      %v3604 = vrot.slane %v3602, 1
      %v3605 = vor.u32 %v3600, %v3604
      %v3607 = vshll.u32 %v3303, 16
      %v3609 = vrot.slane %v3607, 1
      %v3610 = vsel %vm2285, %v3605, %v3609
      %v3612 = vshrl.u32 %v3144, 16
      %v3614 = vshll.u32 %v3144, 16
      %v3616 = vrot.slane %v3614, 1
      %v3617 = vor.u32 %v3612, %v3616
      %v3619 = vshll.u32 %v3304, 16
      %v3621 = vrot.slane %v3619, 1
      %v3622 = vsel %vm2285, %v3617, %v3621
      %v3624 = vshrl.u32 %v3145, 16
      %v3626 = vshll.u32 %v3145, 16
      %v3628 = vrot.slane %v3626, 1
      %v3629 = vor.u32 %v3624, %v3628
      %v3631 = vshll.u32 %v3305, 16
      %v3633 = vrot.slane %v3631, 1
      %v3634 = vsel %vm2285, %v3629, %v3633
      %v3636 = vshrl.u32 %v3146, 16
      %v3638 = vshll.u32 %v3146, 16
      %v3640 = vrot.slane %v3638, 1
      %v3641 = vor.u32 %v3636, %v3640
      %v3643 = vshll.u32 %v3306, 16
      %v3645 = vrot.slane %v3643, 1
      %v3646 = vsel %vm2285, %v3641, %v3645
      %v3648 = vshrl.u32 %v3147, 16
      %v3650 = vshll.u32 %v3147, 16
      %v3652 = vrot.slane %v3650, 1
      %v3653 = vor.u32 %v3648, %v3652
      %v3655 = vshll.u32 %v3307, 16
      %v3657 = vrot.slane %v3655, 1
      %v3658 = vsel %vm2285, %v3653, %v3657
      %v3660 = vshrl.u32 %v3148, 16
      %v3662 = vshll.u32 %v3148, 16
      %v3664 = vrot.slane %v3662, 1
      %v3665 = vor.u32 %v3660, %v3664
      %v3667 = vshll.u32 %v3308, 16
      %v3669 = vrot.slane %v3667, 1
      %v3670 = vsel %vm2285, %v3665, %v3669
      %v3672 = vshrl.u32 %v3149, 16
      %v3674 = vshll.u32 %v3149, 16
      %v3676 = vrot.slane %v3674, 1
      %v3677 = vor.u32 %v3672, %v3676
      %v3679 = vshll.u32 %v3309, 16
      %v3681 = vrot.slane %v3679, 1
      %v3682 = vsel %vm2285, %v3677, %v3681
      %v3684 = vshrl.u32 %v3150, 16
      %v3686 = vshll.u32 %v3150, 16
      %v3688 = vrot.slane %v3686, 1
      %v3689 = vor.u32 %v3684, %v3688
      %v3691 = vshll.u32 %v3310, 16
      %v3693 = vrot.slane %v3691, 1
      %v3694 = vsel %vm2285, %v3689, %v3693
      %3695 = vrot.lane.b32.xlu0 %v3322, 8
      %v3696 = vpop.permute.xlu0 %3695
      %3697 = vrot.lane.b32.xlu0 %v3334, 8
      %v3698 = vpop.permute.xlu0 %3697
      %3699 = vrot.lane.b32.xlu0 %v3346, 8
      %v3700 = vpop.permute.xlu0 %3699
      %3701 = vrot.lane.b32.xlu0 %v3358, 8
      %v3702 = vpop.permute.xlu0 %3701
      %3703 = vrot.lane.b32.xlu0 %v3370, 8
      %v3704 = vpop.permute.xlu0 %3703
      %3705 = vrot.lane.b32.xlu0 %v3382, 8
      %v3706 = vpop.permute.xlu0 %3705
      %3707 = vrot.lane.b32.xlu0 %v3394, 8
      %v3708 = vpop.permute.xlu0 %3707
      %3709 = vrot.lane.b32.xlu0 %v3406, 8
      %v3710 = vpop.permute.xlu0 %3709
      %3711 = vrot.lane.b32.xlu0 %v3418, 8
      %v3712 = vpop.permute.xlu0 %3711
      %3713 = vrot.lane.b32.xlu0 %v3430, 8
      %v3714 = vpop.permute.xlu0 %3713
      %3715 = vrot.lane.b32.xlu0 %v3442, 8
      %v3716 = vpop.permute.xlu0 %3715
      %3717 = vrot.lane.b32.xlu0 %v3454, 8
      %v3718 = vpop.permute.xlu0 %3717
      %3719 = vrot.lane.b32.xlu0 %v3466, 8
      %v3720 = vpop.permute.xlu0 %3719
      %3721 = vrot.lane.b32.xlu0 %v3478, 8
      %v3722 = vpop.permute.xlu0 %3721
      %3723 = vrot.lane.b32.xlu0 %v3490, 8
      %v3724 = vpop.permute.xlu0 %3723
      %3725 = vrot.lane.b32.xlu0 %v3502, 8
      %v3726 = vpop.permute.xlu0 %3725
      %3727 = vrot.lane.b32.xlu0 %v3514, 8
      %v3728 = vpop.permute.xlu0 %3727
      %3729 = vrot.lane.b32.xlu0 %v3526, 8
      %v3730 = vpop.permute.xlu0 %3729
      %3731 = vrot.lane.b32.xlu0 %v3538, 8
      %v3732 = vpop.permute.xlu0 %3731
      %3733 = vrot.lane.b32.xlu0 %v3550, 8
      %v3734 = vpop.permute.xlu0 %3733
      %3735 = vrot.lane.b32.xlu0 %v3562, 8
      %v3736 = vpop.permute.xlu0 %3735
      %3737 = vrot.lane.b32.xlu0 %v3574, 8
      %v3738 = vpop.permute.xlu0 %3737
      %3739 = vrot.lane.b32.xlu0 %v3586, 8
      %v3740 = vpop.permute.xlu0 %3739
      %3741 = vrot.lane.b32.xlu0 %v3598, 8
      %v3742 = vpop.permute.xlu0 %3741
      %3743 = vrot.lane.b32.xlu0 %v3610, 8
      %v3744 = vpop.permute.xlu0 %3743
      %3745 = vrot.lane.b32.xlu0 %v3622, 8
      %v3746 = vpop.permute.xlu0 %3745
      %3747 = vrot.lane.b32.xlu0 %v3634, 8
      %v3748 = vpop.permute.xlu0 %3747
      %3749 = vrot.lane.b32.xlu0 %v3646, 8
      %v3750 = vpop.permute.xlu0 %3749
      %3751 = vrot.lane.b32.xlu0 %v3658, 8
      %v3752 = vpop.permute.xlu0 %3751
      %3753 = vrot.lane.b32.xlu0 %v3670, 8
      %v3754 = vpop.permute.xlu0 %3753
      %3755 = vrot.lane.b32.xlu0 %v3682, 8
      %v3756 = vpop.permute.xlu0 %3755
      %3757 = vrot.lane.b32.xlu0 %v3694, 8
      %v3758 = vpop.permute.xlu0 %3757
      %v3791 = vunpack.c.l.b16 %v1868
      %v3792 = vunpack.c.l.b16 %v1869
      %v3793 = vunpack.c.l.b16 %v1870
      %v3794 = vunpack.c.l.b16 %v1871
      %v3795 = vunpack.c.l.b16 %v1872
      %v3796 = vunpack.c.l.b16 %v1873
      %v3797 = vunpack.c.l.b16 %v1874
      %v3798 = vunpack.c.l.b16 %v1875
      %v3799 = vunpack.c.l.b16 %v1876
      %v3800 = vunpack.c.l.b16 %v1877
      %v3801 = vunpack.c.l.b16 %v1878
      %v3802 = vunpack.c.l.b16 %v1879
      %v3803 = vunpack.c.l.b16 %v1880
      %v3804 = vunpack.c.l.b16 %v1881
      %v3805 = vunpack.c.l.b16 %v1882
      %v3806 = vunpack.c.l.b16 %v1883
      %v3807 = vunpack.c.l.b16 %v1884
      %v3808 = vunpack.c.l.b16 %v1885
      %v3809 = vunpack.c.l.b16 %v1886
      %v3810 = vunpack.c.l.b16 %v1887
      %v3811 = vunpack.c.l.b16 %v1888
      %v3812 = vunpack.c.l.b16 %v1889
      %v3813 = vunpack.c.l.b16 %v1890
      %v3814 = vunpack.c.l.b16 %v1891
      %v3815 = vunpack.c.l.b16 %v1892
      %v3816 = vunpack.c.l.b16 %v1893
      %v3817 = vunpack.c.l.b16 %v1894
      %v3818 = vunpack.c.l.b16 %v1895
      %v3819 = vunpack.c.l.b16 %v1896
      %v3820 = vunpack.c.l.b16 %v1897
      %v3821 = vunpack.c.l.b16 %v1898
      %v3822 = vunpack.c.l.b16 %v1899
      %v3823 = vpack.c.b16 %v3056, %v3791
      %v3824 = vpack.c.b16 %v3058, %v3792
      %v3825 = vpack.c.b16 %v3060, %v3793
      %v3826 = vpack.c.b16 %v3062, %v3794
      %v3827 = vpack.c.b16 %v3064, %v3795
      %v3828 = vpack.c.b16 %v3066, %v3796
      %v3829 = vpack.c.b16 %v3068, %v3797
      %v3830 = vpack.c.b16 %v3070, %v3798
      %v3831 = vpack.c.b16 %v3072, %v3799
      %v3832 = vpack.c.b16 %v3074, %v3800
      %v3833 = vpack.c.b16 %v3076, %v3801
      %v3834 = vpack.c.b16 %v3078, %v3802
      %v3835 = vpack.c.b16 %v3080, %v3803
      %v3836 = vpack.c.b16 %v3082, %v3804
      %v3837 = vpack.c.b16 %v3084, %v3805
      %v3838 = vpack.c.b16 %v3086, %v3806
      %v3839 = vpack.c.b16 %v3088, %v3807
      %v3840 = vpack.c.b16 %v3090, %v3808
      %v3841 = vpack.c.b16 %v3092, %v3809
      %v3842 = vpack.c.b16 %v3094, %v3810
      %v3843 = vpack.c.b16 %v3096, %v3811
      %v3844 = vpack.c.b16 %v3098, %v3812
      %v3845 = vpack.c.b16 %v3100, %v3813
      %v3846 = vpack.c.b16 %v3102, %v3814
      %v3847 = vpack.c.b16 %v3104, %v3815
      %v3848 = vpack.c.b16 %v3106, %v3816
      %v3849 = vpack.c.b16 %v3108, %v3817
      %v3850 = vpack.c.b16 %v3110, %v3818
      %v3851 = vpack.c.b16 %v3112, %v3819
      %v3852 = vpack.c.b16 %v3114, %v3820
      %v3853 = vpack.c.b16 %v3116, %v3821
      %v3854 = vpack.c.b16 %v3118, %v3822
      %v3855 = vrot.slane %v3823, 1
      %v3856 = vrot.slane %v3279, 1
      %v3857 = vsel %vm2830, %v3855, %v3856
      %v3858 = vrot.slane %v3824, 1
      %v3859 = vrot.slane %v3280, 1
      %v3860 = vsel %vm2830, %v3858, %v3859
      %v3861 = vrot.slane %v3825, 1
      %v3862 = vrot.slane %v3281, 1
      %v3863 = vsel %vm2830, %v3861, %v3862
      %v3864 = vrot.slane %v3826, 1
      %v3865 = vrot.slane %v3282, 1
      %v3866 = vsel %vm2830, %v3864, %v3865
      %v3867 = vrot.slane %v3827, 1
      %v3868 = vrot.slane %v3283, 1
      %v3869 = vsel %vm2830, %v3867, %v3868
      %v3870 = vrot.slane %v3828, 1
      %v3871 = vrot.slane %v3284, 1
      %v3872 = vsel %vm2830, %v3870, %v3871
      %v3873 = vrot.slane %v3829, 1
      %v3874 = vrot.slane %v3285, 1
      %v3875 = vsel %vm2830, %v3873, %v3874
      %v3876 = vrot.slane %v3830, 1
      %v3877 = vrot.slane %v3286, 1
      %v3878 = vsel %vm2830, %v3876, %v3877
      %v3879 = vrot.slane %v3831, 1
      %v3880 = vrot.slane %v3287, 1
      %v3881 = vsel %vm2830, %v3879, %v3880
      %v3882 = vrot.slane %v3832, 1
      %v3883 = vrot.slane %v3288, 1
      %v3884 = vsel %vm2830, %v3882, %v3883
      %v3885 = vrot.slane %v3833, 1
      %v3886 = vrot.slane %v3289, 1
      %v3887 = vsel %vm2830, %v3885, %v3886
      %v3888 = vrot.slane %v3834, 1
      %v3889 = vrot.slane %v3290, 1
      %v3890 = vsel %vm2830, %v3888, %v3889
      %v3891 = vrot.slane %v3835, 1
      %v3892 = vrot.slane %v3291, 1
      %v3893 = vsel %vm2830, %v3891, %v3892
      %v3894 = vrot.slane %v3836, 1
      %v3895 = vrot.slane %v3292, 1
      %v3896 = vsel %vm2830, %v3894, %v3895
      %v3897 = vrot.slane %v3837, 1
      %v3898 = vrot.slane %v3293, 1
      %v3899 = vsel %vm2830, %v3897, %v3898
      %v3900 = vrot.slane %v3838, 1
      %v3901 = vrot.slane %v3294, 1
      %v3902 = vsel %vm2830, %v3900, %v3901
      %v3903 = vrot.slane %v3839, 1
      %v3904 = vrot.slane %v3295, 1
      %v3905 = vsel %vm2830, %v3903, %v3904
      %v3906 = vrot.slane %v3840, 1
      %v3907 = vrot.slane %v3296, 1
      %v3908 = vsel %vm2830, %v3906, %v3907
      %v3909 = vrot.slane %v3841, 1
      %v3910 = vrot.slane %v3297, 1
      %v3911 = vsel %vm2830, %v3909, %v3910
      %v3912 = vrot.slane %v3842, 1
      %v3913 = vrot.slane %v3298, 1
      %v3914 = vsel %vm2830, %v3912, %v3913
      %v3915 = vrot.slane %v3843, 1
      %v3916 = vrot.slane %v3299, 1
      %v3917 = vsel %vm2830, %v3915, %v3916
      %v3918 = vrot.slane %v3844, 1
      %v3919 = vrot.slane %v3300, 1
      %v3920 = vsel %vm2830, %v3918, %v3919
      %v3921 = vrot.slane %v3845, 1
      %v3922 = vrot.slane %v3301, 1
      %v3923 = vsel %vm2830, %v3921, %v3922
      %v3924 = vrot.slane %v3846, 1
      %v3925 = vrot.slane %v3302, 1
      %v3926 = vsel %vm2830, %v3924, %v3925
      %v3927 = vrot.slane %v3847, 1
      %v3928 = vrot.slane %v3303, 1
      %v3929 = vsel %vm2830, %v3927, %v3928
      %v3930 = vrot.slane %v3848, 1
      %v3931 = vrot.slane %v3304, 1
      %v3932 = vsel %vm2830, %v3930, %v3931
      %v3933 = vrot.slane %v3849, 1
      %v3934 = vrot.slane %v3305, 1
      %v3935 = vsel %vm2830, %v3933, %v3934
      %v3936 = vrot.slane %v3850, 1
      %v3937 = vrot.slane %v3306, 1
      %v3938 = vsel %vm2830, %v3936, %v3937
      %v3939 = vrot.slane %v3851, 1
      %v3940 = vrot.slane %v3307, 1
      %v3941 = vsel %vm2830, %v3939, %v3940
      %v3942 = vrot.slane %v3852, 1
      %v3943 = vrot.slane %v3308, 1
      %v3944 = vsel %vm2830, %v3942, %v3943
      %v3945 = vrot.slane %v3853, 1
      %v3946 = vrot.slane %v3309, 1
      %v3947 = vsel %vm2830, %v3945, %v3946
      %v3948 = vrot.slane %v3854, 1
      %v3949 = vrot.slane %v3310, 1
      %v3950 = vsel %vm2830, %v3948, %v3949
      %3951 = vrot.lane.b32.xlu0 %v3857, 10
      %v3952 = vpop.permute.xlu0 %3951
      %3953 = vrot.lane.b32.xlu0 %v3860, 10
      %v3954 = vpop.permute.xlu0 %3953
      %3955 = vrot.lane.b32.xlu0 %v3863, 10
      %v3956 = vpop.permute.xlu0 %3955
      %3957 = vrot.lane.b32.xlu0 %v3866, 10
      %v3958 = vpop.permute.xlu0 %3957
      %3959 = vrot.lane.b32.xlu0 %v3869, 10
      %v3960 = vpop.permute.xlu0 %3959
      %3961 = vrot.lane.b32.xlu0 %v3872, 10
      %v3962 = vpop.permute.xlu0 %3961
      %3963 = vrot.lane.b32.xlu0 %v3875, 10
      %v3964 = vpop.permute.xlu0 %3963
      %3965 = vrot.lane.b32.xlu0 %v3878, 10
      %v3966 = vpop.permute.xlu0 %3965
      %3967 = vrot.lane.b32.xlu0 %v3881, 10
      %v3968 = vpop.permute.xlu0 %3967
      %3969 = vrot.lane.b32.xlu0 %v3884, 10
      %v3970 = vpop.permute.xlu0 %3969
      %3971 = vrot.lane.b32.xlu0 %v3887, 10
      %v3972 = vpop.permute.xlu0 %3971
      %3973 = vrot.lane.b32.xlu0 %v3890, 10
      %v3974 = vpop.permute.xlu0 %3973
      %3975 = vrot.lane.b32.xlu0 %v3893, 10
      %v3976 = vpop.permute.xlu0 %3975
      %3977 = vrot.lane.b32.xlu0 %v3896, 10
      %v3978 = vpop.permute.xlu0 %3977
      %3979 = vrot.lane.b32.xlu0 %v3899, 10
      %v3980 = vpop.permute.xlu0 %3979
      %3981 = vrot.lane.b32.xlu0 %v3902, 10
      %v3982 = vpop.permute.xlu0 %3981
      %3983 = vrot.lane.b32.xlu0 %v3905, 10
      %v3984 = vpop.permute.xlu0 %3983
      %3985 = vrot.lane.b32.xlu0 %v3908, 10
      %v3986 = vpop.permute.xlu0 %3985
      %3987 = vrot.lane.b32.xlu0 %v3911, 10
      %v3988 = vpop.permute.xlu0 %3987
      %3989 = vrot.lane.b32.xlu0 %v3914, 10
      %v3990 = vpop.permute.xlu0 %3989
      %3991 = vrot.lane.b32.xlu0 %v3917, 10
      %v3992 = vpop.permute.xlu0 %3991
      %3993 = vrot.lane.b32.xlu0 %v3920, 10
      %v3994 = vpop.permute.xlu0 %3993
      %3995 = vrot.lane.b32.xlu0 %v3923, 10
      %v3996 = vpop.permute.xlu0 %3995
      %3997 = vrot.lane.b32.xlu0 %v3926, 10
      %v3998 = vpop.permute.xlu0 %3997
      %3999 = vrot.lane.b32.xlu0 %v3929, 10
      %v4000 = vpop.permute.xlu0 %3999
      %4001 = vrot.lane.b32.xlu0 %v3932, 10
      %v4002 = vpop.permute.xlu0 %4001
      %4003 = vrot.lane.b32.xlu0 %v3935, 10
      %v4004 = vpop.permute.xlu0 %4003
      %4005 = vrot.lane.b32.xlu0 %v3938, 10
      %v4006 = vpop.permute.xlu0 %4005
      %4007 = vrot.lane.b32.xlu0 %v3941, 10
      %v4008 = vpop.permute.xlu0 %4007
      %4009 = vrot.lane.b32.xlu0 %v3944, 10
      %v4010 = vpop.permute.xlu0 %4009
      %4011 = vrot.lane.b32.xlu0 %v3947, 10
      %v4012 = vpop.permute.xlu0 %4011
      %4013 = vrot.lane.b32.xlu0 %v3950, 10
      %v4014 = vpop.permute.xlu0 %4013
      %v4079 = vunpack.c.l.b16 %v1901
      %v4080 = vunpack.c.l.b16 %v1902
      %v4081 = vunpack.c.l.b16 %v1903
      %v4082 = vunpack.c.l.b16 %v1904
      %v4083 = vunpack.c.l.b16 %v1905
      %v4084 = vunpack.c.l.b16 %v1906
      %v4085 = vunpack.c.l.b16 %v1907
      %v4086 = vunpack.c.l.b16 %v1908
      %v4087 = vunpack.c.l.b16 %v1909
      %v4088 = vunpack.c.l.b16 %v1910
      %v4089 = vunpack.c.l.b16 %v1911
      %v4090 = vunpack.c.l.b16 %v1912
      %v4091 = vunpack.c.l.b16 %v1913
      %v4092 = vunpack.c.l.b16 %v1914
      %v4093 = vunpack.c.l.b16 %v1915
      %v4094 = vunpack.c.l.b16 %v1916
      %v4095 = vunpack.c.l.b16 %v1917
      %v4096 = vunpack.c.l.b16 %v1918
      %v4097 = vunpack.c.l.b16 %v1919
      %v4098 = vunpack.c.l.b16 %v1920
      %v4099 = vunpack.c.l.b16 %v1921
      %v4100 = vunpack.c.l.b16 %v1922
      %v4101 = vunpack.c.l.b16 %v1923
      %v4102 = vunpack.c.l.b16 %v1924
      %v4103 = vunpack.c.l.b16 %v1925
      %v4104 = vunpack.c.l.b16 %v1926
      %v4105 = vunpack.c.l.b16 %v1927
      %v4106 = vunpack.c.l.b16 %v1928
      %v4107 = vunpack.c.l.b16 %v1929
      %v4108 = vunpack.c.l.b16 %v1930
      %v4109 = vunpack.c.l.b16 %v1931
      %v4110 = vunpack.c.l.b16 %v1932
      %v4111 = vunpack.c.l.b16 %v1933
      %v4112 = vunpack.c.l.b16 %v1934
      %v4113 = vunpack.c.l.b16 %v1935
      %v4114 = vunpack.c.l.b16 %v1936
      %v4115 = vunpack.c.l.b16 %v1937
      %v4116 = vunpack.c.l.b16 %v1938
      %v4117 = vunpack.c.l.b16 %v1939
      %v4118 = vunpack.c.l.b16 %v1940
      %v4119 = vunpack.c.l.b16 %v1941
      %v4120 = vunpack.c.l.b16 %v1942
      %v4121 = vunpack.c.l.b16 %v1943
      %v4122 = vunpack.c.l.b16 %v1944
      %v4123 = vunpack.c.l.b16 %v1945
      %v4124 = vunpack.c.l.b16 %v1946
      %v4125 = vunpack.c.l.b16 %v1947
      %v4126 = vunpack.c.l.b16 %v1948
      %v4127 = vunpack.c.l.b16 %v1949
      %v4128 = vunpack.c.l.b16 %v1950
      %v4129 = vunpack.c.l.b16 %v1951
      %v4130 = vunpack.c.l.b16 %v1952
      %v4131 = vunpack.c.l.b16 %v1953
      %v4132 = vunpack.c.l.b16 %v1954
      %v4133 = vunpack.c.l.b16 %v1955
      %v4134 = vunpack.c.l.b16 %v1956
      %v4135 = vunpack.c.l.b16 %v1957
      %v4136 = vunpack.c.l.b16 %v1958
      %v4137 = vunpack.c.l.b16 %v1959
      %v4138 = vunpack.c.l.b16 %v1960
      %v4139 = vunpack.c.l.b16 %v1961
      %v4140 = vunpack.c.l.b16 %v1962
      %v4141 = vunpack.c.l.b16 %v1963
      %v4142 = vunpack.c.l.b16 %v1964
      %v4143 = vpack.c.b16 %v4080, %v4079
      %v4144 = vpack.c.b16 %v4082, %v4081
      %v4145 = vpack.c.b16 %v4084, %v4083
      %v4146 = vpack.c.b16 %v4086, %v4085
      %v4147 = vpack.c.b16 %v4088, %v4087
      %v4148 = vpack.c.b16 %v4090, %v4089
      %v4149 = vpack.c.b16 %v4092, %v4091
      %v4150 = vpack.c.b16 %v4094, %v4093
      %v4151 = vpack.c.b16 %v4096, %v4095
      %v4152 = vpack.c.b16 %v4098, %v4097
      %v4153 = vpack.c.b16 %v4100, %v4099
      %v4154 = vpack.c.b16 %v4102, %v4101
      %v4155 = vpack.c.b16 %v4104, %v4103
      %v4156 = vpack.c.b16 %v4106, %v4105
      %v4157 = vpack.c.b16 %v4108, %v4107
      %v4158 = vpack.c.b16 %v4110, %v4109
      %v4159 = vpack.c.b16 %v4112, %v4111
      %v4160 = vpack.c.b16 %v4114, %v4113
      %v4161 = vpack.c.b16 %v4116, %v4115
      %v4162 = vpack.c.b16 %v4118, %v4117
      %v4163 = vpack.c.b16 %v4120, %v4119
      %v4164 = vpack.c.b16 %v4122, %v4121
      %v4165 = vpack.c.b16 %v4124, %v4123
      %v4166 = vpack.c.b16 %v4126, %v4125
      %v4167 = vpack.c.b16 %v4128, %v4127
      %v4168 = vpack.c.b16 %v4130, %v4129
      %v4169 = vpack.c.b16 %v4132, %v4131
      %v4170 = vpack.c.b16 %v4134, %v4133
      %v4171 = vpack.c.b16 %v4136, %v4135
      %v4172 = vpack.c.b16 %v4138, %v4137
      %v4173 = vpack.c.b16 %v4140, %v4139
      %v4174 = vpack.c.b16 %v4142, %v4141
      %4175 = vrot.lane.b32.xlu0 %v4143, 12
      %v4176 = vpop.permute.xlu0 %4175
      %4177 = vrot.lane.b32.xlu0 %v4144, 12
      %v4178 = vpop.permute.xlu0 %4177
      %4179 = vrot.lane.b32.xlu0 %v4145, 12
      %v4180 = vpop.permute.xlu0 %4179
      %4181 = vrot.lane.b32.xlu0 %v4146, 12
      %v4182 = vpop.permute.xlu0 %4181
      %4183 = vrot.lane.b32.xlu0 %v4147, 12
      %v4184 = vpop.permute.xlu0 %4183
      %4185 = vrot.lane.b32.xlu0 %v4148, 12
      %v4186 = vpop.permute.xlu0 %4185
      %4187 = vrot.lane.b32.xlu0 %v4149, 12
      %v4188 = vpop.permute.xlu0 %4187
      %4189 = vrot.lane.b32.xlu0 %v4150, 12
      %v4190 = vpop.permute.xlu0 %4189
      %4191 = vrot.lane.b32.xlu0 %v4151, 12
      %v4192 = vpop.permute.xlu0 %4191
      %4193 = vrot.lane.b32.xlu0 %v4152, 12
      %v4194 = vpop.permute.xlu0 %4193
      %4195 = vrot.lane.b32.xlu0 %v4153, 12
      %v4196 = vpop.permute.xlu0 %4195
      %4197 = vrot.lane.b32.xlu0 %v4154, 12
      %v4198 = vpop.permute.xlu0 %4197
      %4199 = vrot.lane.b32.xlu0 %v4155, 12
      %v4200 = vpop.permute.xlu0 %4199
      %4201 = vrot.lane.b32.xlu0 %v4156, 12
      %v4202 = vpop.permute.xlu0 %4201
      %4203 = vrot.lane.b32.xlu0 %v4157, 12
      %v4204 = vpop.permute.xlu0 %4203
      %4205 = vrot.lane.b32.xlu0 %v4158, 12
      %v4206 = vpop.permute.xlu0 %4205
      %4207 = vrot.lane.b32.xlu0 %v4159, 12
      %v4208 = vpop.permute.xlu0 %4207
      %4209 = vrot.lane.b32.xlu0 %v4160, 12
      %v4210 = vpop.permute.xlu0 %4209
      %4211 = vrot.lane.b32.xlu0 %v4161, 12
      %v4212 = vpop.permute.xlu0 %4211
      %4213 = vrot.lane.b32.xlu0 %v4162, 12
      %v4214 = vpop.permute.xlu0 %4213
      %4215 = vrot.lane.b32.xlu0 %v4163, 12
      %v4216 = vpop.permute.xlu0 %4215
      %4217 = vrot.lane.b32.xlu0 %v4164, 12
      %v4218 = vpop.permute.xlu0 %4217
      %4219 = vrot.lane.b32.xlu0 %v4165, 12
      %v4220 = vpop.permute.xlu0 %4219
      %4221 = vrot.lane.b32.xlu0 %v4166, 12
      %v4222 = vpop.permute.xlu0 %4221
      %4223 = vrot.lane.b32.xlu0 %v4167, 12
      %v4224 = vpop.permute.xlu0 %4223
      %4225 = vrot.lane.b32.xlu0 %v4168, 12
      %v4226 = vpop.permute.xlu0 %4225
      %4227 = vrot.lane.b32.xlu0 %v4169, 12
      %v4228 = vpop.permute.xlu0 %4227
      %4229 = vrot.lane.b32.xlu0 %v4170, 12
      %v4230 = vpop.permute.xlu0 %4229
      %4231 = vrot.lane.b32.xlu0 %v4171, 12
      %v4232 = vpop.permute.xlu0 %4231
      %4233 = vrot.lane.b32.xlu0 %v4172, 12
      %v4234 = vpop.permute.xlu0 %4233
      %4235 = vrot.lane.b32.xlu0 %v4173, 12
      %v4236 = vpop.permute.xlu0 %4235
      %4237 = vrot.lane.b32.xlu0 %v4174, 12
      %v4238 = vpop.permute.xlu0 %4237
      %v4271 = vunpack.c.l.b16 %v1965
      %v4272 = vunpack.c.l.b16 %v1966
      %v4273 = vunpack.c.l.b16 %v1967
      %v4274 = vunpack.c.l.b16 %v1968
      %v4275 = vunpack.c.l.b16 %v1969
      %v4276 = vunpack.c.l.b16 %v1970
      %v4277 = vunpack.c.l.b16 %v1971
      %v4278 = vunpack.c.l.b16 %v1972
      %v4279 = vunpack.c.l.b16 %v1973
      %v4280 = vunpack.c.l.b16 %v1974
      %v4281 = vunpack.c.l.b16 %v1975
      %v4282 = vunpack.c.l.b16 %v1976
      %v4283 = vunpack.c.l.b16 %v1977
      %v4284 = vunpack.c.l.b16 %v1978
      %v4285 = vunpack.c.l.b16 %v1979
      %v4286 = vunpack.c.l.b16 %v1980
      %v4287 = vunpack.c.l.b16 %v1981
      %v4288 = vunpack.c.l.b16 %v1982
      %v4289 = vunpack.c.l.b16 %v1983
      %v4290 = vunpack.c.l.b16 %v1984
      %v4291 = vunpack.c.l.b16 %v1985
      %v4292 = vunpack.c.l.b16 %v1986
      %v4293 = vunpack.c.l.b16 %v1987
      %v4294 = vunpack.c.l.b16 %v1988
      %v4295 = vunpack.c.l.b16 %v1989
      %v4296 = vunpack.c.l.b16 %v1990
      %v4297 = vunpack.c.l.b16 %v1991
      %v4298 = vunpack.c.l.b16 %v1992
      %v4299 = vunpack.c.l.b16 %v1993
      %v4300 = vunpack.c.l.b16 %v1994
      %v4301 = vunpack.c.l.b16 %v1995
      %v4302 = vunpack.c.l.b16 %v1996
      %v4303 = vpack.c.b16 %v4271, %v4271
      %v4304 = vpack.c.b16 %v4272, %v4272
      %v4305 = vpack.c.b16 %v4273, %v4273
      %v4306 = vpack.c.b16 %v4274, %v4274
      %v4307 = vpack.c.b16 %v4275, %v4275
      %v4308 = vpack.c.b16 %v4276, %v4276
      %v4309 = vpack.c.b16 %v4277, %v4277
      %v4310 = vpack.c.b16 %v4278, %v4278
      %v4311 = vpack.c.b16 %v4279, %v4279
      %v4312 = vpack.c.b16 %v4280, %v4280
      %v4313 = vpack.c.b16 %v4281, %v4281
      %v4314 = vpack.c.b16 %v4282, %v4282
      %v4315 = vpack.c.b16 %v4283, %v4283
      %v4316 = vpack.c.b16 %v4284, %v4284
      %v4317 = vpack.c.b16 %v4285, %v4285
      %v4318 = vpack.c.b16 %v4286, %v4286
      %v4319 = vpack.c.b16 %v4287, %v4287
      %v4320 = vpack.c.b16 %v4288, %v4288
      %v4321 = vpack.c.b16 %v4289, %v4289
      %v4322 = vpack.c.b16 %v4290, %v4290
      %v4323 = vpack.c.b16 %v4291, %v4291
      %v4324 = vpack.c.b16 %v4292, %v4292
      %v4325 = vpack.c.b16 %v4293, %v4293
      %v4326 = vpack.c.b16 %v4294, %v4294
      %v4327 = vpack.c.b16 %v4295, %v4295
      %v4328 = vpack.c.b16 %v4296, %v4296
      %v4329 = vpack.c.b16 %v4297, %v4297
      %v4330 = vpack.c.b16 %v4298, %v4298
      %v4331 = vpack.c.b16 %v4299, %v4299
      %v4332 = vpack.c.b16 %v4300, %v4300
      %v4333 = vpack.c.b16 %v4301, %v4301
      %v4334 = vpack.c.b16 %v4302, %v4302
      %v4336 = vshrl.u32 %v4143, 16
      %v4338 = vshll.u32 %v4143, 16
      %v4340 = vrot.slane %v4338, 1
      %v4341 = vor.u32 %v4336, %v4340
      %v4343 = vshll.u32 %v4303, 16
      %v4345 = vrot.slane %v4343, 1
      %v4346 = vsel %vm2285, %v4341, %v4345
      %v4348 = vshrl.u32 %v4144, 16
      %v4350 = vshll.u32 %v4144, 16
      %v4352 = vrot.slane %v4350, 1
      %v4353 = vor.u32 %v4348, %v4352
      %v4355 = vshll.u32 %v4304, 16
      %v4357 = vrot.slane %v4355, 1
      %v4358 = vsel %vm2285, %v4353, %v4357
      %v4360 = vshrl.u32 %v4145, 16
      %v4362 = vshll.u32 %v4145, 16
      %v4364 = vrot.slane %v4362, 1
      %v4365 = vor.u32 %v4360, %v4364
      %v4367 = vshll.u32 %v4305, 16
      %v4369 = vrot.slane %v4367, 1
      %v4370 = vsel %vm2285, %v4365, %v4369
      %v4372 = vshrl.u32 %v4146, 16
      %v4374 = vshll.u32 %v4146, 16
      %v4376 = vrot.slane %v4374, 1
      %v4377 = vor.u32 %v4372, %v4376
      %v4379 = vshll.u32 %v4306, 16
      %v4381 = vrot.slane %v4379, 1
      %v4382 = vsel %vm2285, %v4377, %v4381
      %v4384 = vshrl.u32 %v4147, 16
      %v4386 = vshll.u32 %v4147, 16
      %v4388 = vrot.slane %v4386, 1
      %v4389 = vor.u32 %v4384, %v4388
      %v4391 = vshll.u32 %v4307, 16
      %v4393 = vrot.slane %v4391, 1
      %v4394 = vsel %vm2285, %v4389, %v4393
      %v4396 = vshrl.u32 %v4148, 16
      %v4398 = vshll.u32 %v4148, 16
      %v4400 = vrot.slane %v4398, 1
      %v4401 = vor.u32 %v4396, %v4400
      %v4403 = vshll.u32 %v4308, 16
      %v4405 = vrot.slane %v4403, 1
      %v4406 = vsel %vm2285, %v4401, %v4405
      %v4408 = vshrl.u32 %v4149, 16
      %v4410 = vshll.u32 %v4149, 16
      %v4412 = vrot.slane %v4410, 1
      %v4413 = vor.u32 %v4408, %v4412
      %v4415 = vshll.u32 %v4309, 16
      %v4417 = vrot.slane %v4415, 1
      %v4418 = vsel %vm2285, %v4413, %v4417
      %v4420 = vshrl.u32 %v4150, 16
      %v4422 = vshll.u32 %v4150, 16
      %v4424 = vrot.slane %v4422, 1
      %v4425 = vor.u32 %v4420, %v4424
      %v4427 = vshll.u32 %v4310, 16
      %v4429 = vrot.slane %v4427, 1
      %v4430 = vsel %vm2285, %v4425, %v4429
      %v4432 = vshrl.u32 %v4151, 16
      %v4434 = vshll.u32 %v4151, 16
      %v4436 = vrot.slane %v4434, 1
      %v4437 = vor.u32 %v4432, %v4436
      %v4439 = vshll.u32 %v4311, 16
      %v4441 = vrot.slane %v4439, 1
      %v4442 = vsel %vm2285, %v4437, %v4441
      %v4444 = vshrl.u32 %v4152, 16
      %v4446 = vshll.u32 %v4152, 16
      %v4448 = vrot.slane %v4446, 1
      %v4449 = vor.u32 %v4444, %v4448
      %v4451 = vshll.u32 %v4312, 16
      %v4453 = vrot.slane %v4451, 1
      %v4454 = vsel %vm2285, %v4449, %v4453
      %v4456 = vshrl.u32 %v4153, 16
      %v4458 = vshll.u32 %v4153, 16
      %v4460 = vrot.slane %v4458, 1
      %v4461 = vor.u32 %v4456, %v4460
      %v4463 = vshll.u32 %v4313, 16
      %v4465 = vrot.slane %v4463, 1
      %v4466 = vsel %vm2285, %v4461, %v4465
      %v4468 = vshrl.u32 %v4154, 16
      %v4470 = vshll.u32 %v4154, 16
      %v4472 = vrot.slane %v4470, 1
      %v4473 = vor.u32 %v4468, %v4472
      %v4475 = vshll.u32 %v4314, 16
      %v4477 = vrot.slane %v4475, 1
      %v4478 = vsel %vm2285, %v4473, %v4477
      %v4480 = vshrl.u32 %v4155, 16
      %v4482 = vshll.u32 %v4155, 16
      %v4484 = vrot.slane %v4482, 1
      %v4485 = vor.u32 %v4480, %v4484
      %v4487 = vshll.u32 %v4315, 16
      %v4489 = vrot.slane %v4487, 1
      %v4490 = vsel %vm2285, %v4485, %v4489
      %v4492 = vshrl.u32 %v4156, 16
      %v4494 = vshll.u32 %v4156, 16
      %v4496 = vrot.slane %v4494, 1
      %v4497 = vor.u32 %v4492, %v4496
      %v4499 = vshll.u32 %v4316, 16
      %v4501 = vrot.slane %v4499, 1
      %v4502 = vsel %vm2285, %v4497, %v4501
      %v4504 = vshrl.u32 %v4157, 16
      %v4506 = vshll.u32 %v4157, 16
      %v4508 = vrot.slane %v4506, 1
      %v4509 = vor.u32 %v4504, %v4508
      %v4511 = vshll.u32 %v4317, 16
      %v4513 = vrot.slane %v4511, 1
      %v4514 = vsel %vm2285, %v4509, %v4513
      %v4516 = vshrl.u32 %v4158, 16
      %v4518 = vshll.u32 %v4158, 16
      %v4520 = vrot.slane %v4518, 1
      %v4521 = vor.u32 %v4516, %v4520
      %v4523 = vshll.u32 %v4318, 16
      %v4525 = vrot.slane %v4523, 1
      %v4526 = vsel %vm2285, %v4521, %v4525
      %v4528 = vshrl.u32 %v4159, 16
      %v4530 = vshll.u32 %v4159, 16
      %v4532 = vrot.slane %v4530, 1
      %v4533 = vor.u32 %v4528, %v4532
      %v4535 = vshll.u32 %v4319, 16
      %v4537 = vrot.slane %v4535, 1
      %v4538 = vsel %vm2285, %v4533, %v4537
      %v4540 = vshrl.u32 %v4160, 16
      %v4542 = vshll.u32 %v4160, 16
      %v4544 = vrot.slane %v4542, 1
      %v4545 = vor.u32 %v4540, %v4544
      %v4547 = vshll.u32 %v4320, 16
      %v4549 = vrot.slane %v4547, 1
      %v4550 = vsel %vm2285, %v4545, %v4549
      %v4552 = vshrl.u32 %v4161, 16
      %v4554 = vshll.u32 %v4161, 16
      %v4556 = vrot.slane %v4554, 1
      %v4557 = vor.u32 %v4552, %v4556
      %v4559 = vshll.u32 %v4321, 16
      %v4561 = vrot.slane %v4559, 1
      %v4562 = vsel %vm2285, %v4557, %v4561
      %v4564 = vshrl.u32 %v4162, 16
      %v4566 = vshll.u32 %v4162, 16
      %v4568 = vrot.slane %v4566, 1
      %v4569 = vor.u32 %v4564, %v4568
      %v4571 = vshll.u32 %v4322, 16
      %v4573 = vrot.slane %v4571, 1
      %v4574 = vsel %vm2285, %v4569, %v4573
      %v4576 = vshrl.u32 %v4163, 16
      %v4578 = vshll.u32 %v4163, 16
      %v4580 = vrot.slane %v4578, 1
      %v4581 = vor.u32 %v4576, %v4580
      %v4583 = vshll.u32 %v4323, 16
      %v4585 = vrot.slane %v4583, 1
      %v4586 = vsel %vm2285, %v4581, %v4585
      %v4588 = vshrl.u32 %v4164, 16
      %v4590 = vshll.u32 %v4164, 16
      %v4592 = vrot.slane %v4590, 1
      %v4593 = vor.u32 %v4588, %v4592
      %v4595 = vshll.u32 %v4324, 16
      %v4597 = vrot.slane %v4595, 1
      %v4598 = vsel %vm2285, %v4593, %v4597
      %v4600 = vshrl.u32 %v4165, 16
      %v4602 = vshll.u32 %v4165, 16
      %v4604 = vrot.slane %v4602, 1
      %v4605 = vor.u32 %v4600, %v4604
      %v4607 = vshll.u32 %v4325, 16
      %v4609 = vrot.slane %v4607, 1
      %v4610 = vsel %vm2285, %v4605, %v4609
      %v4612 = vshrl.u32 %v4166, 16
      %v4614 = vshll.u32 %v4166, 16
      %v4616 = vrot.slane %v4614, 1
      %v4617 = vor.u32 %v4612, %v4616
      %v4619 = vshll.u32 %v4326, 16
      %v4621 = vrot.slane %v4619, 1
      %v4622 = vsel %vm2285, %v4617, %v4621
      %v4624 = vshrl.u32 %v4167, 16
      %v4626 = vshll.u32 %v4167, 16
      %v4628 = vrot.slane %v4626, 1
      %v4629 = vor.u32 %v4624, %v4628
      %v4631 = vshll.u32 %v4327, 16
      %v4633 = vrot.slane %v4631, 1
      %v4634 = vsel %vm2285, %v4629, %v4633
      %v4636 = vshrl.u32 %v4168, 16
      %v4638 = vshll.u32 %v4168, 16
      %v4640 = vrot.slane %v4638, 1
      %v4641 = vor.u32 %v4636, %v4640
      %v4643 = vshll.u32 %v4328, 16
      %v4645 = vrot.slane %v4643, 1
      %v4646 = vsel %vm2285, %v4641, %v4645
      %v4648 = vshrl.u32 %v4169, 16
      %v4650 = vshll.u32 %v4169, 16
      %v4652 = vrot.slane %v4650, 1
      %v4653 = vor.u32 %v4648, %v4652
      %v4655 = vshll.u32 %v4329, 16
      %v4657 = vrot.slane %v4655, 1
      %v4658 = vsel %vm2285, %v4653, %v4657
      %v4660 = vshrl.u32 %v4170, 16
      %v4662 = vshll.u32 %v4170, 16
      %v4664 = vrot.slane %v4662, 1
      %v4665 = vor.u32 %v4660, %v4664
      %v4667 = vshll.u32 %v4330, 16
      %v4669 = vrot.slane %v4667, 1
      %v4670 = vsel %vm2285, %v4665, %v4669
      %v4672 = vshrl.u32 %v4171, 16
      %v4674 = vshll.u32 %v4171, 16
      %v4676 = vrot.slane %v4674, 1
      %v4677 = vor.u32 %v4672, %v4676
      %v4679 = vshll.u32 %v4331, 16
      %v4681 = vrot.slane %v4679, 1
      %v4682 = vsel %vm2285, %v4677, %v4681
      %v4684 = vshrl.u32 %v4172, 16
      %v4686 = vshll.u32 %v4172, 16
      %v4688 = vrot.slane %v4686, 1
      %v4689 = vor.u32 %v4684, %v4688
      %v4691 = vshll.u32 %v4332, 16
      %v4693 = vrot.slane %v4691, 1
      %v4694 = vsel %vm2285, %v4689, %v4693
      %v4696 = vshrl.u32 %v4173, 16
      %v4698 = vshll.u32 %v4173, 16
      %v4700 = vrot.slane %v4698, 1
      %v4701 = vor.u32 %v4696, %v4700
      %v4703 = vshll.u32 %v4333, 16
      %v4705 = vrot.slane %v4703, 1
      %v4706 = vsel %vm2285, %v4701, %v4705
      %v4708 = vshrl.u32 %v4174, 16
      %v4710 = vshll.u32 %v4174, 16
      %v4712 = vrot.slane %v4710, 1
      %v4713 = vor.u32 %v4708, %v4712
      %v4715 = vshll.u32 %v4334, 16
      %v4717 = vrot.slane %v4715, 1
      %v4718 = vsel %vm2285, %v4713, %v4717
      %4719 = vrot.lane.b32.xlu0 %v4346, 14
      %v4720 = vpop.permute.xlu0 %4719
      %4721 = vrot.lane.b32.xlu0 %v4358, 14
      %v4722 = vpop.permute.xlu0 %4721
      %4723 = vrot.lane.b32.xlu0 %v4370, 14
      %v4724 = vpop.permute.xlu0 %4723
      %4725 = vrot.lane.b32.xlu0 %v4382, 14
      %v4726 = vpop.permute.xlu0 %4725
      %4727 = vrot.lane.b32.xlu0 %v4394, 14
      %v4728 = vpop.permute.xlu0 %4727
      %4729 = vrot.lane.b32.xlu0 %v4406, 14
      %v4730 = vpop.permute.xlu0 %4729
      %4731 = vrot.lane.b32.xlu0 %v4418, 14
      %v4732 = vpop.permute.xlu0 %4731
      %4733 = vrot.lane.b32.xlu0 %v4430, 14
      %v4734 = vpop.permute.xlu0 %4733
      %4735 = vrot.lane.b32.xlu0 %v4442, 14
      %v4736 = vpop.permute.xlu0 %4735
      %4737 = vrot.lane.b32.xlu0 %v4454, 14
      %v4738 = vpop.permute.xlu0 %4737
      %4739 = vrot.lane.b32.xlu0 %v4466, 14
      %v4740 = vpop.permute.xlu0 %4739
      %4741 = vrot.lane.b32.xlu0 %v4478, 14
      %v4742 = vpop.permute.xlu0 %4741
      %4743 = vrot.lane.b32.xlu0 %v4490, 14
      %v4744 = vpop.permute.xlu0 %4743
      %4745 = vrot.lane.b32.xlu0 %v4502, 14
      %v4746 = vpop.permute.xlu0 %4745
      %4747 = vrot.lane.b32.xlu0 %v4514, 14
      %v4748 = vpop.permute.xlu0 %4747
      %4749 = vrot.lane.b32.xlu0 %v4526, 14
      %v4750 = vpop.permute.xlu0 %4749
      %4751 = vrot.lane.b32.xlu0 %v4538, 14
      %v4752 = vpop.permute.xlu0 %4751
      %4753 = vrot.lane.b32.xlu0 %v4550, 14
      %v4754 = vpop.permute.xlu0 %4753
      %4755 = vrot.lane.b32.xlu0 %v4562, 14
      %v4756 = vpop.permute.xlu0 %4755
      %4757 = vrot.lane.b32.xlu0 %v4574, 14
      %v4758 = vpop.permute.xlu0 %4757
      %4759 = vrot.lane.b32.xlu0 %v4586, 14
      %v4760 = vpop.permute.xlu0 %4759
      %4761 = vrot.lane.b32.xlu0 %v4598, 14
      %v4762 = vpop.permute.xlu0 %4761
      %4763 = vrot.lane.b32.xlu0 %v4610, 14
      %v4764 = vpop.permute.xlu0 %4763
      %4765 = vrot.lane.b32.xlu0 %v4622, 14
      %v4766 = vpop.permute.xlu0 %4765
      %4767 = vrot.lane.b32.xlu0 %v4634, 14
      %v4768 = vpop.permute.xlu0 %4767
      %4769 = vrot.lane.b32.xlu0 %v4646, 14
      %v4770 = vpop.permute.xlu0 %4769
      %4771 = vrot.lane.b32.xlu0 %v4658, 14
      %v4772 = vpop.permute.xlu0 %4771
      %4773 = vrot.lane.b32.xlu0 %v4670, 14
      %v4774 = vpop.permute.xlu0 %4773
      %4775 = vrot.lane.b32.xlu0 %v4682, 14
      %v4776 = vpop.permute.xlu0 %4775
      %4777 = vrot.lane.b32.xlu0 %v4694, 14
      %v4778 = vpop.permute.xlu0 %4777
      %4779 = vrot.lane.b32.xlu0 %v4706, 14
      %v4780 = vpop.permute.xlu0 %4779
      %4781 = vrot.lane.b32.xlu0 %v4718, 14
      %v4782 = vpop.permute.xlu0 %4781
      %v4815 = vunpack.c.l.b16 %v1997
      %v4816 = vunpack.c.l.b16 %v1998
      %v4817 = vunpack.c.l.b16 %v1999
      %v4818 = vunpack.c.l.b16 %v2000
      %v4819 = vunpack.c.l.b16 %v2001
      %v4820 = vunpack.c.l.b16 %v2002
      %v4821 = vunpack.c.l.b16 %v2003
      %v4822 = vunpack.c.l.b16 %v2004
      %v4823 = vunpack.c.l.b16 %v2005
      %v4824 = vunpack.c.l.b16 %v2006
      %v4825 = vunpack.c.l.b16 %v2007
      %v4826 = vunpack.c.l.b16 %v2008
      %v4827 = vunpack.c.l.b16 %v2009
      %v4828 = vunpack.c.l.b16 %v2010
      %v4829 = vunpack.c.l.b16 %v2011
      %v4830 = vunpack.c.l.b16 %v2012
      %v4831 = vunpack.c.l.b16 %v2013
      %v4832 = vunpack.c.l.b16 %v2014
      %v4833 = vunpack.c.l.b16 %v2015
      %v4834 = vunpack.c.l.b16 %v2016
      %v4835 = vunpack.c.l.b16 %v2017
      %v4836 = vunpack.c.l.b16 %v2018
      %v4837 = vunpack.c.l.b16 %v2019
      %v4838 = vunpack.c.l.b16 %v2020
      %v4839 = vunpack.c.l.b16 %v2021
      %v4840 = vunpack.c.l.b16 %v2022
      %v4841 = vunpack.c.l.b16 %v2023
      %v4842 = vunpack.c.l.b16 %v2024
      %v4843 = vunpack.c.l.b16 %v2025
      %v4844 = vunpack.c.l.b16 %v2026
      %v4845 = vunpack.c.l.b16 %v2027
      %v4846 = vunpack.c.l.b16 %v2028
      %v4847 = vpack.c.b16 %v4080, %v4815
      %v4848 = vpack.c.b16 %v4082, %v4816
      %v4849 = vpack.c.b16 %v4084, %v4817
      %v4850 = vpack.c.b16 %v4086, %v4818
      %v4851 = vpack.c.b16 %v4088, %v4819
      %v4852 = vpack.c.b16 %v4090, %v4820
      %v4853 = vpack.c.b16 %v4092, %v4821
      %v4854 = vpack.c.b16 %v4094, %v4822
      %v4855 = vpack.c.b16 %v4096, %v4823
      %v4856 = vpack.c.b16 %v4098, %v4824
      %v4857 = vpack.c.b16 %v4100, %v4825
      %v4858 = vpack.c.b16 %v4102, %v4826
      %v4859 = vpack.c.b16 %v4104, %v4827
      %v4860 = vpack.c.b16 %v4106, %v4828
      %v4861 = vpack.c.b16 %v4108, %v4829
      %v4862 = vpack.c.b16 %v4110, %v4830
      %v4863 = vpack.c.b16 %v4112, %v4831
      %v4864 = vpack.c.b16 %v4114, %v4832
      %v4865 = vpack.c.b16 %v4116, %v4833
      %v4866 = vpack.c.b16 %v4118, %v4834
      %v4867 = vpack.c.b16 %v4120, %v4835
      %v4868 = vpack.c.b16 %v4122, %v4836
      %v4869 = vpack.c.b16 %v4124, %v4837
      %v4870 = vpack.c.b16 %v4126, %v4838
      %v4871 = vpack.c.b16 %v4128, %v4839
      %v4872 = vpack.c.b16 %v4130, %v4840
      %v4873 = vpack.c.b16 %v4132, %v4841
      %v4874 = vpack.c.b16 %v4134, %v4842
      %v4875 = vpack.c.b16 %v4136, %v4843
      %v4876 = vpack.c.b16 %v4138, %v4844
      %v4877 = vpack.c.b16 %v4140, %v4845
      %v4878 = vpack.c.b16 %v4142, %v4846
      %v4879 = vrot.slane %v4847, 1
      %v4880 = vrot.slane %v4303, 1
      %v4881 = vsel %vm2830, %v4879, %v4880
      %v4882 = vrot.slane %v4848, 1
      %v4883 = vrot.slane %v4304, 1
      %v4884 = vsel %vm2830, %v4882, %v4883
      %v4885 = vrot.slane %v4849, 1
      %v4886 = vrot.slane %v4305, 1
      %v4887 = vsel %vm2830, %v4885, %v4886
      %v4888 = vrot.slane %v4850, 1
      %v4889 = vrot.slane %v4306, 1
      %v4890 = vsel %vm2830, %v4888, %v4889
      %v4891 = vrot.slane %v4851, 1
      %v4892 = vrot.slane %v4307, 1
      %v4893 = vsel %vm2830, %v4891, %v4892
      %v4894 = vrot.slane %v4852, 1
      %v4895 = vrot.slane %v4308, 1
      %v4896 = vsel %vm2830, %v4894, %v4895
      %v4897 = vrot.slane %v4853, 1
      %v4898 = vrot.slane %v4309, 1
      %v4899 = vsel %vm2830, %v4897, %v4898
      %v4900 = vrot.slane %v4854, 1
      %v4901 = vrot.slane %v4310, 1
      %v4902 = vsel %vm2830, %v4900, %v4901
      %v4903 = vrot.slane %v4855, 1
      %v4904 = vrot.slane %v4311, 1
      %v4905 = vsel %vm2830, %v4903, %v4904
      %v4906 = vrot.slane %v4856, 1
      %v4907 = vrot.slane %v4312, 1
      %v4908 = vsel %vm2830, %v4906, %v4907
      %v4909 = vrot.slane %v4857, 1
      %v4910 = vrot.slane %v4313, 1
      %v4911 = vsel %vm2830, %v4909, %v4910
      %v4912 = vrot.slane %v4858, 1
      %v4913 = vrot.slane %v4314, 1
      %v4914 = vsel %vm2830, %v4912, %v4913
      %v4915 = vrot.slane %v4859, 1
      %v4916 = vrot.slane %v4315, 1
      %v4917 = vsel %vm2830, %v4915, %v4916
      %v4918 = vrot.slane %v4860, 1
      %v4919 = vrot.slane %v4316, 1
      %v4920 = vsel %vm2830, %v4918, %v4919
      %v4921 = vrot.slane %v4861, 1
      %v4922 = vrot.slane %v4317, 1
      %v4923 = vsel %vm2830, %v4921, %v4922
      %v4924 = vrot.slane %v4862, 1
      %v4925 = vrot.slane %v4318, 1
      %v4926 = vsel %vm2830, %v4924, %v4925
      %v4927 = vrot.slane %v4863, 1
      %v4928 = vrot.slane %v4319, 1
      %v4929 = vsel %vm2830, %v4927, %v4928
      %v4930 = vrot.slane %v4864, 1
      %v4931 = vrot.slane %v4320, 1
      %v4932 = vsel %vm2830, %v4930, %v4931
      %v4933 = vrot.slane %v4865, 1
      %v4934 = vrot.slane %v4321, 1
      %v4935 = vsel %vm2830, %v4933, %v4934
      %v4936 = vrot.slane %v4866, 1
      %v4937 = vrot.slane %v4322, 1
      %v4938 = vsel %vm2830, %v4936, %v4937
      %v4939 = vrot.slane %v4867, 1
      %v4940 = vrot.slane %v4323, 1
      %v4941 = vsel %vm2830, %v4939, %v4940
      %v4942 = vrot.slane %v4868, 1
      %v4943 = vrot.slane %v4324, 1
      %v4944 = vsel %vm2830, %v4942, %v4943
      %v4945 = vrot.slane %v4869, 1
      %v4946 = vrot.slane %v4325, 1
      %v4947 = vsel %vm2830, %v4945, %v4946
      %v4948 = vrot.slane %v4870, 1
      %v4949 = vrot.slane %v4326, 1
      %v4950 = vsel %vm2830, %v4948, %v4949
      %v4951 = vrot.slane %v4871, 1
      %v4952 = vrot.slane %v4327, 1
      %v4953 = vsel %vm2830, %v4951, %v4952
      %v4954 = vrot.slane %v4872, 1
      %v4955 = vrot.slane %v4328, 1
      %v4956 = vsel %vm2830, %v4954, %v4955
      %v4957 = vrot.slane %v4873, 1
      %v4958 = vrot.slane %v4329, 1
      %v4959 = vsel %vm2830, %v4957, %v4958
      %v4960 = vrot.slane %v4874, 1
      %v4961 = vrot.slane %v4330, 1
      %v4962 = vsel %vm2830, %v4960, %v4961
      %v4963 = vrot.slane %v4875, 1
      %v4964 = vrot.slane %v4331, 1
      %v4965 = vsel %vm2830, %v4963, %v4964
      %v4966 = vrot.slane %v4876, 1
      %v4967 = vrot.slane %v4332, 1
      %v4968 = vsel %vm2830, %v4966, %v4967
      %v4969 = vrot.slane %v4877, 1
      %v4970 = vrot.slane %v4333, 1
      %v4971 = vsel %vm2830, %v4969, %v4970
      %v4972 = vrot.slane %v4878, 1
      %v4973 = vrot.slane %v4334, 1
      %v4974 = vsel %vm2830, %v4972, %v4973
      %4975 = vrot.lane.b32.xlu0 %v4881, 16
      %v4976 = vpop.permute.xlu0 %4975
      %4977 = vrot.lane.b32.xlu0 %v4884, 16
      %v4978 = vpop.permute.xlu0 %4977
      %4979 = vrot.lane.b32.xlu0 %v4887, 16
      %v4980 = vpop.permute.xlu0 %4979
      %4981 = vrot.lane.b32.xlu0 %v4890, 16
      %v4982 = vpop.permute.xlu0 %4981
      %4983 = vrot.lane.b32.xlu0 %v4893, 16
      %v4984 = vpop.permute.xlu0 %4983
      %4985 = vrot.lane.b32.xlu0 %v4896, 16
      %v4986 = vpop.permute.xlu0 %4985
      %4987 = vrot.lane.b32.xlu0 %v4899, 16
      %v4988 = vpop.permute.xlu0 %4987
      %4989 = vrot.lane.b32.xlu0 %v4902, 16
      %v4990 = vpop.permute.xlu0 %4989
      %4991 = vrot.lane.b32.xlu0 %v4905, 16
      %v4992 = vpop.permute.xlu0 %4991
      %4993 = vrot.lane.b32.xlu0 %v4908, 16
      %v4994 = vpop.permute.xlu0 %4993
      %4995 = vrot.lane.b32.xlu0 %v4911, 16
      %v4996 = vpop.permute.xlu0 %4995
      %4997 = vrot.lane.b32.xlu0 %v4914, 16
      %v4998 = vpop.permute.xlu0 %4997
      %4999 = vrot.lane.b32.xlu0 %v4917, 16
      %v5000 = vpop.permute.xlu0 %4999
      %5001 = vrot.lane.b32.xlu0 %v4920, 16
      %v5002 = vpop.permute.xlu0 %5001
      %5003 = vrot.lane.b32.xlu0 %v4923, 16
      %v5004 = vpop.permute.xlu0 %5003
      %5005 = vrot.lane.b32.xlu0 %v4926, 16
      %v5006 = vpop.permute.xlu0 %5005
      %5007 = vrot.lane.b32.xlu0 %v4929, 16
      %v5008 = vpop.permute.xlu0 %5007
      %5009 = vrot.lane.b32.xlu0 %v4932, 16
      %v5010 = vpop.permute.xlu0 %5009
      %5011 = vrot.lane.b32.xlu0 %v4935, 16
      %v5012 = vpop.permute.xlu0 %5011
      %5013 = vrot.lane.b32.xlu0 %v4938, 16
      %v5014 = vpop.permute.xlu0 %5013
      %5015 = vrot.lane.b32.xlu0 %v4941, 16
      %v5016 = vpop.permute.xlu0 %5015
      %5017 = vrot.lane.b32.xlu0 %v4944, 16
      %v5018 = vpop.permute.xlu0 %5017
      %5019 = vrot.lane.b32.xlu0 %v4947, 16
      %v5020 = vpop.permute.xlu0 %5019
      %5021 = vrot.lane.b32.xlu0 %v4950, 16
      %v5022 = vpop.permute.xlu0 %5021
      %5023 = vrot.lane.b32.xlu0 %v4953, 16
      %v5024 = vpop.permute.xlu0 %5023
      %5025 = vrot.lane.b32.xlu0 %v4956, 16
      %v5026 = vpop.permute.xlu0 %5025
      %5027 = vrot.lane.b32.xlu0 %v4959, 16
      %v5028 = vpop.permute.xlu0 %5027
      %5029 = vrot.lane.b32.xlu0 %v4962, 16
      %v5030 = vpop.permute.xlu0 %5029
      %5031 = vrot.lane.b32.xlu0 %v4965, 16
      %v5032 = vpop.permute.xlu0 %5031
      %5033 = vrot.lane.b32.xlu0 %v4968, 16
      %v5034 = vpop.permute.xlu0 %5033
      %5035 = vrot.lane.b32.xlu0 %v4971, 16
      %v5036 = vpop.permute.xlu0 %5035
      %5037 = vrot.lane.b32.xlu0 %v4974, 16
      %v5038 = vpop.permute.xlu0 %5037
      %vm5039 = vcmask 15360
      %v5041 = vsel %vm5039, %v2157, %v2671
      %v5043 = vsel %vm5039, %v2158, %v2673
      %v5045 = vsel %vm5039, %v2159, %v2675
      %v5047 = vsel %vm5039, %v2160, %v2677
      %v5049 = vsel %vm5039, %v2161, %v2679
      %v5051 = vsel %vm5039, %v2162, %v2681
      %v5053 = vsel %vm5039, %v2163, %v2683
      %v5055 = vsel %vm5039, %v2164, %v2685
      %v5057 = vsel %vm5039, %v2165, %v2687
      %v5059 = vsel %vm5039, %v2166, %v2689
      %v5061 = vsel %vm5039, %v2167, %v2691
      %v5063 = vsel %vm5039, %v2168, %v2693
      %v5065 = vsel %vm5039, %v2169, %v2695
      %v5067 = vsel %vm5039, %v2170, %v2697
      %v5069 = vsel %vm5039, %v2171, %v2699
      %v5071 = vsel %vm5039, %v2172, %v2701
      %v5073 = vsel %vm5039, %v2173, %v2703
      %v5075 = vsel %vm5039, %v2174, %v2705
      %v5077 = vsel %vm5039, %v2175, %v2707
      %v5079 = vsel %vm5039, %v2176, %v2709
      %v5081 = vsel %vm5039, %v2177, %v2711
      %v5083 = vsel %vm5039, %v2178, %v2713
      %v5085 = vsel %vm5039, %v2179, %v2715
      %v5087 = vsel %vm5039, %v2180, %v2717
      %v5089 = vsel %vm5039, %v2181, %v2719
      %v5091 = vsel %vm5039, %v2182, %v2721
      %v5093 = vsel %vm5039, %v2183, %v2723
      %v5095 = vsel %vm5039, %v2184, %v2725
      %v5097 = vsel %vm5039, %v2185, %v2727
      %v5099 = vsel %vm5039, %v2186, %v2729
      %v5101 = vsel %vm5039, %v2187, %v2731
      %v5103 = vsel %vm5039, %v2188, %v2733
      %vm5104 = vcmask 31744
      %v5106 = vsel %vm5104, %v5041, %v2928
      %v5108 = vsel %vm5104, %v5043, %v2930
      %v5110 = vsel %vm5104, %v5045, %v2932
      %v5112 = vsel %vm5104, %v5047, %v2934
      %v5114 = vsel %vm5104, %v5049, %v2936
      %v5116 = vsel %vm5104, %v5051, %v2938
      %v5118 = vsel %vm5104, %v5053, %v2940
      %v5120 = vsel %vm5104, %v5055, %v2942
      %v5122 = vsel %vm5104, %v5057, %v2944
      %v5124 = vsel %vm5104, %v5059, %v2946
      %v5126 = vsel %vm5104, %v5061, %v2948
      %v5128 = vsel %vm5104, %v5063, %v2950
      %v5130 = vsel %vm5104, %v5065, %v2952
      %v5132 = vsel %vm5104, %v5067, %v2954
      %v5134 = vsel %vm5104, %v5069, %v2956
      %v5136 = vsel %vm5104, %v5071, %v2958
      %v5138 = vsel %vm5104, %v5073, %v2960
      %v5140 = vsel %vm5104, %v5075, %v2962
      %v5142 = vsel %vm5104, %v5077, %v2964
      %v5144 = vsel %vm5104, %v5079, %v2966
      %v5146 = vsel %vm5104, %v5081, %v2968
      %v5148 = vsel %vm5104, %v5083, %v2970
      %v5150 = vsel %vm5104, %v5085, %v2972
      %v5152 = vsel %vm5104, %v5087, %v2974
      %v5154 = vsel %vm5104, %v5089, %v2976
      %v5156 = vsel %vm5104, %v5091, %v2978
      %v5158 = vsel %vm5104, %v5093, %v2980
      %v5160 = vsel %vm5104, %v5095, %v2982
      %v5162 = vsel %vm5104, %v5097, %v2984
      %v5164 = vsel %vm5104, %v5099, %v2986
      %v5166 = vsel %vm5104, %v5101, %v2988
      %v5168 = vsel %vm5104, %v5103, %v2990
      %vm5169 = vcmask 48128
      %v5171 = vsel %vm5169, %v5106, %v3152
      %v5173 = vsel %vm5169, %v5108, %v3154
      %v5175 = vsel %vm5169, %v5110, %v3156
      %v5177 = vsel %vm5169, %v5112, %v3158
      %v5179 = vsel %vm5169, %v5114, %v3160
      %v5181 = vsel %vm5169, %v5116, %v3162
      %v5183 = vsel %vm5169, %v5118, %v3164
      %v5185 = vsel %vm5169, %v5120, %v3166
      %v5187 = vsel %vm5169, %v5122, %v3168
      %v5189 = vsel %vm5169, %v5124, %v3170
      %v5191 = vsel %vm5169, %v5126, %v3172
      %v5193 = vsel %vm5169, %v5128, %v3174
      %v5195 = vsel %vm5169, %v5130, %v3176
      %v5197 = vsel %vm5169, %v5132, %v3178
      %v5199 = vsel %vm5169, %v5134, %v3180
      %v5201 = vsel %vm5169, %v5136, %v3182
      %v5203 = vsel %vm5169, %v5138, %v3184
      %v5205 = vsel %vm5169, %v5140, %v3186
      %v5207 = vsel %vm5169, %v5142, %v3188
      %v5209 = vsel %vm5169, %v5144, %v3190
      %v5211 = vsel %vm5169, %v5146, %v3192
      %v5213 = vsel %vm5169, %v5148, %v3194
      %v5215 = vsel %vm5169, %v5150, %v3196
      %v5217 = vsel %vm5169, %v5152, %v3198
      %v5219 = vsel %vm5169, %v5154, %v3200
      %v5221 = vsel %vm5169, %v5156, %v3202
      %v5223 = vsel %vm5169, %v5158, %v3204
      %v5225 = vsel %vm5169, %v5160, %v3206
      %v5227 = vsel %vm5169, %v5162, %v3208
      %v5229 = vsel %vm5169, %v5164, %v3210
      %v5231 = vsel %vm5169, %v5166, %v3212
      %v5233 = vsel %vm5169, %v5168, %v3214
      %vm5234 = vcmask 64512
      %v5236 = vsel %vm5234, %v5171, %v3696
      %v5238 = vsel %vm5234, %v5173, %v3698
      %v5240 = vsel %vm5234, %v5175, %v3700
      %v5242 = vsel %vm5234, %v5177, %v3702
      %v5244 = vsel %vm5234, %v5179, %v3704
      %v5246 = vsel %vm5234, %v5181, %v3706
      %v5248 = vsel %vm5234, %v5183, %v3708
      %v5250 = vsel %vm5234, %v5185, %v3710
      %v5252 = vsel %vm5234, %v5187, %v3712
      %v5254 = vsel %vm5234, %v5189, %v3714
      %v5256 = vsel %vm5234, %v5191, %v3716
      %v5258 = vsel %vm5234, %v5193, %v3718
      %v5260 = vsel %vm5234, %v5195, %v3720
      %v5262 = vsel %vm5234, %v5197, %v3722
      %v5264 = vsel %vm5234, %v5199, %v3724
      %v5266 = vsel %vm5234, %v5201, %v3726
      %v5268 = vsel %vm5234, %v5203, %v3728
      %v5270 = vsel %vm5234, %v5205, %v3730
      %v5272 = vsel %vm5234, %v5207, %v3732
      %v5274 = vsel %vm5234, %v5209, %v3734
      %v5276 = vsel %vm5234, %v5211, %v3736
      %v5278 = vsel %vm5234, %v5213, %v3738
      %v5280 = vsel %vm5234, %v5215, %v3740
      %v5282 = vsel %vm5234, %v5217, %v3742
      %v5284 = vsel %vm5234, %v5219, %v3744
      %v5286 = vsel %vm5234, %v5221, %v3746
      %v5288 = vsel %vm5234, %v5223, %v3748
      %v5290 = vsel %vm5234, %v5225, %v3750
      %v5292 = vsel %vm5234, %v5227, %v3752
      %v5294 = vsel %vm5234, %v5229, %v3754
      %v5296 = vsel %vm5234, %v5231, %v3756
      %v5298 = vsel %vm5234, %v5233, %v3758
      %vm5299 = vcmask 80896
      %v5301 = vsel %vm5299, %v5236, %v3952
      %v5303 = vsel %vm5299, %v5238, %v3954
      %v5305 = vsel %vm5299, %v5240, %v3956
      %v5307 = vsel %vm5299, %v5242, %v3958
      %v5309 = vsel %vm5299, %v5244, %v3960
      %v5311 = vsel %vm5299, %v5246, %v3962
      %v5313 = vsel %vm5299, %v5248, %v3964
      %v5315 = vsel %vm5299, %v5250, %v3966
      %v5317 = vsel %vm5299, %v5252, %v3968
      %v5319 = vsel %vm5299, %v5254, %v3970
      %v5321 = vsel %vm5299, %v5256, %v3972
      %v5323 = vsel %vm5299, %v5258, %v3974
      %v5325 = vsel %vm5299, %v5260, %v3976
      %v5327 = vsel %vm5299, %v5262, %v3978
      %v5329 = vsel %vm5299, %v5264, %v3980
      %v5331 = vsel %vm5299, %v5266, %v3982
      %v5333 = vsel %vm5299, %v5268, %v3984
      %v5335 = vsel %vm5299, %v5270, %v3986
      %v5337 = vsel %vm5299, %v5272, %v3988
      %v5339 = vsel %vm5299, %v5274, %v3990
      %v5341 = vsel %vm5299, %v5276, %v3992
      %v5343 = vsel %vm5299, %v5278, %v3994
      %v5345 = vsel %vm5299, %v5280, %v3996
      %v5347 = vsel %vm5299, %v5282, %v3998
      %v5349 = vsel %vm5299, %v5284, %v4000
      %v5351 = vsel %vm5299, %v5286, %v4002
      %v5353 = vsel %vm5299, %v5288, %v4004
      %v5355 = vsel %vm5299, %v5290, %v4006
      %v5357 = vsel %vm5299, %v5292, %v4008
      %v5359 = vsel %vm5299, %v5294, %v4010
      %v5361 = vsel %vm5299, %v5296, %v4012
      %v5363 = vsel %vm5299, %v5298, %v4014
      %vm5364 = vcmask 97280
      %v5366 = vsel %vm5364, %v5301, %v4176
      %v5368 = vsel %vm5364, %v5303, %v4178
      %v5370 = vsel %vm5364, %v5305, %v4180
      %v5372 = vsel %vm5364, %v5307, %v4182
      %v5374 = vsel %vm5364, %v5309, %v4184
      %v5376 = vsel %vm5364, %v5311, %v4186
      %v5378 = vsel %vm5364, %v5313, %v4188
      %v5380 = vsel %vm5364, %v5315, %v4190
      %v5382 = vsel %vm5364, %v5317, %v4192
      %v5384 = vsel %vm5364, %v5319, %v4194
      %v5386 = vsel %vm5364, %v5321, %v4196
      %v5388 = vsel %vm5364, %v5323, %v4198
      %v5390 = vsel %vm5364, %v5325, %v4200
      %v5392 = vsel %vm5364, %v5327, %v4202
      %v5394 = vsel %vm5364, %v5329, %v4204
      %v5396 = vsel %vm5364, %v5331, %v4206
      %v5398 = vsel %vm5364, %v5333, %v4208
      %v5400 = vsel %vm5364, %v5335, %v4210
      %v5402 = vsel %vm5364, %v5337, %v4212
      %v5404 = vsel %vm5364, %v5339, %v4214
      %v5406 = vsel %vm5364, %v5341, %v4216
      %v5408 = vsel %vm5364, %v5343, %v4218
      %v5410 = vsel %vm5364, %v5345, %v4220
      %v5412 = vsel %vm5364, %v5347, %v4222
      %v5414 = vsel %vm5364, %v5349, %v4224
      %v5416 = vsel %vm5364, %v5351, %v4226
      %v5418 = vsel %vm5364, %v5353, %v4228
      %v5420 = vsel %vm5364, %v5355, %v4230
      %v5422 = vsel %vm5364, %v5357, %v4232
      %v5424 = vsel %vm5364, %v5359, %v4234
      %v5426 = vsel %vm5364, %v5361, %v4236
      %v5428 = vsel %vm5364, %v5363, %v4238
      %vm5429 = vcmask 113664
      %v5431 = vsel %vm5429, %v5366, %v4720
      %v5433 = vsel %vm5429, %v5368, %v4722
      %v5435 = vsel %vm5429, %v5370, %v4724
      %v5437 = vsel %vm5429, %v5372, %v4726
      %v5439 = vsel %vm5429, %v5374, %v4728
      %v5441 = vsel %vm5429, %v5376, %v4730
      %v5443 = vsel %vm5429, %v5378, %v4732
      %v5445 = vsel %vm5429, %v5380, %v4734
      %v5447 = vsel %vm5429, %v5382, %v4736
      %v5449 = vsel %vm5429, %v5384, %v4738
      %v5451 = vsel %vm5429, %v5386, %v4740
      %v5453 = vsel %vm5429, %v5388, %v4742
      %v5455 = vsel %vm5429, %v5390, %v4744
      %v5457 = vsel %vm5429, %v5392, %v4746
      %v5459 = vsel %vm5429, %v5394, %v4748
      %v5461 = vsel %vm5429, %v5396, %v4750
      %v5463 = vsel %vm5429, %v5398, %v4752
      %v5465 = vsel %vm5429, %v5400, %v4754
      %v5467 = vsel %vm5429, %v5402, %v4756
      %v5469 = vsel %vm5429, %v5404, %v4758
      %v5471 = vsel %vm5429, %v5406, %v4760
      %v5473 = vsel %vm5429, %v5408, %v4762
      %v5475 = vsel %vm5429, %v5410, %v4764
      %v5477 = vsel %vm5429, %v5412, %v4766
      %v5479 = vsel %vm5429, %v5414, %v4768
      %v5481 = vsel %vm5429, %v5416, %v4770
      %v5483 = vsel %vm5429, %v5418, %v4772
      %v5485 = vsel %vm5429, %v5420, %v4774
      %v5487 = vsel %vm5429, %v5422, %v4776
      %v5489 = vsel %vm5429, %v5424, %v4778
      %v5491 = vsel %vm5429, %v5426, %v4780
      %v5493 = vsel %vm5429, %v5428, %v4782
      %vm5494 = vcmask 130048
      %v5496 = vsel %vm5494, %v5431, %v4976
      %v5498 = vsel %vm5494, %v5433, %v4978
      %v5500 = vsel %vm5494, %v5435, %v4980
      %v5502 = vsel %vm5494, %v5437, %v4982
      %v5504 = vsel %vm5494, %v5439, %v4984
      %v5506 = vsel %vm5494, %v5441, %v4986
      %v5508 = vsel %vm5494, %v5443, %v4988
      %v5510 = vsel %vm5494, %v5445, %v4990
      %v5512 = vsel %vm5494, %v5447, %v4992
      %v5514 = vsel %vm5494, %v5449, %v4994
      %v5516 = vsel %vm5494, %v5451, %v4996
      %v5518 = vsel %vm5494, %v5453, %v4998
      %v5520 = vsel %vm5494, %v5455, %v5000
      %v5522 = vsel %vm5494, %v5457, %v5002
      %v5524 = vsel %vm5494, %v5459, %v5004
      %v5526 = vsel %vm5494, %v5461, %v5006
      %v5528 = vsel %vm5494, %v5463, %v5008
      %v5530 = vsel %vm5494, %v5465, %v5010
      %v5532 = vsel %vm5494, %v5467, %v5012
      %v5534 = vsel %vm5494, %v5469, %v5014
      %v5536 = vsel %vm5494, %v5471, %v5016
      %v5538 = vsel %vm5494, %v5473, %v5018
      %v5540 = vsel %vm5494, %v5475, %v5020
      %v5542 = vsel %vm5494, %v5477, %v5022
      %v5544 = vsel %vm5494, %v5479, %v5024
      %v5546 = vsel %vm5494, %v5481, %v5026
      %v5548 = vsel %vm5494, %v5483, %v5028
      %v5550 = vsel %vm5494, %v5485, %v5030
      %v5552 = vsel %vm5494, %v5487, %v5032
      %v5554 = vsel %vm5494, %v5489, %v5034
      %v5556 = vsel %vm5494, %v5491, %v5036
      %v5558 = vsel %vm5494, %v5493, %v5038
      %v5559 = vld [vmem:[%s1] sm:$0xf]
      %v5560 = vld [vmem:[%s1 + $0x4] sm:$0xf]
      %v5561 = vld [vmem:[%s1 + $0x8] sm:$0x1]
      %v5562 = vld [vmem:[%s2] sm:$0x1]
      %v5564 = vlaneseq
      %v5565 = vshrl.u32 %v5564, 7
      %v5566 = vsub.s32 0, %v5565
      %v5567 = vrot.slane %v5562, %v5566
      %v5572 = vunpack.c.l.b16 %v5559
      %v5573 = vunpack.c.l.b16 %v5560
      %v5574 = vunpack.c.l.b16 %v5561
      %v5575 = vpack.c.b16 %v5573, %v5572
      %v5576 = vpack.c.b16 %v5574, %v5574
      %vm5578 = vcmask 146432
      %v5579 = vsel %vm5578, %v5496, 0
      %v5581 = vsel %vm5578, %v5498, 0
      %v5583 = vsel %vm5578, %v5500, 0
      %v5585 = vsel %vm5578, %v5502, 0
      %v5587 = vsel %vm5578, %v5504, 0
      %v5589 = vsel %vm5578, %v5506, 0
      %v5591 = vsel %vm5578, %v5508, 0
      %v5593 = vsel %vm5578, %v5510, 0
      %v5595 = vsel %vm5578, %v5512, 0
      %v5597 = vsel %vm5578, %v5514, 0
      %v5599 = vsel %vm5578, %v5516, 0
      %v5601 = vsel %vm5578, %v5518, 0
      %v5603 = vsel %vm5578, %v5520, 0
      %v5605 = vsel %vm5578, %v5522, 0
      %v5607 = vsel %vm5578, %v5524, 0
      %v5609 = vsel %vm5578, %v5526, 0
      %v5611 = vsel %vm5578, %v5528, 0
      %v5613 = vsel %vm5578, %v5530, 0
      %v5615 = vsel %vm5578, %v5532, 0
      %v5617 = vsel %vm5578, %v5534, 0
      %v5619 = vsel %vm5578, %v5536, 0
      %v5621 = vsel %vm5578, %v5538, 0
      %v5623 = vsel %vm5578, %v5540, 0
      %v5625 = vsel %vm5578, %v5542, 0
      %v5627 = vsel %vm5578, %v5544, 0
      %v5629 = vsel %vm5578, %v5546, 0
      %v5631 = vsel %vm5578, %v5548, 0
      %v5633 = vsel %vm5578, %v5550, 0
      %v5635 = vsel %vm5578, %v5552, 0
      %v5637 = vsel %vm5578, %v5554, 0
      %v5639 = vsel %vm5578, %v5556, 0
      %v5641 = vsel %vm5578, %v5558, 0
      %vm5643 = vcmask 1040384
      %v5645 = vsel %vm5643, %v5576, 0
      %5647 = vmatprep.subr.bf16.mxu0 0
      %5648 = vmatpush1.bf16.msra.mxu0 0
      %5649 = vmatprep.subr.bf16.mxu0 0
      %5650 = vmatpush1.bf16.msra.mxu0 0
      %5651 = vmatprep.subr.bf16.mxu0 0
      %5652 = vmatpush1.bf16.msra.mxu0 0
      %5653 = vmatprep.subr.bf16.mxu0 0
      %5654 = vmatpush1.bf16.msra.mxu0 0
      %5655 = vmatprep.subr.bf16.mxu0 0
      %5656 = vmatpush1.bf16.msra.mxu0 0
      %5657 = vmatprep.subr.bf16.mxu0 0
      %5658 = vmatpush1.bf16.msra.mxu0 0
      %5659 = vmatprep.subr.bf16.mxu0 0
      %5660 = vmatpush1.bf16.msra.mxu0 %v5645
      %5661 = vmatprep.subr.bf16.mxu0 0
      %5662 = vmatpush1.bf16.msra.mxu0 %v5575
      %5663 = vmatprep.subr.bf16.mxu0 0
      %5664 = vmatpush2.bf16.msra.mxu0 0
      %5665 = vmatprep.subr.bf16.mxu0 0
      %5666 = vmatpush2.bf16.msra.mxu0 0
      %5667 = vmatprep.subr.bf16.mxu0 0
      %5668 = vmatpush2.bf16.msra.mxu0 0
      %5669 = vmatprep.subr.bf16.mxu0 0
      %5670 = vmatpush2.bf16.msra.mxu0 0
      %5671 = vmatprep.subr.bf16.mxu0 0
      %5672 = vmatpush2.bf16.msra.mxu0 0
      %5673 = vmatprep.subr.bf16.mxu0 0
      %5674 = vmatpush2.bf16.msra.mxu0 0
      %5675 = vmatprep.subr.bf16.mxu0 0
      %5676 = vmatpush2.bf16.msra.mxu0 0
      %5677 = vmatprep.subr.bf16.mxu0 0
      %5678 = vmatpush2.bf16.msra.mxu0 0
      %5679 = vmatprep.mubr.bf16.mxu0 0
      %5680 = vmatmul.mubr.bf16.gmra.mxu0 %v5579
      %v5681 = vpop.f32.mrf.mxu0
      %v5682 = vadd.f32 %v5567, %v5681
      %v5683 = vpop.f32.mrf.mxu0
      %v5684 = vpop.f32.mrf.mxu0
      %v5685 = vadd.f32 %v5567, %v5684
      %v5686 = vpop.f32.mrf.mxu0
      %5687 = vmatprep.mubr.bf16.mxu0 0
      %5688 = vmatmul.mubr.bf16.gmra.mxu0 %v5581
      %v5689 = vpop.f32.mrf.mxu0
      %v5690 = vadd.f32 %v5567, %v5689
      %v5691 = vpop.f32.mrf.mxu0
      %v5692 = vpop.f32.mrf.mxu0
      %v5693 = vadd.f32 %v5567, %v5692
      %v5694 = vpop.f32.mrf.mxu0
      %5695 = vmatprep.mubr.bf16.mxu0 0
      %5696 = vmatmul.mubr.bf16.gmra.mxu0 %v5583
      %v5697 = vpop.f32.mrf.mxu0
      %v5698 = vadd.f32 %v5567, %v5697
      %v5699 = vpop.f32.mrf.mxu0
      %v5700 = vpop.f32.mrf.mxu0
      %v5701 = vadd.f32 %v5567, %v5700
      %v5702 = vpop.f32.mrf.mxu0
      %5703 = vmatprep.mubr.bf16.mxu0 0
      %5704 = vmatmul.mubr.bf16.gmra.mxu0 %v5585
      %v5705 = vpop.f32.mrf.mxu0
      %v5706 = vadd.f32 %v5567, %v5705
      %v5707 = vpop.f32.mrf.mxu0
      %v5708 = vpop.f32.mrf.mxu0
      %v5709 = vadd.f32 %v5567, %v5708
      %v5710 = vpop.f32.mrf.mxu0
      %5711 = vmatprep.mubr.bf16.mxu0 0
      %5712 = vmatmul.mubr.bf16.gmra.mxu0 %v5587
      %v5713 = vpop.f32.mrf.mxu0
      %v5714 = vadd.f32 %v5567, %v5713
      %v5715 = vpop.f32.mrf.mxu0
      %v5716 = vpop.f32.mrf.mxu0
      %v5717 = vadd.f32 %v5567, %v5716
      %v5718 = vpop.f32.mrf.mxu0
      %5719 = vmatprep.mubr.bf16.mxu0 0
      %5720 = vmatmul.mubr.bf16.gmra.mxu0 %v5589
      %v5721 = vpop.f32.mrf.mxu0
      %v5722 = vadd.f32 %v5567, %v5721
      %v5723 = vpop.f32.mrf.mxu0
      %v5724 = vpop.f32.mrf.mxu0
      %v5725 = vadd.f32 %v5567, %v5724
      %v5726 = vpop.f32.mrf.mxu0
      %5727 = vmatprep.mubr.bf16.mxu0 0
      %5728 = vmatmul.mubr.bf16.gmra.mxu0 %v5591
      %v5729 = vpop.f32.mrf.mxu0
      %v5730 = vadd.f32 %v5567, %v5729
      %v5731 = vpop.f32.mrf.mxu0
      %v5732 = vpop.f32.mrf.mxu0
      %v5733 = vadd.f32 %v5567, %v5732
      %v5734 = vpop.f32.mrf.mxu0
      %5735 = vmatprep.mubr.bf16.mxu0 0
      %5736 = vmatmul.mubr.bf16.gmra.mxu0 %v5593
      %v5737 = vpop.f32.mrf.mxu0
      %v5738 = vadd.f32 %v5567, %v5737
      %v5739 = vpop.f32.mrf.mxu0
      %v5740 = vpop.f32.mrf.mxu0
      %v5741 = vadd.f32 %v5567, %v5740
      %v5742 = vpop.f32.mrf.mxu0
      %5743 = vmatprep.mubr.bf16.mxu0 0
      %5744 = vmatmul.mubr.bf16.gmra.mxu0 %v5595
      %v5745 = vpop.f32.mrf.mxu0
      %v5746 = vadd.f32 %v5567, %v5745
      %v5747 = vpop.f32.mrf.mxu0
      %v5748 = vpop.f32.mrf.mxu0
      %v5749 = vadd.f32 %v5567, %v5748
      %v5750 = vpop.f32.mrf.mxu0
      %5751 = vmatprep.mubr.bf16.mxu0 0
      %5752 = vmatmul.mubr.bf16.gmra.mxu0 %v5597
      %v5753 = vpop.f32.mrf.mxu0
      %v5754 = vadd.f32 %v5567, %v5753
      %v5755 = vpop.f32.mrf.mxu0
      %v5756 = vpop.f32.mrf.mxu0
      %v5757 = vadd.f32 %v5567, %v5756
      %v5758 = vpop.f32.mrf.mxu0
      %5759 = vmatprep.mubr.bf16.mxu0 0
      %5760 = vmatmul.mubr.bf16.gmra.mxu0 %v5599
      %v5761 = vpop.f32.mrf.mxu0
      %v5762 = vadd.f32 %v5567, %v5761
      %v5763 = vpop.f32.mrf.mxu0
      %v5764 = vpop.f32.mrf.mxu0
      %v5765 = vadd.f32 %v5567, %v5764
      %v5766 = vpop.f32.mrf.mxu0
      %5767 = vmatprep.mubr.bf16.mxu0 0
      %5768 = vmatmul.mubr.bf16.gmra.mxu0 %v5601
      %v5769 = vpop.f32.mrf.mxu0
      %v5770 = vadd.f32 %v5567, %v5769
      %v5771 = vpop.f32.mrf.mxu0
      %v5772 = vpop.f32.mrf.mxu0
      %v5773 = vadd.f32 %v5567, %v5772
      %v5774 = vpop.f32.mrf.mxu0
      %5775 = vmatprep.mubr.bf16.mxu0 0
      %5776 = vmatmul.mubr.bf16.gmra.mxu0 %v5603
      %v5777 = vpop.f32.mrf.mxu0
      %v5778 = vadd.f32 %v5567, %v5777
      %v5779 = vpop.f32.mrf.mxu0
      %v5780 = vpop.f32.mrf.mxu0
      %v5781 = vadd.f32 %v5567, %v5780
      %v5782 = vpop.f32.mrf.mxu0
      %5783 = vmatprep.mubr.bf16.mxu0 0
      %5784 = vmatmul.mubr.bf16.gmra.mxu0 %v5605
      %v5785 = vpop.f32.mrf.mxu0
      %v5786 = vadd.f32 %v5567, %v5785
      %v5787 = vpop.f32.mrf.mxu0
      %v5788 = vpop.f32.mrf.mxu0
      %v5789 = vadd.f32 %v5567, %v5788
      %v5790 = vpop.f32.mrf.mxu0
      %5791 = vmatprep.mubr.bf16.mxu0 0
      %5792 = vmatmul.mubr.bf16.gmra.mxu0 %v5607
      %v5793 = vpop.f32.mrf.mxu0
      %v5794 = vadd.f32 %v5567, %v5793
      %v5795 = vpop.f32.mrf.mxu0
      %v5796 = vpop.f32.mrf.mxu0
      %v5797 = vadd.f32 %v5567, %v5796
      %v5798 = vpop.f32.mrf.mxu0
      %5799 = vmatprep.mubr.bf16.mxu0 0
      %5800 = vmatmul.mubr.bf16.gmra.mxu0 %v5609
      %v5801 = vpop.f32.mrf.mxu0
      %v5802 = vadd.f32 %v5567, %v5801
      %v5803 = vpop.f32.mrf.mxu0
      %v5804 = vpop.f32.mrf.mxu0
      %v5805 = vadd.f32 %v5567, %v5804
      %v5806 = vpop.f32.mrf.mxu0
      %5807 = vmatprep.mubr.bf16.mxu0 0
      %5808 = vmatmul.mubr.bf16.gmra.mxu0 %v5611
      %v5809 = vpop.f32.mrf.mxu0
      %v5810 = vadd.f32 %v5567, %v5809
      %v5811 = vpop.f32.mrf.mxu0
      %v5812 = vpop.f32.mrf.mxu0
      %v5813 = vadd.f32 %v5567, %v5812
      %v5814 = vpop.f32.mrf.mxu0
      %5815 = vmatprep.mubr.bf16.mxu0 0
      %5816 = vmatmul.mubr.bf16.gmra.mxu0 %v5613
      %v5817 = vpop.f32.mrf.mxu0
      %v5818 = vadd.f32 %v5567, %v5817
      %v5819 = vpop.f32.mrf.mxu0
      %v5820 = vpop.f32.mrf.mxu0
      %v5821 = vadd.f32 %v5567, %v5820
      %v5822 = vpop.f32.mrf.mxu0
      %5823 = vmatprep.mubr.bf16.mxu0 0
      %5824 = vmatmul.mubr.bf16.gmra.mxu0 %v5615
      %v5825 = vpop.f32.mrf.mxu0
      %v5826 = vadd.f32 %v5567, %v5825
      %v5827 = vpop.f32.mrf.mxu0
      %v5828 = vpop.f32.mrf.mxu0
      %v5829 = vadd.f32 %v5567, %v5828
      %v5830 = vpop.f32.mrf.mxu0
      %5831 = vmatprep.mubr.bf16.mxu0 0
      %5832 = vmatmul.mubr.bf16.gmra.mxu0 %v5617
      %v5833 = vpop.f32.mrf.mxu0
      %v5834 = vadd.f32 %v5567, %v5833
      %v5835 = vpop.f32.mrf.mxu0
      %v5836 = vpop.f32.mrf.mxu0
      %v5837 = vadd.f32 %v5567, %v5836
      %v5838 = vpop.f32.mrf.mxu0
      %5839 = vmatprep.mubr.bf16.mxu0 0
      %5840 = vmatmul.mubr.bf16.gmra.mxu0 %v5619
      %v5841 = vpop.f32.mrf.mxu0
      %v5842 = vadd.f32 %v5567, %v5841
      %v5843 = vpop.f32.mrf.mxu0
      %v5844 = vpop.f32.mrf.mxu0
      %v5845 = vadd.f32 %v5567, %v5844
      %v5846 = vpop.f32.mrf.mxu0
      %5847 = vmatprep.mubr.bf16.mxu0 0
      %5848 = vmatmul.mubr.bf16.gmra.mxu0 %v5621
      %v5849 = vpop.f32.mrf.mxu0
      %v5850 = vadd.f32 %v5567, %v5849
      %v5851 = vpop.f32.mrf.mxu0
      %v5852 = vpop.f32.mrf.mxu0
      %v5853 = vadd.f32 %v5567, %v5852
      %v5854 = vpop.f32.mrf.mxu0
      %5855 = vmatprep.mubr.bf16.mxu0 0
      %5856 = vmatmul.mubr.bf16.gmra.mxu0 %v5623
      %v5857 = vpop.f32.mrf.mxu0
      %v5858 = vadd.f32 %v5567, %v5857
      %v5859 = vpop.f32.mrf.mxu0
      %v5860 = vpop.f32.mrf.mxu0
      %v5861 = vadd.f32 %v5567, %v5860
      %v5862 = vpop.f32.mrf.mxu0
      %5863 = vmatprep.mubr.bf16.mxu0 0
      %5864 = vmatmul.mubr.bf16.gmra.mxu0 %v5625
      %v5865 = vpop.f32.mrf.mxu0
      %v5866 = vadd.f32 %v5567, %v5865
      %v5867 = vpop.f32.mrf.mxu0
      %v5868 = vpop.f32.mrf.mxu0
      %v5869 = vadd.f32 %v5567, %v5868
      %v5870 = vpop.f32.mrf.mxu0
      %5871 = vmatprep.mubr.bf16.mxu0 0
      %5872 = vmatmul.mubr.bf16.gmra.mxu0 %v5627
      %v5873 = vpop.f32.mrf.mxu0
      %v5874 = vadd.f32 %v5567, %v5873
      %v5875 = vpop.f32.mrf.mxu0
      %v5876 = vpop.f32.mrf.mxu0
      %v5877 = vadd.f32 %v5567, %v5876
      %v5878 = vpop.f32.mrf.mxu0
      %5879 = vmatprep.mubr.bf16.mxu0 0
      %5880 = vmatmul.mubr.bf16.gmra.mxu0 %v5629
      %v5881 = vpop.f32.mrf.mxu0
      %v5882 = vadd.f32 %v5567, %v5881
      %v5883 = vpop.f32.mrf.mxu0
      %v5884 = vpop.f32.mrf.mxu0
      %v5885 = vadd.f32 %v5567, %v5884
      %v5886 = vpop.f32.mrf.mxu0
      %5887 = vmatprep.mubr.bf16.mxu0 0
      %5888 = vmatmul.mubr.bf16.gmra.mxu0 %v5631
      %v5889 = vpop.f32.mrf.mxu0
      %v5890 = vadd.f32 %v5567, %v5889
      %v5891 = vpop.f32.mrf.mxu0
      %v5892 = vpop.f32.mrf.mxu0
      %v5893 = vadd.f32 %v5567, %v5892
      %v5894 = vpop.f32.mrf.mxu0
      %5895 = vmatprep.mubr.bf16.mxu0 0
      %5896 = vmatmul.mubr.bf16.gmra.mxu0 %v5633
      %v5897 = vpop.f32.mrf.mxu0
      %v5898 = vadd.f32 %v5567, %v5897
      %v5899 = vpop.f32.mrf.mxu0
      %v5900 = vpop.f32.mrf.mxu0
      %v5901 = vadd.f32 %v5567, %v5900
      %v5902 = vpop.f32.mrf.mxu0
      %5903 = vmatprep.mubr.bf16.mxu0 0
      %5904 = vmatmul.mubr.bf16.gmra.mxu0 %v5635
      %v5905 = vpop.f32.mrf.mxu0
      %v5906 = vadd.f32 %v5567, %v5905
      %v5907 = vpop.f32.mrf.mxu0
      %v5908 = vpop.f32.mrf.mxu0
      %v5909 = vadd.f32 %v5567, %v5908
      %v5910 = vpop.f32.mrf.mxu0
      %5911 = vmatprep.mubr.bf16.mxu0 0
      %5912 = vmatmul.mubr.bf16.gmra.mxu0 %v5637
      %v5913 = vpop.f32.mrf.mxu0
      %v5914 = vadd.f32 %v5567, %v5913
      %v5915 = vpop.f32.mrf.mxu0
      %v5916 = vpop.f32.mrf.mxu0
      %v5917 = vadd.f32 %v5567, %v5916
      %v5918 = vpop.f32.mrf.mxu0
      %5919 = vmatprep.mubr.bf16.mxu0 0
      %5920 = vmatmul.mubr.bf16.gmra.mxu0 %v5639
      %v5921 = vpop.f32.mrf.mxu0
      %v5922 = vadd.f32 %v5567, %v5921
      %v5923 = vpop.f32.mrf.mxu0
      %v5924 = vpop.f32.mrf.mxu0
      %v5925 = vadd.f32 %v5567, %v5924
      %v5926 = vpop.f32.mrf.mxu0
      %5927 = vmatprep.mubr.bf16.mxu0 0
      %5928 = vmatmul.mubr.bf16.gmra.mxu0 %v5641
      %v5929 = vpop.f32.mrf.mxu0
      %v5930 = vadd.f32 %v5567, %v5929
      %v5931 = vpop.f32.mrf.mxu0
      %v5932 = vpop.f32.mrf.mxu0
      %v5933 = vadd.f32 %v5567, %v5932
      %v5934 = vpop.f32.mrf.mxu0
      %5935 = vdwg.mxu0
      %v5936 = vmax.f32 %v5682, 0.0
      %v5937 = vmax.f32 %v5685, 0.0
      %v5938 = vmax.f32 %v5690, 0.0
      %v5939 = vmax.f32 %v5693, 0.0
      %v5940 = vmax.f32 %v5698, 0.0
      %v5941 = vmax.f32 %v5701, 0.0
      %v5942 = vmax.f32 %v5706, 0.0
      %v5943 = vmax.f32 %v5709, 0.0
      %v5944 = vmax.f32 %v5714, 0.0
      %v5945 = vmax.f32 %v5717, 0.0
      %v5946 = vmax.f32 %v5722, 0.0
      %v5947 = vmax.f32 %v5725, 0.0
      %v5948 = vmax.f32 %v5730, 0.0
      %v5949 = vmax.f32 %v5733, 0.0
      %v5950 = vmax.f32 %v5738, 0.0
      %v5951 = vmax.f32 %v5741, 0.0
      %v5952 = vmax.f32 %v5746, 0.0
      %v5953 = vmax.f32 %v5749, 0.0
      %v5954 = vmax.f32 %v5754, 0.0
      %v5955 = vmax.f32 %v5757, 0.0
      %v5956 = vmax.f32 %v5762, 0.0
      %v5957 = vmax.f32 %v5765, 0.0
      %v5958 = vmax.f32 %v5770, 0.0
      %v5959 = vmax.f32 %v5773, 0.0
      %v5960 = vmax.f32 %v5778, 0.0
      %v5961 = vmax.f32 %v5781, 0.0
      %v5962 = vmax.f32 %v5786, 0.0
      %v5963 = vmax.f32 %v5789, 0.0
      %v5964 = vmax.f32 %v5794, 0.0
      %v5965 = vmax.f32 %v5797, 0.0
      %v5966 = vmax.f32 %v5802, 0.0
      %v5967 = vmax.f32 %v5805, 0.0
      %v5968 = vmax.f32 %v5810, 0.0
      %v5969 = vmax.f32 %v5813, 0.0
      %v5970 = vmax.f32 %v5818, 0.0
      %v5971 = vmax.f32 %v5821, 0.0
      %v5972 = vmax.f32 %v5826, 0.0
      %v5973 = vmax.f32 %v5829, 0.0
      %v5974 = vmax.f32 %v5834, 0.0
      %v5975 = vmax.f32 %v5837, 0.0
      %v5976 = vmax.f32 %v5842, 0.0
      %v5977 = vmax.f32 %v5845, 0.0
      %v5978 = vmax.f32 %v5850, 0.0
      %v5979 = vmax.f32 %v5853, 0.0
      %v5980 = vmax.f32 %v5858, 0.0
      %v5981 = vmax.f32 %v5861, 0.0
      %v5982 = vmax.f32 %v5866, 0.0
      %v5983 = vmax.f32 %v5869, 0.0
      %v5984 = vmax.f32 %v5874, 0.0
      %v5985 = vmax.f32 %v5877, 0.0
      %v5986 = vmax.f32 %v5882, 0.0
      %v5987 = vmax.f32 %v5885, 0.0
      %v5988 = vmax.f32 %v5890, 0.0
      %v5989 = vmax.f32 %v5893, 0.0
      %v5990 = vmax.f32 %v5898, 0.0
      %v5991 = vmax.f32 %v5901, 0.0
      %v5992 = vmax.f32 %v5906, 0.0
      %v5993 = vmax.f32 %v5909, 0.0
      %v5994 = vmax.f32 %v5914, 0.0
      %v5995 = vmax.f32 %v5917, 0.0
      %v5996 = vmax.f32 %v5922, 0.0
      %v5997 = vmax.f32 %v5925, 0.0
      %v5998 = vmax.f32 %v5930, 0.0
      %v5999 = vmax.f32 %v5933, 0.0
      %6000 = vst.msk [vmem:[#allocation3] sm:$0xff] %vm5494, %v5936
      %6001 = vst.msk [vmem:[#allocation3 + $0x8] sm:$0xff] %vm5494, %v5937
      %6002 = vst.msk [vmem:[#allocation3 + $0x10] sm:$0xff] %vm5494, %v5938
      %6003 = vst.msk [vmem:[#allocation3 + $0x18] sm:$0xff] %vm5494, %v5939
      %6004 = vst.msk [vmem:[#allocation3 + $0x20] sm:$0xff] %vm5494, %v5940
      %6005 = vst.msk [vmem:[#allocation3 + $0x28] sm:$0xff] %vm5494, %v5941
      %6006 = vst.msk [vmem:[#allocation3 + $0x30] sm:$0xff] %vm5494, %v5942
      %6007 = vst.msk [vmem:[#allocation3 + $0x38] sm:$0xff] %vm5494, %v5943
      %6008 = vst.msk [vmem:[#allocation3 + $0x40] sm:$0xff] %vm5494, %v5944
      %6009 = vst.msk [vmem:[#allocation3 + $0x48] sm:$0xff] %vm5494, %v5945
      %6010 = vst.msk [vmem:[#allocation3 + $0x50] sm:$0xff] %vm5494, %v5946
      %6011 = vst.msk [vmem:[#allocation3 + $0x58] sm:$0xff] %vm5494, %v5947
      %6012 = vst.msk [vmem:[#allocation3 + $0x60] sm:$0xff] %vm5494, %v5948
      %6013 = vst.msk [vmem:[#allocation3 + $0x68] sm:$0xff] %vm5494, %v5949
      %6014 = vst.msk [vmem:[#allocation3 + $0x70] sm:$0xff] %vm5494, %v5950
      %6015 = vst.msk [vmem:[#allocation3 + $0x78] sm:$0xff] %vm5494, %v5951
      %6016 = vst.msk [vmem:[#allocation3 + $0x80] sm:$0xff] %vm5494, %v5952
      %6017 = vst.msk [vmem:[#allocation3 + $0x88] sm:$0xff] %vm5494, %v5953
      %6018 = vst.msk [vmem:[#allocation3 + $0x90] sm:$0xff] %vm5494, %v5954
      %6019 = vst.msk [vmem:[#allocation3 + $0x98] sm:$0xff] %vm5494, %v5955
      %6020 = vst.msk [vmem:[#allocation3 + $0xa0] sm:$0xff] %vm5494, %v5956
      %6021 = vst.msk [vmem:[#allocation3 + $0xa8] sm:$0xff] %vm5494, %v5957
      %6022 = vst.msk [vmem:[#allocation3 + $0xb0] sm:$0xff] %vm5494, %v5958
      %6023 = vst.msk [vmem:[#allocation3 + $0xb8] sm:$0xff] %vm5494, %v5959
      %6024 = vst.msk [vmem:[#allocation3 + $0xc0] sm:$0xff] %vm5494, %v5960
      %6025 = vst.msk [vmem:[#allocation3 + $0xc8] sm:$0xff] %vm5494, %v5961
      %6026 = vst.msk [vmem:[#allocation3 + $0xd0] sm:$0xff] %vm5494, %v5962
      %6027 = vst.msk [vmem:[#allocation3 + $0xd8] sm:$0xff] %vm5494, %v5963
      %6028 = vst.msk [vmem:[#allocation3 + $0xe0] sm:$0xff] %vm5494, %v5964
      %6029 = vst.msk [vmem:[#allocation3 + $0xe8] sm:$0xff] %vm5494, %v5965
      %6030 = vst.msk [vmem:[#allocation3 + $0xf0] sm:$0xff] %vm5494, %v5966
      %6031 = vst.msk [vmem:[#allocation3 + $0xf8] sm:$0xff] %vm5494, %v5967
      %6032 = vst.msk [vmem:[#allocation3 + $0x100] sm:$0xff] %vm5494, %v5968
      %6033 = vst.msk [vmem:[#allocation3 + $0x108] sm:$0xff] %vm5494, %v5969
      %6034 = vst.msk [vmem:[#allocation3 + $0x110] sm:$0xff] %vm5494, %v5970
      %6035 = vst.msk [vmem:[#allocation3 + $0x118] sm:$0xff] %vm5494, %v5971
      %6036 = vst.msk [vmem:[#allocation3 + $0x120] sm:$0xff] %vm5494, %v5972
      %6037 = vst.msk [vmem:[#allocation3 + $0x128] sm:$0xff] %vm5494, %v5973
      %6038 = vst.msk [vmem:[#allocation3 + $0x130] sm:$0xff] %vm5494, %v5974
      %6039 = vst.msk [vmem:[#allocation3 + $0x138] sm:$0xff] %vm5494, %v5975
      %6040 = vst.msk [vmem:[#allocation3 + $0x140] sm:$0xff] %vm5494, %v5976
      %6041 = vst.msk [vmem:[#allocation3 + $0x148] sm:$0xff] %vm5494, %v5977
      %6042 = vst.msk [vmem:[#allocation3 + $0x150] sm:$0xff] %vm5494, %v5978
      %6043 = vst.msk [vmem:[#allocation3 + $0x158] sm:$0xff] %vm5494, %v5979
      %6044 = vst.msk [vmem:[#allocation3 + $0x160] sm:$0xff] %vm5494, %v5980
      %6045 = vst.msk [vmem:[#allocation3 + $0x168] sm:$0xff] %vm5494, %v5981
      %6046 = vst.msk [vmem:[#allocation3 + $0x170] sm:$0xff] %vm5494, %v5982
      %6047 = vst.msk [vmem:[#allocation3 + $0x178] sm:$0xff] %vm5494, %v5983
      %6048 = vst.msk [vmem:[#allocation3 + $0x180] sm:$0xff] %vm5494, %v5984
      %6049 = vst.msk [vmem:[#allocation3 + $0x188] sm:$0xff] %vm5494, %v5985
      %6050 = vst.msk [vmem:[#allocation3 + $0x190] sm:$0xff] %vm5494, %v5986
      %6051 = vst.msk [vmem:[#allocation3 + $0x198] sm:$0xff] %vm5494, %v5987
      %6052 = vst.msk [vmem:[#allocation3 + $0x1a0] sm:$0xff] %vm5494, %v5988
      %6053 = vst.msk [vmem:[#allocation3 + $0x1a8] sm:$0xff] %vm5494, %v5989
      %6054 = vst.msk [vmem:[#allocation3 + $0x1b0] sm:$0xff] %vm5494, %v5990
      %6055 = vst.msk [vmem:[#allocation3 + $0x1b8] sm:$0xff] %vm5494, %v5991
      %6056 = vst.msk [vmem:[#allocation3 + $0x1c0] sm:$0xff] %vm5494, %v5992
      %6057 = vst.msk [vmem:[#allocation3 + $0x1c8] sm:$0xff] %vm5494, %v5993
      %6058 = vst.msk [vmem:[#allocation3 + $0x1d0] sm:$0xff] %vm5494, %v5994
      %6059 = vst.msk [vmem:[#allocation3 + $0x1d8] sm:$0xff] %vm5494, %v5995
      %6060 = vst.msk [vmem:[#allocation3 + $0x1e0] sm:$0xff] %vm5494, %v5996
      %6061 = vst.msk [vmem:[#allocation3 + $0x1e8] sm:$0xff] %vm5494, %v5997
      %6062 = vst.msk [vmem:[#allocation3 + $0x1f0] sm:$0xff] %vm5494, %v5998
      %6063 = vst.msk [vmem:[#allocation3 + $0x1f8] sm:$0xff] %vm5494, %v5999
      %v6064 = vld [vmem:[#allocation3] ss:$2 sm:$0xff]
      %s6065 = scalar_lea.vmem [#allocation3], 16
      %v6066 = vld [vmem:[%s6065] ss:$2 sm:$0xff]
      %s6067 = scalar_lea.vmem [#allocation3], 32
      %v6068 = vld [vmem:[%s6067] ss:$2 sm:$0xff]
      %s6069 = scalar_lea.vmem [#allocation3], 48
      %v6070 = vld [vmem:[%s6069] ss:$2 sm:$0xff]
      %s6071 = scalar_lea.vmem [#allocation3], 64
      %v6072 = vld [vmem:[%s6071] ss:$2 sm:$0xff]
      %s6073 = scalar_lea.vmem [#allocation3], 80
      %v6074 = vld [vmem:[%s6073] ss:$2 sm:$0xff]
      %s6075 = scalar_lea.vmem [#allocation3], 96
      %v6076 = vld [vmem:[%s6075] ss:$2 sm:$0xff]
      %s6077 = scalar_lea.vmem [#allocation3], 112
      %v6078 = vld [vmem:[%s6077] ss:$2 sm:$0xff]
      %s6079 = scalar_lea.vmem [#allocation3], 128
      %v6080 = vld [vmem:[%s6079] ss:$2 sm:$0xff]
      %s6081 = scalar_lea.vmem [#allocation3], 144
      %v6082 = vld [vmem:[%s6081] ss:$2 sm:$0xff]
      %s6083 = scalar_lea.vmem [#allocation3], 160
      %v6084 = vld [vmem:[%s6083] ss:$2 sm:$0xff]
      %s6085 = scalar_lea.vmem [#allocation3], 176
      %v6086 = vld [vmem:[%s6085] ss:$2 sm:$0xff]
      %s6087 = scalar_lea.vmem [#allocation3], 192
      %v6088 = vld [vmem:[%s6087] ss:$2 sm:$0xff]
      %s6089 = scalar_lea.vmem [#allocation3], 208
      %v6090 = vld [vmem:[%s6089] ss:$2 sm:$0xff]
      %s6091 = scalar_lea.vmem [#allocation3], 224
      %v6092 = vld [vmem:[%s6091] ss:$2 sm:$0xff]
      %s6093 = scalar_lea.vmem [#allocation3], 240
      %v6094 = vld [vmem:[%s6093] ss:$2 sm:$0xff]
      %s6095 = scalar_lea.vmem [#allocation3], 256
      %v6096 = vld [vmem:[%s6095] ss:$2 sm:$0xff]
      %s6097 = scalar_lea.vmem [#allocation3], 272
      %v6098 = vld [vmem:[%s6097] ss:$2 sm:$0xff]
      %s6099 = scalar_lea.vmem [#allocation3], 288
      %v6100 = vld [vmem:[%s6099] ss:$2 sm:$0xff]
      %s6101 = scalar_lea.vmem [#allocation3], 304
      %v6102 = vld [vmem:[%s6101] ss:$2 sm:$0xff]
      %s6103 = scalar_lea.vmem [#allocation3], 320
      %v6104 = vld [vmem:[%s6103] ss:$2 sm:$0xff]
      %s6105 = scalar_lea.vmem [#allocation3], 336
      %v6106 = vld [vmem:[%s6105] ss:$2 sm:$0xff]
      %s6107 = scalar_lea.vmem [#allocation3], 352
      %v6108 = vld [vmem:[%s6107] ss:$2 sm:$0xff]
      %s6109 = scalar_lea.vmem [#allocation3], 368
      %v6110 = vld [vmem:[%s6109] ss:$2 sm:$0xff]
      %s6111 = scalar_lea.vmem [#allocation3], 384
      %v6112 = vld [vmem:[%s6111] ss:$2 sm:$0xff]
      %s6113 = scalar_lea.vmem [#allocation3], 400
      %v6114 = vld [vmem:[%s6113] ss:$2 sm:$0xff]
      %s6115 = scalar_lea.vmem [#allocation3], 416
      %v6116 = vld [vmem:[%s6115] ss:$2 sm:$0xff]
      %s6117 = scalar_lea.vmem [#allocation3], 432
      %v6118 = vld [vmem:[%s6117] ss:$2 sm:$0xff]
      %s6119 = scalar_lea.vmem [#allocation3], 448
      %v6120 = vld [vmem:[%s6119] ss:$2 sm:$0xff]
      %s6121 = scalar_lea.vmem [#allocation3], 464
      %v6122 = vld [vmem:[%s6121] ss:$2 sm:$0xff]
      %s6123 = scalar_lea.vmem [#allocation3], 480
      %v6124 = vld [vmem:[%s6123] ss:$2 sm:$0xff]
      %s6125 = scalar_lea.vmem [#allocation3], 496
      %v6126 = vld [vmem:[%s6125] ss:$2 sm:$0xff]
      %s6127 = scalar_lea.vmem [#allocation3], 1
      %v6128 = vld [vmem:[%s6127] ss:$2 sm:$0xff]
      %s6129 = scalar_lea.vmem [#allocation3], 17
      %v6130 = vld [vmem:[%s6129] ss:$2 sm:$0xff]
      %s6131 = scalar_lea.vmem [#allocation3], 33
      %v6132 = vld [vmem:[%s6131] ss:$2 sm:$0xff]
      %s6133 = scalar_lea.vmem [#allocation3], 49
      %v6134 = vld [vmem:[%s6133] ss:$2 sm:$0xff]
      %s6135 = scalar_lea.vmem [#allocation3], 65
      %v6136 = vld [vmem:[%s6135] ss:$2 sm:$0xff]
      %s6137 = scalar_lea.vmem [#allocation3], 81
      %v6138 = vld [vmem:[%s6137] ss:$2 sm:$0xff]
      %s6139 = scalar_lea.vmem [#allocation3], 97
      %v6140 = vld [vmem:[%s6139] ss:$2 sm:$0xff]
      %s6141 = scalar_lea.vmem [#allocation3], 113
      %v6142 = vld [vmem:[%s6141] ss:$2 sm:$0xff]
      %s6143 = scalar_lea.vmem [#allocation3], 129
      %v6144 = vld [vmem:[%s6143] ss:$2 sm:$0xff]
      %s6145 = scalar_lea.vmem [#allocation3], 145
      %v6146 = vld [vmem:[%s6145] ss:$2 sm:$0xff]
      %s6147 = scalar_lea.vmem [#allocation3], 161
      %v6148 = vld [vmem:[%s6147] ss:$2 sm:$0xff]
      %s6149 = scalar_lea.vmem [#allocation3], 177
      %v6150 = vld [vmem:[%s6149] ss:$2 sm:$0xff]
      %s6151 = scalar_lea.vmem [#allocation3], 193
      %v6152 = vld [vmem:[%s6151] ss:$2 sm:$0xff]
      %s6153 = scalar_lea.vmem [#allocation3], 209
      %v6154 = vld [vmem:[%s6153] ss:$2 sm:$0xff]
      %s6155 = scalar_lea.vmem [#allocation3], 225
      %v6156 = vld [vmem:[%s6155] ss:$2 sm:$0xff]
      %s6157 = scalar_lea.vmem [#allocation3], 241
      %v6158 = vld [vmem:[%s6157] ss:$2 sm:$0xff]
      %s6159 = scalar_lea.vmem [#allocation3], 257
      %v6160 = vld [vmem:[%s6159] ss:$2 sm:$0xff]
      %s6161 = scalar_lea.vmem [#allocation3], 273
      %v6162 = vld [vmem:[%s6161] ss:$2 sm:$0xff]
      %s6163 = scalar_lea.vmem [#allocation3], 289
      %v6164 = vld [vmem:[%s6163] ss:$2 sm:$0xff]
      %s6165 = scalar_lea.vmem [#allocation3], 305
      %v6166 = vld [vmem:[%s6165] ss:$2 sm:$0xff]
      %s6167 = scalar_lea.vmem [#allocation3], 321
      %v6168 = vld [vmem:[%s6167] ss:$2 sm:$0xff]
      %s6169 = scalar_lea.vmem [#allocation3], 337
      %v6170 = vld [vmem:[%s6169] ss:$2 sm:$0xff]
      %s6171 = scalar_lea.vmem [#allocation3], 353
      %v6172 = vld [vmem:[%s6171] ss:$2 sm:$0xff]
      %s6173 = scalar_lea.vmem [#allocation3], 369
      %v6174 = vld [vmem:[%s6173] ss:$2 sm:$0xff]
      %s6175 = scalar_lea.vmem [#allocation3], 385
      %v6176 = vld [vmem:[%s6175] ss:$2 sm:$0xff]
      %s6177 = scalar_lea.vmem [#allocation3], 401
      %v6178 = vld [vmem:[%s6177] ss:$2 sm:$0xff]
      %s6179 = scalar_lea.vmem [#allocation3], 417
      %v6180 = vld [vmem:[%s6179] ss:$2 sm:$0xff]
      %s6181 = scalar_lea.vmem [#allocation3], 433
      %v6182 = vld [vmem:[%s6181] ss:$2 sm:$0xff]
      %s6183 = scalar_lea.vmem [#allocation3], 449
      %v6184 = vld [vmem:[%s6183] ss:$2 sm:$0xff]
      %s6185 = scalar_lea.vmem [#allocation3], 465
      %v6186 = vld [vmem:[%s6185] ss:$2 sm:$0xff]
      %s6187 = scalar_lea.vmem [#allocation3], 481
      %v6188 = vld [vmem:[%s6187] ss:$2 sm:$0xff]
      %s6189 = scalar_lea.vmem [#allocation3], 497
      %v6190 = vld [vmem:[%s6189] ss:$2 sm:$0xff]
      %v6191 = vmax.f32 %v6064, %v6128
      %v6192 = vmax.f32 %v6066, %v6130
      %v6193 = vmax.f32 %v6068, %v6132
      %v6194 = vmax.f32 %v6070, %v6134
      %v6195 = vmax.f32 %v6072, %v6136
      %v6196 = vmax.f32 %v6074, %v6138
      %v6197 = vmax.f32 %v6076, %v6140
      %v6198 = vmax.f32 %v6078, %v6142
      %v6199 = vmax.f32 %v6080, %v6144
      %v6200 = vmax.f32 %v6082, %v6146
      %v6201 = vmax.f32 %v6084, %v6148
      %v6202 = vmax.f32 %v6086, %v6150
      %v6203 = vmax.f32 %v6088, %v6152
      %v6204 = vmax.f32 %v6090, %v6154
      %v6205 = vmax.f32 %v6092, %v6156
      %v6206 = vmax.f32 %v6094, %v6158
      %v6207 = vmax.f32 %v6096, %v6160
      %v6208 = vmax.f32 %v6098, %v6162
      %v6209 = vmax.f32 %v6100, %v6164
      %v6210 = vmax.f32 %v6102, %v6166
      %v6211 = vmax.f32 %v6104, %v6168
      %v6212 = vmax.f32 %v6106, %v6170
      %v6213 = vmax.f32 %v6108, %v6172
      %v6214 = vmax.f32 %v6110, %v6174
      %v6215 = vmax.f32 %v6112, %v6176
      %v6216 = vmax.f32 %v6114, %v6178
      %v6217 = vmax.f32 %v6116, %v6180
      %v6218 = vmax.f32 %v6118, %v6182
      %v6219 = vmax.f32 %v6120, %v6184
      %v6220 = vmax.f32 %v6122, %v6186
      %v6221 = vmax.f32 %v6124, %v6188
      %v6222 = vmax.f32 %v6126, %v6190
      %v6223 = vmax.f32 %v6191, %v6192
      %v6224 = vmax.f32 %v6193, %v6194
      %v6225 = vmax.f32 %v6195, %v6196
      %v6226 = vmax.f32 %v6197, %v6198
      %v6227 = vmax.f32 %v6199, %v6200
      %v6228 = vmax.f32 %v6201, %v6202
      %v6229 = vmax.f32 %v6203, %v6204
      %v6230 = vmax.f32 %v6205, %v6206
      %v6231 = vmax.f32 %v6207, %v6208
      %v6232 = vmax.f32 %v6209, %v6210
      %v6233 = vmax.f32 %v6211, %v6212
      %v6234 = vmax.f32 %v6213, %v6214
      %v6235 = vmax.f32 %v6215, %v6216
      %v6236 = vmax.f32 %v6217, %v6218
      %v6237 = vmax.f32 %v6219, %v6220
      %v6238 = vmax.f32 %v6221, %v6222
      %vm6239 = vcmask 125952
      %6240 = vst.msk [vmem:[#allocation4] sm:$0xf] %vm6239, 0
      %vm6241 = vcmask 122880
      %6242 = vst.msk [vmem:[#allocation4 + $0x4] sm:$0x1] %vm6241, 0
      %6243 = vst.msk [vmem:[#allocation4 + $0x50] sm:$0xf] %vm6239, 0
      %6244 = vst.msk [vmem:[#allocation4 + $0x54] sm:$0x1] %vm6241, 0
      %s6245 = scalar_lea.vmem [#allocation4], 72
      %6246 = vst.msk [vmem:[%s6245] sm:$0xf] %vm6239, 0
      %6247 = vst.msk [vmem:[%s6245 + $0x4] sm:$0x1] %vm6241, 0
      %6248 = vst.msk [vmem:[%s6245 + $0x50] sm:$0xf] %vm6239, 0
      %6249 = vst.msk [vmem:[%s6245 + $0x54] sm:$0x1] %vm6241, 0
      %vm6250 = vcmask 122880
      %vm6251 = vmand %vm6250, %vm299
      %v6252 = vld [vmem:[#allocation4] sm:$0x1]
      %v6253 = vsel %vm6251, 0, %v6252
      %6254 = vst [vmem:[#allocation4] sm:$0x1] %v6253
      %v6255 = vld [vmem:[#allocation4 + $0x8] sm:$0x1]
      %v6256 = vsel %vm6251, 0, %v6255
      %6257 = vst [vmem:[#allocation4 + $0x8] sm:$0x1] %v6256
      %v6258 = vld [vmem:[#allocation4 + $0x10] sm:$0x1]
      %v6259 = vsel %vm6251, 0, %v6258
      %6260 = vst [vmem:[#allocation4 + $0x10] sm:$0x1] %v6259
      %v6261 = vld [vmem:[#allocation4 + $0x18] sm:$0x1]
      %v6262 = vsel %vm6251, 0, %v6261
      %6263 = vst [vmem:[#allocation4 + $0x18] sm:$0x1] %v6262
      %v6264 = vld [vmem:[#allocation4 + $0x20] sm:$0x1]
      %v6265 = vsel %vm6251, 0, %v6264
      %6266 = vst [vmem:[#allocation4 + $0x20] sm:$0x1] %v6265
      %v6267 = vld [vmem:[#allocation4 + $0x28] sm:$0x1]
      %v6268 = vsel %vm6251, 0, %v6267
      %6269 = vst [vmem:[#allocation4 + $0x28] sm:$0x1] %v6268
      %v6270 = vld [vmem:[#allocation4 + $0x30] sm:$0x1]
      %v6271 = vsel %vm6251, 0, %v6270
      %6272 = vst [vmem:[#allocation4 + $0x30] sm:$0x1] %v6271
      %v6273 = vld [vmem:[#allocation4 + $0x38] sm:$0x1]
      %v6274 = vsel %vm6251, 0, %v6273
      %6275 = vst [vmem:[#allocation4 + $0x38] sm:$0x1] %v6274
      %v6276 = vld [vmem:[#allocation4 + $0x40] sm:$0x1]
      %v6277 = vsel %vm6251, 0, %v6276
      %6278 = vst [vmem:[#allocation4 + $0x40] sm:$0x1] %v6277
      %v6279 = vld [vmem:[#allocation4 + $0x48] sm:$0x1]
      %v6280 = vsel %vm6251, 0, %v6279
      %6281 = vst [vmem:[#allocation4 + $0x48] sm:$0x1] %v6280
      %v6282 = vld [vmem:[#allocation4 + $0x50] sm:$0x1]
      %v6283 = vsel %vm6251, 0, %v6282
      %6284 = vst [vmem:[#allocation4 + $0x50] sm:$0x1] %v6283
      %v6285 = vld [vmem:[#allocation4 + $0x58] sm:$0x1]
      %v6286 = vsel %vm6251, 0, %v6285
      %6287 = vst [vmem:[#allocation4 + $0x58] sm:$0x1] %v6286
      %v6288 = vld [vmem:[#allocation4 + $0x60] sm:$0x1]
      %v6289 = vsel %vm6251, 0, %v6288
      %6290 = vst [vmem:[#allocation4 + $0x60] sm:$0x1] %v6289
      %v6291 = vld [vmem:[#allocation4 + $0x68] sm:$0x1]
      %v6292 = vsel %vm6251, 0, %v6291
      %6293 = vst [vmem:[#allocation4 + $0x68] sm:$0x1] %v6292
      %v6294 = vld [vmem:[#allocation4 + $0x70] sm:$0x1]
      %v6295 = vsel %vm6251, 0, %v6294
      %6296 = vst [vmem:[#allocation4 + $0x70] sm:$0x1] %v6295
      %v6297 = vld [vmem:[#allocation4 + $0x78] sm:$0x1]
      %v6298 = vsel %vm6251, 0, %v6297
      %6299 = vst [vmem:[#allocation4 + $0x78] sm:$0x1] %v6298
      %v6300 = vld [vmem:[#allocation4 + $0x80] sm:$0x1]
      %v6301 = vsel %vm6251, 0, %v6300
      %6302 = vst [vmem:[#allocation4 + $0x80] sm:$0x1] %v6301
      %v6303 = vld [vmem:[#allocation4 + $0x88] sm:$0x1]
      %v6304 = vsel %vm6251, 0, %v6303
      %6305 = vst [vmem:[#allocation4 + $0x88] sm:$0x1] %v6304
      %v6306 = vld [vmem:[#allocation4 + $0x90] sm:$0x1]
      %v6307 = vsel %vm6251, 0, %v6306
      %6308 = vst [vmem:[#allocation4 + $0x90] sm:$0x1] %v6307
      %v6309 = vld [vmem:[#allocation4 + $0x98] sm:$0x1]
      %v6310 = vsel %vm6251, 0, %v6309
      %6311 = vst [vmem:[#allocation4 + $0x98] sm:$0x1] %v6310
      %vm6312 = vmand %vm6250, %vm409
      %v6313 = vld [vmem:[#allocation4 + $0x4] sm:$0x1]
      %v6314 = vsel %vm6312, 0, %v6313
      %6315 = vst [vmem:[#allocation4 + $0x4] sm:$0x1] %v6314
      %v6316 = vld [vmem:[#allocation4 + $0xc] sm:$0x1]
      %v6317 = vsel %vm6312, 0, %v6316
      %6318 = vst [vmem:[#allocation4 + $0xc] sm:$0x1] %v6317
      %v6319 = vld [vmem:[#allocation4 + $0x14] sm:$0x1]
      %v6320 = vsel %vm6312, 0, %v6319
      %6321 = vst [vmem:[#allocation4 + $0x14] sm:$0x1] %v6320
      %v6322 = vld [vmem:[#allocation4 + $0x1c] sm:$0x1]
      %v6323 = vsel %vm6312, 0, %v6322
      %6324 = vst [vmem:[#allocation4 + $0x1c] sm:$0x1] %v6323
      %v6325 = vld [vmem:[#allocation4 + $0x24] sm:$0x1]
      %v6326 = vsel %vm6312, 0, %v6325
      %6327 = vst [vmem:[#allocation4 + $0x24] sm:$0x1] %v6326
      %v6328 = vld [vmem:[#allocation4 + $0x2c] sm:$0x1]
      %v6329 = vsel %vm6312, 0, %v6328
      %6330 = vst [vmem:[#allocation4 + $0x2c] sm:$0x1] %v6329
      %v6331 = vld [vmem:[#allocation4 + $0x34] sm:$0x1]
      %v6332 = vsel %vm6312, 0, %v6331
      %6333 = vst [vmem:[#allocation4 + $0x34] sm:$0x1] %v6332
      %v6334 = vld [vmem:[#allocation4 + $0x3c] sm:$0x1]
      %v6335 = vsel %vm6312, 0, %v6334
      %6336 = vst [vmem:[#allocation4 + $0x3c] sm:$0x1] %v6335
      %v6337 = vld [vmem:[#allocation4 + $0x44] sm:$0x1]
      %v6338 = vsel %vm6312, 0, %v6337
      %6339 = vst [vmem:[#allocation4 + $0x44] sm:$0x1] %v6338
      %v6340 = vld [vmem:[#allocation4 + $0x4c] sm:$0x1]
      %v6341 = vsel %vm6312, 0, %v6340
      %6342 = vst [vmem:[#allocation4 + $0x4c] sm:$0x1] %v6341
      %v6343 = vld [vmem:[#allocation4 + $0x54] sm:$0x1]
      %v6344 = vsel %vm6312, 0, %v6343
      %6345 = vst [vmem:[#allocation4 + $0x54] sm:$0x1] %v6344
      %v6346 = vld [vmem:[#allocation4 + $0x5c] sm:$0x1]
      %v6347 = vsel %vm6312, 0, %v6346
      %6348 = vst [vmem:[#allocation4 + $0x5c] sm:$0x1] %v6347
      %v6349 = vld [vmem:[#allocation4 + $0x64] sm:$0x1]
      %v6350 = vsel %vm6312, 0, %v6349
      %6351 = vst [vmem:[#allocation4 + $0x64] sm:$0x1] %v6350
      %v6352 = vld [vmem:[#allocation4 + $0x6c] sm:$0x1]
      %v6353 = vsel %vm6312, 0, %v6352
      %6354 = vst [vmem:[#allocation4 + $0x6c] sm:$0x1] %v6353
      %v6355 = vld [vmem:[#allocation4 + $0x74] sm:$0x1]
      %v6356 = vsel %vm6312, 0, %v6355
      %6357 = vst [vmem:[#allocation4 + $0x74] sm:$0x1] %v6356
      %v6358 = vld [vmem:[#allocation4 + $0x7c] sm:$0x1]
      %v6359 = vsel %vm6312, 0, %v6358
      %6360 = vst [vmem:[#allocation4 + $0x7c] sm:$0x1] %v6359
      %v6361 = vld [vmem:[#allocation4 + $0x84] sm:$0x1]
      %v6362 = vsel %vm6312, 0, %v6361
      %6363 = vst [vmem:[#allocation4 + $0x84] sm:$0x1] %v6362
      %v6364 = vld [vmem:[#allocation4 + $0x8c] sm:$0x1]
      %v6365 = vsel %vm6312, 0, %v6364
      %6366 = vst [vmem:[#allocation4 + $0x8c] sm:$0x1] %v6365
      %v6367 = vld [vmem:[#allocation4 + $0x94] sm:$0x1]
      %v6368 = vsel %vm6312, 0, %v6367
      %6369 = vst [vmem:[#allocation4 + $0x94] sm:$0x1] %v6368
      %v6370 = vld [vmem:[#allocation4 + $0x9c] sm:$0x1]
      %v6371 = vsel %vm6312, 0, %v6370
      %6372 = vst [vmem:[#allocation4 + $0x9c] sm:$0x1] %v6371
      %v6373 = vpack.c.bf16 %v6223, %v6223
      %v6374 = vpack.c.bf16 %v6224, %v6224
      %v6375 = vpack.c.bf16 %v6225, %v6225
      %v6376 = vpack.c.bf16 %v6226, %v6226
      %v6377 = vpack.c.bf16 %v6227, %v6227
      %v6378 = vpack.c.bf16 %v6228, %v6228
      %v6379 = vpack.c.bf16 %v6229, %v6229
      %v6380 = vpack.c.bf16 %v6230, %v6230
      %v6381 = vpack.c.bf16 %v6231, %v6231
      %v6382 = vpack.c.bf16 %v6232, %v6232
      %v6383 = vpack.c.bf16 %v6233, %v6233
      %v6384 = vpack.c.bf16 %v6234, %v6234
      %v6385 = vpack.c.bf16 %v6235, %v6235
      %v6386 = vpack.c.bf16 %v6236, %v6236
      %v6387 = vpack.c.bf16 %v6237, %v6237
      %v6388 = vpack.c.bf16 %v6238, %v6238
      %v6405 = vunpack.c.l.b16 %v6373
      %v6406 = vunpack.c.l.b16 %v6374
      %v6407 = vunpack.c.l.b16 %v6375
      %v6408 = vunpack.c.l.b16 %v6376
      %v6409 = vunpack.c.l.b16 %v6377
      %v6410 = vunpack.c.l.b16 %v6378
      %v6411 = vunpack.c.l.b16 %v6379
      %v6412 = vunpack.c.l.b16 %v6380
      %v6413 = vunpack.c.l.b16 %v6381
      %v6414 = vunpack.c.l.b16 %v6382
      %v6415 = vunpack.c.l.b16 %v6383
      %v6416 = vunpack.c.l.b16 %v6384
      %v6417 = vunpack.c.l.b16 %v6385
      %v6418 = vunpack.c.l.b16 %v6386
      %v6419 = vunpack.c.l.b16 %v6387
      %v6420 = vunpack.c.l.b16 %v6388
      %v6421 = vpack.c.b16 %v6405, %v6405
      %v6422 = vpack.c.b16 %v6406, %v6406
      %v6423 = vpack.c.b16 %v6407, %v6407
      %v6424 = vpack.c.b16 %v6408, %v6408
      %v6425 = vpack.c.b16 %v6409, %v6409
      %v6426 = vpack.c.b16 %v6410, %v6410
      %v6427 = vpack.c.b16 %v6411, %v6411
      %v6428 = vpack.c.b16 %v6412, %v6412
      %v6429 = vpack.c.b16 %v6413, %v6413
      %v6430 = vpack.c.b16 %v6414, %v6414
      %v6431 = vpack.c.b16 %v6415, %v6415
      %v6432 = vpack.c.b16 %v6416, %v6416
      %v6433 = vpack.c.b16 %v6417, %v6417
      %v6434 = vpack.c.b16 %v6418, %v6418
      %v6435 = vpack.c.b16 %v6419, %v6419
      %v6436 = vpack.c.b16 %v6420, %v6420
      %v6438 = vshrl.u32 %v6421, 16
      %v6440 = vrot.slane %v6438, 7
      %v6441 = vshll.u32 %v6421, 16
      %v6443 = vor.u32 %v6440, %v6441
      %v6444 = vrot.slane %v6440, 4
      %v6446 = vshrl.u32 %v6422, 16
      %v6448 = vrot.slane %v6446, 7
      %v6449 = vshll.u32 %v6422, 16
      %v6451 = vor.u32 %v6448, %v6449
      %v6452 = vrot.slane %v6448, 4
      %v6454 = vshrl.u32 %v6423, 16
      %v6456 = vrot.slane %v6454, 7
      %v6457 = vshll.u32 %v6423, 16
      %v6459 = vor.u32 %v6456, %v6457
      %v6460 = vrot.slane %v6456, 4
      %v6462 = vshrl.u32 %v6424, 16
      %v6464 = vrot.slane %v6462, 7
      %v6465 = vshll.u32 %v6424, 16
      %v6467 = vor.u32 %v6464, %v6465
      %v6468 = vrot.slane %v6464, 4
      %v6470 = vshrl.u32 %v6425, 16
      %v6472 = vrot.slane %v6470, 7
      %v6473 = vshll.u32 %v6425, 16
      %v6475 = vor.u32 %v6472, %v6473
      %v6476 = vrot.slane %v6472, 4
      %v6478 = vshrl.u32 %v6426, 16
      %v6480 = vrot.slane %v6478, 7
      %v6481 = vshll.u32 %v6426, 16
      %v6483 = vor.u32 %v6480, %v6481
      %v6484 = vrot.slane %v6480, 4
      %v6486 = vshrl.u32 %v6427, 16
      %v6488 = vrot.slane %v6486, 7
      %v6489 = vshll.u32 %v6427, 16
      %v6491 = vor.u32 %v6488, %v6489
      %v6492 = vrot.slane %v6488, 4
      %v6494 = vshrl.u32 %v6428, 16
      %v6496 = vrot.slane %v6494, 7
      %v6497 = vshll.u32 %v6428, 16
      %v6499 = vor.u32 %v6496, %v6497
      %v6500 = vrot.slane %v6496, 4
      %v6502 = vshrl.u32 %v6429, 16
      %v6504 = vrot.slane %v6502, 7
      %v6505 = vshll.u32 %v6429, 16
      %v6507 = vor.u32 %v6504, %v6505
      %v6508 = vrot.slane %v6504, 4
      %v6510 = vshrl.u32 %v6430, 16
      %v6512 = vrot.slane %v6510, 7
      %v6513 = vshll.u32 %v6430, 16
      %v6515 = vor.u32 %v6512, %v6513
      %v6516 = vrot.slane %v6512, 4
      %v6518 = vshrl.u32 %v6431, 16
      %v6520 = vrot.slane %v6518, 7
      %v6521 = vshll.u32 %v6431, 16
      %v6523 = vor.u32 %v6520, %v6521
      %v6524 = vrot.slane %v6520, 4
      %v6526 = vshrl.u32 %v6432, 16
      %v6528 = vrot.slane %v6526, 7
      %v6529 = vshll.u32 %v6432, 16
      %v6531 = vor.u32 %v6528, %v6529
      %v6532 = vrot.slane %v6528, 4
      %v6534 = vshrl.u32 %v6433, 16
      %v6536 = vrot.slane %v6534, 7
      %v6537 = vshll.u32 %v6433, 16
      %v6539 = vor.u32 %v6536, %v6537
      %v6540 = vrot.slane %v6536, 4
      %v6542 = vshrl.u32 %v6434, 16
      %v6544 = vrot.slane %v6542, 7
      %v6545 = vshll.u32 %v6434, 16
      %v6547 = vor.u32 %v6544, %v6545
      %v6548 = vrot.slane %v6544, 4
      %v6550 = vshrl.u32 %v6435, 16
      %v6552 = vrot.slane %v6550, 7
      %v6553 = vshll.u32 %v6435, 16
      %v6555 = vor.u32 %v6552, %v6553
      %v6556 = vrot.slane %v6552, 4
      %v6558 = vshrl.u32 %v6436, 16
      %v6560 = vrot.slane %v6558, 7
      %v6561 = vshll.u32 %v6436, 16
      %v6563 = vor.u32 %v6560, %v6561
      %v6564 = vrot.slane %v6560, 4
      %s6597 = scalar_lea.vmem [#allocation4], 8
      %vm6598 = vcmask 125952
      %vm6599 = vmand %vm6598, %vm409
      %v6600 = vld [vmem:[%s6597] sm:$0xf]
      %v6601 = vsel %vm6599, %v6443, %v6600
      %6602 = vst [vmem:[%s6597] sm:$0xf] %v6601
      %v6603 = vld [vmem:[%s6597 + $0x4] sm:$0x1]
      %v6604 = vsel %vm6251, %v6444, %v6603
      %6605 = vst [vmem:[%s6597 + $0x4] sm:$0x1] %v6604
      %v6606 = vld [vmem:[%s6597 + $0x8] sm:$0xf]
      %v6607 = vsel %vm6599, %v6451, %v6606
      %6608 = vst [vmem:[%s6597 + $0x8] sm:$0xf] %v6607
      %v6609 = vld [vmem:[%s6597 + $0xc] sm:$0x1]
      %v6610 = vsel %vm6251, %v6452, %v6609
      %6611 = vst [vmem:[%s6597 + $0xc] sm:$0x1] %v6610
      %v6612 = vld [vmem:[%s6597 + $0x10] sm:$0xf]
      %v6613 = vsel %vm6599, %v6459, %v6612
      %6614 = vst [vmem:[%s6597 + $0x10] sm:$0xf] %v6613
      %v6615 = vld [vmem:[%s6597 + $0x14] sm:$0x1]
      %v6616 = vsel %vm6251, %v6460, %v6615
      %6617 = vst [vmem:[%s6597 + $0x14] sm:$0x1] %v6616
      %v6618 = vld [vmem:[%s6597 + $0x18] sm:$0xf]
      %v6619 = vsel %vm6599, %v6467, %v6618
      %6620 = vst [vmem:[%s6597 + $0x18] sm:$0xf] %v6619
      %v6621 = vld [vmem:[%s6597 + $0x1c] sm:$0x1]
      %v6622 = vsel %vm6251, %v6468, %v6621
      %6623 = vst [vmem:[%s6597 + $0x1c] sm:$0x1] %v6622
      %v6624 = vld [vmem:[%s6597 + $0x20] sm:$0xf]
      %v6625 = vsel %vm6599, %v6475, %v6624
      %6626 = vst [vmem:[%s6597 + $0x20] sm:$0xf] %v6625
      %v6627 = vld [vmem:[%s6597 + $0x24] sm:$0x1]
      %v6628 = vsel %vm6251, %v6476, %v6627
      %6629 = vst [vmem:[%s6597 + $0x24] sm:$0x1] %v6628
      %v6630 = vld [vmem:[%s6597 + $0x28] sm:$0xf]
      %v6631 = vsel %vm6599, %v6483, %v6630
      %6632 = vst [vmem:[%s6597 + $0x28] sm:$0xf] %v6631
      %v6633 = vld [vmem:[%s6597 + $0x2c] sm:$0x1]
      %v6634 = vsel %vm6251, %v6484, %v6633
      %6635 = vst [vmem:[%s6597 + $0x2c] sm:$0x1] %v6634
      %v6636 = vld [vmem:[%s6597 + $0x30] sm:$0xf]
      %v6637 = vsel %vm6599, %v6491, %v6636
      %6638 = vst [vmem:[%s6597 + $0x30] sm:$0xf] %v6637
      %v6639 = vld [vmem:[%s6597 + $0x34] sm:$0x1]
      %v6640 = vsel %vm6251, %v6492, %v6639
      %6641 = vst [vmem:[%s6597 + $0x34] sm:$0x1] %v6640
      %v6642 = vld [vmem:[%s6597 + $0x38] sm:$0xf]
      %v6643 = vsel %vm6599, %v6499, %v6642
      %6644 = vst [vmem:[%s6597 + $0x38] sm:$0xf] %v6643
      %v6645 = vld [vmem:[%s6597 + $0x3c] sm:$0x1]
      %v6646 = vsel %vm6251, %v6500, %v6645
      %6647 = vst [vmem:[%s6597 + $0x3c] sm:$0x1] %v6646
      %v6648 = vld [vmem:[%s6597 + $0x50] sm:$0xf]
      %v6649 = vsel %vm6599, %v6507, %v6648
      %6650 = vst [vmem:[%s6597 + $0x50] sm:$0xf] %v6649
      %v6651 = vld [vmem:[%s6597 + $0x54] sm:$0x1]
      %v6652 = vsel %vm6251, %v6508, %v6651
      %6653 = vst [vmem:[%s6597 + $0x54] sm:$0x1] %v6652
      %v6654 = vld [vmem:[%s6597 + $0x58] sm:$0xf]
      %v6655 = vsel %vm6599, %v6515, %v6654
      %6656 = vst [vmem:[%s6597 + $0x58] sm:$0xf] %v6655
      %v6657 = vld [vmem:[%s6597 + $0x5c] sm:$0x1]
      %v6658 = vsel %vm6251, %v6516, %v6657
      %6659 = vst [vmem:[%s6597 + $0x5c] sm:$0x1] %v6658
      %v6660 = vld [vmem:[%s6597 + $0x60] sm:$0xf]
      %v6661 = vsel %vm6599, %v6523, %v6660
      %6662 = vst [vmem:[%s6597 + $0x60] sm:$0xf] %v6661
      %v6663 = vld [vmem:[%s6597 + $0x64] sm:$0x1]
      %v6664 = vsel %vm6251, %v6524, %v6663
      %6665 = vst [vmem:[%s6597 + $0x64] sm:$0x1] %v6664
      %v6666 = vld [vmem:[%s6597 + $0x68] sm:$0xf]
      %v6667 = vsel %vm6599, %v6531, %v6666
      %6668 = vst [vmem:[%s6597 + $0x68] sm:$0xf] %v6667
      %v6669 = vld [vmem:[%s6597 + $0x6c] sm:$0x1]
      %v6670 = vsel %vm6251, %v6532, %v6669
      %6671 = vst [vmem:[%s6597 + $0x6c] sm:$0x1] %v6670
      %v6672 = vld [vmem:[%s6597 + $0x70] sm:$0xf]
      %v6673 = vsel %vm6599, %v6539, %v6672
      %6674 = vst [vmem:[%s6597 + $0x70] sm:$0xf] %v6673
      %v6675 = vld [vmem:[%s6597 + $0x74] sm:$0x1]
      %v6676 = vsel %vm6251, %v6540, %v6675
      %6677 = vst [vmem:[%s6597 + $0x74] sm:$0x1] %v6676
      %v6678 = vld [vmem:[%s6597 + $0x78] sm:$0xf]
      %v6679 = vsel %vm6599, %v6547, %v6678
      %6680 = vst [vmem:[%s6597 + $0x78] sm:$0xf] %v6679
      %v6681 = vld [vmem:[%s6597 + $0x7c] sm:$0x1]
      %v6682 = vsel %vm6251, %v6548, %v6681
      %6683 = vst [vmem:[%s6597 + $0x7c] sm:$0x1] %v6682
      %v6684 = vld [vmem:[%s6597 + $0x80] sm:$0xf]
      %v6685 = vsel %vm6599, %v6555, %v6684
      %6686 = vst [vmem:[%s6597 + $0x80] sm:$0xf] %v6685
      %v6687 = vld [vmem:[%s6597 + $0x84] sm:$0x1]
      %v6688 = vsel %vm6251, %v6556, %v6687
      %6689 = vst [vmem:[%s6597 + $0x84] sm:$0x1] %v6688
      %v6690 = vld [vmem:[%s6597 + $0x88] sm:$0xf]
      %v6691 = vsel %vm6599, %v6563, %v6690
      %6692 = vst [vmem:[%s6597 + $0x88] sm:$0xf] %v6691
      %v6693 = vld [vmem:[%s6597 + $0x8c] sm:$0x1]
      %v6694 = vsel %vm6251, %v6564, %v6693
      %6695 = vst [vmem:[%s6597 + $0x8c] sm:$0x1] %v6694
      %v6696 = vld [vmem:[#allocation4] sm:$0xf]
      %v6697 = vld [vmem:[#allocation4 + $0x8] sm:$0xf]
      %v6698 = vld [vmem:[#allocation4 + $0x10] sm:$0xf]
      %v6699 = vld [vmem:[#allocation4 + $0x18] sm:$0xf]
      %v6700 = vld [vmem:[#allocation4 + $0x20] sm:$0xf]
      %v6701 = vld [vmem:[#allocation4 + $0x28] sm:$0xf]
      %v6702 = vld [vmem:[#allocation4 + $0x30] sm:$0xf]
      %v6703 = vld [vmem:[#allocation4 + $0x38] sm:$0xf]
      %v6704 = vld [vmem:[#allocation4 + $0x50] sm:$0xf]
      %v6705 = vld [vmem:[#allocation4 + $0x58] sm:$0xf]
      %v6706 = vld [vmem:[#allocation4 + $0x60] sm:$0xf]
      %v6707 = vld [vmem:[#allocation4 + $0x68] sm:$0xf]
      %v6708 = vld [vmem:[#allocation4 + $0x70] sm:$0xf]
      %v6709 = vld [vmem:[#allocation4 + $0x78] sm:$0xf]
      %v6710 = vld [vmem:[#allocation4 + $0x80] sm:$0xf]
      %v6711 = vld [vmem:[#allocation4 + $0x88] sm:$0xf]
      %v6712 = vld [vmem:[#allocation4 + $0x4] sm:$0x1]
      %v6713 = vld [vmem:[#allocation4 + $0xc] sm:$0x1]
      %v6714 = vld [vmem:[#allocation4 + $0x14] sm:$0x1]
      %v6715 = vld [vmem:[#allocation4 + $0x1c] sm:$0x1]
      %v6716 = vld [vmem:[#allocation4 + $0x24] sm:$0x1]
      %v6717 = vld [vmem:[#allocation4 + $0x2c] sm:$0x1]
      %v6718 = vld [vmem:[#allocation4 + $0x34] sm:$0x1]
      %v6719 = vld [vmem:[#allocation4 + $0x3c] sm:$0x1]
      %v6720 = vld [vmem:[#allocation4 + $0x54] sm:$0x1]
      %v6721 = vld [vmem:[#allocation4 + $0x5c] sm:$0x1]
      %v6722 = vld [vmem:[#allocation4 + $0x64] sm:$0x1]
      %v6723 = vld [vmem:[#allocation4 + $0x6c] sm:$0x1]
      %v6724 = vld [vmem:[#allocation4 + $0x74] sm:$0x1]
      %v6725 = vld [vmem:[#allocation4 + $0x7c] sm:$0x1]
      %v6726 = vld [vmem:[#allocation4 + $0x84] sm:$0x1]
      %v6727 = vld [vmem:[#allocation4 + $0x8c] sm:$0x1]
      %v6728 = vld [vmem:[#allocation4] sm:$0xe]
      %v6729 = vld [vmem:[#allocation4 + $0x8] sm:$0xe]
      %v6730 = vld [vmem:[#allocation4 + $0x10] sm:$0xe]
      %v6731 = vld [vmem:[#allocation4 + $0x18] sm:$0xe]
      %v6732 = vld [vmem:[#allocation4 + $0x20] sm:$0xe]
      %v6733 = vld [vmem:[#allocation4 + $0x28] sm:$0xe]
      %v6734 = vld [vmem:[#allocation4 + $0x30] sm:$0xe]
      %v6735 = vld [vmem:[#allocation4 + $0x38] sm:$0xe]
      %v6736 = vld [vmem:[#allocation4 + $0x50] sm:$0xe]
      %v6737 = vld [vmem:[#allocation4 + $0x58] sm:$0xe]
      %v6738 = vld [vmem:[#allocation4 + $0x60] sm:$0xe]
      %v6739 = vld [vmem:[#allocation4 + $0x68] sm:$0xe]
      %v6740 = vld [vmem:[#allocation4 + $0x70] sm:$0xe]
      %v6741 = vld [vmem:[#allocation4 + $0x78] sm:$0xe]
      %v6742 = vld [vmem:[#allocation4 + $0x80] sm:$0xe]
      %v6743 = vld [vmem:[#allocation4 + $0x88] sm:$0xe]
      %v6744 = vld [vmem:[%s6597] sm:$0xf]
      %v6745 = vld [vmem:[%s6597 + $0x8] sm:$0xf]
      %v6746 = vld [vmem:[%s6597 + $0x10] sm:$0xf]
      %v6747 = vld [vmem:[%s6597 + $0x18] sm:$0xf]
      %v6748 = vld [vmem:[%s6597 + $0x20] sm:$0xf]
      %v6749 = vld [vmem:[%s6597 + $0x28] sm:$0xf]
      %v6750 = vld [vmem:[%s6597 + $0x30] sm:$0xf]
      %v6751 = vld [vmem:[%s6597 + $0x38] sm:$0xf]
      %v6752 = vld [vmem:[%s6597 + $0x50] sm:$0xf]
      %v6753 = vld [vmem:[%s6597 + $0x58] sm:$0xf]
      %v6754 = vld [vmem:[%s6597 + $0x60] sm:$0xf]
      %v6755 = vld [vmem:[%s6597 + $0x68] sm:$0xf]
      %v6756 = vld [vmem:[%s6597 + $0x70] sm:$0xf]
      %v6757 = vld [vmem:[%s6597 + $0x78] sm:$0xf]
      %v6758 = vld [vmem:[%s6597 + $0x80] sm:$0xf]
      %v6759 = vld [vmem:[%s6597 + $0x88] sm:$0xf]
      %v6760 = vld [vmem:[%s6597 + $0x4] sm:$0x1]
      %v6761 = vld [vmem:[%s6597 + $0xc] sm:$0x1]
      %v6762 = vld [vmem:[%s6597 + $0x14] sm:$0x1]
      %v6763 = vld [vmem:[%s6597 + $0x1c] sm:$0x1]
      %v6764 = vld [vmem:[%s6597 + $0x24] sm:$0x1]
      %v6765 = vld [vmem:[%s6597 + $0x2c] sm:$0x1]
      %v6766 = vld [vmem:[%s6597 + $0x34] sm:$0x1]
      %v6767 = vld [vmem:[%s6597 + $0x3c] sm:$0x1]
      %v6768 = vld [vmem:[%s6597 + $0x54] sm:$0x1]
      %v6769 = vld [vmem:[%s6597 + $0x5c] sm:$0x1]
      %v6770 = vld [vmem:[%s6597 + $0x64] sm:$0x1]
      %v6771 = vld [vmem:[%s6597 + $0x6c] sm:$0x1]
      %v6772 = vld [vmem:[%s6597 + $0x74] sm:$0x1]
      %v6773 = vld [vmem:[%s6597 + $0x7c] sm:$0x1]
      %v6774 = vld [vmem:[%s6597 + $0x84] sm:$0x1]
      %v6775 = vld [vmem:[%s6597 + $0x8c] sm:$0x1]
      %v6776 = vld [vmem:[%s6597] sm:$0xe]
      %v6777 = vld [vmem:[%s6597 + $0x8] sm:$0xe]
      %v6778 = vld [vmem:[%s6597 + $0x10] sm:$0xe]
      %v6779 = vld [vmem:[%s6597 + $0x18] sm:$0xe]
      %v6780 = vld [vmem:[%s6597 + $0x20] sm:$0xe]
      %v6781 = vld [vmem:[%s6597 + $0x28] sm:$0xe]
      %v6782 = vld [vmem:[%s6597 + $0x30] sm:$0xe]
      %v6783 = vld [vmem:[%s6597 + $0x38] sm:$0xe]
      %v6784 = vld [vmem:[%s6597 + $0x50] sm:$0xe]
      %v6785 = vld [vmem:[%s6597 + $0x58] sm:$0xe]
      %v6786 = vld [vmem:[%s6597 + $0x60] sm:$0xe]
      %v6787 = vld [vmem:[%s6597 + $0x68] sm:$0xe]
      %v6788 = vld [vmem:[%s6597 + $0x70] sm:$0xe]
      %v6789 = vld [vmem:[%s6597 + $0x78] sm:$0xe]
      %v6790 = vld [vmem:[%s6597 + $0x80] sm:$0xe]
      %v6791 = vld [vmem:[%s6597 + $0x88] sm:$0xe]
      %s6792 = scalar_lea.vmem [#allocation4], 16
      %v6793 = vld [vmem:[%s6792] sm:$0xf]
      %v6794 = vld [vmem:[%s6792 + $0x8] sm:$0xf]
      %v6795 = vld [vmem:[%s6792 + $0x10] sm:$0xf]
      %v6796 = vld [vmem:[%s6792 + $0x18] sm:$0xf]
      %v6797 = vld [vmem:[%s6792 + $0x20] sm:$0xf]
      %v6798 = vld [vmem:[%s6792 + $0x28] sm:$0xf]
      %v6799 = vld [vmem:[%s6792 + $0x30] sm:$0xf]
      %v6800 = vld [vmem:[%s6792 + $0x38] sm:$0xf]
      %v6801 = vld [vmem:[%s6792 + $0x50] sm:$0xf]
      %v6802 = vld [vmem:[%s6792 + $0x58] sm:$0xf]
      %v6803 = vld [vmem:[%s6792 + $0x60] sm:$0xf]
      %v6804 = vld [vmem:[%s6792 + $0x68] sm:$0xf]
      %v6805 = vld [vmem:[%s6792 + $0x70] sm:$0xf]
      %v6806 = vld [vmem:[%s6792 + $0x78] sm:$0xf]
      %v6807 = vld [vmem:[%s6792 + $0x80] sm:$0xf]
      %v6808 = vld [vmem:[%s6792 + $0x88] sm:$0xf]
      %v6809 = vld [vmem:[%s6792 + $0x4] sm:$0x1]
      %v6810 = vld [vmem:[%s6792 + $0xc] sm:$0x1]
      %v6811 = vld [vmem:[%s6792 + $0x14] sm:$0x1]
      %v6812 = vld [vmem:[%s6792 + $0x1c] sm:$0x1]
      %v6813 = vld [vmem:[%s6792 + $0x24] sm:$0x1]
      %v6814 = vld [vmem:[%s6792 + $0x2c] sm:$0x1]
      %v6815 = vld [vmem:[%s6792 + $0x34] sm:$0x1]
      %v6816 = vld [vmem:[%s6792 + $0x3c] sm:$0x1]
      %v6817 = vld [vmem:[%s6792 + $0x54] sm:$0x1]
      %v6818 = vld [vmem:[%s6792 + $0x5c] sm:$0x1]
      %v6819 = vld [vmem:[%s6792 + $0x64] sm:$0x1]
      %v6820 = vld [vmem:[%s6792 + $0x6c] sm:$0x1]
      %v6821 = vld [vmem:[%s6792 + $0x74] sm:$0x1]
      %v6822 = vld [vmem:[%s6792 + $0x7c] sm:$0x1]
      %v6823 = vld [vmem:[%s6792 + $0x84] sm:$0x1]
      %v6824 = vld [vmem:[%s6792 + $0x8c] sm:$0x1]
      %v6825 = vld [vmem:[%s6792] sm:$0xe]
      %v6826 = vld [vmem:[%s6792 + $0x8] sm:$0xe]
      %v6827 = vld [vmem:[%s6792 + $0x10] sm:$0xe]
      %v6828 = vld [vmem:[%s6792 + $0x18] sm:$0xe]
      %v6829 = vld [vmem:[%s6792 + $0x20] sm:$0xe]
      %v6830 = vld [vmem:[%s6792 + $0x28] sm:$0xe]
      %v6831 = vld [vmem:[%s6792 + $0x30] sm:$0xe]
      %v6832 = vld [vmem:[%s6792 + $0x38] sm:$0xe]
      %v6833 = vld [vmem:[%s6792 + $0x50] sm:$0xe]
      %v6834 = vld [vmem:[%s6792 + $0x58] sm:$0xe]
      %v6835 = vld [vmem:[%s6792 + $0x60] sm:$0xe]
      %v6836 = vld [vmem:[%s6792 + $0x68] sm:$0xe]
      %v6837 = vld [vmem:[%s6792 + $0x70] sm:$0xe]
      %v6838 = vld [vmem:[%s6792 + $0x78] sm:$0xe]
      %v6839 = vld [vmem:[%s6792 + $0x80] sm:$0xe]
      %v6840 = vld [vmem:[%s6792 + $0x88] sm:$0xe]
      %v6873 = vunpack.c.l.b16 %v6696
      %v6874 = vunpack.c.l.b16 %v6712
      %v6875 = vunpack.c.l.b16 %v6697
      %v6876 = vunpack.c.l.b16 %v6713
      %v6877 = vunpack.c.l.b16 %v6698
      %v6878 = vunpack.c.l.b16 %v6714
      %v6879 = vunpack.c.l.b16 %v6699
      %v6880 = vunpack.c.l.b16 %v6715
      %v6881 = vunpack.c.l.b16 %v6700
      %v6882 = vunpack.c.l.b16 %v6716
      %v6883 = vunpack.c.l.b16 %v6701
      %v6884 = vunpack.c.l.b16 %v6717
      %v6885 = vunpack.c.l.b16 %v6702
      %v6886 = vunpack.c.l.b16 %v6718
      %v6887 = vunpack.c.l.b16 %v6703
      %v6888 = vunpack.c.l.b16 %v6719
      %v6889 = vunpack.c.l.b16 %v6704
      %v6890 = vunpack.c.l.b16 %v6720
      %v6891 = vunpack.c.l.b16 %v6705
      %v6892 = vunpack.c.l.b16 %v6721
      %v6893 = vunpack.c.l.b16 %v6706
      %v6894 = vunpack.c.l.b16 %v6722
      %v6895 = vunpack.c.l.b16 %v6707
      %v6896 = vunpack.c.l.b16 %v6723
      %v6897 = vunpack.c.l.b16 %v6708
      %v6898 = vunpack.c.l.b16 %v6724
      %v6899 = vunpack.c.l.b16 %v6709
      %v6900 = vunpack.c.l.b16 %v6725
      %v6901 = vunpack.c.l.b16 %v6710
      %v6902 = vunpack.c.l.b16 %v6726
      %v6903 = vunpack.c.l.b16 %v6711
      %v6904 = vunpack.c.l.b16 %v6727
      %v6905 = vpack.c.b16 %v6874, %v6873
      %v6906 = vpack.c.b16 %v6876, %v6875
      %v6907 = vpack.c.b16 %v6878, %v6877
      %v6908 = vpack.c.b16 %v6880, %v6879
      %v6909 = vpack.c.b16 %v6882, %v6881
      %v6910 = vpack.c.b16 %v6884, %v6883
      %v6911 = vpack.c.b16 %v6886, %v6885
      %v6912 = vpack.c.b16 %v6888, %v6887
      %v6913 = vpack.c.b16 %v6890, %v6889
      %v6914 = vpack.c.b16 %v6892, %v6891
      %v6915 = vpack.c.b16 %v6894, %v6893
      %v6916 = vpack.c.b16 %v6896, %v6895
      %v6917 = vpack.c.b16 %v6898, %v6897
      %v6918 = vpack.c.b16 %v6900, %v6899
      %v6919 = vpack.c.b16 %v6902, %v6901
      %v6920 = vpack.c.b16 %v6904, %v6903
      %v6922 = vshrl.u32 %v6905, 16
      %v6924 = vshll.u32 %v6905, 16
      %v6926 = vrot.slane %v6924, 1
      %v6927 = vor.u32 %v6922, %v6926
      %v6929 = vshrl.u32 %v6906, 16
      %v6931 = vshll.u32 %v6906, 16
      %v6933 = vrot.slane %v6931, 1
      %v6934 = vor.u32 %v6929, %v6933
      %v6936 = vshrl.u32 %v6907, 16
      %v6938 = vshll.u32 %v6907, 16
      %v6940 = vrot.slane %v6938, 1
      %v6941 = vor.u32 %v6936, %v6940
      %v6943 = vshrl.u32 %v6908, 16
      %v6945 = vshll.u32 %v6908, 16
      %v6947 = vrot.slane %v6945, 1
      %v6948 = vor.u32 %v6943, %v6947
      %v6950 = vshrl.u32 %v6909, 16
      %v6952 = vshll.u32 %v6909, 16
      %v6954 = vrot.slane %v6952, 1
      %v6955 = vor.u32 %v6950, %v6954
      %v6957 = vshrl.u32 %v6910, 16
      %v6959 = vshll.u32 %v6910, 16
      %v6961 = vrot.slane %v6959, 1
      %v6962 = vor.u32 %v6957, %v6961
      %v6964 = vshrl.u32 %v6911, 16
      %v6966 = vshll.u32 %v6911, 16
      %v6968 = vrot.slane %v6966, 1
      %v6969 = vor.u32 %v6964, %v6968
      %v6971 = vshrl.u32 %v6912, 16
      %v6973 = vshll.u32 %v6912, 16
      %v6975 = vrot.slane %v6973, 1
      %v6976 = vor.u32 %v6971, %v6975
      %v6978 = vshrl.u32 %v6913, 16
      %v6980 = vshll.u32 %v6913, 16
      %v6982 = vrot.slane %v6980, 1
      %v6983 = vor.u32 %v6978, %v6982
      %v6985 = vshrl.u32 %v6914, 16
      %v6987 = vshll.u32 %v6914, 16
      %v6989 = vrot.slane %v6987, 1
      %v6990 = vor.u32 %v6985, %v6989
      %v6992 = vshrl.u32 %v6915, 16
      %v6994 = vshll.u32 %v6915, 16
      %v6996 = vrot.slane %v6994, 1
      %v6997 = vor.u32 %v6992, %v6996
      %v6999 = vshrl.u32 %v6916, 16
      %v7001 = vshll.u32 %v6916, 16
      %v7003 = vrot.slane %v7001, 1
      %v7004 = vor.u32 %v6999, %v7003
      %v7006 = vshrl.u32 %v6917, 16
      %v7008 = vshll.u32 %v6917, 16
      %v7010 = vrot.slane %v7008, 1
      %v7011 = vor.u32 %v7006, %v7010
      %v7013 = vshrl.u32 %v6918, 16
      %v7015 = vshll.u32 %v6918, 16
      %v7017 = vrot.slane %v7015, 1
      %v7018 = vor.u32 %v7013, %v7017
      %v7020 = vshrl.u32 %v6919, 16
      %v7022 = vshll.u32 %v6919, 16
      %v7024 = vrot.slane %v7022, 1
      %v7025 = vor.u32 %v7020, %v7024
      %v7027 = vshrl.u32 %v6920, 16
      %v7029 = vshll.u32 %v6920, 16
      %v7031 = vrot.slane %v7029, 1
      %v7032 = vor.u32 %v7027, %v7031
      %7033 = vrot.lane.b32.xlu0 %v6927, 16
      %v7034 = vpop.permute.xlu0 %7033
      %7035 = vrot.lane.b32.xlu0 %v6934, 16
      %v7036 = vpop.permute.xlu0 %7035
      %7037 = vrot.lane.b32.xlu0 %v6941, 16
      %v7038 = vpop.permute.xlu0 %7037
      %7039 = vrot.lane.b32.xlu0 %v6948, 16
      %v7040 = vpop.permute.xlu0 %7039
      %7041 = vrot.lane.b32.xlu0 %v6955, 16
      %v7042 = vpop.permute.xlu0 %7041
      %7043 = vrot.lane.b32.xlu0 %v6962, 16
      %v7044 = vpop.permute.xlu0 %7043
      %7045 = vrot.lane.b32.xlu0 %v6969, 16
      %v7046 = vpop.permute.xlu0 %7045
      %7047 = vrot.lane.b32.xlu0 %v6976, 16
      %v7048 = vpop.permute.xlu0 %7047
      %7049 = vrot.lane.b32.xlu0 %v6983, 16
      %v7050 = vpop.permute.xlu0 %7049
      %7051 = vrot.lane.b32.xlu0 %v6990, 16
      %v7052 = vpop.permute.xlu0 %7051
      %7053 = vrot.lane.b32.xlu0 %v6997, 16
      %v7054 = vpop.permute.xlu0 %7053
      %7055 = vrot.lane.b32.xlu0 %v7004, 16
      %v7056 = vpop.permute.xlu0 %7055
      %7057 = vrot.lane.b32.xlu0 %v7011, 16
      %v7058 = vpop.permute.xlu0 %7057
      %7059 = vrot.lane.b32.xlu0 %v7018, 16
      %v7060 = vpop.permute.xlu0 %7059
      %7061 = vrot.lane.b32.xlu0 %v7025, 16
      %v7062 = vpop.permute.xlu0 %7061
      %7063 = vrot.lane.b32.xlu0 %v7032, 16
      %v7064 = vpop.permute.xlu0 %7063
      %v7081 = vunpack.c.l.b16 %v6728
      %v7082 = vunpack.c.l.b16 %v6729
      %v7083 = vunpack.c.l.b16 %v6730
      %v7084 = vunpack.c.l.b16 %v6731
      %v7085 = vunpack.c.l.b16 %v6732
      %v7086 = vunpack.c.l.b16 %v6733
      %v7087 = vunpack.c.l.b16 %v6734
      %v7088 = vunpack.c.l.b16 %v6735
      %v7089 = vunpack.c.l.b16 %v6736
      %v7090 = vunpack.c.l.b16 %v6737
      %v7091 = vunpack.c.l.b16 %v6738
      %v7092 = vunpack.c.l.b16 %v6739
      %v7093 = vunpack.c.l.b16 %v6740
      %v7094 = vunpack.c.l.b16 %v6741
      %v7095 = vunpack.c.l.b16 %v6742
      %v7096 = vunpack.c.l.b16 %v6743
      %v7097 = vpack.c.b16 %v6874, %v7081
      %v7098 = vpack.c.b16 %v6876, %v7082
      %v7099 = vpack.c.b16 %v6878, %v7083
      %v7100 = vpack.c.b16 %v6880, %v7084
      %v7101 = vpack.c.b16 %v6882, %v7085
      %v7102 = vpack.c.b16 %v6884, %v7086
      %v7103 = vpack.c.b16 %v6886, %v7087
      %v7104 = vpack.c.b16 %v6888, %v7088
      %v7105 = vpack.c.b16 %v6890, %v7089
      %v7106 = vpack.c.b16 %v6892, %v7090
      %v7107 = vpack.c.b16 %v6894, %v7091
      %v7108 = vpack.c.b16 %v6896, %v7092
      %v7109 = vpack.c.b16 %v6898, %v7093
      %v7110 = vpack.c.b16 %v6900, %v7094
      %v7111 = vpack.c.b16 %v6902, %v7095
      %v7112 = vpack.c.b16 %v6904, %v7096
      %v7113 = vrot.slane %v7097, 1
      %v7114 = vrot.slane %v7098, 1
      %v7115 = vrot.slane %v7099, 1
      %v7116 = vrot.slane %v7100, 1
      %v7117 = vrot.slane %v7101, 1
      %v7118 = vrot.slane %v7102, 1
      %v7119 = vrot.slane %v7103, 1
      %v7120 = vrot.slane %v7104, 1
      %v7121 = vrot.slane %v7105, 1
      %v7122 = vrot.slane %v7106, 1
      %v7123 = vrot.slane %v7107, 1
      %v7124 = vrot.slane %v7108, 1
      %v7125 = vrot.slane %v7109, 1
      %v7126 = vrot.slane %v7110, 1
      %v7127 = vrot.slane %v7111, 1
      %v7128 = vrot.slane %v7112, 1
      %7129 = vrot.lane.b32.xlu0 %v7113, 32
      %v7130 = vpop.permute.xlu0 %7129
      %7131 = vrot.lane.b32.xlu0 %v7114, 32
      %v7132 = vpop.permute.xlu0 %7131
      %7133 = vrot.lane.b32.xlu0 %v7115, 32
      %v7134 = vpop.permute.xlu0 %7133
      %7135 = vrot.lane.b32.xlu0 %v7116, 32
      %v7136 = vpop.permute.xlu0 %7135
      %7137 = vrot.lane.b32.xlu0 %v7117, 32
      %v7138 = vpop.permute.xlu0 %7137
      %7139 = vrot.lane.b32.xlu0 %v7118, 32
      %v7140 = vpop.permute.xlu0 %7139
      %7141 = vrot.lane.b32.xlu0 %v7119, 32
      %v7142 = vpop.permute.xlu0 %7141
      %7143 = vrot.lane.b32.xlu0 %v7120, 32
      %v7144 = vpop.permute.xlu0 %7143
      %7145 = vrot.lane.b32.xlu0 %v7121, 32
      %v7146 = vpop.permute.xlu0 %7145
      %7147 = vrot.lane.b32.xlu0 %v7122, 32
      %v7148 = vpop.permute.xlu0 %7147
      %7149 = vrot.lane.b32.xlu0 %v7123, 32
      %v7150 = vpop.permute.xlu0 %7149
      %7151 = vrot.lane.b32.xlu0 %v7124, 32
      %v7152 = vpop.permute.xlu0 %7151
      %7153 = vrot.lane.b32.xlu0 %v7125, 32
      %v7154 = vpop.permute.xlu0 %7153
      %7155 = vrot.lane.b32.xlu0 %v7126, 32
      %v7156 = vpop.permute.xlu0 %7155
      %7157 = vrot.lane.b32.xlu0 %v7127, 32
      %v7158 = vpop.permute.xlu0 %7157
      %7159 = vrot.lane.b32.xlu0 %v7128, 32
      %v7160 = vpop.permute.xlu0 %7159
      %v7177 = vunpack.c.l.b16 %v6744
      %v7178 = vunpack.c.l.b16 %v6745
      %v7179 = vunpack.c.l.b16 %v6746
      %v7180 = vunpack.c.l.b16 %v6747
      %v7181 = vunpack.c.l.b16 %v6748
      %v7182 = vunpack.c.l.b16 %v6749
      %v7183 = vunpack.c.l.b16 %v6750
      %v7184 = vunpack.c.l.b16 %v6751
      %v7185 = vunpack.c.l.b16 %v6752
      %v7186 = vunpack.c.l.b16 %v6753
      %v7187 = vunpack.c.l.b16 %v6754
      %v7188 = vunpack.c.l.b16 %v6755
      %v7189 = vunpack.c.l.b16 %v6756
      %v7190 = vunpack.c.l.b16 %v6757
      %v7191 = vunpack.c.l.b16 %v6758
      %v7192 = vunpack.c.l.b16 %v6759
      %v7193 = vpack.c.b16 %v7177, %v7177
      %v7194 = vpack.c.b16 %v7178, %v7178
      %v7195 = vpack.c.b16 %v7179, %v7179
      %v7196 = vpack.c.b16 %v7180, %v7180
      %v7197 = vpack.c.b16 %v7181, %v7181
      %v7198 = vpack.c.b16 %v7182, %v7182
      %v7199 = vpack.c.b16 %v7183, %v7183
      %v7200 = vpack.c.b16 %v7184, %v7184
      %v7201 = vpack.c.b16 %v7185, %v7185
      %v7202 = vpack.c.b16 %v7186, %v7186
      %v7203 = vpack.c.b16 %v7187, %v7187
      %v7204 = vpack.c.b16 %v7188, %v7188
      %v7205 = vpack.c.b16 %v7189, %v7189
      %v7206 = vpack.c.b16 %v7190, %v7190
      %v7207 = vpack.c.b16 %v7191, %v7191
      %v7208 = vpack.c.b16 %v7192, %v7192
      %7209 = vrot.lane.b32.xlu0 %v7193, 48
      %v7210 = vpop.permute.xlu0 %7209
      %7211 = vrot.lane.b32.xlu0 %v7194, 48
      %v7212 = vpop.permute.xlu0 %7211
      %7213 = vrot.lane.b32.xlu0 %v7195, 48
      %v7214 = vpop.permute.xlu0 %7213
      %7215 = vrot.lane.b32.xlu0 %v7196, 48
      %v7216 = vpop.permute.xlu0 %7215
      %7217 = vrot.lane.b32.xlu0 %v7197, 48
      %v7218 = vpop.permute.xlu0 %7217
      %7219 = vrot.lane.b32.xlu0 %v7198, 48
      %v7220 = vpop.permute.xlu0 %7219
      %7221 = vrot.lane.b32.xlu0 %v7199, 48
      %v7222 = vpop.permute.xlu0 %7221
      %7223 = vrot.lane.b32.xlu0 %v7200, 48
      %v7224 = vpop.permute.xlu0 %7223
      %7225 = vrot.lane.b32.xlu0 %v7201, 48
      %v7226 = vpop.permute.xlu0 %7225
      %7227 = vrot.lane.b32.xlu0 %v7202, 48
      %v7228 = vpop.permute.xlu0 %7227
      %7229 = vrot.lane.b32.xlu0 %v7203, 48
      %v7230 = vpop.permute.xlu0 %7229
      %7231 = vrot.lane.b32.xlu0 %v7204, 48
      %v7232 = vpop.permute.xlu0 %7231
      %7233 = vrot.lane.b32.xlu0 %v7205, 48
      %v7234 = vpop.permute.xlu0 %7233
      %7235 = vrot.lane.b32.xlu0 %v7206, 48
      %v7236 = vpop.permute.xlu0 %7235
      %7237 = vrot.lane.b32.xlu0 %v7207, 48
      %v7238 = vpop.permute.xlu0 %7237
      %7239 = vrot.lane.b32.xlu0 %v7208, 48
      %v7240 = vpop.permute.xlu0 %7239
      %v7257 = vunpack.c.l.b16 %v6760
      %v7258 = vunpack.c.l.b16 %v6761
      %v7259 = vunpack.c.l.b16 %v6762
      %v7260 = vunpack.c.l.b16 %v6763
      %v7261 = vunpack.c.l.b16 %v6764
      %v7262 = vunpack.c.l.b16 %v6765
      %v7263 = vunpack.c.l.b16 %v6766
      %v7264 = vunpack.c.l.b16 %v6767
      %v7265 = vunpack.c.l.b16 %v6768
      %v7266 = vunpack.c.l.b16 %v6769
      %v7267 = vunpack.c.l.b16 %v6770
      %v7268 = vunpack.c.l.b16 %v6771
      %v7269 = vunpack.c.l.b16 %v6772
      %v7270 = vunpack.c.l.b16 %v6773
      %v7271 = vunpack.c.l.b16 %v6774
      %v7272 = vunpack.c.l.b16 %v6775
      %v7273 = vpack.c.b16 %v7257, %v7177
      %v7274 = vpack.c.b16 %v7258, %v7178
      %v7275 = vpack.c.b16 %v7259, %v7179
      %v7276 = vpack.c.b16 %v7260, %v7180
      %v7277 = vpack.c.b16 %v7261, %v7181
      %v7278 = vpack.c.b16 %v7262, %v7182
      %v7279 = vpack.c.b16 %v7263, %v7183
      %v7280 = vpack.c.b16 %v7264, %v7184
      %v7281 = vpack.c.b16 %v7265, %v7185
      %v7282 = vpack.c.b16 %v7266, %v7186
      %v7283 = vpack.c.b16 %v7267, %v7187
      %v7284 = vpack.c.b16 %v7268, %v7188
      %v7285 = vpack.c.b16 %v7269, %v7189
      %v7286 = vpack.c.b16 %v7270, %v7190
      %v7287 = vpack.c.b16 %v7271, %v7191
      %v7288 = vpack.c.b16 %v7272, %v7192
      %v7290 = vshrl.u32 %v7273, 16
      %v7292 = vshll.u32 %v7273, 16
      %v7294 = vrot.slane %v7292, 1
      %v7295 = vor.u32 %v7290, %v7294
      %v7297 = vshrl.u32 %v7274, 16
      %v7299 = vshll.u32 %v7274, 16
      %v7301 = vrot.slane %v7299, 1
      %v7302 = vor.u32 %v7297, %v7301
      %v7304 = vshrl.u32 %v7275, 16
      %v7306 = vshll.u32 %v7275, 16
      %v7308 = vrot.slane %v7306, 1
      %v7309 = vor.u32 %v7304, %v7308
      %v7311 = vshrl.u32 %v7276, 16
      %v7313 = vshll.u32 %v7276, 16
      %v7315 = vrot.slane %v7313, 1
      %v7316 = vor.u32 %v7311, %v7315
      %v7318 = vshrl.u32 %v7277, 16
      %v7320 = vshll.u32 %v7277, 16
      %v7322 = vrot.slane %v7320, 1
      %v7323 = vor.u32 %v7318, %v7322
      %v7325 = vshrl.u32 %v7278, 16
      %v7327 = vshll.u32 %v7278, 16
      %v7329 = vrot.slane %v7327, 1
      %v7330 = vor.u32 %v7325, %v7329
      %v7332 = vshrl.u32 %v7279, 16
      %v7334 = vshll.u32 %v7279, 16
      %v7336 = vrot.slane %v7334, 1
      %v7337 = vor.u32 %v7332, %v7336
      %v7339 = vshrl.u32 %v7280, 16
      %v7341 = vshll.u32 %v7280, 16
      %v7343 = vrot.slane %v7341, 1
      %v7344 = vor.u32 %v7339, %v7343
      %v7346 = vshrl.u32 %v7281, 16
      %v7348 = vshll.u32 %v7281, 16
      %v7350 = vrot.slane %v7348, 1
      %v7351 = vor.u32 %v7346, %v7350
      %v7353 = vshrl.u32 %v7282, 16
      %v7355 = vshll.u32 %v7282, 16
      %v7357 = vrot.slane %v7355, 1
      %v7358 = vor.u32 %v7353, %v7357
      %v7360 = vshrl.u32 %v7283, 16
      %v7362 = vshll.u32 %v7283, 16
      %v7364 = vrot.slane %v7362, 1
      %v7365 = vor.u32 %v7360, %v7364
      %v7367 = vshrl.u32 %v7284, 16
      %v7369 = vshll.u32 %v7284, 16
      %v7371 = vrot.slane %v7369, 1
      %v7372 = vor.u32 %v7367, %v7371
      %v7374 = vshrl.u32 %v7285, 16
      %v7376 = vshll.u32 %v7285, 16
      %v7378 = vrot.slane %v7376, 1
      %v7379 = vor.u32 %v7374, %v7378
      %v7381 = vshrl.u32 %v7286, 16
      %v7383 = vshll.u32 %v7286, 16
      %v7385 = vrot.slane %v7383, 1
      %v7386 = vor.u32 %v7381, %v7385
      %v7388 = vshrl.u32 %v7287, 16
      %v7390 = vshll.u32 %v7287, 16
      %v7392 = vrot.slane %v7390, 1
      %v7393 = vor.u32 %v7388, %v7392
      %v7395 = vshrl.u32 %v7288, 16
      %v7397 = vshll.u32 %v7288, 16
      %v7399 = vrot.slane %v7397, 1
      %v7400 = vor.u32 %v7395, %v7399
      %7401 = vrot.lane.b32.xlu0 %v7295, 64
      %v7402 = vpop.permute.xlu0 %7401
      %7403 = vrot.lane.b32.xlu0 %v7302, 64
      %v7404 = vpop.permute.xlu0 %7403
      %7405 = vrot.lane.b32.xlu0 %v7309, 64
      %v7406 = vpop.permute.xlu0 %7405
      %7407 = vrot.lane.b32.xlu0 %v7316, 64
      %v7408 = vpop.permute.xlu0 %7407
      %7409 = vrot.lane.b32.xlu0 %v7323, 64
      %v7410 = vpop.permute.xlu0 %7409
      %7411 = vrot.lane.b32.xlu0 %v7330, 64
      %v7412 = vpop.permute.xlu0 %7411
      %7413 = vrot.lane.b32.xlu0 %v7337, 64
      %v7414 = vpop.permute.xlu0 %7413
      %7415 = vrot.lane.b32.xlu0 %v7344, 64
      %v7416 = vpop.permute.xlu0 %7415
      %7417 = vrot.lane.b32.xlu0 %v7351, 64
      %v7418 = vpop.permute.xlu0 %7417
      %7419 = vrot.lane.b32.xlu0 %v7358, 64
      %v7420 = vpop.permute.xlu0 %7419
      %7421 = vrot.lane.b32.xlu0 %v7365, 64
      %v7422 = vpop.permute.xlu0 %7421
      %7423 = vrot.lane.b32.xlu0 %v7372, 64
      %v7424 = vpop.permute.xlu0 %7423
      %7425 = vrot.lane.b32.xlu0 %v7379, 64
      %v7426 = vpop.permute.xlu0 %7425
      %7427 = vrot.lane.b32.xlu0 %v7386, 64
      %v7428 = vpop.permute.xlu0 %7427
      %7429 = vrot.lane.b32.xlu0 %v7393, 64
      %v7430 = vpop.permute.xlu0 %7429
      %7431 = vrot.lane.b32.xlu0 %v7400, 64
      %v7432 = vpop.permute.xlu0 %7431
      %v7449 = vunpack.c.l.b16 %v6776
      %v7450 = vunpack.c.l.b16 %v6777
      %v7451 = vunpack.c.l.b16 %v6778
      %v7452 = vunpack.c.l.b16 %v6779
      %v7453 = vunpack.c.l.b16 %v6780
      %v7454 = vunpack.c.l.b16 %v6781
      %v7455 = vunpack.c.l.b16 %v6782
      %v7456 = vunpack.c.l.b16 %v6783
      %v7457 = vunpack.c.l.b16 %v6784
      %v7458 = vunpack.c.l.b16 %v6785
      %v7459 = vunpack.c.l.b16 %v6786
      %v7460 = vunpack.c.l.b16 %v6787
      %v7461 = vunpack.c.l.b16 %v6788
      %v7462 = vunpack.c.l.b16 %v6789
      %v7463 = vunpack.c.l.b16 %v6790
      %v7464 = vunpack.c.l.b16 %v6791
      %v7465 = vpack.c.b16 %v7257, %v7449
      %v7466 = vpack.c.b16 %v7258, %v7450
      %v7467 = vpack.c.b16 %v7259, %v7451
      %v7468 = vpack.c.b16 %v7260, %v7452
      %v7469 = vpack.c.b16 %v7261, %v7453
      %v7470 = vpack.c.b16 %v7262, %v7454
      %v7471 = vpack.c.b16 %v7263, %v7455
      %v7472 = vpack.c.b16 %v7264, %v7456
      %v7473 = vpack.c.b16 %v7265, %v7457
      %v7474 = vpack.c.b16 %v7266, %v7458
      %v7475 = vpack.c.b16 %v7267, %v7459
      %v7476 = vpack.c.b16 %v7268, %v7460
      %v7477 = vpack.c.b16 %v7269, %v7461
      %v7478 = vpack.c.b16 %v7270, %v7462
      %v7479 = vpack.c.b16 %v7271, %v7463
      %v7480 = vpack.c.b16 %v7272, %v7464
      %v7481 = vrot.slane %v7465, 1
      %v7482 = vrot.slane %v7466, 1
      %v7483 = vrot.slane %v7467, 1
      %v7484 = vrot.slane %v7468, 1
      %v7485 = vrot.slane %v7469, 1
      %v7486 = vrot.slane %v7470, 1
      %v7487 = vrot.slane %v7471, 1
      %v7488 = vrot.slane %v7472, 1
      %v7489 = vrot.slane %v7473, 1
      %v7490 = vrot.slane %v7474, 1
      %v7491 = vrot.slane %v7475, 1
      %v7492 = vrot.slane %v7476, 1
      %v7493 = vrot.slane %v7477, 1
      %v7494 = vrot.slane %v7478, 1
      %v7495 = vrot.slane %v7479, 1
      %v7496 = vrot.slane %v7480, 1
      %7497 = vrot.lane.b32.xlu0 %v7481, 80
      %v7498 = vpop.permute.xlu0 %7497
      %7499 = vrot.lane.b32.xlu0 %v7482, 80
      %v7500 = vpop.permute.xlu0 %7499
      %7501 = vrot.lane.b32.xlu0 %v7483, 80
      %v7502 = vpop.permute.xlu0 %7501
      %7503 = vrot.lane.b32.xlu0 %v7484, 80
      %v7504 = vpop.permute.xlu0 %7503
      %7505 = vrot.lane.b32.xlu0 %v7485, 80
      %v7506 = vpop.permute.xlu0 %7505
      %7507 = vrot.lane.b32.xlu0 %v7486, 80
      %v7508 = vpop.permute.xlu0 %7507
      %7509 = vrot.lane.b32.xlu0 %v7487, 80
      %v7510 = vpop.permute.xlu0 %7509
      %7511 = vrot.lane.b32.xlu0 %v7488, 80
      %v7512 = vpop.permute.xlu0 %7511
      %7513 = vrot.lane.b32.xlu0 %v7489, 80
      %v7514 = vpop.permute.xlu0 %7513
      %7515 = vrot.lane.b32.xlu0 %v7490, 80
      %v7516 = vpop.permute.xlu0 %7515
      %7517 = vrot.lane.b32.xlu0 %v7491, 80
      %v7518 = vpop.permute.xlu0 %7517
      %7519 = vrot.lane.b32.xlu0 %v7492, 80
      %v7520 = vpop.permute.xlu0 %7519
      %7521 = vrot.lane.b32.xlu0 %v7493, 80
      %v7522 = vpop.permute.xlu0 %7521
      %7523 = vrot.lane.b32.xlu0 %v7494, 80
      %v7524 = vpop.permute.xlu0 %7523
      %7525 = vrot.lane.b32.xlu0 %v7495, 80
      %v7526 = vpop.permute.xlu0 %7525
      %7527 = vrot.lane.b32.xlu0 %v7496, 80
      %v7528 = vpop.permute.xlu0 %7527
      %v7545 = vunpack.c.l.b16 %v6793
      %v7546 = vunpack.c.l.b16 %v6794
      %v7547 = vunpack.c.l.b16 %v6795
      %v7548 = vunpack.c.l.b16 %v6796
      %v7549 = vunpack.c.l.b16 %v6797
      %v7550 = vunpack.c.l.b16 %v6798
      %v7551 = vunpack.c.l.b16 %v6799
      %v7552 = vunpack.c.l.b16 %v6800
      %v7553 = vunpack.c.l.b16 %v6801
      %v7554 = vunpack.c.l.b16 %v6802
      %v7555 = vunpack.c.l.b16 %v6803
      %v7556 = vunpack.c.l.b16 %v6804
      %v7557 = vunpack.c.l.b16 %v6805
      %v7558 = vunpack.c.l.b16 %v6806
      %v7559 = vunpack.c.l.b16 %v6807
      %v7560 = vunpack.c.l.b16 %v6808
      %v7561 = vpack.c.b16 %v7545, %v7545
      %v7562 = vpack.c.b16 %v7546, %v7546
      %v7563 = vpack.c.b16 %v7547, %v7547
      %v7564 = vpack.c.b16 %v7548, %v7548
      %v7565 = vpack.c.b16 %v7549, %v7549
      %v7566 = vpack.c.b16 %v7550, %v7550
      %v7567 = vpack.c.b16 %v7551, %v7551
      %v7568 = vpack.c.b16 %v7552, %v7552
      %v7569 = vpack.c.b16 %v7553, %v7553
      %v7570 = vpack.c.b16 %v7554, %v7554
      %v7571 = vpack.c.b16 %v7555, %v7555
      %v7572 = vpack.c.b16 %v7556, %v7556
      %v7573 = vpack.c.b16 %v7557, %v7557
      %v7574 = vpack.c.b16 %v7558, %v7558
      %v7575 = vpack.c.b16 %v7559, %v7559
      %v7576 = vpack.c.b16 %v7560, %v7560
      %7577 = vrot.lane.b32.xlu0 %v7561, 96
      %v7578 = vpop.permute.xlu0 %7577
      %7579 = vrot.lane.b32.xlu0 %v7562, 96
      %v7580 = vpop.permute.xlu0 %7579
      %7581 = vrot.lane.b32.xlu0 %v7563, 96
      %v7582 = vpop.permute.xlu0 %7581
      %7583 = vrot.lane.b32.xlu0 %v7564, 96
      %v7584 = vpop.permute.xlu0 %7583
      %7585 = vrot.lane.b32.xlu0 %v7565, 96
      %v7586 = vpop.permute.xlu0 %7585
      %7587 = vrot.lane.b32.xlu0 %v7566, 96
      %v7588 = vpop.permute.xlu0 %7587
      %7589 = vrot.lane.b32.xlu0 %v7567, 96
      %v7590 = vpop.permute.xlu0 %7589
      %7591 = vrot.lane.b32.xlu0 %v7568, 96
      %v7592 = vpop.permute.xlu0 %7591
      %7593 = vrot.lane.b32.xlu0 %v7569, 96
      %v7594 = vpop.permute.xlu0 %7593
      %7595 = vrot.lane.b32.xlu0 %v7570, 96
      %v7596 = vpop.permute.xlu0 %7595
      %7597 = vrot.lane.b32.xlu0 %v7571, 96
      %v7598 = vpop.permute.xlu0 %7597
      %7599 = vrot.lane.b32.xlu0 %v7572, 96
      %v7600 = vpop.permute.xlu0 %7599
      %7601 = vrot.lane.b32.xlu0 %v7573, 96
      %v7602 = vpop.permute.xlu0 %7601
      %7603 = vrot.lane.b32.xlu0 %v7574, 96
      %v7604 = vpop.permute.xlu0 %7603
      %7605 = vrot.lane.b32.xlu0 %v7575, 96
      %v7606 = vpop.permute.xlu0 %7605
      %7607 = vrot.lane.b32.xlu0 %v7576, 96
      %v7608 = vpop.permute.xlu0 %7607
      %v7625 = vunpack.c.l.b16 %v6809
      %v7626 = vunpack.c.l.b16 %v6810
      %v7627 = vunpack.c.l.b16 %v6811
      %v7628 = vunpack.c.l.b16 %v6812
      %v7629 = vunpack.c.l.b16 %v6813
      %v7630 = vunpack.c.l.b16 %v6814
      %v7631 = vunpack.c.l.b16 %v6815
      %v7632 = vunpack.c.l.b16 %v6816
      %v7633 = vunpack.c.l.b16 %v6817
      %v7634 = vunpack.c.l.b16 %v6818
      %v7635 = vunpack.c.l.b16 %v6819
      %v7636 = vunpack.c.l.b16 %v6820
      %v7637 = vunpack.c.l.b16 %v6821
      %v7638 = vunpack.c.l.b16 %v6822
      %v7639 = vunpack.c.l.b16 %v6823
      %v7640 = vunpack.c.l.b16 %v6824
      %v7641 = vpack.c.b16 %v7625, %v7545
      %v7642 = vpack.c.b16 %v7626, %v7546
      %v7643 = vpack.c.b16 %v7627, %v7547
      %v7644 = vpack.c.b16 %v7628, %v7548
      %v7645 = vpack.c.b16 %v7629, %v7549
      %v7646 = vpack.c.b16 %v7630, %v7550
      %v7647 = vpack.c.b16 %v7631, %v7551
      %v7648 = vpack.c.b16 %v7632, %v7552
      %v7649 = vpack.c.b16 %v7633, %v7553
      %v7650 = vpack.c.b16 %v7634, %v7554
      %v7651 = vpack.c.b16 %v7635, %v7555
      %v7652 = vpack.c.b16 %v7636, %v7556
      %v7653 = vpack.c.b16 %v7637, %v7557
      %v7654 = vpack.c.b16 %v7638, %v7558
      %v7655 = vpack.c.b16 %v7639, %v7559
      %v7656 = vpack.c.b16 %v7640, %v7560
      %v7658 = vshrl.u32 %v7641, 16
      %v7660 = vshll.u32 %v7641, 16
      %v7662 = vrot.slane %v7660, 1
      %v7663 = vor.u32 %v7658, %v7662
      %v7665 = vshrl.u32 %v7642, 16
      %v7667 = vshll.u32 %v7642, 16
      %v7669 = vrot.slane %v7667, 1
      %v7670 = vor.u32 %v7665, %v7669
      %v7672 = vshrl.u32 %v7643, 16
      %v7674 = vshll.u32 %v7643, 16
      %v7676 = vrot.slane %v7674, 1
      %v7677 = vor.u32 %v7672, %v7676
      %v7679 = vshrl.u32 %v7644, 16
      %v7681 = vshll.u32 %v7644, 16
      %v7683 = vrot.slane %v7681, 1
      %v7684 = vor.u32 %v7679, %v7683
      %v7686 = vshrl.u32 %v7645, 16
      %v7688 = vshll.u32 %v7645, 16
      %v7690 = vrot.slane %v7688, 1
      %v7691 = vor.u32 %v7686, %v7690
      %v7693 = vshrl.u32 %v7646, 16
      %v7695 = vshll.u32 %v7646, 16
      %v7697 = vrot.slane %v7695, 1
      %v7698 = vor.u32 %v7693, %v7697
      %v7700 = vshrl.u32 %v7647, 16
      %v7702 = vshll.u32 %v7647, 16
      %v7704 = vrot.slane %v7702, 1
      %v7705 = vor.u32 %v7700, %v7704
      %v7707 = vshrl.u32 %v7648, 16
      %v7709 = vshll.u32 %v7648, 16
      %v7711 = vrot.slane %v7709, 1
      %v7712 = vor.u32 %v7707, %v7711
      %v7714 = vshrl.u32 %v7649, 16
      %v7716 = vshll.u32 %v7649, 16
      %v7718 = vrot.slane %v7716, 1
      %v7719 = vor.u32 %v7714, %v7718
      %v7721 = vshrl.u32 %v7650, 16
      %v7723 = vshll.u32 %v7650, 16
      %v7725 = vrot.slane %v7723, 1
      %v7726 = vor.u32 %v7721, %v7725
      %v7728 = vshrl.u32 %v7651, 16
      %v7730 = vshll.u32 %v7651, 16
      %v7732 = vrot.slane %v7730, 1
      %v7733 = vor.u32 %v7728, %v7732
      %v7735 = vshrl.u32 %v7652, 16
      %v7737 = vshll.u32 %v7652, 16
      %v7739 = vrot.slane %v7737, 1
      %v7740 = vor.u32 %v7735, %v7739
      %v7742 = vshrl.u32 %v7653, 16
      %v7744 = vshll.u32 %v7653, 16
      %v7746 = vrot.slane %v7744, 1
      %v7747 = vor.u32 %v7742, %v7746
      %v7749 = vshrl.u32 %v7654, 16
      %v7751 = vshll.u32 %v7654, 16
      %v7753 = vrot.slane %v7751, 1
      %v7754 = vor.u32 %v7749, %v7753
      %v7756 = vshrl.u32 %v7655, 16
      %v7758 = vshll.u32 %v7655, 16
      %v7760 = vrot.slane %v7758, 1
      %v7761 = vor.u32 %v7756, %v7760
      %v7763 = vshrl.u32 %v7656, 16
      %v7765 = vshll.u32 %v7656, 16
      %v7767 = vrot.slane %v7765, 1
      %v7768 = vor.u32 %v7763, %v7767
      %7769 = vrot.lane.b32.xlu0 %v7663, 112
      %v7770 = vpop.permute.xlu0 %7769
      %7771 = vrot.lane.b32.xlu0 %v7670, 112
      %v7772 = vpop.permute.xlu0 %7771
      %7773 = vrot.lane.b32.xlu0 %v7677, 112
      %v7774 = vpop.permute.xlu0 %7773
      %7775 = vrot.lane.b32.xlu0 %v7684, 112
      %v7776 = vpop.permute.xlu0 %7775
      %7777 = vrot.lane.b32.xlu0 %v7691, 112
      %v7778 = vpop.permute.xlu0 %7777
      %7779 = vrot.lane.b32.xlu0 %v7698, 112
      %v7780 = vpop.permute.xlu0 %7779
      %7781 = vrot.lane.b32.xlu0 %v7705, 112
      %v7782 = vpop.permute.xlu0 %7781
      %7783 = vrot.lane.b32.xlu0 %v7712, 112
      %v7784 = vpop.permute.xlu0 %7783
      %7785 = vrot.lane.b32.xlu0 %v7719, 112
      %v7786 = vpop.permute.xlu0 %7785
      %7787 = vrot.lane.b32.xlu0 %v7726, 112
      %v7788 = vpop.permute.xlu0 %7787
      %7789 = vrot.lane.b32.xlu0 %v7733, 112
      %v7790 = vpop.permute.xlu0 %7789
      %7791 = vrot.lane.b32.xlu0 %v7740, 112
      %v7792 = vpop.permute.xlu0 %7791
      %7793 = vrot.lane.b32.xlu0 %v7747, 112
      %v7794 = vpop.permute.xlu0 %7793
      %7795 = vrot.lane.b32.xlu0 %v7754, 112
      %v7796 = vpop.permute.xlu0 %7795
      %7797 = vrot.lane.b32.xlu0 %v7761, 112
      %v7798 = vpop.permute.xlu0 %7797
      %7799 = vrot.lane.b32.xlu0 %v7768, 112
      %v7800 = vpop.permute.xlu0 %7799
      %v7817 = vunpack.c.l.b16 %v6825
      %v7818 = vunpack.c.l.b16 %v6826
      %v7819 = vunpack.c.l.b16 %v6827
      %v7820 = vunpack.c.l.b16 %v6828
      %v7821 = vunpack.c.l.b16 %v6829
      %v7822 = vunpack.c.l.b16 %v6830
      %v7823 = vunpack.c.l.b16 %v6831
      %v7824 = vunpack.c.l.b16 %v6832
      %v7825 = vunpack.c.l.b16 %v6833
      %v7826 = vunpack.c.l.b16 %v6834
      %v7827 = vunpack.c.l.b16 %v6835
      %v7828 = vunpack.c.l.b16 %v6836
      %v7829 = vunpack.c.l.b16 %v6837
      %v7830 = vunpack.c.l.b16 %v6838
      %v7831 = vunpack.c.l.b16 %v6839
      %v7832 = vunpack.c.l.b16 %v6840
      %v7833 = vpack.c.b16 %v7625, %v7817
      %v7834 = vpack.c.b16 %v7626, %v7818
      %v7835 = vpack.c.b16 %v7627, %v7819
      %v7836 = vpack.c.b16 %v7628, %v7820
      %v7837 = vpack.c.b16 %v7629, %v7821
      %v7838 = vpack.c.b16 %v7630, %v7822
      %v7839 = vpack.c.b16 %v7631, %v7823
      %v7840 = vpack.c.b16 %v7632, %v7824
      %v7841 = vpack.c.b16 %v7633, %v7825
      %v7842 = vpack.c.b16 %v7634, %v7826
      %v7843 = vpack.c.b16 %v7635, %v7827
      %v7844 = vpack.c.b16 %v7636, %v7828
      %v7845 = vpack.c.b16 %v7637, %v7829
      %v7846 = vpack.c.b16 %v7638, %v7830
      %v7847 = vpack.c.b16 %v7639, %v7831
      %v7848 = vpack.c.b16 %v7640, %v7832
      %v7849 = vrot.slane %v7833, 1
      %v7850 = vrot.slane %v7834, 1
      %v7851 = vrot.slane %v7835, 1
      %v7852 = vrot.slane %v7836, 1
      %v7853 = vrot.slane %v7837, 1
      %v7854 = vrot.slane %v7838, 1
      %v7855 = vrot.slane %v7839, 1
      %v7856 = vrot.slane %v7840, 1
      %v7857 = vrot.slane %v7841, 1
      %v7858 = vrot.slane %v7842, 1
      %v7859 = vrot.slane %v7843, 1
      %v7860 = vrot.slane %v7844, 1
      %v7861 = vrot.slane %v7845, 1
      %v7862 = vrot.slane %v7846, 1
      %v7863 = vrot.slane %v7847, 1
      %v7864 = vrot.slane %v7848, 1
      %v7867 = vsel %vm5494, %v6696, %v7034
      %v7870 = vsel %vm5494, %v6697, %v7036
      %v7873 = vsel %vm5494, %v6698, %v7038
      %v7876 = vsel %vm5494, %v6699, %v7040
      %v7879 = vsel %vm5494, %v6700, %v7042
      %v7882 = vsel %vm5494, %v6701, %v7044
      %v7885 = vsel %vm5494, %v6702, %v7046
      %v7888 = vsel %vm5494, %v6703, %v7048
      %v7891 = vsel %vm5494, %v6704, %v7050
      %v7894 = vsel %vm5494, %v6705, %v7052
      %v7897 = vsel %vm5494, %v6706, %v7054
      %v7900 = vsel %vm5494, %v6707, %v7056
      %v7903 = vsel %vm5494, %v6708, %v7058
      %v7906 = vsel %vm5494, %v6709, %v7060
      %v7909 = vsel %vm5494, %v6710, %v7062
      %v7912 = vsel %vm5494, %v6711, %v7064
      %vm7913 = vcmask 261120
      %v7915 = vsel %vm7913, %v7867, %v7130
      %v7917 = vsel %vm7913, %v7870, %v7132
      %v7919 = vsel %vm7913, %v7873, %v7134
      %v7921 = vsel %vm7913, %v7876, %v7136
      %v7923 = vsel %vm7913, %v7879, %v7138
      %v7925 = vsel %vm7913, %v7882, %v7140
      %v7927 = vsel %vm7913, %v7885, %v7142
      %v7929 = vsel %vm7913, %v7888, %v7144
      %v7931 = vsel %vm7913, %v7891, %v7146
      %v7933 = vsel %vm7913, %v7894, %v7148
      %v7935 = vsel %vm7913, %v7897, %v7150
      %v7937 = vsel %vm7913, %v7900, %v7152
      %v7939 = vsel %vm7913, %v7903, %v7154
      %v7941 = vsel %vm7913, %v7906, %v7156
      %v7943 = vsel %vm7913, %v7909, %v7158
      %v7945 = vsel %vm7913, %v7912, %v7160
      %vm7946 = vcmask 392192
      %v7948 = vsel %vm7946, %v7915, %v7210
      %v7950 = vsel %vm7946, %v7917, %v7212
      %v7952 = vsel %vm7946, %v7919, %v7214
      %v7954 = vsel %vm7946, %v7921, %v7216
      %v7956 = vsel %vm7946, %v7923, %v7218
      %v7958 = vsel %vm7946, %v7925, %v7220
      %v7960 = vsel %vm7946, %v7927, %v7222
      %v7962 = vsel %vm7946, %v7929, %v7224
      %v7964 = vsel %vm7946, %v7931, %v7226
      %v7966 = vsel %vm7946, %v7933, %v7228
      %v7968 = vsel %vm7946, %v7935, %v7230
      %v7970 = vsel %vm7946, %v7937, %v7232
      %v7972 = vsel %vm7946, %v7939, %v7234
      %v7974 = vsel %vm7946, %v7941, %v7236
      %v7976 = vsel %vm7946, %v7943, %v7238
      %v7978 = vsel %vm7946, %v7945, %v7240
      %vm7979 = vcmask 523264
      %v7981 = vsel %vm7979, %v7948, %v7402
      %v7983 = vsel %vm7979, %v7950, %v7404
      %v7985 = vsel %vm7979, %v7952, %v7406
      %v7987 = vsel %vm7979, %v7954, %v7408
      %v7989 = vsel %vm7979, %v7956, %v7410
      %v7991 = vsel %vm7979, %v7958, %v7412
      %v7993 = vsel %vm7979, %v7960, %v7414
      %v7995 = vsel %vm7979, %v7962, %v7416
      %v7997 = vsel %vm7979, %v7964, %v7418
      %v7999 = vsel %vm7979, %v7966, %v7420
      %v8001 = vsel %vm7979, %v7968, %v7422
      %v8003 = vsel %vm7979, %v7970, %v7424
      %v8005 = vsel %vm7979, %v7972, %v7426
      %v8007 = vsel %vm7979, %v7974, %v7428
      %v8009 = vsel %vm7979, %v7976, %v7430
      %v8011 = vsel %vm7979, %v7978, %v7432
      %vm8012 = vcmask 654336
      %v8014 = vsel %vm8012, %v7981, %v7498
      %v8016 = vsel %vm8012, %v7983, %v7500
      %v8018 = vsel %vm8012, %v7985, %v7502
      %v8020 = vsel %vm8012, %v7987, %v7504
      %v8022 = vsel %vm8012, %v7989, %v7506
      %v8024 = vsel %vm8012, %v7991, %v7508
      %v8026 = vsel %vm8012, %v7993, %v7510
      %v8028 = vsel %vm8012, %v7995, %v7512
      %v8030 = vsel %vm8012, %v7997, %v7514
      %v8032 = vsel %vm8012, %v7999, %v7516
      %v8034 = vsel %vm8012, %v8001, %v7518
      %v8036 = vsel %vm8012, %v8003, %v7520
      %v8038 = vsel %vm8012, %v8005, %v7522
      %v8040 = vsel %vm8012, %v8007, %v7524
      %v8042 = vsel %vm8012, %v8009, %v7526
      %v8044 = vsel %vm8012, %v8011, %v7528
      %vm8045 = vcmask 785408
      %v8047 = vsel %vm8045, %v8014, %v7578
      %v8049 = vsel %vm8045, %v8016, %v7580
      %v8051 = vsel %vm8045, %v8018, %v7582
      %v8053 = vsel %vm8045, %v8020, %v7584
      %v8055 = vsel %vm8045, %v8022, %v7586
      %v8057 = vsel %vm8045, %v8024, %v7588
      %v8059 = vsel %vm8045, %v8026, %v7590
      %v8061 = vsel %vm8045, %v8028, %v7592
      %v8063 = vsel %vm8045, %v8030, %v7594
      %v8065 = vsel %vm8045, %v8032, %v7596
      %v8067 = vsel %vm8045, %v8034, %v7598
      %v8069 = vsel %vm8045, %v8036, %v7600
      %v8071 = vsel %vm8045, %v8038, %v7602
      %v8073 = vsel %vm8045, %v8040, %v7604
      %v8075 = vsel %vm8045, %v8042, %v7606
      %v8077 = vsel %vm8045, %v8044, %v7608
      %vm8078 = vcmask 916480
      %v8080 = vsel %vm8078, %v8047, %v7770
      %v8082 = vsel %vm8078, %v8049, %v7772
      %v8084 = vsel %vm8078, %v8051, %v7774
      %v8086 = vsel %vm8078, %v8053, %v7776
      %v8088 = vsel %vm8078, %v8055, %v7778
      %v8090 = vsel %vm8078, %v8057, %v7780
      %v8092 = vsel %vm8078, %v8059, %v7782
      %v8094 = vsel %vm8078, %v8061, %v7784
      %v8096 = vsel %vm8078, %v8063, %v7786
      %v8098 = vsel %vm8078, %v8065, %v7788
      %v8100 = vsel %vm8078, %v8067, %v7790
      %v8102 = vsel %vm8078, %v8069, %v7792
      %v8104 = vsel %vm8078, %v8071, %v7794
      %v8106 = vsel %vm8078, %v8073, %v7796
      %v8108 = vsel %vm8078, %v8075, %v7798
      %v8110 = vsel %vm8078, %v8077, %v7800
      %v8127 = vunpack.c.l.b16 %v8080
      %v8128 = vunpack.c.l.b16 %v7849
      %v8129 = vunpack.c.l.b16 %v8082
      %v8130 = vunpack.c.l.b16 %v7850
      %v8131 = vunpack.c.l.b16 %v8084
      %v8132 = vunpack.c.l.b16 %v7851
      %v8133 = vunpack.c.l.b16 %v8086
      %v8134 = vunpack.c.l.b16 %v7852
      %v8135 = vunpack.c.l.b16 %v8088
      %v8136 = vunpack.c.l.b16 %v7853
      %v8137 = vunpack.c.l.b16 %v8090
      %v8138 = vunpack.c.l.b16 %v7854
      %v8139 = vunpack.c.l.b16 %v8092
      %v8140 = vunpack.c.l.b16 %v7855
      %v8141 = vunpack.c.l.b16 %v8094
      %v8142 = vunpack.c.l.b16 %v7856
      %v8143 = vunpack.c.l.b16 %v8096
      %v8144 = vunpack.c.l.b16 %v7857
      %v8145 = vunpack.c.l.b16 %v8098
      %v8146 = vunpack.c.l.b16 %v7858
      %v8147 = vunpack.c.l.b16 %v8100
      %v8148 = vunpack.c.l.b16 %v7859
      %v8149 = vunpack.c.l.b16 %v8102
      %v8150 = vunpack.c.l.b16 %v7860
      %v8151 = vunpack.c.l.b16 %v8104
      %v8152 = vunpack.c.l.b16 %v7861
      %v8153 = vunpack.c.l.b16 %v8106
      %v8154 = vunpack.c.l.b16 %v7862
      %v8155 = vunpack.c.l.b16 %v8108
      %v8156 = vunpack.c.l.b16 %v7863
      %v8157 = vunpack.c.l.b16 %v8110
      %v8158 = vunpack.c.l.b16 %v7864
      %v8159 = vld [vmem:[%s3] sm:$0xf]
      %v8160 = vld [vmem:[%s3 + $0x4] sm:$0xf]
      %v8161 = vld [vmem:[%s3 + $0x8] sm:$0xf]
      %v8162 = vld [vmem:[%s3 + $0xc] sm:$0xf]
      %v8163 = vld [vmem:[%s3 + $0x10] sm:$0xf]
      %v8164 = vld [vmem:[%s3 + $0x14] sm:$0xf]
      %v8165 = vld [vmem:[%s3 + $0x18] sm:$0xf]
      %v8166 = vld [vmem:[%s3 + $0x1c] sm:$0xf]
      %v8167 = vld [vmem:[%s3 + $0x20] sm:$0xf]
      %v8168 = vld [vmem:[%s3 + $0x24] sm:$0xf]
      %v8169 = vld [vmem:[%s3 + $0x28] sm:$0xf]
      %v8170 = vld [vmem:[%s3 + $0x2c] sm:$0xf]
      %v8171 = vld [vmem:[%s3 + $0x30] sm:$0xf]
      %v8172 = vld [vmem:[%s3 + $0x34] sm:$0xf]
      %v8173 = vld [vmem:[%s3 + $0x38] sm:$0xf]
      %v8174 = vld [vmem:[%s3 + $0x3c] sm:$0xf]
      %v8175 = vld [vmem:[%s3 + $0x40] sm:$0xf]
      %v8176 = vld [vmem:[%s3 + $0x44] sm:$0xf]
      %v8177 = vld [vmem:[%s4] sm:$0x1]
      %v8179 = vlaneseq
      %v8180 = vshrl.u32 %v8179, 7
      %v8181 = vsub.s32 0, %v8180
      %v8182 = vrot.slane %v8177, %v8181
      %v8184 = vpack.c.b16 %v8129, %v8127
      %v8185 = vpack.c.b16 %v8130, %v8128
      %v8186 = vpack.c.b16 %v8133, %v8131
      %v8187 = vpack.c.b16 %v8134, %v8132
      %v8188 = vpack.c.b16 %v8137, %v8135
      %v8189 = vpack.c.b16 %v8138, %v8136
      %v8190 = vpack.c.b16 %v8141, %v8139
      %v8191 = vpack.c.b16 %v8142, %v8140
      %v8192 = vpack.c.b16 %v8145, %v8143
      %v8193 = vpack.c.b16 %v8146, %v8144
      %v8194 = vpack.c.b16 %v8149, %v8147
      %v8195 = vpack.c.b16 %v8150, %v8148
      %v8196 = vpack.c.b16 %v8153, %v8151
      %v8197 = vpack.c.b16 %v8154, %v8152
      %v8198 = vpack.c.b16 %v8157, %v8155
      %v8199 = vpack.c.b16 %v8158, %v8156
      %v8226 = vunpack.c.l.b16 %v8159
      %v8227 = vunpack.c.l.b16 %v8160
      %v8228 = vunpack.c.l.b16 %v8161
      %v8229 = vunpack.c.l.b16 %v8162
      %v8230 = vunpack.c.l.b16 %v8163
      %v8231 = vunpack.c.l.b16 %v8164
      %v8232 = vunpack.c.l.b16 %v8165
      %v8233 = vunpack.c.l.b16 %v8166
      %v8234 = vunpack.c.l.b16 %v8167
      %v8235 = vunpack.c.l.b16 %v8168
      %v8236 = vunpack.c.l.b16 %v8169
      %v8237 = vunpack.c.l.b16 %v8170
      %v8238 = vunpack.c.l.b16 %v8171
      %v8239 = vunpack.c.l.b16 %v8172
      %v8240 = vunpack.c.l.b16 %v8173
      %v8241 = vunpack.c.l.b16 %v8174
      %v8242 = vunpack.c.l.b16 %v8175
      %v8243 = vunpack.c.l.b16 %v8176
      %v8244 = vpack.c.b16 %v8227, %v8226
      %v8245 = vpack.c.b16 %v8229, %v8228
      %v8246 = vpack.c.b16 %v8231, %v8230
      %v8247 = vpack.c.b16 %v8233, %v8232
      %v8248 = vpack.c.b16 %v8235, %v8234
      %v8249 = vpack.c.b16 %v8237, %v8236
      %v8250 = vpack.c.b16 %v8239, %v8238
      %v8251 = vpack.c.b16 %v8241, %v8240
      %v8252 = vpack.c.b16 %v8243, %v8242
      %v8263 = vsel %vm5494, %v8185, 0
      %v8266 = vsel %vm5494, %v8187, 0
      %v8269 = vsel %vm5494, %v8189, 0
      %v8272 = vsel %vm5494, %v8191, 0
      %v8275 = vsel %vm5494, %v8193, 0
      %v8278 = vsel %vm5494, %v8195, 0
      %v8281 = vsel %vm5494, %v8197, 0
      %v8284 = vsel %vm5494, %v8199, 0
      %8286 = vmatprep.subr.bf16.mxu0 0
      %8287 = vmatpush1.bf16.msra.mxu0 %v8251
      %8288 = vmatprep.subr.bf16.mxu0 0
      %8289 = vmatpush1.bf16.msra.mxu0 %v8250
      %8290 = vmatprep.subr.bf16.mxu0 0
      %8291 = vmatpush1.bf16.msra.mxu0 %v8249
      %8292 = vmatprep.subr.bf16.mxu0 0
      %8293 = vmatpush1.bf16.msra.mxu0 %v8248
      %8294 = vmatprep.subr.bf16.mxu0 0
      %8295 = vmatpush1.bf16.msra.mxu0 %v8247
      %8296 = vmatprep.subr.bf16.mxu0 0
      %8297 = vmatpush1.bf16.msra.mxu0 %v8246
      %8298 = vmatprep.subr.bf16.mxu0 0
      %8299 = vmatpush1.bf16.msra.mxu0 %v8245
      %8300 = vmatprep.subr.bf16.mxu0 0
      %8301 = vmatpush1.bf16.msra.mxu0 %v8244
      %8302 = vmatprep.subr.bf16.mxu0 0
      %8303 = vmatpush2.bf16.msra.mxu0 0
      %8304 = vmatprep.subr.bf16.mxu0 0
      %8305 = vmatpush2.bf16.msra.mxu0 0
      %8306 = vmatprep.subr.bf16.mxu0 0
      %8307 = vmatpush2.bf16.msra.mxu0 0
      %8308 = vmatprep.subr.bf16.mxu0 0
      %8309 = vmatpush2.bf16.msra.mxu0 0
      %8310 = vmatprep.subr.bf16.mxu0 0
      %8311 = vmatpush2.bf16.msra.mxu0 0
      %8312 = vmatprep.subr.bf16.mxu0 0
      %8313 = vmatpush2.bf16.msra.mxu0 0
      %8314 = vmatprep.subr.bf16.mxu0 0
      %8315 = vmatpush2.bf16.msra.mxu0 0
      %8316 = vmatprep.subr.bf16.mxu0 0
      %8317 = vmatpush2.bf16.msra.mxu0 %v8252
      %8318 = vmatprep.mubr.bf16.mxu0 %v8263
      %8319 = vmatmul.mubr.bf16.gmra.mxu0 %v8184
      %v8320 = vpop.f32.mrf.mxu0
      %v8321 = vadd.f32 %v8182, %v8320
      %v8322 = vpop.f32.mrf.mxu0
      %v8323 = vpop.f32.mrf.mxu0
      %v8324 = vadd.f32 %v8182, %v8323
      %v8325 = vpop.f32.mrf.mxu0
      %8326 = vmatprep.mubr.bf16.mxu0 %v8266
      %8327 = vmatmul.mubr.bf16.gmra.mxu0 %v8186
      %v8328 = vpop.f32.mrf.mxu0
      %v8329 = vadd.f32 %v8182, %v8328
      %v8330 = vpop.f32.mrf.mxu0
      %v8331 = vpop.f32.mrf.mxu0
      %v8332 = vadd.f32 %v8182, %v8331
      %v8333 = vpop.f32.mrf.mxu0
      %8334 = vmatprep.mubr.bf16.mxu0 %v8269
      %8335 = vmatmul.mubr.bf16.gmra.mxu0 %v8188
      %v8336 = vpop.f32.mrf.mxu0
      %v8337 = vadd.f32 %v8182, %v8336
      %v8338 = vpop.f32.mrf.mxu0
      %v8339 = vpop.f32.mrf.mxu0
      %v8340 = vadd.f32 %v8182, %v8339
      %v8341 = vpop.f32.mrf.mxu0
      %8342 = vmatprep.mubr.bf16.mxu0 %v8272
      %8343 = vmatmul.mubr.bf16.gmra.mxu0 %v8190
      %v8344 = vpop.f32.mrf.mxu0
      %v8345 = vadd.f32 %v8182, %v8344
      %v8346 = vpop.f32.mrf.mxu0
      %v8347 = vpop.f32.mrf.mxu0
      %v8348 = vadd.f32 %v8182, %v8347
      %v8349 = vpop.f32.mrf.mxu0
      %8350 = vmatprep.mubr.bf16.mxu0 %v8275
      %8351 = vmatmul.mubr.bf16.gmra.mxu0 %v8192
      %v8352 = vpop.f32.mrf.mxu0
      %v8353 = vadd.f32 %v8182, %v8352
      %v8354 = vpop.f32.mrf.mxu0
      %v8355 = vpop.f32.mrf.mxu0
      %v8356 = vadd.f32 %v8182, %v8355
      %v8357 = vpop.f32.mrf.mxu0
      %8358 = vmatprep.mubr.bf16.mxu0 %v8278
      %8359 = vmatmul.mubr.bf16.gmra.mxu0 %v8194
      %v8360 = vpop.f32.mrf.mxu0
      %v8361 = vadd.f32 %v8182, %v8360
      %v8362 = vpop.f32.mrf.mxu0
      %v8363 = vpop.f32.mrf.mxu0
      %v8364 = vadd.f32 %v8182, %v8363
      %v8365 = vpop.f32.mrf.mxu0
      %8366 = vmatprep.mubr.bf16.mxu0 %v8281
      %8367 = vmatmul.mubr.bf16.gmra.mxu0 %v8196
      %v8368 = vpop.f32.mrf.mxu0
      %v8369 = vadd.f32 %v8182, %v8368
      %v8370 = vpop.f32.mrf.mxu0
      %v8371 = vpop.f32.mrf.mxu0
      %v8372 = vadd.f32 %v8182, %v8371
      %v8373 = vpop.f32.mrf.mxu0
      %8374 = vmatprep.mubr.bf16.mxu0 %v8284
      %8375 = vmatmul.mubr.bf16.gmra.mxu0 %v8198
      %v8376 = vpop.f32.mrf.mxu0
      %v8377 = vadd.f32 %v8182, %v8376
      %v8378 = vpop.f32.mrf.mxu0
      %v8379 = vpop.f32.mrf.mxu0
      %v8380 = vadd.f32 %v8182, %v8379
      %v8381 = vpop.f32.mrf.mxu0
      %8382 = vdwg.mxu0
      %v8383 = vmax.f32 %v8321, 0.0
      %v8384 = vmax.f32 %v8324, 0.0
      %v8385 = vmax.f32 %v8329, 0.0
      %v8386 = vmax.f32 %v8332, 0.0
      %v8387 = vmax.f32 %v8337, 0.0
      %v8388 = vmax.f32 %v8340, 0.0
      %v8389 = vmax.f32 %v8345, 0.0
      %v8390 = vmax.f32 %v8348, 0.0
      %v8391 = vmax.f32 %v8353, 0.0
      %v8392 = vmax.f32 %v8356, 0.0
      %v8393 = vmax.f32 %v8361, 0.0
      %v8394 = vmax.f32 %v8364, 0.0
      %v8395 = vmax.f32 %v8369, 0.0
      %v8396 = vmax.f32 %v8372, 0.0
      %v8397 = vmax.f32 %v8377, 0.0
      %v8398 = vmax.f32 %v8380, 0.0
      %8399 = vst.msk [vmem:[#allocation5] sm:$0xff] %vm5104, %v8383
      %8400 = vst.msk [vmem:[#allocation5 + $0x8] sm:$0xff] %vm5104, %v8384
      %8401 = vst.msk [vmem:[#allocation5 + $0x10] sm:$0xff] %vm5104, %v8385
      %8402 = vst.msk [vmem:[#allocation5 + $0x18] sm:$0xff] %vm5104, %v8386
      %8403 = vst.msk [vmem:[#allocation5 + $0x20] sm:$0xff] %vm5104, %v8387
      %8404 = vst.msk [vmem:[#allocation5 + $0x28] sm:$0xff] %vm5104, %v8388
      %8405 = vst.msk [vmem:[#allocation5 + $0x30] sm:$0xff] %vm5104, %v8389
      %8406 = vst.msk [vmem:[#allocation5 + $0x38] sm:$0xff] %vm5104, %v8390
      %8407 = vst.msk [vmem:[#allocation5 + $0x40] sm:$0xff] %vm5104, %v8391
      %8408 = vst.msk [vmem:[#allocation5 + $0x48] sm:$0xff] %vm5104, %v8392
      %8409 = vst.msk [vmem:[#allocation5 + $0x50] sm:$0xff] %vm5104, %v8393
      %8410 = vst.msk [vmem:[#allocation5 + $0x58] sm:$0xff] %vm5104, %v8394
      %8411 = vst.msk [vmem:[#allocation5 + $0x60] sm:$0xff] %vm5104, %v8395
      %8412 = vst.msk [vmem:[#allocation5 + $0x68] sm:$0xff] %vm5104, %v8396
      %8413 = vst.msk [vmem:[#allocation5 + $0x70] sm:$0xff] %vm5104, %v8397
      %8414 = vst.msk [vmem:[#allocation5 + $0x78] sm:$0xff] %vm5104, %v8398
      %v8415 = vld [vmem:[#allocation5] ss:$2 sm:$0xff]
      %s8416 = scalar_lea.vmem [#allocation5], 16
      %v8417 = vld [vmem:[%s8416] ss:$2 sm:$0xff]
      %s8418 = scalar_lea.vmem [#allocation5], 32
      %v8419 = vld [vmem:[%s8418] ss:$2 sm:$0xff]
      %s8420 = scalar_lea.vmem [#allocation5], 48
      %v8421 = vld [vmem:[%s8420] ss:$2 sm:$0xff]
      %s8422 = scalar_lea.vmem [#allocation5], 64
      %v8423 = vld [vmem:[%s8422] ss:$2 sm:$0xff]
      %s8424 = scalar_lea.vmem [#allocation5], 80
      %v8425 = vld [vmem:[%s8424] ss:$2 sm:$0xff]
      %s8426 = scalar_lea.vmem [#allocation5], 96
      %v8427 = vld [vmem:[%s8426] ss:$2 sm:$0xff]
      %s8428 = scalar_lea.vmem [#allocation5], 112
      %v8429 = vld [vmem:[%s8428] ss:$2 sm:$0xff]
      %s8430 = scalar_lea.vmem [#allocation5], 1
      %v8431 = vld [vmem:[%s8430] ss:$2 sm:$0xff]
      %s8432 = scalar_lea.vmem [#allocation5], 17
      %v8433 = vld [vmem:[%s8432] ss:$2 sm:$0xff]
      %s8434 = scalar_lea.vmem [#allocation5], 33
      %v8435 = vld [vmem:[%s8434] ss:$2 sm:$0xff]
      %s8436 = scalar_lea.vmem [#allocation5], 49
      %v8437 = vld [vmem:[%s8436] ss:$2 sm:$0xff]
      %s8438 = scalar_lea.vmem [#allocation5], 65
      %v8439 = vld [vmem:[%s8438] ss:$2 sm:$0xff]
      %s8440 = scalar_lea.vmem [#allocation5], 81
      %v8441 = vld [vmem:[%s8440] ss:$2 sm:$0xff]
      %s8442 = scalar_lea.vmem [#allocation5], 97
      %v8443 = vld [vmem:[%s8442] ss:$2 sm:$0xff]
      %s8444 = scalar_lea.vmem [#allocation5], 113
      %v8445 = vld [vmem:[%s8444] ss:$2 sm:$0xff]
      %v8446 = vmax.f32 %v8415, %v8431
      %v8447 = vmax.f32 %v8417, %v8433
      %v8448 = vmax.f32 %v8419, %v8435
      %v8449 = vmax.f32 %v8421, %v8437
      %v8450 = vmax.f32 %v8423, %v8439
      %v8451 = vmax.f32 %v8425, %v8441
      %v8452 = vmax.f32 %v8427, %v8443
      %v8453 = vmax.f32 %v8429, %v8445
      %v8462 = vcombine.high %v8446, %v8446
      %v8463 = vcombine.high %v8447, %v8447
      %v8464 = vcombine.high %v8448, %v8448
      %v8465 = vcombine.high %v8449, %v8449
      %v8466 = vcombine.high %v8450, %v8450
      %v8467 = vcombine.high %v8451, %v8451
      %v8468 = vcombine.high %v8452, %v8452
      %v8469 = vcombine.high %v8453, %v8453
      %v8478 = vmax.f32 %v8446, %v8462
      %v8479 = vmax.f32 %v8447, %v8463
      %v8480 = vmax.f32 %v8448, %v8464
      %v8481 = vmax.f32 %v8449, %v8465
      %v8482 = vmax.f32 %v8450, %v8466
      %v8483 = vmax.f32 %v8451, %v8467
      %v8484 = vmax.f32 %v8452, %v8468
      %v8485 = vmax.f32 %v8453, %v8469
      %v8488 = vlaneseq
      %v8489 = vshrl.u32 %v8488, 7
      %v8490 = vsub.s32 0, %v8489
      %v8491 = vrot.slane %v8478, %v8490
      %v8492 = vlaneseq
      %v8493 = vshrl.u32 %v8492, 7
      %v8494 = vsub.s32 0, %v8493
      %v8495 = vrot.slane %v8482, %v8494
      %vm8496 = vcmask 1041409
      %v8497 = vsel %vm8496, %v8495, %v8491
      %v8499 = vlaneseq
      %v8500 = vshrl.u32 %v8499, 7
      %v8501 = vsub.s32 1, %v8500
      %v8502 = vrot.slane %v8478, %v8501
      %v8503 = vlaneseq
      %v8504 = vshrl.u32 %v8503, 7
      %v8505 = vsub.s32 1, %v8504
      %v8506 = vrot.slane %v8482, %v8505
      %v8507 = vsel %vm8496, %v8506, %v8502
      %8508 = vrot.lane.b32.xlu0 %v8507, 4
      %v8509 = vpop.permute.xlu0 %8508
      %v8511 = vlaneseq
      %v8512 = vshrl.u32 %v8511, 7
      %v8513 = vsub.s32 2, %v8512
      %v8514 = vrot.slane %v8478, %v8513
      %v8515 = vlaneseq
      %v8516 = vshrl.u32 %v8515, 7
      %v8517 = vsub.s32 2, %v8516
      %v8518 = vrot.slane %v8482, %v8517
      %v8519 = vsel %vm8496, %v8518, %v8514
      %8520 = vrot.lane.b32.xlu0 %v8519, 8
      %v8521 = vpop.permute.xlu0 %8520
      %v8523 = vlaneseq
      %v8524 = vshrl.u32 %v8523, 7
      %v8525 = vsub.s32 3, %v8524
      %v8526 = vrot.slane %v8478, %v8525
      %v8527 = vlaneseq
      %v8528 = vshrl.u32 %v8527, 7
      %v8529 = vsub.s32 3, %v8528
      %v8530 = vrot.slane %v8482, %v8529
      %v8531 = vsel %vm8496, %v8530, %v8526
      %8532 = vrot.lane.b32.xlu0 %v8531, 12
      %v8533 = vpop.permute.xlu0 %8532
      %v8537 = vlaneseq
      %v8538 = vshrl.u32 %v8537, 7
      %v8539 = vsub.s32 0, %v8538
      %v8540 = vrot.slane %v8479, %v8539
      %v8541 = vlaneseq
      %v8542 = vshrl.u32 %v8541, 7
      %v8543 = vsub.s32 0, %v8542
      %v8544 = vrot.slane %v8483, %v8543
      %v8545 = vsel %vm8496, %v8544, %v8540
      %8546 = vrot.lane.b32.xlu0 %v8545, 16
      %v8547 = vpop.permute.xlu0 %8546
      %v8549 = vlaneseq
      %v8550 = vshrl.u32 %v8549, 7
      %v8551 = vsub.s32 1, %v8550
      %v8552 = vrot.slane %v8479, %v8551
      %v8553 = vlaneseq
      %v8554 = vshrl.u32 %v8553, 7
      %v8555 = vsub.s32 1, %v8554
      %v8556 = vrot.slane %v8483, %v8555
      %v8557 = vsel %vm8496, %v8556, %v8552
      %8558 = vrot.lane.b32.xlu0 %v8557, 20
      %v8559 = vpop.permute.xlu0 %8558
      %v8561 = vlaneseq
      %v8562 = vshrl.u32 %v8561, 7
      %v8563 = vsub.s32 2, %v8562
      %v8564 = vrot.slane %v8479, %v8563
      %v8565 = vlaneseq
      %v8566 = vshrl.u32 %v8565, 7
      %v8567 = vsub.s32 2, %v8566
      %v8568 = vrot.slane %v8483, %v8567
      %v8569 = vsel %vm8496, %v8568, %v8564
      %8570 = vrot.lane.b32.xlu0 %v8569, 24
      %v8571 = vpop.permute.xlu0 %8570
      %v8573 = vlaneseq
      %v8574 = vshrl.u32 %v8573, 7
      %v8575 = vsub.s32 3, %v8574
      %v8576 = vrot.slane %v8479, %v8575
      %v8577 = vlaneseq
      %v8578 = vshrl.u32 %v8577, 7
      %v8579 = vsub.s32 3, %v8578
      %v8580 = vrot.slane %v8483, %v8579
      %v8581 = vsel %vm8496, %v8580, %v8576
      %8582 = vrot.lane.b32.xlu0 %v8581, 28
      %v8583 = vpop.permute.xlu0 %8582
      %v8587 = vlaneseq
      %v8588 = vshrl.u32 %v8587, 7
      %v8589 = vsub.s32 0, %v8588
      %v8590 = vrot.slane %v8480, %v8589
      %v8591 = vlaneseq
      %v8592 = vshrl.u32 %v8591, 7
      %v8593 = vsub.s32 0, %v8592
      %v8594 = vrot.slane %v8484, %v8593
      %v8595 = vsel %vm8496, %v8594, %v8590
      %8596 = vrot.lane.b32.xlu0 %v8595, 32
      %v8597 = vpop.permute.xlu0 %8596
      %v8599 = vlaneseq
      %v8600 = vshrl.u32 %v8599, 7
      %v8601 = vsub.s32 1, %v8600
      %v8602 = vrot.slane %v8480, %v8601
      %v8603 = vlaneseq
      %v8604 = vshrl.u32 %v8603, 7
      %v8605 = vsub.s32 1, %v8604
      %v8606 = vrot.slane %v8484, %v8605
      %v8607 = vsel %vm8496, %v8606, %v8602
      %8608 = vrot.lane.b32.xlu0 %v8607, 36
      %v8609 = vpop.permute.xlu0 %8608
      %v8611 = vlaneseq
      %v8612 = vshrl.u32 %v8611, 7
      %v8613 = vsub.s32 2, %v8612
      %v8614 = vrot.slane %v8480, %v8613
      %v8615 = vlaneseq
      %v8616 = vshrl.u32 %v8615, 7
      %v8617 = vsub.s32 2, %v8616
      %v8618 = vrot.slane %v8484, %v8617
      %v8619 = vsel %vm8496, %v8618, %v8614
      %8620 = vrot.lane.b32.xlu0 %v8619, 40
      %v8621 = vpop.permute.xlu0 %8620
      %v8623 = vlaneseq
      %v8624 = vshrl.u32 %v8623, 7
      %v8625 = vsub.s32 3, %v8624
      %v8626 = vrot.slane %v8480, %v8625
      %v8627 = vlaneseq
      %v8628 = vshrl.u32 %v8627, 7
      %v8629 = vsub.s32 3, %v8628
      %v8630 = vrot.slane %v8484, %v8629
      %v8631 = vsel %vm8496, %v8630, %v8626
      %8632 = vrot.lane.b32.xlu0 %v8631, 44
      %v8633 = vpop.permute.xlu0 %8632
      %v8637 = vlaneseq
      %v8638 = vshrl.u32 %v8637, 7
      %v8639 = vsub.s32 0, %v8638
      %v8640 = vrot.slane %v8481, %v8639
      %v8641 = vlaneseq
      %v8642 = vshrl.u32 %v8641, 7
      %v8643 = vsub.s32 0, %v8642
      %v8644 = vrot.slane %v8485, %v8643
      %v8645 = vsel %vm8496, %v8644, %v8640
      %8646 = vrot.lane.b32.xlu0 %v8645, 48
      %v8647 = vpop.permute.xlu0 %8646
      %v8649 = vlaneseq
      %v8650 = vshrl.u32 %v8649, 7
      %v8651 = vsub.s32 1, %v8650
      %v8652 = vrot.slane %v8481, %v8651
      %v8653 = vlaneseq
      %v8654 = vshrl.u32 %v8653, 7
      %v8655 = vsub.s32 1, %v8654
      %v8656 = vrot.slane %v8485, %v8655
      %v8657 = vsel %vm8496, %v8656, %v8652
      %8658 = vrot.lane.b32.xlu0 %v8657, 52
      %v8659 = vpop.permute.xlu0 %8658
      %v8661 = vlaneseq
      %v8662 = vshrl.u32 %v8661, 7
      %v8663 = vsub.s32 2, %v8662
      %v8664 = vrot.slane %v8481, %v8663
      %v8665 = vlaneseq
      %v8666 = vshrl.u32 %v8665, 7
      %v8667 = vsub.s32 2, %v8666
      %v8668 = vrot.slane %v8485, %v8667
      %v8669 = vsel %vm8496, %v8668, %v8664
      %8670 = vrot.lane.b32.xlu0 %v8669, 56
      %v8671 = vpop.permute.xlu0 %8670
      %v8673 = vlaneseq
      %v8674 = vshrl.u32 %v8673, 7
      %v8675 = vsub.s32 3, %v8674
      %v8676 = vrot.slane %v8481, %v8675
      %v8677 = vlaneseq
      %v8678 = vshrl.u32 %v8677, 7
      %v8679 = vsub.s32 3, %v8678
      %v8680 = vrot.slane %v8485, %v8679
      %v8681 = vsel %vm8496, %v8680, %v8676
      %8682 = vrot.lane.b32.xlu0 %v8681, 60
      %v8683 = vpop.permute.xlu0 %8682
      %v8685 = vsel %vm5104, %v8497, %v8509
      %v8686 = vsel %vm5234, %v8685, %v8521
      %v8687 = vsel %vm5364, %v8686, %v8533
      %v8688 = vsel %vm5494, %v8687, %v8547
      %vm8689 = vcmask 162816
      %v8690 = vsel %vm8689, %v8688, %v8559
      %vm8691 = vcmask 195584
      %v8692 = vsel %vm8691, %v8690, %v8571
      %vm8693 = vcmask 228352
      %v8694 = vsel %vm8693, %v8692, %v8583
      %v8695 = vsel %vm7913, %v8694, %v8597
      %vm8696 = vcmask 293888
      %v8697 = vsel %vm8696, %v8695, %v8609
      %vm8698 = vcmask 326656
      %v8699 = vsel %vm8698, %v8697, %v8621
      %vm8700 = vcmask 359424
      %v8701 = vsel %vm8700, %v8699, %v8633
      %v8702 = vsel %vm7946, %v8701, %v8647
      %vm8703 = vcmask 424960
      %v8704 = vsel %vm8703, %v8702, %v8659
      %vm8705 = vcmask 457728
      %v8706 = vsel %vm8705, %v8704, %v8671
      %vm8707 = vcmask 490496
      %v8708 = vsel %vm8707, %v8706, %v8683
      %v8709 = vld [vmem:[%s5] sm:$0xff]
      %v8710 = vld [vmem:[%s5 + $0x8] sm:$0xff]
      %v8711 = vld [vmem:[%s5 + $0x10] sm:$0xff]
      %v8712 = vld [vmem:[%s5 + $0x18] sm:$0xff]
      %v8713 = vld [vmem:[%s5 + $0x20] sm:$0xff]
      %v8714 = vld [vmem:[%s5 + $0x28] sm:$0xff]
      %v8715 = vld [vmem:[%s5 + $0x30] sm:$0xff]
      %v8716 = vld [vmem:[%s5 + $0x38] sm:$0xff]
      %v8717 = vld [vmem:[%s6] sm:$0x1]
      %v8719 = vlaneseq
      %v8720 = vshrl.u32 %v8719, 7
      %v8721 = vsub.s32 0, %v8720
      %v8722 = vrot.slane %v8717, %v8721
      %v8725 = vsel %vm7979, %v8708, 0
      %8727 = vmatprep.subr.mxu0 0.0
      %8728 = vmatpush1.msra.mxu0 0.0
      %8729 = vmatprep.subr.mxu0 0.0
      %8730 = vmatpush1.msra.mxu0 0.0
      %8731 = vmatprep.subr.mxu0 0.0
      %8732 = vmatpush1.msra.mxu0 0.0
      %8733 = vmatprep.subr.mxu0 0.0
      %8734 = vmatpush1.msra.mxu0 0.0
      %8735 = vmatprep.subr.mxu0 0.0
      %8736 = vmatpush1.msra.mxu0 0.0
      %8737 = vmatprep.subr.mxu0 0.0
      %8738 = vmatpush1.msra.mxu0 0.0
      %8739 = vmatprep.subr.mxu0 0.0
      %8740 = vmatpush1.msra.mxu0 0.0
      %8741 = vmatprep.subr.mxu0 0.0
      %8742 = vmatpush1.msra.mxu0 0.0
      %8743 = vmatprep.subr.mxu0 0.0
      %8744 = vmatpush1.msra.mxu0 %v8716
      %8745 = vmatprep.subr.mxu0 0.0
      %8746 = vmatpush1.msra.mxu0 %v8715
      %8747 = vmatprep.subr.mxu0 0.0
      %8748 = vmatpush1.msra.mxu0 %v8714
      %8749 = vmatprep.subr.mxu0 0.0
      %8750 = vmatpush1.msra.mxu0 %v8713
      %8751 = vmatprep.subr.mxu0 0.0
      %8752 = vmatpush1.msra.mxu0 %v8712
      %8753 = vmatprep.subr.mxu0 0.0
      %8754 = vmatpush1.msra.mxu0 %v8711
      %8755 = vmatprep.subr.mxu0 0.0
      %8756 = vmatpush1.msra.mxu0 %v8710
      %8757 = vmatprep.subr.mxu0 0.0
      %8758 = vmatpush1.msra.mxu0 %v8709
      %8759 = vmatprep.subr.mxu0 0.0
      %8760 = vmatpush2.msra.mxu0 0.0
      %8761 = vmatprep.subr.mxu0 0.0
      %8762 = vmatpush2.msra.mxu0 0.0
      %8763 = vmatprep.subr.mxu0 0.0
      %8764 = vmatpush2.msra.mxu0 0.0
      %8765 = vmatprep.subr.mxu0 0.0
      %8766 = vmatpush2.msra.mxu0 0.0
      %8767 = vmatprep.subr.mxu0 0.0
      %8768 = vmatpush2.msra.mxu0 0.0
      %8769 = vmatprep.subr.mxu0 0.0
      %8770 = vmatpush2.msra.mxu0 0.0
      %8771 = vmatprep.subr.mxu0 0.0
      %8772 = vmatpush2.msra.mxu0 0.0
      %8773 = vmatprep.subr.mxu0 0.0
      %8774 = vmatpush2.msra.mxu0 0.0
      %8775 = vmatprep.subr.mxu0 0.0
      %8776 = vmatpush2.msra.mxu0 0.0
      %8777 = vmatprep.subr.mxu0 0.0
      %8778 = vmatpush2.msra.mxu0 0.0
      %8779 = vmatprep.subr.mxu0 0.0
      %8780 = vmatpush2.msra.mxu0 0.0
      %8781 = vmatprep.subr.mxu0 0.0
      %8782 = vmatpush2.msra.mxu0 0.0
      %8783 = vmatprep.subr.mxu0 0.0
      %8784 = vmatpush2.msra.mxu0 0.0
      %8785 = vmatprep.subr.mxu0 0.0
      %8786 = vmatpush2.msra.mxu0 0.0
      %8787 = vmatprep.subr.mxu0 0.0
      %8788 = vmatpush2.msra.mxu0 0.0
      %8789 = vmatprep.subr.mxu0 0.0
      %8790 = vmatpush2.msra.mxu0 0.0
      %8791 = vmatprep.mubr.f32.mxu0 0.0
      %8792 = vmatmul.mubr.f32.gmra.mxu0 %v8725
      %v8793 = vpop.f32.mrf.mxu0
      %v8794 = vadd.f32 %v8722, %v8793
      %v8795 = vpop.f32.mrf.mxu0
      %8796 = vdwg.mxu0
      %vm8797 = vcmask 123904
      %8798 = vst.msk [vmem:[%s281] sm:$0x3] %vm8797, %v8794
      %p8799 = scmp.lt.s32.totalorder %s18, 1
      %s8800 = scalar_select %p8799, %s18, 1
      %s8801 = smul.addr %s8800, 2
      %s8802 = scalar_lea.vmem %s7, %s8801
      // Predicated region
      $region49: #{cnn_encoder1_forward.1} parent=47 // pred_check
        %p8803 = pneg %p188
      $region50: #{cnn_encoder1_forward.1} parent=47 // pred_check_branch
        %8805 = sbr.rel (%p8803) target = $region52
      $region51: #{cnn_encoder1_forward.1} parent=47 // pred_region
        _
      $region52: #{cnn_encoder1_forward.1} parent=47 // pred_fallthru
        _
    $region48: #{cnn_encoder1_forward.1} parent=5 // pred_fallthru
      _
    %p8806 = scmp.le.s32.totalorder 2, %s13
    // Predicated region
    $region53: #{cnn_encoder1_forward.1} parent=5 // pred_check
      %p8807 = pneg %p8806
    $region54: #{cnn_encoder1_forward.1} parent=5 // pred_check_branch
      %8809 = sbr.rel (%p8807) target = $region56
    $region55: #{cnn_encoder1_forward.1} parent=5 // pred_region
      %s8810 = ssub.s32 %s13, 2
      // Predicated region
      $region57: #{cnn_encoder1_forward.1} parent=55 // pred_check
        %p8811 = pneg %p194
      $region58: #{cnn_encoder1_forward.1} parent=55 // pred_check_branch
        %8813 = sbr.rel (%p8811) target = $region60
      $region59: #{cnn_encoder1_forward.1} parent=55 // pred_region
        %p8814 = scmp.lt.s32.totalorder %s19, 1
        %s8815 = scalar_select %p8814, %s19, 1
        %s8816 = smul.addr %s8815, 2
        %s8817 = scalar_lea.vmem %s7, %s8816
      $region60: #{cnn_encoder1_forward.1} parent=55 // pred_fallthru
        _
    $region56: #{cnn_encoder1_forward.1} parent=5 // pred_fallthru
      _
  $region6: #{cnn_encoder1_forward.1} parent=0 // loop_footer
    %s17 = sadd.s32 1, %s13
  $region7: #{cnn_encoder1_forward.1} parent=0 // loop_footer_branch
    %12 = sbr.rel target = $region3
  $region8: #{cnn_encoder1_forward.1} parent=0 // loop_exit
    _

</llo_original>
